<compile_context>
chip_gen: v7x
topology: tpu7x:2x2x1
jax: 0.10.0
libtpu: 0.0.40
codegen_flags: <defaults>
</compile_context>

<pallas_src>
import functools
import numpy as np
import jax
import jax.numpy as jnp
from jax.experimental import pallas as pl
from jax.experimental.pallas import tpu as pltpu


# ----------------------------------------------------------------------------
# Host-side constant selection matrices (numpy, built once at trace time)
# ----------------------------------------------------------------------------

def _split_mats(B, L):
    """De-interleave a batch-flat (B*L, C) array into per-batch even/odd rows."""
    n, h = B * L, (B * L) // 2
    i = np.arange(h)[:, None]
    j = np.arange(n)[None, :]
    even = (j == 2 * i).astype(np.float32)
    odd = (j == 2 * i + 1).astype(np.float32)
    return np.stack([even, odd])                       # (2, h, n)


def _zip_mats(B, L):
    """Interleave two batch-flat (B*L, C) halves into a batch-flat (B*2L, C)."""
    n, h = 2 * B * L, B * L
    i = np.arange(n)[:, None]
    j = np.arange(h)[None, :]
    z_even = (i == 2 * j).astype(np.float32)
    z_odd = (i == 2 * j + 1).astype(np.float32)
    return np.stack([z_even, z_odd])                   # (2, n, h)


def _conv_tap_mats(B, L):
    """Tap-gather matrices for the two k=3 convs of one branch on a batch-flat
    (B*L, C) input:
      T : ReplicationPad1d((2,2)) + tap shift -> L+2 rows/batch (conv1 inputs)
      U : valid tap shift                     -> L   rows/batch (conv2 inputs)
    Returned stacked along taps: T (3*B*(L+2), B*L), U (3*B*L, B*(L+2))."""
    L1 = L + 2
    T = np.zeros((3, B * L1, B * L), np.float32)
    U = np.zeros((3, B * L, B * L1), np.float32)
    for t in range(3):
        for b in range(B):
            for l in range(L1):
                src = b * L + int(np.clip(l + t - 2, 0, L - 1))
                T[t, b * L1 + l, src] = 1.0
            for l in range(L):
                U[t, b * L + l, b * L1 + l + t] = 1.0
    return T.reshape(3 * B * L1, B * L), U.reshape(3 * B * L, B * L1)


# ----------------------------------------------------------------------------
# Fused Pallas kernel: full SCINet forward in one invocation
# ----------------------------------------------------------------------------

def _scinet_kernel(x_ref, w1_ref, b1_ref, w2_ref, b2_ref, wp_ref,
                   s1_ref, z1_ref, s2_ref, z2_ref,
                   t1_ref, u1_ref, t0_ref, u0_ref,
                   o_ref):
    x = x_ref[...]                                     # (B*S, C) batch-flat input
    P, S = wp_ref.shape
    B = x.shape[0] // S                                # static python int

    def dot(a, b):
        return jnp.dot(a, b, preferred_element_type=jnp.float32)

    def branch(v, k, tcat, ucat):
        """One phi/psi/rho/eta branch on a batch-flat (B*Lh, C) input:
           RepPad(2,2) -> Conv1d(C->Dm,k=3) -> LeakyReLU(0.01) -> Dropout(id)
           -> Conv1d(Dm->C,k=3) -> Tanh."""
        r1 = tcat.shape[0] // 3                        # B*(Lh+2)
        r2 = ucat.shape[0] // 3                        # B*Lh
        xt = dot(tcat, v)                              # (3*r1, C): 3 padded tap views
        y1 = (dot(xt[0:r1], w1_ref[k, 0])
              + dot(xt[r1:2 * r1], w1_ref[k, 1])
              + dot(xt[2 * r1:3 * r1], w1_ref[k, 2])
              + b1_ref[k])                             # (r1, Dm)
        y1 = jnp.where(y1 >= 0, y1, 0.01 * y1)         # LeakyReLU; Dropout = identity (eval)
        yt = dot(ucat, y1)                             # (3*r2, Dm)
        y2 = (dot(yt[0:r2], w2_ref[k, 0])
              + dot(yt[r2:2 * r2], w2_ref[k, 1])
              + dot(yt[2 * r2:3 * r2], w2_ref[k, 2])
              + b2_ref[k])                             # (r2, C)
        return jnp.tanh(y2)

    def sci_block(v, base, se, so, tcat, ucat):
        """SCIBlock on a batch-flat (B*L, C) input -> (even_update, odd_update)."""
        x_even = dot(se, v)
        x_odd = dot(so, v)
        x_odd_s = x_odd * jnp.exp(branch(x_even, base + 0, tcat, ucat))    # phi
        x_even_s = x_even * jnp.exp(branch(x_odd, base + 1, tcat, ucat))   # psi
        even_upd = x_even_s + branch(x_odd_s, base + 3, tcat, ucat)        # eta
        odd_upd = x_odd_s - branch(x_even_s, base + 2, tcat, ucat)         # rho
        return even_upd, odd_upd

    t1, u1 = t1_ref[...], u1_ref[...]                  # level-1 tap gathers
    t0, u0 = t0_ref[...], u0_ref[...]                  # level-0 tap gathers

    # Level-1 block on the full sequence.
    e_upd, o_upd = sci_block(x, 0, s1_ref[0], s1_ref[1], t1, u1)
    # Level-0 trees (their own blocks) on each half, then zip_up_the_pants.
    ee, eo = sci_block(e_upd, 4, s2_ref[0], s2_ref[1], t0, u0)
    even_out = dot(z2_ref[0], ee) + dot(z2_ref[1], eo)
    oe, oo = sci_block(o_upd, 8, s2_ref[0], s2_ref[1], t0, u0)
    odd_out = dot(z2_ref[0], oe) + dot(z2_ref[1], oo)
    # Final zip + residual.
    total = dot(z1_ref[0], even_out) + dot(z1_ref[1], odd_out) + x         # (B*S, C)
    # Projection: nn.Conv1d(seq_len -> pred_len, k=1, bias=False) == W(P,S) @ total[b].
    wp = wp_ref[...]
    for b in range(B):                                 # B is static (2): unrolled
        o_ref[b] = dot(wp, total[b * S:(b + 1) * S])


# ----------------------------------------------------------------------------
# Wrapper
# ----------------------------------------------------------------------------

def model_forward(x_enc, x_mark_enc, x_dec, x_mark_dec, params, mask=None):
    # configs.rev / configs.arev disabled -> RevIN / AdaRevIN are identity here.
    B, S, C = x_enc.shape
    P = params["proj_w"].shape[0]
    Lh, Lq = S // 2, S // 4                            # level-1 / level-0 half lengths

    s1 = _split_mats(B, S)                             # (2, B*Lh, B*S)
    z1 = _zip_mats(B, Lh)                              # (2, B*S, B*Lh)
    s2 = _split_mats(B, Lh)                            # (2, B*Lq, B*Lh)
    z2 = _zip_mats(B, Lq)                              # (2, B*Lh, B*Lq)
    t1, u1 = _conv_tap_mats(B, Lh)                     # level-1 branch conv gathers
    t0, u0 = _conv_tap_mats(B, Lq)                     # level-0 branch conv gathers

    vmem = pl.BlockSpec(memory_space=pltpu.MemorySpace.VMEM)
    out = pl.pallas_call(
        _scinet_kernel,
        out_shape=jax.ShapeDtypeStruct((B, P, C), jnp.float32),
        in_specs=[vmem] * 14,
        out_specs=vmem,
    )(x_enc.reshape(B * S, C),
      params["w1"], params["b1"], params["w2"], params["b2"], params["proj_w"],
      s1, z1, s2, z2, t1, u1, t0, u0)
    return out


# ----------------------------------------------------------------------------
# Deterministic parameter init
# ----------------------------------------------------------------------------

def init_params(key, seq_len, pred_len, enc_in, d_model):
    kw1, kb1, kw2, kb2, kp = jax.random.split(key, 5)
    n_branch = 12   # 3 SCIBlocks (level-1, level-0 even, level-0 odd) x (phi, psi, rho, eta)
    return {
        # torch Conv1d weight (out, in, tap) stored here as (branch, tap, in, out)
        "w1": 0.1 * jax.random.normal(kw1, (n_branch, 3, enc_in, d_model), jnp.float32),
        "b1": 0.1 * jax.random.normal(kb1, (n_branch, 1, d_model), jnp.float32),
        "w2": 0.1 * jax.random.normal(kw2, (n_branch, 3, d_model, enc_in), jnp.float32),
        "b2": 0.1 * jax.random.normal(kb2, (n_branch, 1, enc_in), jnp.float32),
        # nn.Conv1d(seq_len, pred_len, kernel_size=1, bias=False) weight -> (P, S)
        "proj_w": 0.1 * jax.random.normal(kp, (pred_len, seq_len), jnp.float32),
    }


# ----------------------------------------------------------------------------
# Main
# ----------------------------------------------------------------------------

if __name__ == "__main__":
    # Small config: seq_len must be divisible by 4 (level-1 tree).
    B, SEQ_LEN, PRED_LEN, ENC_IN, D_MODEL = 2, 16, 8, 8, 32

    root = jax.random.PRNGKey(0)
    k_x, k_p = jax.random.split(root)
    params = init_params(k_p, SEQ_LEN, PRED_LEN, ENC_IN, D_MODEL)

    x_enc = jax.random.normal(k_x, (B, SEQ_LEN, ENC_IN), jnp.float32)
    # Unused by forward (kept for signature parity).
    x_mark_enc = jnp.zeros((B, SEQ_LEN, 4), jnp.float32)
    x_dec = jnp.zeros((B, PRED_LEN, ENC_IN), jnp.float32)
    x_mark_dec = jnp.zeros((B, PRED_LEN, 4), jnp.float32)

    fwd = jax.jit(functools.partial(model_forward, params=params))
    out = fwd(x_enc, x_mark_enc, x_dec, x_mark_dec)
    out = jax.block_until_ready(out)

    assert out.shape == (B, PRED_LEN, ENC_IN), out.shape
    assert bool(jnp.all(jnp.isfinite(out)))
    print("KERNEL_OK")
</pallas_src>

<mosaic_0001>
module attributes {stable_mosaic.version = 11 : i64} {
  func.func @_scinet_kernel(%arg0: memref<32x8xf32, #tpu.memory_space<vmem>>, %arg1: memref<12x3x8x32xf32, #tpu.memory_space<vmem>>, %arg2: memref<12x1x32xf32, #tpu.memory_space<vmem>>, %arg3: memref<12x3x32x8xf32, #tpu.memory_space<vmem>>, %arg4: memref<12x1x8xf32, #tpu.memory_space<vmem>>, %arg5: memref<8x16xf32, #tpu.memory_space<vmem>>, %arg6: memref<2x16x32xf32, #tpu.memory_space<vmem>>, %arg7: memref<2x32x16xf32, #tpu.memory_space<vmem>>, %arg8: memref<2x8x16xf32, #tpu.memory_space<vmem>>, %arg9: memref<2x16x8xf32, #tpu.memory_space<vmem>>, %arg10: memref<60x16xf32, #tpu.memory_space<vmem>>, %arg11: memref<48x20xf32, #tpu.memory_space<vmem>>, %arg12: memref<36x8xf32, #tpu.memory_space<vmem>>, %arg13: memref<24x12xf32, #tpu.memory_space<vmem>>, %arg14: memref<2x8x8xf32, #tpu.memory_space<vmem>>) attributes {dimension_semantics = [], scalar_prefetch = 0 : i64, scratch_operands = 0 : i64, tpu.core_type = #tpu.core_type<tc>} {
    %c0 = arith.constant 0 : index
    %c0_0 = arith.constant 0 : index
    %0 = vector.load %arg0[%c0, %c0_0] : memref<32x8xf32, #tpu.memory_space<vmem>>, vector<32x8xf32>
    %c0_1 = arith.constant 0 : index
    %c0_2 = arith.constant 0 : index
    %1 = vector.load %arg10[%c0_1, %c0_2] : memref<60x16xf32, #tpu.memory_space<vmem>>, vector<60x16xf32>
    %c0_3 = arith.constant 0 : index
    %c0_4 = arith.constant 0 : index
    %2 = vector.load %arg11[%c0_3, %c0_4] : memref<48x20xf32, #tpu.memory_space<vmem>>, vector<48x20xf32>
    %c0_5 = arith.constant 0 : index
    %c0_6 = arith.constant 0 : index
    %3 = vector.load %arg12[%c0_5, %c0_6] : memref<36x8xf32, #tpu.memory_space<vmem>>, vector<36x8xf32>
    %c0_7 = arith.constant 0 : index
    %c0_8 = arith.constant 0 : index
    %4 = vector.load %arg13[%c0_7, %c0_8] : memref<24x12xf32, #tpu.memory_space<vmem>>, vector<24x12xf32>
    %c0_9 = arith.constant 0 : index
    %c0_10 = arith.constant 0 : index
    %c0_11 = arith.constant 0 : index
    %5 = vector.load %arg6[%c0_9, %c0_10, %c0_11] : memref<2x16x32xf32, #tpu.memory_space<vmem>>, vector<1x16x32xf32>
    %6 = vector.shape_cast %5 : vector<1x16x32xf32> to vector<16x32xf32>
    %c1 = arith.constant 1 : index
    %c0_12 = arith.constant 0 : index
    %c0_13 = arith.constant 0 : index
    %7 = vector.load %arg6[%c1, %c0_12, %c0_13] : memref<2x16x32xf32, #tpu.memory_space<vmem>>, vector<1x16x32xf32>
    %8 = vector.shape_cast %7 : vector<1x16x32xf32> to vector<16x32xf32>
    %cst = arith.constant dense<0.000000e+00> : vector<16x8xf32>
    %9 = tpu.matmul %6, %0, %cst {dimension_numbers = #tpu.dot_dimension_numbers<[1], [0], [0], [1], [0, 0, 1, 1], [], []>} : vector<16x32xf32>, vector<32x8xf32>, vector<16x8xf32> -> vector<16x8xf32>
    %cst_14 = arith.constant dense<0.000000e+00> : vector<16x8xf32>
    %10 = tpu.matmul %8, %0, %cst_14 {dimension_numbers = #tpu.dot_dimension_numbers<[1], [0], [0], [1], [0, 0, 1, 1], [], []>} : vector<16x32xf32>, vector<32x8xf32>, vector<16x8xf32> -> vector<16x8xf32>
    %cst_15 = arith.constant dense<0.000000e+00> : vector<60x8xf32>
    %11 = tpu.matmul %1, %9, %cst_15 {dimension_numbers = #tpu.dot_dimension_numbers<[1], [0], [0], [1], [0, 0, 1, 1], [], []>} : vector<60x16xf32>, vector<16x8xf32>, vector<60x8xf32> -> vector<60x8xf32>
    %12 = vector.extract_strided_slice %11 {offsets = [0, 0], sizes = [20, 8], strides = [1, 1]} : vector<60x8xf32> to vector<20x8xf32>
    %c0_16 = arith.constant 0 : index
    %c0_17 = arith.constant 0 : index
    %c0_18 = arith.constant 0 : index
    %c0_19 = arith.constant 0 : index
    %13 = vector.load %arg1[%c0_16, %c0_17, %c0_18, %c0_19] : memref<12x3x8x32xf32, #tpu.memory_space<vmem>>, vector<1x1x8x32xf32>
    %14 = vector.shape_cast %13 : vector<1x1x8x32xf32> to vector<8x32xf32>
    %cst_20 = arith.constant dense<0.000000e+00> : vector<20x32xf32>
    %15 = tpu.matmul %12, %14, %cst_20 {dimension_numbers = #tpu.dot_dimension_numbers<[1], [0], [0], [1], [0, 0, 1, 1], [], []>} : vector<20x8xf32>, vector<8x32xf32>, vector<20x32xf32> -> vector<20x32xf32>
    %16 = vector.extract_strided_slice %11 {offsets = [20, 0], sizes = [20, 8], strides = [1, 1]} : vector<60x8xf32> to vector<20x8xf32>
    %c0_21 = arith.constant 0 : index
    %c1_22 = arith.constant 1 : index
    %c0_23 = arith.constant 0 : index
    %c0_24 = arith.constant 0 : index
    %17 = vector.load %arg1[%c0_21, %c1_22, %c0_23, %c0_24] : memref<12x3x8x32xf32, #tpu.memory_space<vmem>>, vector<1x1x8x32xf32>
    %18 = vector.shape_cast %17 : vector<1x1x8x32xf32> to vector<8x32xf32>
    %cst_25 = arith.constant dense<0.000000e+00> : vector<20x32xf32>
    %19 = tpu.matmul %16, %18, %cst_25 {dimension_numbers = #tpu.dot_dimension_numbers<[1], [0], [0], [1], [0, 0, 1, 1], [], []>} : vector<20x8xf32>, vector<8x32xf32>, vector<20x32xf32> -> vector<20x32xf32>
    %20 = arith.addf %15, %19 : vector<20x32xf32>
    %21 = vector.extract_strided_slice %11 {offsets = [40, 0], sizes = [20, 8], strides = [1, 1]} : vector<60x8xf32> to vector<20x8xf32>
    %c0_26 = arith.constant 0 : index
    %c2 = arith.constant 2 : index
    %c0_27 = arith.constant 0 : index
    %c0_28 = arith.constant 0 : index
    %22 = vector.load %arg1[%c0_26, %c2, %c0_27, %c0_28] : memref<12x3x8x32xf32, #tpu.memory_space<vmem>>, vector<1x1x8x32xf32>
    %23 = vector.shape_cast %22 : vector<1x1x8x32xf32> to vector<8x32xf32>
    %cst_29 = arith.constant dense<0.000000e+00> : vector<20x32xf32>
    %24 = tpu.matmul %21, %23, %cst_29 {dimension_numbers = #tpu.dot_dimension_numbers<[1], [0], [0], [1], [0, 0, 1, 1], [], []>} : vector<20x8xf32>, vector<8x32xf32>, vector<20x32xf32> -> vector<20x32xf32>
    %25 = arith.addf %20, %24 : vector<20x32xf32>
    %c0_30 = arith.constant 0 : index
    %c0_31 = arith.constant 0 : index
    %c0_32 = arith.constant 0 : index
    %26 = vector.load %arg2[%c0_30, %c0_31, %c0_32] : memref<12x1x32xf32, #tpu.memory_space<vmem>>, vector<1x1x32xf32>
    %27 = vector.shape_cast %26 : vector<1x1x32xf32> to vector<1x32xf32>
    %28 = vector.broadcast %27 : vector<1x32xf32> to vector<20x32xf32>
    %29 = arith.addf %25, %28 : vector<20x32xf32>
    %cst_33 = arith.constant 0.000000e+00 : f32
    %30 = vector.broadcast %cst_33 : f32 to vector<20x32xf32>
    %31 = arith.cmpf oge, %29, %30 : vector<20x32xf32>
    %cst_34 = arith.constant 0.00999999977 : f32
    %32 = vector.broadcast %cst_34 : f32 to vector<20x32xf32>
    %33 = arith.mulf %32, %29 : vector<20x32xf32>
    %34 = arith.select %31, %29, %33 : vector<20x32xi1>, vector<20x32xf32>
    %cst_35 = arith.constant dense<0.000000e+00> : vector<48x32xf32>
    %35 = tpu.matmul %2, %34, %cst_35 {dimension_numbers = #tpu.dot_dimension_numbers<[1], [0], [0], [1], [0, 0, 1, 1], [], []>} : vector<48x20xf32>, vector<20x32xf32>, vector<48x32xf32> -> vector<48x32xf32>
    %36 = vector.extract_strided_slice %35 {offsets = [0, 0], sizes = [16, 32], strides = [1, 1]} : vector<48x32xf32> to vector<16x32xf32>
    %c0_36 = arith.constant 0 : index
    %c0_37 = arith.constant 0 : index
    %c0_38 = arith.constant 0 : index
    %c0_39 = arith.constant 0 : index
    %37 = vector.load %arg3[%c0_36, %c0_37, %c0_38, %c0_39] : memref<12x3x32x8xf32, #tpu.memory_space<vmem>>, vector<1x1x32x8xf32>
    %38 = vector.shape_cast %37 : vector<1x1x32x8xf32> to vector<32x8xf32>
    %cst_40 = arith.constant dense<0.000000e+00> : vector<16x8xf32>
    %39 = tpu.matmul %36, %38, %cst_40 {dimension_numbers = #tpu.dot_dimension_numbers<[1], [0], [0], [1], [0, 0, 1, 1], [], []>} : vector<16x32xf32>, vector<32x8xf32>, vector<16x8xf32> -> vector<16x8xf32>
    %40 = vector.extract_strided_slice %35 {offsets = [16, 0], sizes = [16, 32], strides = [1, 1]} : vector<48x32xf32> to vector<16x32xf32>
    %c0_41 = arith.constant 0 : index
    %c1_42 = arith.constant 1 : index
    %c0_43 = arith.constant 0 : index
    %c0_44 = arith.constant 0 : index
    %41 = vector.load %arg3[%c0_41, %c1_42, %c0_43, %c0_44] : memref<12x3x32x8xf32, #tpu.memory_space<vmem>>, vector<1x1x32x8xf32>
    %42 = vector.shape_cast %41 : vector<1x1x32x8xf32> to vector<32x8xf32>
    %cst_45 = arith.constant dense<0.000000e+00> : vector<16x8xf32>
    %43 = tpu.matmul %40, %42, %cst_45 {dimension_numbers = #tpu.dot_dimension_numbers<[1], [0], [0], [1], [0, 0, 1, 1], [], []>} : vector<16x32xf32>, vector<32x8xf32>, vector<16x8xf32> -> vector<16x8xf32>
    %44 = arith.addf %39, %43 : vector<16x8xf32>
    %45 = vector.extract_strided_slice %35 {offsets = [32, 0], sizes = [16, 32], strides = [1, 1]} : vector<48x32xf32> to vector<16x32xf32>
    %c0_46 = arith.constant 0 : index
    %c2_47 = arith.constant 2 : index
    %c0_48 = arith.constant 0 : index
    %c0_49 = arith.constant 0 : index
    %46 = vector.load %arg3[%c0_46, %c2_47, %c0_48, %c0_49] : memref<12x3x32x8xf32, #tpu.memory_space<vmem>>, vector<1x1x32x8xf32>
    %47 = vector.shape_cast %46 : vector<1x1x32x8xf32> to vector<32x8xf32>
    %cst_50 = arith.constant dense<0.000000e+00> : vector<16x8xf32>
    %48 = tpu.matmul %45, %47, %cst_50 {dimension_numbers = #tpu.dot_dimension_numbers<[1], [0], [0], [1], [0, 0, 1, 1], [], []>} : vector<16x32xf32>, vector<32x8xf32>, vector<16x8xf32> -> vector<16x8xf32>
    %49 = arith.addf %44, %48 : vector<16x8xf32>
    %c0_51 = arith.constant 0 : index
    %c0_52 = arith.constant 0 : index
    %c0_53 = arith.constant 0 : index
    %50 = vector.load %arg4[%c0_51, %c0_52, %c0_53] : memref<12x1x8xf32, #tpu.memory_space<vmem>>, vector<1x1x8xf32>
    %51 = vector.shape_cast %50 : vector<1x1x8xf32> to vector<1x8xf32>
    %52 = vector.broadcast %51 : vector<1x8xf32> to vector<16x8xf32>
    %53 = arith.addf %49, %52 : vector<16x8xf32>
    %54 = math.tanh %53 : vector<16x8xf32>
    %55 = math.exp %54 : vector<16x8xf32>
    %56 = arith.mulf %10, %55 : vector<16x8xf32>
    %cst_54 = arith.constant dense<0.000000e+00> : vector<60x8xf32>
    %57 = tpu.matmul %1, %10, %cst_54 {dimension_numbers = #tpu.dot_dimension_numbers<[1], [0], [0], [1], [0, 0, 1, 1], [], []>} : vector<60x16xf32>, vector<16x8xf32>, vector<60x8xf32> -> vector<60x8xf32>
    %58 = vector.extract_strided_slice %57 {offsets = [0, 0], sizes = [20, 8], strides = [1, 1]} : vector<60x8xf32> to vector<20x8xf32>
    %c1_55 = arith.constant 1 : index
    %c0_56 = arith.constant 0 : index
    %c0_57 = arith.constant 0 : index
    %c0_58 = arith.constant 0 : index
    %59 = vector.load %arg1[%c1_55, %c0_56, %c0_57, %c0_58] : memref<12x3x8x32xf32, #tpu.memory_space<vmem>>, vector<1x1x8x32xf32>
    %60 = vector.shape_cast %59 : vector<1x1x8x32xf32> to vector<8x32xf32>
    %cst_59 = arith.constant dense<0.000000e+00> : vector<20x32xf32>
    %61 = tpu.matmul %58, %60, %cst_59 {dimension_numbers = #tpu.dot_dimension_numbers<[1], [0], [0], [1], [0, 0, 1, 1], [], []>} : vector<20x8xf32>, vector<8x32xf32>, vector<20x32xf32> -> vector<20x32xf32>
    %62 = vector.extract_strided_slice %57 {offsets = [20, 0], sizes = [20, 8], strides = [1, 1]} : vector<60x8xf32> to vector<20x8xf32>
    %c1_60 = arith.constant 1 : index
    %c1_61 = arith.constant 1 : index
    %c0_62 = arith.constant 0 : index
    %c0_63 = arith.constant 0 : index
    %63 = vector.load %arg1[%c1_60, %c1_61, %c0_62, %c0_63] : memref<12x3x8x32xf32, #tpu.memory_space<vmem>>, vector<1x1x8x32xf32>
    %64 = vector.shape_cast %63 : vector<1x1x8x32xf32> to vector<8x32xf32>
    %cst_64 = arith.constant dense<0.000000e+00> : vector<20x32xf32>
    %65 = tpu.matmul %62, %64, %cst_64 {dimension_numbers = #tpu.dot_dimension_numbers<[1], [0], [0], [1], [0, 0, 1, 1], [], []>} : vector<20x8xf32>, vector<8x32xf32>, vector<20x32xf32> -> vector<20x32xf32>
    %66 = arith.addf %61, %65 : vector<20x32xf32>
    %67 = vector.extract_strided_slice %57 {offsets = [40, 0], sizes = [20, 8], strides = [1, 1]} : vector<60x8xf32> to vector<20x8xf32>
    %c1_65 = arith.constant 1 : index
    %c2_66 = arith.constant 2 : index
    %c0_67 = arith.constant 0 : index
    %c0_68 = arith.constant 0 : index
    %68 = vector.load %arg1[%c1_65, %c2_66, %c0_67, %c0_68] : memref<12x3x8x32xf32, #tpu.memory_space<vmem>>, vector<1x1x8x32xf32>
    %69 = vector.shape_cast %68 : vector<1x1x8x32xf32> to vector<8x32xf32>
    %cst_69 = arith.constant dense<0.000000e+00> : vector<20x32xf32>
    %70 = tpu.matmul %67, %69, %cst_69 {dimension_numbers = #tpu.dot_dimension_numbers<[1], [0], [0], [1], [0, 0, 1, 1], [], []>} : vector<20x8xf32>, vector<8x32xf32>, vector<20x32xf32> -> vector<20x32xf32>
    %71 = arith.addf %66, %70 : vector<20x32xf32>
    %c1_70 = arith.constant 1 : index
    %c0_71 = arith.constant 0 : index
    %c0_72 = arith.constant 0 : index
    %72 = vector.load %arg2[%c1_70, %c0_71, %c0_72] : memref<12x1x32xf32, #tpu.memory_space<vmem>>, vector<1x1x32xf32>
    %73 = vector.shape_cast %72 : vector<1x1x32xf32> to vector<1x32xf32>
    %74 = vector.broadcast %73 : vector<1x32xf32> to vector<20x32xf32>
    %75 = arith.addf %71, %74 : vector<20x32xf32>
    %cst_73 = arith.constant 0.000000e+00 : f32
    %76 = vector.broadcast %cst_73 : f32 to vector<20x32xf32>
    %77 = arith.cmpf oge, %75, %76 : vector<20x32xf32>
    %cst_74 = arith.constant 0.00999999977 : f32
    %78 = vector.broadcast %cst_74 : f32 to vector<20x32xf32>
    %79 = arith.mulf %78, %75 : vector<20x32xf32>
    %80 = arith.select %77, %75, %79 : vector<20x32xi1>, vector<20x32xf32>
    %cst_75 = arith.constant dense<0.000000e+00> : vector<48x32xf32>
    %81 = tpu.matmul %2, %80, %cst_75 {dimension_numbers = #tpu.dot_dimension_numbers<[1], [0], [0], [1], [0, 0, 1, 1], [], []>} : vector<48x20xf32>, vector<20x32xf32>, vector<48x32xf32> -> vector<48x32xf32>
    %82 = vector.extract_strided_slice %81 {offsets = [0, 0], sizes = [16, 32], strides = [1, 1]} : vector<48x32xf32> to vector<16x32xf32>
    %c1_76 = arith.constant 1 : index
    %c0_77 = arith.constant 0 : index
    %c0_78 = arith.constant 0 : index
    %c0_79 = arith.constant 0 : index
    %83 = vector.load %arg3[%c1_76, %c0_77, %c0_78, %c0_79] : memref<12x3x32x8xf32, #tpu.memory_space<vmem>>, vector<1x1x32x8xf32>
    %84 = vector.shape_cast %83 : vector<1x1x32x8xf32> to vector<32x8xf32>
    %cst_80 = arith.constant dense<0.000000e+00> : vector<16x8xf32>
    %85 = tpu.matmul %82, %84, %cst_80 {dimension_numbers = #tpu.dot_dimension_numbers<[1], [0], [0], [1], [0, 0, 1, 1], [], []>} : vector<16x32xf32>, vector<32x8xf32>, vector<16x8xf32> -> vector<16x8xf32>
    %86 = vector.extract_strided_slice %81 {offsets = [16, 0], sizes = [16, 32], strides = [1, 1]} : vector<48x32xf32> to vector<16x32xf32>
    %c1_81 = arith.constant 1 : index
    %c1_82 = arith.constant 1 : index
    %c0_83 = arith.constant 0 : index
    %c0_84 = arith.constant 0 : index
    %87 = vector.load %arg3[%c1_81, %c1_82, %c0_83, %c0_84] : memref<12x3x32x8xf32, #tpu.memory_space<vmem>>, vector<1x1x32x8xf32>
    %88 = vector.shape_cast %87 : vector<1x1x32x8xf32> to vector<32x8xf32>
    %cst_85 = arith.constant dense<0.000000e+00> : vector<16x8xf32>
    %89 = tpu.matmul %86, %88, %cst_85 {dimension_numbers = #tpu.dot_dimension_numbers<[1], [0], [0], [1], [0, 0, 1, 1], [], []>} : vector<16x32xf32>, vector<32x8xf32>, vector<16x8xf32> -> vector<16x8xf32>
    %90 = arith.addf %85, %89 : vector<16x8xf32>
    %91 = vector.extract_strided_slice %81 {offsets = [32, 0], sizes = [16, 32], strides = [1, 1]} : vector<48x32xf32> to vector<16x32xf32>
    %c1_86 = arith.constant 1 : index
    %c2_87 = arith.constant 2 : index
    %c0_88 = arith.constant 0 : index
    %c0_89 = arith.constant 0 : index
    %92 = vector.load %arg3[%c1_86, %c2_87, %c0_88, %c0_89] : memref<12x3x32x8xf32, #tpu.memory_space<vmem>>, vector<1x1x32x8xf32>
    %93 = vector.shape_cast %92 : vector<1x1x32x8xf32> to vector<32x8xf32>
    %cst_90 = arith.constant dense<0.000000e+00> : vector<16x8xf32>
    %94 = tpu.matmul %91, %93, %cst_90 {dimension_numbers = #tpu.dot_dimension_numbers<[1], [0], [0], [1], [0, 0, 1, 1], [], []>} : vector<16x32xf32>, vector<32x8xf32>, vector<16x8xf32> -> vector<16x8xf32>
    %95 = arith.addf %90, %94 : vector<16x8xf32>
    %c1_91 = arith.constant 1 : index
    %c0_92 = arith.constant 0 : index
    %c0_93 = arith.constant 0 : index
    %96 = vector.load %arg4[%c1_91, %c0_92, %c0_93] : memref<12x1x8xf32, #tpu.memory_space<vmem>>, vector<1x1x8xf32>
    %97 = vector.shape_cast %96 : vector<1x1x8xf32> to vector<1x8xf32>
    %98 = vector.broadcast %97 : vector<1x8xf32> to vector<16x8xf32>
    %99 = arith.addf %95, %98 : vector<16x8xf32>
    %100 = math.tanh %99 : vector<16x8xf32>
    %101 = math.exp %100 : vector<16x8xf32>
    %102 = arith.mulf %9, %101 : vector<16x8xf32>
    %cst_94 = arith.constant dense<0.000000e+00> : vector<60x8xf32>
    %103 = tpu.matmul %1, %56, %cst_94 {dimension_numbers = #tpu.dot_dimension_numbers<[1], [0], [0], [1], [0, 0, 1, 1], [], []>} : vector<60x16xf32>, vector<16x8xf32>, vector<60x8xf32> -> vector<60x8xf32>
    %104 = vector.extract_strided_slice %103 {offsets = [0, 0], sizes = [20, 8], strides = [1, 1]} : vector<60x8xf32> to vector<20x8xf32>
    %c3 = arith.constant 3 : index
    %c0_95 = arith.constant 0 : index
    %c0_96 = arith.constant 0 : index
    %c0_97 = arith.constant 0 : index
    %105 = vector.load %arg1[%c3, %c0_95, %c0_96, %c0_97] : memref<12x3x8x32xf32, #tpu.memory_space<vmem>>, vector<1x1x8x32xf32>
    %106 = vector.shape_cast %105 : vector<1x1x8x32xf32> to vector<8x32xf32>
    %cst_98 = arith.constant dense<0.000000e+00> : vector<20x32xf32>
    %107 = tpu.matmul %104, %106, %cst_98 {dimension_numbers = #tpu.dot_dimension_numbers<[1], [0], [0], [1], [0, 0, 1, 1], [], []>} : vector<20x8xf32>, vector<8x32xf32>, vector<20x32xf32> -> vector<20x32xf32>
    %108 = vector.extract_strided_slice %103 {offsets = [20, 0], sizes = [20, 8], strides = [1, 1]} : vector<60x8xf32> to vector<20x8xf32>
    %c3_99 = arith.constant 3 : index
    %c1_100 = arith.constant 1 : index
    %c0_101 = arith.constant 0 : index
    %c0_102 = arith.constant 0 : index
    %109 = vector.load %arg1[%c3_99, %c1_100, %c0_101, %c0_102] : memref<12x3x8x32xf32, #tpu.memory_space<vmem>>, vector<1x1x8x32xf32>
    %110 = vector.shape_cast %109 : vector<1x1x8x32xf32> to vector<8x32xf32>
    %cst_103 = arith.constant dense<0.000000e+00> : vector<20x32xf32>
    %111 = tpu.matmul %108, %110, %cst_103 {dimension_numbers = #tpu.dot_dimension_numbers<[1], [0], [0], [1], [0, 0, 1, 1], [], []>} : vector<20x8xf32>, vector<8x32xf32>, vector<20x32xf32> -> vector<20x32xf32>
    %112 = arith.addf %107, %111 : vector<20x32xf32>
    %113 = vector.extract_strided_slice %103 {offsets = [40, 0], sizes = [20, 8], strides = [1, 1]} : vector<60x8xf32> to vector<20x8xf32>
    %c3_104 = arith.constant 3 : index
    %c2_105 = arith.constant 2 : index
    %c0_106 = arith.constant 0 : index
    %c0_107 = arith.constant 0 : index
    %114 = vector.load %arg1[%c3_104, %c2_105, %c0_106, %c0_107] : memref<12x3x8x32xf32, #tpu.memory_space<vmem>>, vector<1x1x8x32xf32>
    %115 = vector.shape_cast %114 : vector<1x1x8x32xf32> to vector<8x32xf32>
    %cst_108 = arith.constant dense<0.000000e+00> : vector<20x32xf32>
    %116 = tpu.matmul %113, %115, %cst_108 {dimension_numbers = #tpu.dot_dimension_numbers<[1], [0], [0], [1], [0, 0, 1, 1], [], []>} : vector<20x8xf32>, vector<8x32xf32>, vector<20x32xf32> -> vector<20x32xf32>
    %117 = arith.addf %112, %116 : vector<20x32xf32>
    %c3_109 = arith.constant 3 : index
    %c0_110 = arith.constant 0 : index
    %c0_111 = arith.constant 0 : index
    %118 = vector.load %arg2[%c3_109, %c0_110, %c0_111] : memref<12x1x32xf32, #tpu.memory_space<vmem>>, vector<1x1x32xf32>
    %119 = vector.shape_cast %118 : vector<1x1x32xf32> to vector<1x32xf32>
    %120 = vector.broadcast %119 : vector<1x32xf32> to vector<20x32xf32>
    %121 = arith.addf %117, %120 : vector<20x32xf32>
    %cst_112 = arith.constant 0.000000e+00 : f32
    %122 = vector.broadcast %cst_112 : f32 to vector<20x32xf32>
    %123 = arith.cmpf oge, %121, %122 : vector<20x32xf32>
    %cst_113 = arith.constant 0.00999999977 : f32
    %124 = vector.broadcast %cst_113 : f32 to vector<20x32xf32>
    %125 = arith.mulf %124, %121 : vector<20x32xf32>
    %126 = arith.select %123, %121, %125 : vector<20x32xi1>, vector<20x32xf32>
    %cst_114 = arith.constant dense<0.000000e+00> : vector<48x32xf32>
    %127 = tpu.matmul %2, %126, %cst_114 {dimension_numbers = #tpu.dot_dimension_numbers<[1], [0], [0], [1], [0, 0, 1, 1], [], []>} : vector<48x20xf32>, vector<20x32xf32>, vector<48x32xf32> -> vector<48x32xf32>
    %128 = vector.extract_strided_slice %127 {offsets = [0, 0], sizes = [16, 32], strides = [1, 1]} : vector<48x32xf32> to vector<16x32xf32>
    %c3_115 = arith.constant 3 : index
    %c0_116 = arith.constant 0 : index
    %c0_117 = arith.constant 0 : index
    %c0_118 = arith.constant 0 : index
    %129 = vector.load %arg3[%c3_115, %c0_116, %c0_117, %c0_118] : memref<12x3x32x8xf32, #tpu.memory_space<vmem>>, vector<1x1x32x8xf32>
    %130 = vector.shape_cast %129 : vector<1x1x32x8xf32> to vector<32x8xf32>
    %cst_119 = arith.constant dense<0.000000e+00> : vector<16x8xf32>
    %131 = tpu.matmul %128, %130, %cst_119 {dimension_numbers = #tpu.dot_dimension_numbers<[1], [0], [0], [1], [0, 0, 1, 1], [], []>} : vector<16x32xf32>, vector<32x8xf32>, vector<16x8xf32> -> vector<16x8xf32>
    %132 = vector.extract_strided_slice %127 {offsets = [16, 0], sizes = [16, 32], strides = [1, 1]} : vector<48x32xf32> to vector<16x32xf32>
    %c3_120 = arith.constant 3 : index
    %c1_121 = arith.constant 1 : index
    %c0_122 = arith.constant 0 : index
    %c0_123 = arith.constant 0 : index
    %133 = vector.load %arg3[%c3_120, %c1_121, %c0_122, %c0_123] : memref<12x3x32x8xf32, #tpu.memory_space<vmem>>, vector<1x1x32x8xf32>
    %134 = vector.shape_cast %133 : vector<1x1x32x8xf32> to vector<32x8xf32>
    %cst_124 = arith.constant dense<0.000000e+00> : vector<16x8xf32>
    %135 = tpu.matmul %132, %134, %cst_124 {dimension_numbers = #tpu.dot_dimension_numbers<[1], [0], [0], [1], [0, 0, 1, 1], [], []>} : vector<16x32xf32>, vector<32x8xf32>, vector<16x8xf32> -> vector<16x8xf32>
    %136 = arith.addf %131, %135 : vector<16x8xf32>
    %137 = vector.extract_strided_slice %127 {offsets = [32, 0], sizes = [16, 32], strides = [1, 1]} : vector<48x32xf32> to vector<16x32xf32>
    %c3_125 = arith.constant 3 : index
    %c2_126 = arith.constant 2 : index
    %c0_127 = arith.constant 0 : index
    %c0_128 = arith.constant 0 : index
    %138 = vector.load %arg3[%c3_125, %c2_126, %c0_127, %c0_128] : memref<12x3x32x8xf32, #tpu.memory_space<vmem>>, vector<1x1x32x8xf32>
    %139 = vector.shape_cast %138 : vector<1x1x32x8xf32> to vector<32x8xf32>
    %cst_129 = arith.constant dense<0.000000e+00> : vector<16x8xf32>
    %140 = tpu.matmul %137, %139, %cst_129 {dimension_numbers = #tpu.dot_dimension_numbers<[1], [0], [0], [1], [0, 0, 1, 1], [], []>} : vector<16x32xf32>, vector<32x8xf32>, vector<16x8xf32> -> vector<16x8xf32>
    %141 = arith.addf %136, %140 : vector<16x8xf32>
    %c3_130 = arith.constant 3 : index
    %c0_131 = arith.constant 0 : index
    %c0_132 = arith.constant 0 : index
    %142 = vector.load %arg4[%c3_130, %c0_131, %c0_132] : memref<12x1x8xf32, #tpu.memory_space<vmem>>, vector<1x1x8xf32>
    %143 = vector.shape_cast %142 : vector<1x1x8xf32> to vector<1x8xf32>
    %144 = vector.broadcast %143 : vector<1x8xf32> to vector<16x8xf32>
    %145 = arith.addf %141, %144 : vector<16x8xf32>
    %146 = math.tanh %145 : vector<16x8xf32>
    %147 = arith.addf %102, %146 : vector<16x8xf32>
    %cst_133 = arith.constant dense<0.000000e+00> : vector<60x8xf32>
    %148 = tpu.matmul %1, %102, %cst_133 {dimension_numbers = #tpu.dot_dimension_numbers<[1], [0], [0], [1], [0, 0, 1, 1], [], []>} : vector<60x16xf32>, vector<16x8xf32>, vector<60x8xf32> -> vector<60x8xf32>
    %149 = vector.extract_strided_slice %148 {offsets = [0, 0], sizes = [20, 8], strides = [1, 1]} : vector<60x8xf32> to vector<20x8xf32>
    %c2_134 = arith.constant 2 : index
    %c0_135 = arith.constant 0 : index
    %c0_136 = arith.constant 0 : index
    %c0_137 = arith.constant 0 : index
    %150 = vector.load %arg1[%c2_134, %c0_135, %c0_136, %c0_137] : memref<12x3x8x32xf32, #tpu.memory_space<vmem>>, vector<1x1x8x32xf32>
    %151 = vector.shape_cast %150 : vector<1x1x8x32xf32> to vector<8x32xf32>
    %cst_138 = arith.constant dense<0.000000e+00> : vector<20x32xf32>
    %152 = tpu.matmul %149, %151, %cst_138 {dimension_numbers = #tpu.dot_dimension_numbers<[1], [0], [0], [1], [0, 0, 1, 1], [], []>} : vector<20x8xf32>, vector<8x32xf32>, vector<20x32xf32> -> vector<20x32xf32>
    %153 = vector.extract_strided_slice %148 {offsets = [20, 0], sizes = [20, 8], strides = [1, 1]} : vector<60x8xf32> to vector<20x8xf32>
    %c2_139 = arith.constant 2 : index
    %c1_140 = arith.constant 1 : index
    %c0_141 = arith.constant 0 : index
    %c0_142 = arith.constant 0 : index
    %154 = vector.load %arg1[%c2_139, %c1_140, %c0_141, %c0_142] : memref<12x3x8x32xf32, #tpu.memory_space<vmem>>, vector<1x1x8x32xf32>
    %155 = vector.shape_cast %154 : vector<1x1x8x32xf32> to vector<8x32xf32>
    %cst_143 = arith.constant dense<0.000000e+00> : vector<20x32xf32>
    %156 = tpu.matmul %153, %155, %cst_143 {dimension_numbers = #tpu.dot_dimension_numbers<[1], [0], [0], [1], [0, 0, 1, 1], [], []>} : vector<20x8xf32>, vector<8x32xf32>, vector<20x32xf32> -> vector<20x32xf32>
    %157 = arith.addf %152, %156 : vector<20x32xf32>
    %158 = vector.extract_strided_slice %148 {offsets = [40, 0], sizes = [20, 8], strides = [1, 1]} : vector<60x8xf32> to vector<20x8xf32>
    %c2_144 = arith.constant 2 : index
    %c2_145 = arith.constant 2 : index
    %c0_146 = arith.constant 0 : index
    %c0_147 = arith.constant 0 : index
    %159 = vector.load %arg1[%c2_144, %c2_145, %c0_146, %c0_147] : memref<12x3x8x32xf32, #tpu.memory_space<vmem>>, vector<1x1x8x32xf32>
    %160 = vector.shape_cast %159 : vector<1x1x8x32xf32> to vector<8x32xf32>
    %cst_148 = arith.constant dense<0.000000e+00> : vector<20x32xf32>
    %161 = tpu.matmul %158, %160, %cst_148 {dimension_numbers = #tpu.dot_dimension_numbers<[1], [0], [0], [1], [0, 0, 1, 1], [], []>} : vector<20x8xf32>, vector<8x32xf32>, vector<20x32xf32> -> vector<20x32xf32>
    %162 = arith.addf %157, %161 : vector<20x32xf32>
    %c2_149 = arith.constant 2 : index
    %c0_150 = arith.constant 0 : index
    %c0_151 = arith.constant 0 : index
    %163 = vector.load %arg2[%c2_149, %c0_150, %c0_151] : memref<12x1x32xf32, #tpu.memory_space<vmem>>, vector<1x1x32xf32>
    %164 = vector.shape_cast %163 : vector<1x1x32xf32> to vector<1x32xf32>
    %165 = vector.broadcast %164 : vector<1x32xf32> to vector<20x32xf32>
    %166 = arith.addf %162, %165 : vector<20x32xf32>
    %cst_152 = arith.constant 0.000000e+00 : f32
    %167 = vector.broadcast %cst_152 : f32 to vector<20x32xf32>
    %168 = arith.cmpf oge, %166, %167 : vector<20x32xf32>
    %cst_153 = arith.constant 0.00999999977 : f32
    %169 = vector.broadcast %cst_153 : f32 to vector<20x32xf32>
    %170 = arith.mulf %169, %166 : vector<20x32xf32>
    %171 = arith.select %168, %166, %170 : vector<20x32xi1>, vector<20x32xf32>
    %cst_154 = arith.constant dense<0.000000e+00> : vector<48x32xf32>
    %172 = tpu.matmul %2, %171, %cst_154 {dimension_numbers = #tpu.dot_dimension_numbers<[1], [0], [0], [1], [0, 0, 1, 1], [], []>} : vector<48x20xf32>, vector<20x32xf32>, vector<48x32xf32> -> vector<48x32xf32>
    %173 = vector.extract_strided_slice %172 {offsets = [0, 0], sizes = [16, 32], strides = [1, 1]} : vector<48x32xf32> to vector<16x32xf32>
    %c2_155 = arith.constant 2 : index
    %c0_156 = arith.constant 0 : index
    %c0_157 = arith.constant 0 : index
    %c0_158 = arith.constant 0 : index
    %174 = vector.load %arg3[%c2_155, %c0_156, %c0_157, %c0_158] : memref<12x3x32x8xf32, #tpu.memory_space<vmem>>, vector<1x1x32x8xf32>
    %175 = vector.shape_cast %174 : vector<1x1x32x8xf32> to vector<32x8xf32>
    %cst_159 = arith.constant dense<0.000000e+00> : vector<16x8xf32>
    %176 = tpu.matmul %173, %175, %cst_159 {dimension_numbers = #tpu.dot_dimension_numbers<[1], [0], [0], [1], [0, 0, 1, 1], [], []>} : vector<16x32xf32>, vector<32x8xf32>, vector<16x8xf32> -> vector<16x8xf32>
    %177 = vector.extract_strided_slice %172 {offsets = [16, 0], sizes = [16, 32], strides = [1, 1]} : vector<48x32xf32> to vector<16x32xf32>
    %c2_160 = arith.constant 2 : index
    %c1_161 = arith.constant 1 : index
    %c0_162 = arith.constant 0 : index
    %c0_163 = arith.constant 0 : index
    %178 = vector.load %arg3[%c2_160, %c1_161, %c0_162, %c0_163] : memref<12x3x32x8xf32, #tpu.memory_space<vmem>>, vector<1x1x32x8xf32>
    %179 = vector.shape_cast %178 : vector<1x1x32x8xf32> to vector<32x8xf32>
    %cst_164 = arith.constant dense<0.000000e+00> : vector<16x8xf32>
    %180 = tpu.matmul %177, %179, %cst_164 {dimension_numbers = #tpu.dot_dimension_numbers<[1], [0], [0], [1], [0, 0, 1, 1], [], []>} : vector<16x32xf32>, vector<32x8xf32>, vector<16x8xf32> -> vector<16x8xf32>
    %181 = arith.addf %176, %180 : vector<16x8xf32>
    %182 = vector.extract_strided_slice %172 {offsets = [32, 0], sizes = [16, 32], strides = [1, 1]} : vector<48x32xf32> to vector<16x32xf32>
    %c2_165 = arith.constant 2 : index
    %c2_166 = arith.constant 2 : index
    %c0_167 = arith.constant 0 : index
    %c0_168 = arith.constant 0 : index
    %183 = vector.load %arg3[%c2_165, %c2_166, %c0_167, %c0_168] : memref<12x3x32x8xf32, #tpu.memory_space<vmem>>, vector<1x1x32x8xf32>
    %184 = vector.shape_cast %183 : vector<1x1x32x8xf32> to vector<32x8xf32>
    %cst_169 = arith.constant dense<0.000000e+00> : vector<16x8xf32>
    %185 = tpu.matmul %182, %184, %cst_169 {dimension_numbers = #tpu.dot_dimension_numbers<[1], [0], [0], [1], [0, 0, 1, 1], [], []>} : vector<16x32xf32>, vector<32x8xf32>, vector<16x8xf32> -> vector<16x8xf32>
    %186 = arith.addf %181, %185 : vector<16x8xf32>
    %c2_170 = arith.constant 2 : index
    %c0_171 = arith.constant 0 : index
    %c0_172 = arith.constant 0 : index
    %187 = vector.load %arg4[%c2_170, %c0_171, %c0_172] : memref<12x1x8xf32, #tpu.memory_space<vmem>>, vector<1x1x8xf32>
    %188 = vector.shape_cast %187 : vector<1x1x8xf32> to vector<1x8xf32>
    %189 = vector.broadcast %188 : vector<1x8xf32> to vector<16x8xf32>
    %190 = arith.addf %186, %189 : vector<16x8xf32>
    %191 = math.tanh %190 : vector<16x8xf32>
    %192 = arith.subf %56, %191 : vector<16x8xf32>
    %c0_173 = arith.constant 0 : index
    %c0_174 = arith.constant 0 : index
    %c0_175 = arith.constant 0 : index
    %193 = vector.load %arg8[%c0_173, %c0_174, %c0_175] : memref<2x8x16xf32, #tpu.memory_space<vmem>>, vector<1x8x16xf32>
    %194 = vector.shape_cast %193 : vector<1x8x16xf32> to vector<8x16xf32>
    %c1_176 = arith.constant 1 : index
    %c0_177 = arith.constant 0 : index
    %c0_178 = arith.constant 0 : index
    %195 = vector.load %arg8[%c1_176, %c0_177, %c0_178] : memref<2x8x16xf32, #tpu.memory_space<vmem>>, vector<1x8x16xf32>
    %196 = vector.shape_cast %195 : vector<1x8x16xf32> to vector<8x16xf32>
    %cst_179 = arith.constant dense<0.000000e+00> : vector<8x8xf32>
    %197 = tpu.matmul %194, %147, %cst_179 {dimension_numbers = #tpu.dot_dimension_numbers<[1], [0], [0], [1], [0, 0, 1, 1], [], []>} : vector<8x16xf32>, vector<16x8xf32>, vector<8x8xf32> -> vector<8x8xf32>
    %cst_180 = arith.constant dense<0.000000e+00> : vector<8x8xf32>
    %198 = tpu.matmul %196, %147, %cst_180 {dimension_numbers = #tpu.dot_dimension_numbers<[1], [0], [0], [1], [0, 0, 1, 1], [], []>} : vector<8x16xf32>, vector<16x8xf32>, vector<8x8xf32> -> vector<8x8xf32>
    %cst_181 = arith.constant dense<0.000000e+00> : vector<36x8xf32>
    %199 = tpu.matmul %3, %197, %cst_181 {dimension_numbers = #tpu.dot_dimension_numbers<[1], [0], [0], [1], [0, 0, 1, 1], [], []>} : vector<36x8xf32>, vector<8x8xf32>, vector<36x8xf32> -> vector<36x8xf32>
    %200 = vector.extract_strided_slice %199 {offsets = [0, 0], sizes = [12, 8], strides = [1, 1]} : vector<36x8xf32> to vector<12x8xf32>
    %c4 = arith.constant 4 : index
    %c0_182 = arith.constant 0 : index
    %c0_183 = arith.constant 0 : index
    %c0_184 = arith.constant 0 : index
    %201 = vector.load %arg1[%c4, %c0_182, %c0_183, %c0_184] : memref<12x3x8x32xf32, #tpu.memory_space<vmem>>, vector<1x1x8x32xf32>
    %202 = vector.shape_cast %201 : vector<1x1x8x32xf32> to vector<8x32xf32>
    %cst_185 = arith.constant dense<0.000000e+00> : vector<12x32xf32>
    %203 = tpu.matmul %200, %202, %cst_185 {dimension_numbers = #tpu.dot_dimension_numbers<[1], [0], [0], [1], [0, 0, 1, 1], [], []>} : vector<12x8xf32>, vector<8x32xf32>, vector<12x32xf32> -> vector<12x32xf32>
    %204 = vector.extract_strided_slice %199 {offsets = [12, 0], sizes = [12, 8], strides = [1, 1]} : vector<36x8xf32> to vector<12x8xf32>
    %c4_186 = arith.constant 4 : index
    %c1_187 = arith.constant 1 : index
    %c0_188 = arith.constant 0 : index
    %c0_189 = arith.constant 0 : index
    %205 = vector.load %arg1[%c4_186, %c1_187, %c0_188, %c0_189] : memref<12x3x8x32xf32, #tpu.memory_space<vmem>>, vector<1x1x8x32xf32>
    %206 = vector.shape_cast %205 : vector<1x1x8x32xf32> to vector<8x32xf32>
    %cst_190 = arith.constant dense<0.000000e+00> : vector<12x32xf32>
    %207 = tpu.matmul %204, %206, %cst_190 {dimension_numbers = #tpu.dot_dimension_numbers<[1], [0], [0], [1], [0, 0, 1, 1], [], []>} : vector<12x8xf32>, vector<8x32xf32>, vector<12x32xf32> -> vector<12x32xf32>
    %208 = arith.addf %203, %207 : vector<12x32xf32>
    %209 = vector.extract_strided_slice %199 {offsets = [24, 0], sizes = [12, 8], strides = [1, 1]} : vector<36x8xf32> to vector<12x8xf32>
    %c4_191 = arith.constant 4 : index
    %c2_192 = arith.constant 2 : index
    %c0_193 = arith.constant 0 : index
    %c0_194 = arith.constant 0 : index
    %210 = vector.load %arg1[%c4_191, %c2_192, %c0_193, %c0_194] : memref<12x3x8x32xf32, #tpu.memory_space<vmem>>, vector<1x1x8x32xf32>
    %211 = vector.shape_cast %210 : vector<1x1x8x32xf32> to vector<8x32xf32>
    %cst_195 = arith.constant dense<0.000000e+00> : vector<12x32xf32>
    %212 = tpu.matmul %209, %211, %cst_195 {dimension_numbers = #tpu.dot_dimension_numbers<[1], [0], [0], [1], [0, 0, 1, 1], [], []>} : vector<12x8xf32>, vector<8x32xf32>, vector<12x32xf32> -> vector<12x32xf32>
    %213 = arith.addf %208, %212 : vector<12x32xf32>
    %c4_196 = arith.constant 4 : index
    %c0_197 = arith.constant 0 : index
    %c0_198 = arith.constant 0 : index
    %214 = vector.load %arg2[%c4_196, %c0_197, %c0_198] : memref<12x1x32xf32, #tpu.memory_space<vmem>>, vector<1x1x32xf32>
    %215 = vector.shape_cast %214 : vector<1x1x32xf32> to vector<1x32xf32>
    %216 = vector.broadcast %215 : vector<1x32xf32> to vector<12x32xf32>
    %217 = arith.addf %213, %216 : vector<12x32xf32>
    %cst_199 = arith.constant 0.000000e+00 : f32
    %218 = vector.broadcast %cst_199 : f32 to vector<12x32xf32>
    %219 = arith.cmpf oge, %217, %218 : vector<12x32xf32>
    %cst_200 = arith.constant 0.00999999977 : f32
    %220 = vector.broadcast %cst_200 : f32 to vector<12x32xf32>
    %221 = arith.mulf %220, %217 : vector<12x32xf32>
    %222 = arith.select %219, %217, %221 : vector<12x32xi1>, vector<12x32xf32>
    %cst_201 = arith.constant dense<0.000000e+00> : vector<24x32xf32>
    %223 = tpu.matmul %4, %222, %cst_201 {dimension_numbers = #tpu.dot_dimension_numbers<[1], [0], [0], [1], [0, 0, 1, 1], [], []>} : vector<24x12xf32>, vector<12x32xf32>, vector<24x32xf32> -> vector<24x32xf32>
    %224 = vector.extract_strided_slice %223 {offsets = [0, 0], sizes = [8, 32], strides = [1, 1]} : vector<24x32xf32> to vector<8x32xf32>
    %c4_202 = arith.constant 4 : index
    %c0_203 = arith.constant 0 : index
    %c0_204 = arith.constant 0 : index
    %c0_205 = arith.constant 0 : index
    %225 = vector.load %arg3[%c4_202, %c0_203, %c0_204, %c0_205] : memref<12x3x32x8xf32, #tpu.memory_space<vmem>>, vector<1x1x32x8xf32>
    %226 = vector.shape_cast %225 : vector<1x1x32x8xf32> to vector<32x8xf32>
    %cst_206 = arith.constant dense<0.000000e+00> : vector<8x8xf32>
    %227 = tpu.matmul %224, %226, %cst_206 {dimension_numbers = #tpu.dot_dimension_numbers<[1], [0], [0], [1], [0, 0, 1, 1], [], []>} : vector<8x32xf32>, vector<32x8xf32>, vector<8x8xf32> -> vector<8x8xf32>
    %228 = vector.extract_strided_slice %223 {offsets = [8, 0], sizes = [8, 32], strides = [1, 1]} : vector<24x32xf32> to vector<8x32xf32>
    %c4_207 = arith.constant 4 : index
    %c1_208 = arith.constant 1 : index
    %c0_209 = arith.constant 0 : index
    %c0_210 = arith.constant 0 : index
    %229 = vector.load %arg3[%c4_207, %c1_208, %c0_209, %c0_210] : memref<12x3x32x8xf32, #tpu.memory_space<vmem>>, vector<1x1x32x8xf32>
    %230 = vector.shape_cast %229 : vector<1x1x32x8xf32> to vector<32x8xf32>
    %cst_211 = arith.constant dense<0.000000e+00> : vector<8x8xf32>
    %231 = tpu.matmul %228, %230, %cst_211 {dimension_numbers = #tpu.dot_dimension_numbers<[1], [0], [0], [1], [0, 0, 1, 1], [], []>} : vector<8x32xf32>, vector<32x8xf32>, vector<8x8xf32> -> vector<8x8xf32>
    %232 = arith.addf %227, %231 : vector<8x8xf32>
    %233 = vector.extract_strided_slice %223 {offsets = [16, 0], sizes = [8, 32], strides = [1, 1]} : vector<24x32xf32> to vector<8x32xf32>
    %c4_212 = arith.constant 4 : index
    %c2_213 = arith.constant 2 : index
    %c0_214 = arith.constant 0 : index
    %c0_215 = arith.constant 0 : index
    %234 = vector.load %arg3[%c4_212, %c2_213, %c0_214, %c0_215] : memref<12x3x32x8xf32, #tpu.memory_space<vmem>>, vector<1x1x32x8xf32>
    %235 = vector.shape_cast %234 : vector<1x1x32x8xf32> to vector<32x8xf32>
    %cst_216 = arith.constant dense<0.000000e+00> : vector<8x8xf32>
    %236 = tpu.matmul %233, %235, %cst_216 {dimension_numbers = #tpu.dot_dimension_numbers<[1], [0], [0], [1], [0, 0, 1, 1], [], []>} : vector<8x32xf32>, vector<32x8xf32>, vector<8x8xf32> -> vector<8x8xf32>
    %237 = arith.addf %232, %236 : vector<8x8xf32>
    %c4_217 = arith.constant 4 : index
    %c0_218 = arith.constant 0 : index
    %c0_219 = arith.constant 0 : index
    %238 = vector.load %arg4[%c4_217, %c0_218, %c0_219] : memref<12x1x8xf32, #tpu.memory_space<vmem>>, vector<1x1x8xf32>
    %239 = vector.shape_cast %238 : vector<1x1x8xf32> to vector<1x8xf32>
    %240 = vector.broadcast %239 : vector<1x8xf32> to vector<8x8xf32>
    %241 = arith.addf %237, %240 : vector<8x8xf32>
    %242 = math.tanh %241 : vector<8x8xf32>
    %243 = math.exp %242 : vector<8x8xf32>
    %244 = arith.mulf %198, %243 : vector<8x8xf32>
    %cst_220 = arith.constant dense<0.000000e+00> : vector<36x8xf32>
    %245 = tpu.matmul %3, %198, %cst_220 {dimension_numbers = #tpu.dot_dimension_numbers<[1], [0], [0], [1], [0, 0, 1, 1], [], []>} : vector<36x8xf32>, vector<8x8xf32>, vector<36x8xf32> -> vector<36x8xf32>
    %246 = vector.extract_strided_slice %245 {offsets = [0, 0], sizes = [12, 8], strides = [1, 1]} : vector<36x8xf32> to vector<12x8xf32>
    %c5 = arith.constant 5 : index
    %c0_221 = arith.constant 0 : index
    %c0_222 = arith.constant 0 : index
    %c0_223 = arith.constant 0 : index
    %247 = vector.load %arg1[%c5, %c0_221, %c0_222, %c0_223] : memref<12x3x8x32xf32, #tpu.memory_space<vmem>>, vector<1x1x8x32xf32>
    %248 = vector.shape_cast %247 : vector<1x1x8x32xf32> to vector<8x32xf32>
    %cst_224 = arith.constant dense<0.000000e+00> : vector<12x32xf32>
    %249 = tpu.matmul %246, %248, %cst_224 {dimension_numbers = #tpu.dot_dimension_numbers<[1], [0], [0], [1], [0, 0, 1, 1], [], []>} : vector<12x8xf32>, vector<8x32xf32>, vector<12x32xf32> -> vector<12x32xf32>
    %250 = vector.extract_strided_slice %245 {offsets = [12, 0], sizes = [12, 8], strides = [1, 1]} : vector<36x8xf32> to vector<12x8xf32>
    %c5_225 = arith.constant 5 : index
    %c1_226 = arith.constant 1 : index
    %c0_227 = arith.constant 0 : index
    %c0_228 = arith.constant 0 : index
    %251 = vector.load %arg1[%c5_225, %c1_226, %c0_227, %c0_228] : memref<12x3x8x32xf32, #tpu.memory_space<vmem>>, vector<1x1x8x32xf32>
    %252 = vector.shape_cast %251 : vector<1x1x8x32xf32> to vector<8x32xf32>
    %cst_229 = arith.constant dense<0.000000e+00> : vector<12x32xf32>
    %253 = tpu.matmul %250, %252, %cst_229 {dimension_numbers = #tpu.dot_dimension_numbers<[1], [0], [0], [1], [0, 0, 1, 1], [], []>} : vector<12x8xf32>, vector<8x32xf32>, vector<12x32xf32> -> vector<12x32xf32>
    %254 = arith.addf %249, %253 : vector<12x32xf32>
    %255 = vector.extract_strided_slice %245 {offsets = [24, 0], sizes = [12, 8], strides = [1, 1]} : vector<36x8xf32> to vector<12x8xf32>
    %c5_230 = arith.constant 5 : index
    %c2_231 = arith.constant 2 : index
    %c0_232 = arith.constant 0 : index
    %c0_233 = arith.constant 0 : index
    %256 = vector.load %arg1[%c5_230, %c2_231, %c0_232, %c0_233] : memref<12x3x8x32xf32, #tpu.memory_space<vmem>>, vector<1x1x8x32xf32>
    %257 = vector.shape_cast %256 : vector<1x1x8x32xf32> to vector<8x32xf32>
    %cst_234 = arith.constant dense<0.000000e+00> : vector<12x32xf32>
    %258 = tpu.matmul %255, %257, %cst_234 {dimension_numbers = #tpu.dot_dimension_numbers<[1], [0], [0], [1], [0, 0, 1, 1], [], []>} : vector<12x8xf32>, vector<8x32xf32>, vector<12x32xf32> -> vector<12x32xf32>
    %259 = arith.addf %254, %258 : vector<12x32xf32>
    %c5_235 = arith.constant 5 : index
    %c0_236 = arith.constant 0 : index
    %c0_237 = arith.constant 0 : index
    %260 = vector.load %arg2[%c5_235, %c0_236, %c0_237] : memref<12x1x32xf32, #tpu.memory_space<vmem>>, vector<1x1x32xf32>
    %261 = vector.shape_cast %260 : vector<1x1x32xf32> to vector<1x32xf32>
    %262 = vector.broadcast %261 : vector<1x32xf32> to vector<12x32xf32>
    %263 = arith.addf %259, %262 : vector<12x32xf32>
    %cst_238 = arith.constant 0.000000e+00 : f32
    %264 = vector.broadcast %cst_238 : f32 to vector<12x32xf32>
    %265 = arith.cmpf oge, %263, %264 : vector<12x32xf32>
    %cst_239 = arith.constant 0.00999999977 : f32
    %266 = vector.broadcast %cst_239 : f32 to vector<12x32xf32>
    %267 = arith.mulf %266, %263 : vector<12x32xf32>
    %268 = arith.select %265, %263, %267 : vector<12x32xi1>, vector<12x32xf32>
    %cst_240 = arith.constant dense<0.000000e+00> : vector<24x32xf32>
    %269 = tpu.matmul %4, %268, %cst_240 {dimension_numbers = #tpu.dot_dimension_numbers<[1], [0], [0], [1], [0, 0, 1, 1], [], []>} : vector<24x12xf32>, vector<12x32xf32>, vector<24x32xf32> -> vector<24x32xf32>
    %270 = vector.extract_strided_slice %269 {offsets = [0, 0], sizes = [8, 32], strides = [1, 1]} : vector<24x32xf32> to vector<8x32xf32>
    %c5_241 = arith.constant 5 : index
    %c0_242 = arith.constant 0 : index
    %c0_243 = arith.constant 0 : index
    %c0_244 = arith.constant 0 : index
    %271 = vector.load %arg3[%c5_241, %c0_242, %c0_243, %c0_244] : memref<12x3x32x8xf32, #tpu.memory_space<vmem>>, vector<1x1x32x8xf32>
    %272 = vector.shape_cast %271 : vector<1x1x32x8xf32> to vector<32x8xf32>
    %cst_245 = arith.constant dense<0.000000e+00> : vector<8x8xf32>
    %273 = tpu.matmul %270, %272, %cst_245 {dimension_numbers = #tpu.dot_dimension_numbers<[1], [0], [0], [1], [0, 0, 1, 1], [], []>} : vector<8x32xf32>, vector<32x8xf32>, vector<8x8xf32> -> vector<8x8xf32>
    %274 = vector.extract_strided_slice %269 {offsets = [8, 0], sizes = [8, 32], strides = [1, 1]} : vector<24x32xf32> to vector<8x32xf32>
    %c5_246 = arith.constant 5 : index
    %c1_247 = arith.constant 1 : index
    %c0_248 = arith.constant 0 : index
    %c0_249 = arith.constant 0 : index
    %275 = vector.load %arg3[%c5_246, %c1_247, %c0_248, %c0_249] : memref<12x3x32x8xf32, #tpu.memory_space<vmem>>, vector<1x1x32x8xf32>
    %276 = vector.shape_cast %275 : vector<1x1x32x8xf32> to vector<32x8xf32>
    %cst_250 = arith.constant dense<0.000000e+00> : vector<8x8xf32>
    %277 = tpu.matmul %274, %276, %cst_250 {dimension_numbers = #tpu.dot_dimension_numbers<[1], [0], [0], [1], [0, 0, 1, 1], [], []>} : vector<8x32xf32>, vector<32x8xf32>, vector<8x8xf32> -> vector<8x8xf32>
    %278 = arith.addf %273, %277 : vector<8x8xf32>
    %279 = vector.extract_strided_slice %269 {offsets = [16, 0], sizes = [8, 32], strides = [1, 1]} : vector<24x32xf32> to vector<8x32xf32>
    %c5_251 = arith.constant 5 : index
    %c2_252 = arith.constant 2 : index
    %c0_253 = arith.constant 0 : index
    %c0_254 = arith.constant 0 : index
    %280 = vector.load %arg3[%c5_251, %c2_252, %c0_253, %c0_254] : memref<12x3x32x8xf32, #tpu.memory_space<vmem>>, vector<1x1x32x8xf32>
    %281 = vector.shape_cast %280 : vector<1x1x32x8xf32> to vector<32x8xf32>
    %cst_255 = arith.constant dense<0.000000e+00> : vector<8x8xf32>
    %282 = tpu.matmul %279, %281, %cst_255 {dimension_numbers = #tpu.dot_dimension_numbers<[1], [0], [0], [1], [0, 0, 1, 1], [], []>} : vector<8x32xf32>, vector<32x8xf32>, vector<8x8xf32> -> vector<8x8xf32>
    %283 = arith.addf %278, %282 : vector<8x8xf32>
    %c5_256 = arith.constant 5 : index
    %c0_257 = arith.constant 0 : index
    %c0_258 = arith.constant 0 : index
    %284 = vector.load %arg4[%c5_256, %c0_257, %c0_258] : memref<12x1x8xf32, #tpu.memory_space<vmem>>, vector<1x1x8xf32>
    %285 = vector.shape_cast %284 : vector<1x1x8xf32> to vector<1x8xf32>
    %286 = vector.broadcast %285 : vector<1x8xf32> to vector<8x8xf32>
    %287 = arith.addf %283, %286 : vector<8x8xf32>
    %288 = math.tanh %287 : vector<8x8xf32>
    %289 = math.exp %288 : vector<8x8xf32>
    %290 = arith.mulf %197, %289 : vector<8x8xf32>
    %cst_259 = arith.constant dense<0.000000e+00> : vector<36x8xf32>
    %291 = tpu.matmul %3, %244, %cst_259 {dimension_numbers = #tpu.dot_dimension_numbers<[1], [0], [0], [1], [0, 0, 1, 1], [], []>} : vector<36x8xf32>, vector<8x8xf32>, vector<36x8xf32> -> vector<36x8xf32>
    %292 = vector.extract_strided_slice %291 {offsets = [0, 0], sizes = [12, 8], strides = [1, 1]} : vector<36x8xf32> to vector<12x8xf32>
    %c7 = arith.constant 7 : index
    %c0_260 = arith.constant 0 : index
    %c0_261 = arith.constant 0 : index
    %c0_262 = arith.constant 0 : index
    %293 = vector.load %arg1[%c7, %c0_260, %c0_261, %c0_262] : memref<12x3x8x32xf32, #tpu.memory_space<vmem>>, vector<1x1x8x32xf32>
    %294 = vector.shape_cast %293 : vector<1x1x8x32xf32> to vector<8x32xf32>
    %cst_263 = arith.constant dense<0.000000e+00> : vector<12x32xf32>
    %295 = tpu.matmul %292, %294, %cst_263 {dimension_numbers = #tpu.dot_dimension_numbers<[1], [0], [0], [1], [0, 0, 1, 1], [], []>} : vector<12x8xf32>, vector<8x32xf32>, vector<12x32xf32> -> vector<12x32xf32>
    %296 = vector.extract_strided_slice %291 {offsets = [12, 0], sizes = [12, 8], strides = [1, 1]} : vector<36x8xf32> to vector<12x8xf32>
    %c7_264 = arith.constant 7 : index
    %c1_265 = arith.constant 1 : index
    %c0_266 = arith.constant 0 : index
    %c0_267 = arith.constant 0 : index
    %297 = vector.load %arg1[%c7_264, %c1_265, %c0_266, %c0_267] : memref<12x3x8x32xf32, #tpu.memory_space<vmem>>, vector<1x1x8x32xf32>
    %298 = vector.shape_cast %297 : vector<1x1x8x32xf32> to vector<8x32xf32>
    %cst_268 = arith.constant dense<0.000000e+00> : vector<12x32xf32>
    %299 = tpu.matmul %296, %298, %cst_268 {dimension_numbers = #tpu.dot_dimension_numbers<[1], [0], [0], [1], [0, 0, 1, 1], [], []>} : vector<12x8xf32>, vector<8x32xf32>, vector<12x32xf32> -> vector<12x32xf32>
    %300 = arith.addf %295, %299 : vector<12x32xf32>
    %301 = vector.extract_strided_slice %291 {offsets = [24, 0], sizes = [12, 8], strides = [1, 1]} : vector<36x8xf32> to vector<12x8xf32>
    %c7_269 = arith.constant 7 : index
    %c2_270 = arith.constant 2 : index
    %c0_271 = arith.constant 0 : index
    %c0_272 = arith.constant 0 : index
    %302 = vector.load %arg1[%c7_269, %c2_270, %c0_271, %c0_272] : memref<12x3x8x32xf32, #tpu.memory_space<vmem>>, vector<1x1x8x32xf32>
    %303 = vector.shape_cast %302 : vector<1x1x8x32xf32> to vector<8x32xf32>
    %cst_273 = arith.constant dense<0.000000e+00> : vector<12x32xf32>
    %304 = tpu.matmul %301, %303, %cst_273 {dimension_numbers = #tpu.dot_dimension_numbers<[1], [0], [0], [1], [0, 0, 1, 1], [], []>} : vector<12x8xf32>, vector<8x32xf32>, vector<12x32xf32> -> vector<12x32xf32>
    %305 = arith.addf %300, %304 : vector<12x32xf32>
    %c7_274 = arith.constant 7 : index
    %c0_275 = arith.constant 0 : index
    %c0_276 = arith.constant 0 : index
    %306 = vector.load %arg2[%c7_274, %c0_275, %c0_276] : memref<12x1x32xf32, #tpu.memory_space<vmem>>, vector<1x1x32xf32>
    %307 = vector.shape_cast %306 : vector<1x1x32xf32> to vector<1x32xf32>
    %308 = vector.broadcast %307 : vector<1x32xf32> to vector<12x32xf32>
    %309 = arith.addf %305, %308 : vector<12x32xf32>
    %cst_277 = arith.constant 0.000000e+00 : f32
    %310 = vector.broadcast %cst_277 : f32 to vector<12x32xf32>
    %311 = arith.cmpf oge, %309, %310 : vector<12x32xf32>
    %cst_278 = arith.constant 0.00999999977 : f32
    %312 = vector.broadcast %cst_278 : f32 to vector<12x32xf32>
    %313 = arith.mulf %312, %309 : vector<12x32xf32>
    %314 = arith.select %311, %309, %313 : vector<12x32xi1>, vector<12x32xf32>
    %cst_279 = arith.constant dense<0.000000e+00> : vector<24x32xf32>
    %315 = tpu.matmul %4, %314, %cst_279 {dimension_numbers = #tpu.dot_dimension_numbers<[1], [0], [0], [1], [0, 0, 1, 1], [], []>} : vector<24x12xf32>, vector<12x32xf32>, vector<24x32xf32> -> vector<24x32xf32>
    %316 = vector.extract_strided_slice %315 {offsets = [0, 0], sizes = [8, 32], strides = [1, 1]} : vector<24x32xf32> to vector<8x32xf32>
    %c7_280 = arith.constant 7 : index
    %c0_281 = arith.constant 0 : index
    %c0_282 = arith.constant 0 : index
    %c0_283 = arith.constant 0 : index
    %317 = vector.load %arg3[%c7_280, %c0_281, %c0_282, %c0_283] : memref<12x3x32x8xf32, #tpu.memory_space<vmem>>, vector<1x1x32x8xf32>
    %318 = vector.shape_cast %317 : vector<1x1x32x8xf32> to vector<32x8xf32>
    %cst_284 = arith.constant dense<0.000000e+00> : vector<8x8xf32>
    %319 = tpu.matmul %316, %318, %cst_284 {dimension_numbers = #tpu.dot_dimension_numbers<[1], [0], [0], [1], [0, 0, 1, 1], [], []>} : vector<8x32xf32>, vector<32x8xf32>, vector<8x8xf32> -> vector<8x8xf32>
    %320 = vector.extract_strided_slice %315 {offsets = [8, 0], sizes = [8, 32], strides = [1, 1]} : vector<24x32xf32> to vector<8x32xf32>
    %c7_285 = arith.constant 7 : index
    %c1_286 = arith.constant 1 : index
    %c0_287 = arith.constant 0 : index
    %c0_288 = arith.constant 0 : index
    %321 = vector.load %arg3[%c7_285, %c1_286, %c0_287, %c0_288] : memref<12x3x32x8xf32, #tpu.memory_space<vmem>>, vector<1x1x32x8xf32>
    %322 = vector.shape_cast %321 : vector<1x1x32x8xf32> to vector<32x8xf32>
    %cst_289 = arith.constant dense<0.000000e+00> : vector<8x8xf32>
    %323 = tpu.matmul %320, %322, %cst_289 {dimension_numbers = #tpu.dot_dimension_numbers<[1], [0], [0], [1], [0, 0, 1, 1], [], []>} : vector<8x32xf32>, vector<32x8xf32>, vector<8x8xf32> -> vector<8x8xf32>
    %324 = arith.addf %319, %323 : vector<8x8xf32>
    %325 = vector.extract_strided_slice %315 {offsets = [16, 0], sizes = [8, 32], strides = [1, 1]} : vector<24x32xf32> to vector<8x32xf32>
    %c7_290 = arith.constant 7 : index
    %c2_291 = arith.constant 2 : index
    %c0_292 = arith.constant 0 : index
    %c0_293 = arith.constant 0 : index
    %326 = vector.load %arg3[%c7_290, %c2_291, %c0_292, %c0_293] : memref<12x3x32x8xf32, #tpu.memory_space<vmem>>, vector<1x1x32x8xf32>
    %327 = vector.shape_cast %326 : vector<1x1x32x8xf32> to vector<32x8xf32>
    %cst_294 = arith.constant dense<0.000000e+00> : vector<8x8xf32>
    %328 = tpu.matmul %325, %327, %cst_294 {dimension_numbers = #tpu.dot_dimension_numbers<[1], [0], [0], [1], [0, 0, 1, 1], [], []>} : vector<8x32xf32>, vector<32x8xf32>, vector<8x8xf32> -> vector<8x8xf32>
    %329 = arith.addf %324, %328 : vector<8x8xf32>
    %c7_295 = arith.constant 7 : index
    %c0_296 = arith.constant 0 : index
    %c0_297 = arith.constant 0 : index
    %330 = vector.load %arg4[%c7_295, %c0_296, %c0_297] : memref<12x1x8xf32, #tpu.memory_space<vmem>>, vector<1x1x8xf32>
    %331 = vector.shape_cast %330 : vector<1x1x8xf32> to vector<1x8xf32>
    %332 = vector.broadcast %331 : vector<1x8xf32> to vector<8x8xf32>
    %333 = arith.addf %329, %332 : vector<8x8xf32>
    %334 = math.tanh %333 : vector<8x8xf32>
    %335 = arith.addf %290, %334 : vector<8x8xf32>
    %cst_298 = arith.constant dense<0.000000e+00> : vector<36x8xf32>
    %336 = tpu.matmul %3, %290, %cst_298 {dimension_numbers = #tpu.dot_dimension_numbers<[1], [0], [0], [1], [0, 0, 1, 1], [], []>} : vector<36x8xf32>, vector<8x8xf32>, vector<36x8xf32> -> vector<36x8xf32>
    %337 = vector.extract_strided_slice %336 {offsets = [0, 0], sizes = [12, 8], strides = [1, 1]} : vector<36x8xf32> to vector<12x8xf32>
    %c6 = arith.constant 6 : index
    %c0_299 = arith.constant 0 : index
    %c0_300 = arith.constant 0 : index
    %c0_301 = arith.constant 0 : index
    %338 = vector.load %arg1[%c6, %c0_299, %c0_300, %c0_301] : memref<12x3x8x32xf32, #tpu.memory_space<vmem>>, vector<1x1x8x32xf32>
    %339 = vector.shape_cast %338 : vector<1x1x8x32xf32> to vector<8x32xf32>
    %cst_302 = arith.constant dense<0.000000e+00> : vector<12x32xf32>
    %340 = tpu.matmul %337, %339, %cst_302 {dimension_numbers = #tpu.dot_dimension_numbers<[1], [0], [0], [1], [0, 0, 1, 1], [], []>} : vector<12x8xf32>, vector<8x32xf32>, vector<12x32xf32> -> vector<12x32xf32>
    %341 = vector.extract_strided_slice %336 {offsets = [12, 0], sizes = [12, 8], strides = [1, 1]} : vector<36x8xf32> to vector<12x8xf32>
    %c6_303 = arith.constant 6 : index
    %c1_304 = arith.constant 1 : index
    %c0_305 = arith.constant 0 : index
    %c0_306 = arith.constant 0 : index
    %342 = vector.load %arg1[%c6_303, %c1_304, %c0_305, %c0_306] : memref<12x3x8x32xf32, #tpu.memory_space<vmem>>, vector<1x1x8x32xf32>
    %343 = vector.shape_cast %342 : vector<1x1x8x32xf32> to vector<8x32xf32>
    %cst_307 = arith.constant dense<0.000000e+00> : vector<12x32xf32>
    %344 = tpu.matmul %341, %343, %cst_307 {dimension_numbers = #tpu.dot_dimension_numbers<[1], [0], [0], [1], [0, 0, 1, 1], [], []>} : vector<12x8xf32>, vector<8x32xf32>, vector<12x32xf32> -> vector<12x32xf32>
    %345 = arith.addf %340, %344 : vector<12x32xf32>
    %346 = vector.extract_strided_slice %336 {offsets = [24, 0], sizes = [12, 8], strides = [1, 1]} : vector<36x8xf32> to vector<12x8xf32>
    %c6_308 = arith.constant 6 : index
    %c2_309 = arith.constant 2 : index
    %c0_310 = arith.constant 0 : index
    %c0_311 = arith.constant 0 : index
    %347 = vector.load %arg1[%c6_308, %c2_309, %c0_310, %c0_311] : memref<12x3x8x32xf32, #tpu.memory_space<vmem>>, vector<1x1x8x32xf32>
    %348 = vector.shape_cast %347 : vector<1x1x8x32xf32> to vector<8x32xf32>
    %cst_312 = arith.constant dense<0.000000e+00> : vector<12x32xf32>
    %349 = tpu.matmul %346, %348, %cst_312 {dimension_numbers = #tpu.dot_dimension_numbers<[1], [0], [0], [1], [0, 0, 1, 1], [], []>} : vector<12x8xf32>, vector<8x32xf32>, vector<12x32xf32> -> vector<12x32xf32>
    %350 = arith.addf %345, %349 : vector<12x32xf32>
    %c6_313 = arith.constant 6 : index
    %c0_314 = arith.constant 0 : index
    %c0_315 = arith.constant 0 : index
    %351 = vector.load %arg2[%c6_313, %c0_314, %c0_315] : memref<12x1x32xf32, #tpu.memory_space<vmem>>, vector<1x1x32xf32>
    %352 = vector.shape_cast %351 : vector<1x1x32xf32> to vector<1x32xf32>
    %353 = vector.broadcast %352 : vector<1x32xf32> to vector<12x32xf32>
    %354 = arith.addf %350, %353 : vector<12x32xf32>
    %cst_316 = arith.constant 0.000000e+00 : f32
    %355 = vector.broadcast %cst_316 : f32 to vector<12x32xf32>
    %356 = arith.cmpf oge, %354, %355 : vector<12x32xf32>
    %cst_317 = arith.constant 0.00999999977 : f32
    %357 = vector.broadcast %cst_317 : f32 to vector<12x32xf32>
    %358 = arith.mulf %357, %354 : vector<12x32xf32>
    %359 = arith.select %356, %354, %358 : vector<12x32xi1>, vector<12x32xf32>
    %cst_318 = arith.constant dense<0.000000e+00> : vector<24x32xf32>
    %360 = tpu.matmul %4, %359, %cst_318 {dimension_numbers = #tpu.dot_dimension_numbers<[1], [0], [0], [1], [0, 0, 1, 1], [], []>} : vector<24x12xf32>, vector<12x32xf32>, vector<24x32xf32> -> vector<24x32xf32>
    %361 = vector.extract_strided_slice %360 {offsets = [0, 0], sizes = [8, 32], strides = [1, 1]} : vector<24x32xf32> to vector<8x32xf32>
    %c6_319 = arith.constant 6 : index
    %c0_320 = arith.constant 0 : index
    %c0_321 = arith.constant 0 : index
    %c0_322 = arith.constant 0 : index
    %362 = vector.load %arg3[%c6_319, %c0_320, %c0_321, %c0_322] : memref<12x3x32x8xf32, #tpu.memory_space<vmem>>, vector<1x1x32x8xf32>
    %363 = vector.shape_cast %362 : vector<1x1x32x8xf32> to vector<32x8xf32>
    %cst_323 = arith.constant dense<0.000000e+00> : vector<8x8xf32>
    %364 = tpu.matmul %361, %363, %cst_323 {dimension_numbers = #tpu.dot_dimension_numbers<[1], [0], [0], [1], [0, 0, 1, 1], [], []>} : vector<8x32xf32>, vector<32x8xf32>, vector<8x8xf32> -> vector<8x8xf32>
    %365 = vector.extract_strided_slice %360 {offsets = [8, 0], sizes = [8, 32], strides = [1, 1]} : vector<24x32xf32> to vector<8x32xf32>
    %c6_324 = arith.constant 6 : index
    %c1_325 = arith.constant 1 : index
    %c0_326 = arith.constant 0 : index
    %c0_327 = arith.constant 0 : index
    %366 = vector.load %arg3[%c6_324, %c1_325, %c0_326, %c0_327] : memref<12x3x32x8xf32, #tpu.memory_space<vmem>>, vector<1x1x32x8xf32>
    %367 = vector.shape_cast %366 : vector<1x1x32x8xf32> to vector<32x8xf32>
    %cst_328 = arith.constant dense<0.000000e+00> : vector<8x8xf32>
    %368 = tpu.matmul %365, %367, %cst_328 {dimension_numbers = #tpu.dot_dimension_numbers<[1], [0], [0], [1], [0, 0, 1, 1], [], []>} : vector<8x32xf32>, vector<32x8xf32>, vector<8x8xf32> -> vector<8x8xf32>
    %369 = arith.addf %364, %368 : vector<8x8xf32>
    %370 = vector.extract_strided_slice %360 {offsets = [16, 0], sizes = [8, 32], strides = [1, 1]} : vector<24x32xf32> to vector<8x32xf32>
    %c6_329 = arith.constant 6 : index
    %c2_330 = arith.constant 2 : index
    %c0_331 = arith.constant 0 : index
    %c0_332 = arith.constant 0 : index
    %371 = vector.load %arg3[%c6_329, %c2_330, %c0_331, %c0_332] : memref<12x3x32x8xf32, #tpu.memory_space<vmem>>, vector<1x1x32x8xf32>
    %372 = vector.shape_cast %371 : vector<1x1x32x8xf32> to vector<32x8xf32>
    %cst_333 = arith.constant dense<0.000000e+00> : vector<8x8xf32>
    %373 = tpu.matmul %370, %372, %cst_333 {dimension_numbers = #tpu.dot_dimension_numbers<[1], [0], [0], [1], [0, 0, 1, 1], [], []>} : vector<8x32xf32>, vector<32x8xf32>, vector<8x8xf32> -> vector<8x8xf32>
    %374 = arith.addf %369, %373 : vector<8x8xf32>
    %c6_334 = arith.constant 6 : index
    %c0_335 = arith.constant 0 : index
    %c0_336 = arith.constant 0 : index
    %375 = vector.load %arg4[%c6_334, %c0_335, %c0_336] : memref<12x1x8xf32, #tpu.memory_space<vmem>>, vector<1x1x8xf32>
    %376 = vector.shape_cast %375 : vector<1x1x8xf32> to vector<1x8xf32>
    %377 = vector.broadcast %376 : vector<1x8xf32> to vector<8x8xf32>
    %378 = arith.addf %374, %377 : vector<8x8xf32>
    %379 = math.tanh %378 : vector<8x8xf32>
    %380 = arith.subf %244, %379 : vector<8x8xf32>
    %c0_337 = arith.constant 0 : index
    %c0_338 = arith.constant 0 : index
    %c0_339 = arith.constant 0 : index
    %381 = vector.load %arg9[%c0_337, %c0_338, %c0_339] : memref<2x16x8xf32, #tpu.memory_space<vmem>>, vector<1x16x8xf32>
    %382 = vector.shape_cast %381 : vector<1x16x8xf32> to vector<16x8xf32>
    %cst_340 = arith.constant dense<0.000000e+00> : vector<16x8xf32>
    %383 = tpu.matmul %382, %335, %cst_340 {dimension_numbers = #tpu.dot_dimension_numbers<[1], [0], [0], [1], [0, 0, 1, 1], [], []>} : vector<16x8xf32>, vector<8x8xf32>, vector<16x8xf32> -> vector<16x8xf32>
    %c1_341 = arith.constant 1 : index
    %c0_342 = arith.constant 0 : index
    %c0_343 = arith.constant 0 : index
    %384 = vector.load %arg9[%c1_341, %c0_342, %c0_343] : memref<2x16x8xf32, #tpu.memory_space<vmem>>, vector<1x16x8xf32>
    %385 = vector.shape_cast %384 : vector<1x16x8xf32> to vector<16x8xf32>
    %cst_344 = arith.constant dense<0.000000e+00> : vector<16x8xf32>
    %386 = tpu.matmul %385, %380, %cst_344 {dimension_numbers = #tpu.dot_dimension_numbers<[1], [0], [0], [1], [0, 0, 1, 1], [], []>} : vector<16x8xf32>, vector<8x8xf32>, vector<16x8xf32> -> vector<16x8xf32>
    %387 = arith.addf %383, %386 : vector<16x8xf32>
    %c0_345 = arith.constant 0 : index
    %c0_346 = arith.constant 0 : index
    %c0_347 = arith.constant 0 : index
    %388 = vector.load %arg8[%c0_345, %c0_346, %c0_347] : memref<2x8x16xf32, #tpu.memory_space<vmem>>, vector<1x8x16xf32>
    %389 = vector.shape_cast %388 : vector<1x8x16xf32> to vector<8x16xf32>
    %c1_348 = arith.constant 1 : index
    %c0_349 = arith.constant 0 : index
    %c0_350 = arith.constant 0 : index
    %390 = vector.load %arg8[%c1_348, %c0_349, %c0_350] : memref<2x8x16xf32, #tpu.memory_space<vmem>>, vector<1x8x16xf32>
    %391 = vector.shape_cast %390 : vector<1x8x16xf32> to vector<8x16xf32>
    %cst_351 = arith.constant dense<0.000000e+00> : vector<8x8xf32>
    %392 = tpu.matmul %389, %192, %cst_351 {dimension_numbers = #tpu.dot_dimension_numbers<[1], [0], [0], [1], [0, 0, 1, 1], [], []>} : vector<8x16xf32>, vector<16x8xf32>, vector<8x8xf32> -> vector<8x8xf32>
    %cst_352 = arith.constant dense<0.000000e+00> : vector<8x8xf32>
    %393 = tpu.matmul %391, %192, %cst_352 {dimension_numbers = #tpu.dot_dimension_numbers<[1], [0], [0], [1], [0, 0, 1, 1], [], []>} : vector<8x16xf32>, vector<16x8xf32>, vector<8x8xf32> -> vector<8x8xf32>
    %cst_353 = arith.constant dense<0.000000e+00> : vector<36x8xf32>
    %394 = tpu.matmul %3, %392, %cst_353 {dimension_numbers = #tpu.dot_dimension_numbers<[1], [0], [0], [1], [0, 0, 1, 1], [], []>} : vector<36x8xf32>, vector<8x8xf32>, vector<36x8xf32> -> vector<36x8xf32>
    %395 = vector.extract_strided_slice %394 {offsets = [0, 0], sizes = [12, 8], strides = [1, 1]} : vector<36x8xf32> to vector<12x8xf32>
    %c8 = arith.constant 8 : index
    %c0_354 = arith.constant 0 : index
    %c0_355 = arith.constant 0 : index
    %c0_356 = arith.constant 0 : index
    %396 = vector.load %arg1[%c8, %c0_354, %c0_355, %c0_356] : memref<12x3x8x32xf32, #tpu.memory_space<vmem>>, vector<1x1x8x32xf32>
    %397 = vector.shape_cast %396 : vector<1x1x8x32xf32> to vector<8x32xf32>
    %cst_357 = arith.constant dense<0.000000e+00> : vector<12x32xf32>
    %398 = tpu.matmul %395, %397, %cst_357 {dimension_numbers = #tpu.dot_dimension_numbers<[1], [0], [0], [1], [0, 0, 1, 1], [], []>} : vector<12x8xf32>, vector<8x32xf32>, vector<12x32xf32> -> vector<12x32xf32>
    %399 = vector.extract_strided_slice %394 {offsets = [12, 0], sizes = [12, 8], strides = [1, 1]} : vector<36x8xf32> to vector<12x8xf32>
    %c8_358 = arith.constant 8 : index
    %c1_359 = arith.constant 1 : index
    %c0_360 = arith.constant 0 : index
    %c0_361 = arith.constant 0 : index
    %400 = vector.load %arg1[%c8_358, %c1_359, %c0_360, %c0_361] : memref<12x3x8x32xf32, #tpu.memory_space<vmem>>, vector<1x1x8x32xf32>
    %401 = vector.shape_cast %400 : vector<1x1x8x32xf32> to vector<8x32xf32>
    %cst_362 = arith.constant dense<0.000000e+00> : vector<12x32xf32>
    %402 = tpu.matmul %399, %401, %cst_362 {dimension_numbers = #tpu.dot_dimension_numbers<[1], [0], [0], [1], [0, 0, 1, 1], [], []>} : vector<12x8xf32>, vector<8x32xf32>, vector<12x32xf32> -> vector<12x32xf32>
    %403 = arith.addf %398, %402 : vector<12x32xf32>
    %404 = vector.extract_strided_slice %394 {offsets = [24, 0], sizes = [12, 8], strides = [1, 1]} : vector<36x8xf32> to vector<12x8xf32>
    %c8_363 = arith.constant 8 : index
    %c2_364 = arith.constant 2 : index
    %c0_365 = arith.constant 0 : index
    %c0_366 = arith.constant 0 : index
    %405 = vector.load %arg1[%c8_363, %c2_364, %c0_365, %c0_366] : memref<12x3x8x32xf32, #tpu.memory_space<vmem>>, vector<1x1x8x32xf32>
    %406 = vector.shape_cast %405 : vector<1x1x8x32xf32> to vector<8x32xf32>
    %cst_367 = arith.constant dense<0.000000e+00> : vector<12x32xf32>
    %407 = tpu.matmul %404, %406, %cst_367 {dimension_numbers = #tpu.dot_dimension_numbers<[1], [0], [0], [1], [0, 0, 1, 1], [], []>} : vector<12x8xf32>, vector<8x32xf32>, vector<12x32xf32> -> vector<12x32xf32>
    %408 = arith.addf %403, %407 : vector<12x32xf32>
    %c8_368 = arith.constant 8 : index
    %c0_369 = arith.constant 0 : index
    %c0_370 = arith.constant 0 : index
    %409 = vector.load %arg2[%c8_368, %c0_369, %c0_370] : memref<12x1x32xf32, #tpu.memory_space<vmem>>, vector<1x1x32xf32>
    %410 = vector.shape_cast %409 : vector<1x1x32xf32> to vector<1x32xf32>
    %411 = vector.broadcast %410 : vector<1x32xf32> to vector<12x32xf32>
    %412 = arith.addf %408, %411 : vector<12x32xf32>
    %cst_371 = arith.constant 0.000000e+00 : f32
    %413 = vector.broadcast %cst_371 : f32 to vector<12x32xf32>
    %414 = arith.cmpf oge, %412, %413 : vector<12x32xf32>
    %cst_372 = arith.constant 0.00999999977 : f32
    %415 = vector.broadcast %cst_372 : f32 to vector<12x32xf32>
    %416 = arith.mulf %415, %412 : vector<12x32xf32>
    %417 = arith.select %414, %412, %416 : vector<12x32xi1>, vector<12x32xf32>
    %cst_373 = arith.constant dense<0.000000e+00> : vector<24x32xf32>
    %418 = tpu.matmul %4, %417, %cst_373 {dimension_numbers = #tpu.dot_dimension_numbers<[1], [0], [0], [1], [0, 0, 1, 1], [], []>} : vector<24x12xf32>, vector<12x32xf32>, vector<24x32xf32> -> vector<24x32xf32>
    %419 = vector.extract_strided_slice %418 {offsets = [0, 0], sizes = [8, 32], strides = [1, 1]} : vector<24x32xf32> to vector<8x32xf32>
    %c8_374 = arith.constant 8 : index
    %c0_375 = arith.constant 0 : index
    %c0_376 = arith.constant 0 : index
    %c0_377 = arith.constant 0 : index
    %420 = vector.load %arg3[%c8_374, %c0_375, %c0_376, %c0_377] : memref<12x3x32x8xf32, #tpu.memory_space<vmem>>, vector<1x1x32x8xf32>
    %421 = vector.shape_cast %420 : vector<1x1x32x8xf32> to vector<32x8xf32>
    %cst_378 = arith.constant dense<0.000000e+00> : vector<8x8xf32>
    %422 = tpu.matmul %419, %421, %cst_378 {dimension_numbers = #tpu.dot_dimension_numbers<[1], [0], [0], [1], [0, 0, 1, 1], [], []>} : vector<8x32xf32>, vector<32x8xf32>, vector<8x8xf32> -> vector<8x8xf32>
    %423 = vector.extract_strided_slice %418 {offsets = [8, 0], sizes = [8, 32], strides = [1, 1]} : vector<24x32xf32> to vector<8x32xf32>
    %c8_379 = arith.constant 8 : index
    %c1_380 = arith.constant 1 : index
    %c0_381 = arith.constant 0 : index
    %c0_382 = arith.constant 0 : index
    %424 = vector.load %arg3[%c8_379, %c1_380, %c0_381, %c0_382] : memref<12x3x32x8xf32, #tpu.memory_space<vmem>>, vector<1x1x32x8xf32>
    %425 = vector.shape_cast %424 : vector<1x1x32x8xf32> to vector<32x8xf32>
    %cst_383 = arith.constant dense<0.000000e+00> : vector<8x8xf32>
    %426 = tpu.matmul %423, %425, %cst_383 {dimension_numbers = #tpu.dot_dimension_numbers<[1], [0], [0], [1], [0, 0, 1, 1], [], []>} : vector<8x32xf32>, vector<32x8xf32>, vector<8x8xf32> -> vector<8x8xf32>
    %427 = arith.addf %422, %426 : vector<8x8xf32>
    %428 = vector.extract_strided_slice %418 {offsets = [16, 0], sizes = [8, 32], strides = [1, 1]} : vector<24x32xf32> to vector<8x32xf32>
    %c8_384 = arith.constant 8 : index
    %c2_385 = arith.constant 2 : index
    %c0_386 = arith.constant 0 : index
    %c0_387 = arith.constant 0 : index
    %429 = vector.load %arg3[%c8_384, %c2_385, %c0_386, %c0_387] : memref<12x3x32x8xf32, #tpu.memory_space<vmem>>, vector<1x1x32x8xf32>
    %430 = vector.shape_cast %429 : vector<1x1x32x8xf32> to vector<32x8xf32>
    %cst_388 = arith.constant dense<0.000000e+00> : vector<8x8xf32>
    %431 = tpu.matmul %428, %430, %cst_388 {dimension_numbers = #tpu.dot_dimension_numbers<[1], [0], [0], [1], [0, 0, 1, 1], [], []>} : vector<8x32xf32>, vector<32x8xf32>, vector<8x8xf32> -> vector<8x8xf32>
    %432 = arith.addf %427, %431 : vector<8x8xf32>
    %c8_389 = arith.constant 8 : index
    %c0_390 = arith.constant 0 : index
    %c0_391 = arith.constant 0 : index
    %433 = vector.load %arg4[%c8_389, %c0_390, %c0_391] : memref<12x1x8xf32, #tpu.memory_space<vmem>>, vector<1x1x8xf32>
    %434 = vector.shape_cast %433 : vector<1x1x8xf32> to vector<1x8xf32>
    %435 = vector.broadcast %434 : vector<1x8xf32> to vector<8x8xf32>
    %436 = arith.addf %432, %435 : vector<8x8xf32>
    %437 = math.tanh %436 : vector<8x8xf32>
    %438 = math.exp %437 : vector<8x8xf32>
    %439 = arith.mulf %393, %438 : vector<8x8xf32>
    %cst_392 = arith.constant dense<0.000000e+00> : vector<36x8xf32>
    %440 = tpu.matmul %3, %393, %cst_392 {dimension_numbers = #tpu.dot_dimension_numbers<[1], [0], [0], [1], [0, 0, 1, 1], [], []>} : vector<36x8xf32>, vector<8x8xf32>, vector<36x8xf32> -> vector<36x8xf32>
    %441 = vector.extract_strided_slice %440 {offsets = [0, 0], sizes = [12, 8], strides = [1, 1]} : vector<36x8xf32> to vector<12x8xf32>
    %c9 = arith.constant 9 : index
    %c0_393 = arith.constant 0 : index
    %c0_394 = arith.constant 0 : index
    %c0_395 = arith.constant 0 : index
    %442 = vector.load %arg1[%c9, %c0_393, %c0_394, %c0_395] : memref<12x3x8x32xf32, #tpu.memory_space<vmem>>, vector<1x1x8x32xf32>
    %443 = vector.shape_cast %442 : vector<1x1x8x32xf32> to vector<8x32xf32>
    %cst_396 = arith.constant dense<0.000000e+00> : vector<12x32xf32>
    %444 = tpu.matmul %441, %443, %cst_396 {dimension_numbers = #tpu.dot_dimension_numbers<[1], [0], [0], [1], [0, 0, 1, 1], [], []>} : vector<12x8xf32>, vector<8x32xf32>, vector<12x32xf32> -> vector<12x32xf32>
    %445 = vector.extract_strided_slice %440 {offsets = [12, 0], sizes = [12, 8], strides = [1, 1]} : vector<36x8xf32> to vector<12x8xf32>
    %c9_397 = arith.constant 9 : index
    %c1_398 = arith.constant 1 : index
    %c0_399 = arith.constant 0 : index
    %c0_400 = arith.constant 0 : index
    %446 = vector.load %arg1[%c9_397, %c1_398, %c0_399, %c0_400] : memref<12x3x8x32xf32, #tpu.memory_space<vmem>>, vector<1x1x8x32xf32>
    %447 = vector.shape_cast %446 : vector<1x1x8x32xf32> to vector<8x32xf32>
    %cst_401 = arith.constant dense<0.000000e+00> : vector<12x32xf32>
    %448 = tpu.matmul %445, %447, %cst_401 {dimension_numbers = #tpu.dot_dimension_numbers<[1], [0], [0], [1], [0, 0, 1, 1], [], []>} : vector<12x8xf32>, vector<8x32xf32>, vector<12x32xf32> -> vector<12x32xf32>
    %449 = arith.addf %444, %448 : vector<12x32xf32>
    %450 = vector.extract_strided_slice %440 {offsets = [24, 0], sizes = [12, 8], strides = [1, 1]} : vector<36x8xf32> to vector<12x8xf32>
    %c9_402 = arith.constant 9 : index
    %c2_403 = arith.constant 2 : index
    %c0_404 = arith.constant 0 : index
    %c0_405 = arith.constant 0 : index
    %451 = vector.load %arg1[%c9_402, %c2_403, %c0_404, %c0_405] : memref<12x3x8x32xf32, #tpu.memory_space<vmem>>, vector<1x1x8x32xf32>
    %452 = vector.shape_cast %451 : vector<1x1x8x32xf32> to vector<8x32xf32>
    %cst_406 = arith.constant dense<0.000000e+00> : vector<12x32xf32>
    %453 = tpu.matmul %450, %452, %cst_406 {dimension_numbers = #tpu.dot_dimension_numbers<[1], [0], [0], [1], [0, 0, 1, 1], [], []>} : vector<12x8xf32>, vector<8x32xf32>, vector<12x32xf32> -> vector<12x32xf32>
    %454 = arith.addf %449, %453 : vector<12x32xf32>
    %c9_407 = arith.constant 9 : index
    %c0_408 = arith.constant 0 : index
    %c0_409 = arith.constant 0 : index
    %455 = vector.load %arg2[%c9_407, %c0_408, %c0_409] : memref<12x1x32xf32, #tpu.memory_space<vmem>>, vector<1x1x32xf32>
    %456 = vector.shape_cast %455 : vector<1x1x32xf32> to vector<1x32xf32>
    %457 = vector.broadcast %456 : vector<1x32xf32> to vector<12x32xf32>
    %458 = arith.addf %454, %457 : vector<12x32xf32>
    %cst_410 = arith.constant 0.000000e+00 : f32
    %459 = vector.broadcast %cst_410 : f32 to vector<12x32xf32>
    %460 = arith.cmpf oge, %458, %459 : vector<12x32xf32>
    %cst_411 = arith.constant 0.00999999977 : f32
    %461 = vector.broadcast %cst_411 : f32 to vector<12x32xf32>
    %462 = arith.mulf %461, %458 : vector<12x32xf32>
    %463 = arith.select %460, %458, %462 : vector<12x32xi1>, vector<12x32xf32>
    %cst_412 = arith.constant dense<0.000000e+00> : vector<24x32xf32>
    %464 = tpu.matmul %4, %463, %cst_412 {dimension_numbers = #tpu.dot_dimension_numbers<[1], [0], [0], [1], [0, 0, 1, 1], [], []>} : vector<24x12xf32>, vector<12x32xf32>, vector<24x32xf32> -> vector<24x32xf32>
    %465 = vector.extract_strided_slice %464 {offsets = [0, 0], sizes = [8, 32], strides = [1, 1]} : vector<24x32xf32> to vector<8x32xf32>
    %c9_413 = arith.constant 9 : index
    %c0_414 = arith.constant 0 : index
    %c0_415 = arith.constant 0 : index
    %c0_416 = arith.constant 0 : index
    %466 = vector.load %arg3[%c9_413, %c0_414, %c0_415, %c0_416] : memref<12x3x32x8xf32, #tpu.memory_space<vmem>>, vector<1x1x32x8xf32>
    %467 = vector.shape_cast %466 : vector<1x1x32x8xf32> to vector<32x8xf32>
    %cst_417 = arith.constant dense<0.000000e+00> : vector<8x8xf32>
    %468 = tpu.matmul %465, %467, %cst_417 {dimension_numbers = #tpu.dot_dimension_numbers<[1], [0], [0], [1], [0, 0, 1, 1], [], []>} : vector<8x32xf32>, vector<32x8xf32>, vector<8x8xf32> -> vector<8x8xf32>
    %469 = vector.extract_strided_slice %464 {offsets = [8, 0], sizes = [8, 32], strides = [1, 1]} : vector<24x32xf32> to vector<8x32xf32>
    %c9_418 = arith.constant 9 : index
    %c1_419 = arith.constant 1 : index
    %c0_420 = arith.constant 0 : index
    %c0_421 = arith.constant 0 : index
    %470 = vector.load %arg3[%c9_418, %c1_419, %c0_420, %c0_421] : memref<12x3x32x8xf32, #tpu.memory_space<vmem>>, vector<1x1x32x8xf32>
    %471 = vector.shape_cast %470 : vector<1x1x32x8xf32> to vector<32x8xf32>
    %cst_422 = arith.constant dense<0.000000e+00> : vector<8x8xf32>
    %472 = tpu.matmul %469, %471, %cst_422 {dimension_numbers = #tpu.dot_dimension_numbers<[1], [0], [0], [1], [0, 0, 1, 1], [], []>} : vector<8x32xf32>, vector<32x8xf32>, vector<8x8xf32> -> vector<8x8xf32>
    %473 = arith.addf %468, %472 : vector<8x8xf32>
    %474 = vector.extract_strided_slice %464 {offsets = [16, 0], sizes = [8, 32], strides = [1, 1]} : vector<24x32xf32> to vector<8x32xf32>
    %c9_423 = arith.constant 9 : index
    %c2_424 = arith.constant 2 : index
    %c0_425 = arith.constant 0 : index
    %c0_426 = arith.constant 0 : index
    %475 = vector.load %arg3[%c9_423, %c2_424, %c0_425, %c0_426] : memref<12x3x32x8xf32, #tpu.memory_space<vmem>>, vector<1x1x32x8xf32>
    %476 = vector.shape_cast %475 : vector<1x1x32x8xf32> to vector<32x8xf32>
    %cst_427 = arith.constant dense<0.000000e+00> : vector<8x8xf32>
    %477 = tpu.matmul %474, %476, %cst_427 {dimension_numbers = #tpu.dot_dimension_numbers<[1], [0], [0], [1], [0, 0, 1, 1], [], []>} : vector<8x32xf32>, vector<32x8xf32>, vector<8x8xf32> -> vector<8x8xf32>
    %478 = arith.addf %473, %477 : vector<8x8xf32>
    %c9_428 = arith.constant 9 : index
    %c0_429 = arith.constant 0 : index
    %c0_430 = arith.constant 0 : index
    %479 = vector.load %arg4[%c9_428, %c0_429, %c0_430] : memref<12x1x8xf32, #tpu.memory_space<vmem>>, vector<1x1x8xf32>
    %480 = vector.shape_cast %479 : vector<1x1x8xf32> to vector<1x8xf32>
    %481 = vector.broadcast %480 : vector<1x8xf32> to vector<8x8xf32>
    %482 = arith.addf %478, %481 : vector<8x8xf32>
    %483 = math.tanh %482 : vector<8x8xf32>
    %484 = math.exp %483 : vector<8x8xf32>
    %485 = arith.mulf %392, %484 : vector<8x8xf32>
    %cst_431 = arith.constant dense<0.000000e+00> : vector<36x8xf32>
    %486 = tpu.matmul %3, %439, %cst_431 {dimension_numbers = #tpu.dot_dimension_numbers<[1], [0], [0], [1], [0, 0, 1, 1], [], []>} : vector<36x8xf32>, vector<8x8xf32>, vector<36x8xf32> -> vector<36x8xf32>
    %487 = vector.extract_strided_slice %486 {offsets = [0, 0], sizes = [12, 8], strides = [1, 1]} : vector<36x8xf32> to vector<12x8xf32>
    %c11 = arith.constant 11 : index
    %c0_432 = arith.constant 0 : index
    %c0_433 = arith.constant 0 : index
    %c0_434 = arith.constant 0 : index
    %488 = vector.load %arg1[%c11, %c0_432, %c0_433, %c0_434] : memref<12x3x8x32xf32, #tpu.memory_space<vmem>>, vector<1x1x8x32xf32>
    %489 = vector.shape_cast %488 : vector<1x1x8x32xf32> to vector<8x32xf32>
    %cst_435 = arith.constant dense<0.000000e+00> : vector<12x32xf32>
    %490 = tpu.matmul %487, %489, %cst_435 {dimension_numbers = #tpu.dot_dimension_numbers<[1], [0], [0], [1], [0, 0, 1, 1], [], []>} : vector<12x8xf32>, vector<8x32xf32>, vector<12x32xf32> -> vector<12x32xf32>
    %491 = vector.extract_strided_slice %486 {offsets = [12, 0], sizes = [12, 8], strides = [1, 1]} : vector<36x8xf32> to vector<12x8xf32>
    %c11_436 = arith.constant 11 : index
    %c1_437 = arith.constant 1 : index
    %c0_438 = arith.constant 0 : index
    %c0_439 = arith.constant 0 : index
    %492 = vector.load %arg1[%c11_436, %c1_437, %c0_438, %c0_439] : memref<12x3x8x32xf32, #tpu.memory_space<vmem>>, vector<1x1x8x32xf32>
    %493 = vector.shape_cast %492 : vector<1x1x8x32xf32> to vector<8x32xf32>
    %cst_440 = arith.constant dense<0.000000e+00> : vector<12x32xf32>
    %494 = tpu.matmul %491, %493, %cst_440 {dimension_numbers = #tpu.dot_dimension_numbers<[1], [0], [0], [1], [0, 0, 1, 1], [], []>} : vector<12x8xf32>, vector<8x32xf32>, vector<12x32xf32> -> vector<12x32xf32>
    %495 = arith.addf %490, %494 : vector<12x32xf32>
    %496 = vector.extract_strided_slice %486 {offsets = [24, 0], sizes = [12, 8], strides = [1, 1]} : vector<36x8xf32> to vector<12x8xf32>
    %c11_441 = arith.constant 11 : index
    %c2_442 = arith.constant 2 : index
    %c0_443 = arith.constant 0 : index
    %c0_444 = arith.constant 0 : index
    %497 = vector.load %arg1[%c11_441, %c2_442, %c0_443, %c0_444] : memref<12x3x8x32xf32, #tpu.memory_space<vmem>>, vector<1x1x8x32xf32>
    %498 = vector.shape_cast %497 : vector<1x1x8x32xf32> to vector<8x32xf32>
    %cst_445 = arith.constant dense<0.000000e+00> : vector<12x32xf32>
    %499 = tpu.matmul %496, %498, %cst_445 {dimension_numbers = #tpu.dot_dimension_numbers<[1], [0], [0], [1], [0, 0, 1, 1], [], []>} : vector<12x8xf32>, vector<8x32xf32>, vector<12x32xf32> -> vector<12x32xf32>
    %500 = arith.addf %495, %499 : vector<12x32xf32>
    %c11_446 = arith.constant 11 : index
    %c0_447 = arith.constant 0 : index
    %c0_448 = arith.constant 0 : index
    %501 = vector.load %arg2[%c11_446, %c0_447, %c0_448] : memref<12x1x32xf32, #tpu.memory_space<vmem>>, vector<1x1x32xf32>
    %502 = vector.shape_cast %501 : vector<1x1x32xf32> to vector<1x32xf32>
    %503 = vector.broadcast %502 : vector<1x32xf32> to vector<12x32xf32>
    %504 = arith.addf %500, %503 : vector<12x32xf32>
    %cst_449 = arith.constant 0.000000e+00 : f32
    %505 = vector.broadcast %cst_449 : f32 to vector<12x32xf32>
    %506 = arith.cmpf oge, %504, %505 : vector<12x32xf32>
    %cst_450 = arith.constant 0.00999999977 : f32
    %507 = vector.broadcast %cst_450 : f32 to vector<12x32xf32>
    %508 = arith.mulf %507, %504 : vector<12x32xf32>
    %509 = arith.select %506, %504, %508 : vector<12x32xi1>, vector<12x32xf32>
    %cst_451 = arith.constant dense<0.000000e+00> : vector<24x32xf32>
    %510 = tpu.matmul %4, %509, %cst_451 {dimension_numbers = #tpu.dot_dimension_numbers<[1], [0], [0], [1], [0, 0, 1, 1], [], []>} : vector<24x12xf32>, vector<12x32xf32>, vector<24x32xf32> -> vector<24x32xf32>
    %511 = vector.extract_strided_slice %510 {offsets = [0, 0], sizes = [8, 32], strides = [1, 1]} : vector<24x32xf32> to vector<8x32xf32>
    %c11_452 = arith.constant 11 : index
    %c0_453 = arith.constant 0 : index
    %c0_454 = arith.constant 0 : index
    %c0_455 = arith.constant 0 : index
    %512 = vector.load %arg3[%c11_452, %c0_453, %c0_454, %c0_455] : memref<12x3x32x8xf32, #tpu.memory_space<vmem>>, vector<1x1x32x8xf32>
    %513 = vector.shape_cast %512 : vector<1x1x32x8xf32> to vector<32x8xf32>
    %cst_456 = arith.constant dense<0.000000e+00> : vector<8x8xf32>
    %514 = tpu.matmul %511, %513, %cst_456 {dimension_numbers = #tpu.dot_dimension_numbers<[1], [0], [0], [1], [0, 0, 1, 1], [], []>} : vector<8x32xf32>, vector<32x8xf32>, vector<8x8xf32> -> vector<8x8xf32>
    %515 = vector.extract_strided_slice %510 {offsets = [8, 0], sizes = [8, 32], strides = [1, 1]} : vector<24x32xf32> to vector<8x32xf32>
    %c11_457 = arith.constant 11 : index
    %c1_458 = arith.constant 1 : index
    %c0_459 = arith.constant 0 : index
    %c0_460 = arith.constant 0 : index
    %516 = vector.load %arg3[%c11_457, %c1_458, %c0_459, %c0_460] : memref<12x3x32x8xf32, #tpu.memory_space<vmem>>, vector<1x1x32x8xf32>
    %517 = vector.shape_cast %516 : vector<1x1x32x8xf32> to vector<32x8xf32>
    %cst_461 = arith.constant dense<0.000000e+00> : vector<8x8xf32>
    %518 = tpu.matmul %515, %517, %cst_461 {dimension_numbers = #tpu.dot_dimension_numbers<[1], [0], [0], [1], [0, 0, 1, 1], [], []>} : vector<8x32xf32>, vector<32x8xf32>, vector<8x8xf32> -> vector<8x8xf32>
    %519 = arith.addf %514, %518 : vector<8x8xf32>
    %520 = vector.extract_strided_slice %510 {offsets = [16, 0], sizes = [8, 32], strides = [1, 1]} : vector<24x32xf32> to vector<8x32xf32>
    %c11_462 = arith.constant 11 : index
    %c2_463 = arith.constant 2 : index
    %c0_464 = arith.constant 0 : index
    %c0_465 = arith.constant 0 : index
    %521 = vector.load %arg3[%c11_462, %c2_463, %c0_464, %c0_465] : memref<12x3x32x8xf32, #tpu.memory_space<vmem>>, vector<1x1x32x8xf32>
    %522 = vector.shape_cast %521 : vector<1x1x32x8xf32> to vector<32x8xf32>
    %cst_466 = arith.constant dense<0.000000e+00> : vector<8x8xf32>
    %523 = tpu.matmul %520, %522, %cst_466 {dimension_numbers = #tpu.dot_dimension_numbers<[1], [0], [0], [1], [0, 0, 1, 1], [], []>} : vector<8x32xf32>, vector<32x8xf32>, vector<8x8xf32> -> vector<8x8xf32>
    %524 = arith.addf %519, %523 : vector<8x8xf32>
    %c11_467 = arith.constant 11 : index
    %c0_468 = arith.constant 0 : index
    %c0_469 = arith.constant 0 : index
    %525 = vector.load %arg4[%c11_467, %c0_468, %c0_469] : memref<12x1x8xf32, #tpu.memory_space<vmem>>, vector<1x1x8xf32>
    %526 = vector.shape_cast %525 : vector<1x1x8xf32> to vector<1x8xf32>
    %527 = vector.broadcast %526 : vector<1x8xf32> to vector<8x8xf32>
    %528 = arith.addf %524, %527 : vector<8x8xf32>
    %529 = math.tanh %528 : vector<8x8xf32>
    %530 = arith.addf %485, %529 : vector<8x8xf32>
    %cst_470 = arith.constant dense<0.000000e+00> : vector<36x8xf32>
    %531 = tpu.matmul %3, %485, %cst_470 {dimension_numbers = #tpu.dot_dimension_numbers<[1], [0], [0], [1], [0, 0, 1, 1], [], []>} : vector<36x8xf32>, vector<8x8xf32>, vector<36x8xf32> -> vector<36x8xf32>
    %532 = vector.extract_strided_slice %531 {offsets = [0, 0], sizes = [12, 8], strides = [1, 1]} : vector<36x8xf32> to vector<12x8xf32>
    %c10 = arith.constant 10 : index
    %c0_471 = arith.constant 0 : index
    %c0_472 = arith.constant 0 : index
    %c0_473 = arith.constant 0 : index
    %533 = vector.load %arg1[%c10, %c0_471, %c0_472, %c0_473] : memref<12x3x8x32xf32, #tpu.memory_space<vmem>>, vector<1x1x8x32xf32>
    %534 = vector.shape_cast %533 : vector<1x1x8x32xf32> to vector<8x32xf32>
    %cst_474 = arith.constant dense<0.000000e+00> : vector<12x32xf32>
    %535 = tpu.matmul %532, %534, %cst_474 {dimension_numbers = #tpu.dot_dimension_numbers<[1], [0], [0], [1], [0, 0, 1, 1], [], []>} : vector<12x8xf32>, vector<8x32xf32>, vector<12x32xf32> -> vector<12x32xf32>
    %536 = vector.extract_strided_slice %531 {offsets = [12, 0], sizes = [12, 8], strides = [1, 1]} : vector<36x8xf32> to vector<12x8xf32>
    %c10_475 = arith.constant 10 : index
    %c1_476 = arith.constant 1 : index
    %c0_477 = arith.constant 0 : index
    %c0_478 = arith.constant 0 : index
    %537 = vector.load %arg1[%c10_475, %c1_476, %c0_477, %c0_478] : memref<12x3x8x32xf32, #tpu.memory_space<vmem>>, vector<1x1x8x32xf32>
    %538 = vector.shape_cast %537 : vector<1x1x8x32xf32> to vector<8x32xf32>
    %cst_479 = arith.constant dense<0.000000e+00> : vector<12x32xf32>
    %539 = tpu.matmul %536, %538, %cst_479 {dimension_numbers = #tpu.dot_dimension_numbers<[1], [0], [0], [1], [0, 0, 1, 1], [], []>} : vector<12x8xf32>, vector<8x32xf32>, vector<12x32xf32> -> vector<12x32xf32>
    %540 = arith.addf %535, %539 : vector<12x32xf32>
    %541 = vector.extract_strided_slice %531 {offsets = [24, 0], sizes = [12, 8], strides = [1, 1]} : vector<36x8xf32> to vector<12x8xf32>
    %c10_480 = arith.constant 10 : index
    %c2_481 = arith.constant 2 : index
    %c0_482 = arith.constant 0 : index
    %c0_483 = arith.constant 0 : index
    %542 = vector.load %arg1[%c10_480, %c2_481, %c0_482, %c0_483] : memref<12x3x8x32xf32, #tpu.memory_space<vmem>>, vector<1x1x8x32xf32>
    %543 = vector.shape_cast %542 : vector<1x1x8x32xf32> to vector<8x32xf32>
    %cst_484 = arith.constant dense<0.000000e+00> : vector<12x32xf32>
    %544 = tpu.matmul %541, %543, %cst_484 {dimension_numbers = #tpu.dot_dimension_numbers<[1], [0], [0], [1], [0, 0, 1, 1], [], []>} : vector<12x8xf32>, vector<8x32xf32>, vector<12x32xf32> -> vector<12x32xf32>
    %545 = arith.addf %540, %544 : vector<12x32xf32>
    %c10_485 = arith.constant 10 : index
    %c0_486 = arith.constant 0 : index
    %c0_487 = arith.constant 0 : index
    %546 = vector.load %arg2[%c10_485, %c0_486, %c0_487] : memref<12x1x32xf32, #tpu.memory_space<vmem>>, vector<1x1x32xf32>
    %547 = vector.shape_cast %546 : vector<1x1x32xf32> to vector<1x32xf32>
    %548 = vector.broadcast %547 : vector<1x32xf32> to vector<12x32xf32>
    %549 = arith.addf %545, %548 : vector<12x32xf32>
    %cst_488 = arith.constant 0.000000e+00 : f32
    %550 = vector.broadcast %cst_488 : f32 to vector<12x32xf32>
    %551 = arith.cmpf oge, %549, %550 : vector<12x32xf32>
    %cst_489 = arith.constant 0.00999999977 : f32
    %552 = vector.broadcast %cst_489 : f32 to vector<12x32xf32>
    %553 = arith.mulf %552, %549 : vector<12x32xf32>
    %554 = arith.select %551, %549, %553 : vector<12x32xi1>, vector<12x32xf32>
    %cst_490 = arith.constant dense<0.000000e+00> : vector<24x32xf32>
    %555 = tpu.matmul %4, %554, %cst_490 {dimension_numbers = #tpu.dot_dimension_numbers<[1], [0], [0], [1], [0, 0, 1, 1], [], []>} : vector<24x12xf32>, vector<12x32xf32>, vector<24x32xf32> -> vector<24x32xf32>
    %556 = vector.extract_strided_slice %555 {offsets = [0, 0], sizes = [8, 32], strides = [1, 1]} : vector<24x32xf32> to vector<8x32xf32>
    %c10_491 = arith.constant 10 : index
    %c0_492 = arith.constant 0 : index
    %c0_493 = arith.constant 0 : index
    %c0_494 = arith.constant 0 : index
    %557 = vector.load %arg3[%c10_491, %c0_492, %c0_493, %c0_494] : memref<12x3x32x8xf32, #tpu.memory_space<vmem>>, vector<1x1x32x8xf32>
    %558 = vector.shape_cast %557 : vector<1x1x32x8xf32> to vector<32x8xf32>
    %cst_495 = arith.constant dense<0.000000e+00> : vector<8x8xf32>
    %559 = tpu.matmul %556, %558, %cst_495 {dimension_numbers = #tpu.dot_dimension_numbers<[1], [0], [0], [1], [0, 0, 1, 1], [], []>} : vector<8x32xf32>, vector<32x8xf32>, vector<8x8xf32> -> vector<8x8xf32>
    %560 = vector.extract_strided_slice %555 {offsets = [8, 0], sizes = [8, 32], strides = [1, 1]} : vector<24x32xf32> to vector<8x32xf32>
    %c10_496 = arith.constant 10 : index
    %c1_497 = arith.constant 1 : index
    %c0_498 = arith.constant 0 : index
    %c0_499 = arith.constant 0 : index
    %561 = vector.load %arg3[%c10_496, %c1_497, %c0_498, %c0_499] : memref<12x3x32x8xf32, #tpu.memory_space<vmem>>, vector<1x1x32x8xf32>
    %562 = vector.shape_cast %561 : vector<1x1x32x8xf32> to vector<32x8xf32>
    %cst_500 = arith.constant dense<0.000000e+00> : vector<8x8xf32>
    %563 = tpu.matmul %560, %562, %cst_500 {dimension_numbers = #tpu.dot_dimension_numbers<[1], [0], [0], [1], [0, 0, 1, 1], [], []>} : vector<8x32xf32>, vector<32x8xf32>, vector<8x8xf32> -> vector<8x8xf32>
    %564 = arith.addf %559, %563 : vector<8x8xf32>
    %565 = vector.extract_strided_slice %555 {offsets = [16, 0], sizes = [8, 32], strides = [1, 1]} : vector<24x32xf32> to vector<8x32xf32>
    %c10_501 = arith.constant 10 : index
    %c2_502 = arith.constant 2 : index
    %c0_503 = arith.constant 0 : index
    %c0_504 = arith.constant 0 : index
    %566 = vector.load %arg3[%c10_501, %c2_502, %c0_503, %c0_504] : memref<12x3x32x8xf32, #tpu.memory_space<vmem>>, vector<1x1x32x8xf32>
    %567 = vector.shape_cast %566 : vector<1x1x32x8xf32> to vector<32x8xf32>
    %cst_505 = arith.constant dense<0.000000e+00> : vector<8x8xf32>
    %568 = tpu.matmul %565, %567, %cst_505 {dimension_numbers = #tpu.dot_dimension_numbers<[1], [0], [0], [1], [0, 0, 1, 1], [], []>} : vector<8x32xf32>, vector<32x8xf32>, vector<8x8xf32> -> vector<8x8xf32>
    %569 = arith.addf %564, %568 : vector<8x8xf32>
    %c10_506 = arith.constant 10 : index
    %c0_507 = arith.constant 0 : index
    %c0_508 = arith.constant 0 : index
    %570 = vector.load %arg4[%c10_506, %c0_507, %c0_508] : memref<12x1x8xf32, #tpu.memory_space<vmem>>, vector<1x1x8xf32>
    %571 = vector.shape_cast %570 : vector<1x1x8xf32> to vector<1x8xf32>
    %572 = vector.broadcast %571 : vector<1x8xf32> to vector<8x8xf32>
    %573 = arith.addf %569, %572 : vector<8x8xf32>
    %574 = math.tanh %573 : vector<8x8xf32>
    %575 = arith.subf %439, %574 : vector<8x8xf32>
    %c0_509 = arith.constant 0 : index
    %c0_510 = arith.constant 0 : index
    %c0_511 = arith.constant 0 : index
    %576 = vector.load %arg9[%c0_509, %c0_510, %c0_511] : memref<2x16x8xf32, #tpu.memory_space<vmem>>, vector<1x16x8xf32>
    %577 = vector.shape_cast %576 : vector<1x16x8xf32> to vector<16x8xf32>
    %cst_512 = arith.constant dense<0.000000e+00> : vector<16x8xf32>
    %578 = tpu.matmul %577, %530, %cst_512 {dimension_numbers = #tpu.dot_dimension_numbers<[1], [0], [0], [1], [0, 0, 1, 1], [], []>} : vector<16x8xf32>, vector<8x8xf32>, vector<16x8xf32> -> vector<16x8xf32>
    %c1_513 = arith.constant 1 : index
    %c0_514 = arith.constant 0 : index
    %c0_515 = arith.constant 0 : index
    %579 = vector.load %arg9[%c1_513, %c0_514, %c0_515] : memref<2x16x8xf32, #tpu.memory_space<vmem>>, vector<1x16x8xf32>
    %580 = vector.shape_cast %579 : vector<1x16x8xf32> to vector<16x8xf32>
    %cst_516 = arith.constant dense<0.000000e+00> : vector<16x8xf32>
    %581 = tpu.matmul %580, %575, %cst_516 {dimension_numbers = #tpu.dot_dimension_numbers<[1], [0], [0], [1], [0, 0, 1, 1], [], []>} : vector<16x8xf32>, vector<8x8xf32>, vector<16x8xf32> -> vector<16x8xf32>
    %582 = arith.addf %578, %581 : vector<16x8xf32>
    %c0_517 = arith.constant 0 : index
    %c0_518 = arith.constant 0 : index
    %c0_519 = arith.constant 0 : index
    %583 = vector.load %arg7[%c0_517, %c0_518, %c0_519] : memref<2x32x16xf32, #tpu.memory_space<vmem>>, vector<1x32x16xf32>
    %584 = vector.shape_cast %583 : vector<1x32x16xf32> to vector<32x16xf32>
    %cst_520 = arith.constant dense<0.000000e+00> : vector<32x8xf32>
    %585 = tpu.matmul %584, %387, %cst_520 {dimension_numbers = #tpu.dot_dimension_numbers<[1], [0], [0], [1], [0, 0, 1, 1], [], []>} : vector<32x16xf32>, vector<16x8xf32>, vector<32x8xf32> -> vector<32x8xf32>
    %c1_521 = arith.constant 1 : index
    %c0_522 = arith.constant 0 : index
    %c0_523 = arith.constant 0 : index
    %586 = vector.load %arg7[%c1_521, %c0_522, %c0_523] : memref<2x32x16xf32, #tpu.memory_space<vmem>>, vector<1x32x16xf32>
    %587 = vector.shape_cast %586 : vector<1x32x16xf32> to vector<32x16xf32>
    %cst_524 = arith.constant dense<0.000000e+00> : vector<32x8xf32>
    %588 = tpu.matmul %587, %582, %cst_524 {dimension_numbers = #tpu.dot_dimension_numbers<[1], [0], [0], [1], [0, 0, 1, 1], [], []>} : vector<32x16xf32>, vector<16x8xf32>, vector<32x8xf32> -> vector<32x8xf32>
    %589 = arith.addf %585, %588 : vector<32x8xf32>
    %590 = arith.addf %589, %0 : vector<32x8xf32>
    %c0_525 = arith.constant 0 : index
    %c0_526 = arith.constant 0 : index
    %591 = vector.load %arg5[%c0_525, %c0_526] : memref<8x16xf32, #tpu.memory_space<vmem>>, vector<8x16xf32>
    %592 = vector.extract_strided_slice %590 {offsets = [0, 0], sizes = [16, 8], strides = [1, 1]} : vector<32x8xf32> to vector<16x8xf32>
    %cst_527 = arith.constant dense<0.000000e+00> : vector<8x8xf32>
    %593 = tpu.matmul %591, %592, %cst_527 {dimension_numbers = #tpu.dot_dimension_numbers<[1], [0], [0], [1], [0, 0, 1, 1], [], []>} : vector<8x16xf32>, vector<16x8xf32>, vector<8x8xf32> -> vector<8x8xf32>
    %c0_528 = arith.constant 0 : index
    %c0_529 = arith.constant 0 : index
    %c0_530 = arith.constant 0 : index
    %594 = vector.load %arg14[%c0_528, %c0_529, %c0_530] : memref<2x8x8xf32, #tpu.memory_space<vmem>>, vector<1x8x8xf32>
    %595 = vector.shape_cast %594 : vector<1x8x8xf32> to vector<8x8xf32>
    %596 = vector.shape_cast %593 : vector<8x8xf32> to vector<1x8x8xf32>
    tpu.vector_store %arg14[%c0_528, %c0_529, %c0_530], %596 {strides = array<i32>} : memref<2x8x8xf32, #tpu.memory_space<vmem>>, vector<1x8x8xf32>,
    %597 = vector.extract_strided_slice %590 {offsets = [16, 0], sizes = [16, 8], strides = [1, 1]} : vector<32x8xf32> to vector<16x8xf32>
    %cst_531 = arith.constant dense<0.000000e+00> : vector<8x8xf32>
    %598 = tpu.matmul %591, %597, %cst_531 {dimension_numbers = #tpu.dot_dimension_numbers<[1], [0], [0], [1], [0, 0, 1, 1], [], []>} : vector<8x16xf32>, vector<16x8xf32>, vector<8x8xf32> -> vector<8x8xf32>
    %c1_532 = arith.constant 1 : index
    %c0_533 = arith.constant 0 : index
    %c0_534 = arith.constant 0 : index
    %599 = vector.load %arg14[%c1_532, %c0_533, %c0_534] : memref<2x8x8xf32, #tpu.memory_space<vmem>>, vector<1x8x8xf32>
    %600 = vector.shape_cast %599 : vector<1x8x8xf32> to vector<8x8xf32>
    %601 = vector.shape_cast %598 : vector<8x8xf32> to vector<1x8x8xf32>
    tpu.vector_store %arg14[%c1_532, %c0_533, %c0_534], %601 {strides = array<i32>} : memref<2x8x8xf32, #tpu.memory_space<vmem>>, vector<1x8x8xf32>,
    return
  }
}

</mosaic_0001>

<llo_original>
// kernel: model_forward.1
$region0: #{model_forward.1}
  #allocation0 [shape = 'u32[]', space=smem, size = 0x4, offset = 0x4, fixed_abs, tag = 'smem constant byte address 0x4 - core index']
  #allocation1 [shape = 'u32[144,128]{1,0:T(1,128)}', space=vmem, size = 0x12000, scoped, tag = 'internal scratch']
  %s0 = inlined_call_operand.vmem [shape: f32[32,8], index: 0, kind: input, shape index: {}]
  %s1 = inlined_call_operand.hbm [shape: f32[12,3,8,32], index: 1, kind: input, shape index: {}]
  %s2 = inlined_call_operand.hbm [shape: f32[12,1,32], index: 2, kind: input, shape index: {}]
  %s3 = inlined_call_operand.hbm [shape: f32[12,3,32,8], index: 3, kind: input, shape index: {}]
  %s4 = inlined_call_operand.hbm [shape: f32[12,1,8], index: 4, kind: input, shape index: {}]
  %s5 = inlined_call_operand.hbm [shape: f32[8,16], index: 5, kind: input, shape index: {}]
  %s6 = inlined_call_operand.hbm [shape: f32[2,16,32], index: 6, kind: input, shape index: {}]
  %s7 = inlined_call_operand.hbm [shape: f32[2,32,16], index: 7, kind: input, shape index: {}]
  %s8 = inlined_call_operand.hbm [shape: f32[2,8,16], index: 8, kind: input, shape index: {}]
  %s9 = inlined_call_operand.hbm [shape: f32[2,16,8], index: 9, kind: input, shape index: {}]
  %s10 = inlined_call_operand.vmem [shape: f32[60,16], index: 10, kind: input, shape index: {}]
  %s11 = inlined_call_operand.hbm [shape: f32[48,20], index: 11, kind: input, shape index: {}]
  %s12 = inlined_call_operand.hbm [shape: f32[36,8], index: 12, kind: input, shape index: {}]
  %s13 = inlined_call_operand.vmem [shape: f32[24,12], index: 13, kind: input, shape index: {}]
  %s14 = inlined_call_operand.hbm [shape: f32[2,8,8], index: 14, kind: output, shape index: {}]
  %s15 = sld [smem:[#allocation0]]
  $region110: #{model_forward.1} parent=0
    _
  %s17 = ssub.s32 1, %s15
  %s18 = scalar_select 0, %s17, %s15
  $region1: #{model_forward.1} parent=0
    #allocation2 [shape = 'u8[147456]{0}', space=vmem, size = 0x24000, scoped, tag = 'input window, operand 1, single buffered']
    #allocation3 [shape = 's32[1]{0}', space=sflag, size = 0x4, scoped, tag = 'scoped memory for model_forward.1']
    #allocation4 [shape = 's32[1]{0}', space=sflag, size = 0x4, scoped, tag = 'scoped memory for model_forward.1']
    #allocation5 [shape = 'u8[6144]{0}', space=vmem, size = 0x1800, scoped, tag = 'input window, operand 2, single buffered']
    #allocation6 [shape = 's32[1]{0}', space=sflag, size = 0x4, scoped, tag = 'scoped memory for model_forward.1']
    #allocation7 [shape = 'u8[589824]{0}', space=vmem, size = 0x90000, scoped, tag = 'input window, operand 3, single buffered']
    #allocation8 [shape = 'u8[6144]{0}', space=vmem, size = 0x1800, scoped, tag = 'input window, operand 4, single buffered']
    #allocation9 [shape = 's32[1]{0}', space=sflag, size = 0x4, scoped, tag = 'scoped memory for model_forward.1']
    #allocation10 [shape = 'u8[4096]{0}', space=vmem, size = 0x1000, scoped, tag = 'input window, operand 5, single buffered']
    #allocation11 [shape = 'u8[16384]{0}', space=vmem, size = 0x4000, scoped, tag = 'input window, operand 6, single buffered']
    #allocation12 [shape = 's32[1]{0}', space=sflag, size = 0x4, scoped, tag = 'scoped memory for model_forward.1']
    #allocation13 [shape = 'u8[32768]{0}', space=vmem, size = 0x8000, scoped, tag = 'input window, operand 7, single buffered']
    #allocation14 [shape = 'u8[8192]{0}', space=vmem, size = 0x2000, scoped, tag = 'input window, operand 8, single buffered']
    #allocation15 [shape = 's32[1]{0}', space=sflag, size = 0x4, scoped, tag = 'scoped memory for model_forward.1']
    #allocation16 [shape = 'u8[16384]{0}', space=vmem, size = 0x4000, scoped, tag = 'input window, operand 9, single buffered']
    #allocation17 [shape = 'u8[24576]{0}', space=vmem, size = 0x6000, scoped, tag = 'input window, operand 11, single buffered']
    #allocation18 [shape = 's32[1]{0}', space=sflag, size = 0x4, scoped, tag = 'scoped memory for model_forward.1']
    #allocation19 [shape = 'u8[20480]{0}', space=vmem, size = 0x5000, scoped, tag = 'input window, operand 12, single buffered']
    #allocation20 [shape = 'u8[8192]{0}', space=vmem, size = 0x2000, scoped, tag = 'output window, operand 0, single buffered']
    %19 = vsyncpa [#allocation3], 0
    %20 = vsyncpa [#allocation6], 0
    %21 = vsyncpa [#allocation9], 0
    %22 = vsyncpa [#allocation12], 0
    %23 = vsyncpa [#allocation15], 0
    %24 = vsyncpa [#allocation18], 0
    %25 = vsyncpa [#allocation4], 0
    // Predicated region
    $region2: #{model_forward.1} parent=1 // pred_check
      _
    $region3: #{model_forward.1} parent=1 // pred_check_branch
      %27 = sbr.rel (0) target = $region5
    $region4: #{model_forward.1} parent=1 // pred_region
      _
    $region5: #{model_forward.1} parent=1 // pred_fallthru
      _
    // Predicated region
    $region6: #{model_forward.1} parent=1 // pred_check
      _
    $region7: #{model_forward.1} parent=1 // pred_check_branch
      %29 = sbr.rel (0) target = $region9
    $region8: #{model_forward.1} parent=1 // pred_region
      %s31 = ssub.s32 4608, 4608
      %32 = vsyncadd [#allocation3], %s31
      %s33 = sshll.u32 [#allocation2], 4
      %s34 = int_to_ptr.vmem [resolvable:$true] %s33
      %39 = dma.hbm_to_vmem [thread:$0]  %s1, 4608, %s34, [#allocation3], 128, 128, 8
    $region9: #{model_forward.1} parent=1 // pred_fallthru
      _
    // Predicated region
    $region10: #{model_forward.1} parent=1 // pred_check
      _
    $region11: #{model_forward.1} parent=1 // pred_check_branch
      %41 = sbr.rel (0) target = $region13
    $region12: #{model_forward.1} parent=1 // pred_region
      %s43 = ssub.s32 192, 192
      %44 = vsyncadd [#allocation6], %s43
      %s45 = sshll.u32 [#allocation5], 4
      %s46 = int_to_ptr.vmem [resolvable:$true] %s45
      %51 = dma.hbm_to_vmem [thread:$0]  %s2, 192, %s46, [#allocation6], 16, 16, 1
    $region13: #{model_forward.1} parent=1 // pred_fallthru
      _
    // Predicated region
    $region14: #{model_forward.1} parent=1 // pred_check
      _
    $region15: #{model_forward.1} parent=1 // pred_check_branch
      %53 = sbr.rel (0) target = $region17
    $region16: #{model_forward.1} parent=1 // pred_region
      %s55 = ssub.s32 18432, 18432
      %56 = vsyncadd [#allocation6], %s55
      %s57 = sshll.u32 [#allocation7], 4
      %s58 = int_to_ptr.vmem [resolvable:$true] %s57
      %63 = dma.hbm_to_vmem [thread:$0]  %s3, 18432, %s58, [#allocation6], 128, 128, 8
    $region17: #{model_forward.1} parent=1 // pred_fallthru
      _
    // Predicated region
    $region18: #{model_forward.1} parent=1 // pred_check
      _
    $region19: #{model_forward.1} parent=1 // pred_check_branch
      %65 = sbr.rel (0) target = $region21
    $region20: #{model_forward.1} parent=1 // pred_region
      %s67 = ssub.s32 192, 192
      %68 = vsyncadd [#allocation9], %s67
      %s69 = sshll.u32 [#allocation8], 4
      %s70 = int_to_ptr.vmem [resolvable:$true] %s69
      %75 = dma.hbm_to_vmem [thread:$0]  %s4, 192, %s70, [#allocation9], 16, 16, 1
    $region21: #{model_forward.1} parent=1 // pred_fallthru
      _
    // Predicated region
    $region22: #{model_forward.1} parent=1 // pred_check
      _
    $region23: #{model_forward.1} parent=1 // pred_check_branch
      %77 = sbr.rel (0) target = $region25
    $region24: #{model_forward.1} parent=1 // pred_region
      %s79 = ssub.s32 128, 128
      %80 = vsyncadd [#allocation9], %s79
      %s82 = sshll.u32 [#allocation10], 4
      %s83 = int_to_ptr.vmem [resolvable:$true] %s82
      %85 = dma.hbm_to_vmem [thread:$0]  %s5, 128, %s83, [#allocation9]
    $region25: #{model_forward.1} parent=1 // pred_fallthru
      _
    // Predicated region
    $region26: #{model_forward.1} parent=1 // pred_check
      _
    $region27: #{model_forward.1} parent=1 // pred_check_branch
      %87 = sbr.rel (0) target = $region29
    $region28: #{model_forward.1} parent=1 // pred_region
      %s89 = ssub.s32 512, 512
      %90 = vsyncadd [#allocation12], %s89
      %s91 = sshll.u32 [#allocation11], 4
      %s92 = int_to_ptr.vmem [resolvable:$true] %s91
      %97 = dma.hbm_to_vmem [thread:$0]  %s6, 512, %s92, [#allocation12], 128, 128, 8
    $region29: #{model_forward.1} parent=1 // pred_fallthru
      _
    // Predicated region
    $region30: #{model_forward.1} parent=1 // pred_check
      _
    $region31: #{model_forward.1} parent=1 // pred_check_branch
      %99 = sbr.rel (0) target = $region33
    $region32: #{model_forward.1} parent=1 // pred_region
      %s101 = ssub.s32 1024, 1024
      %102 = vsyncadd [#allocation12], %s101
      %s103 = sshll.u32 [#allocation13], 4
      %s104 = int_to_ptr.vmem [resolvable:$true] %s103
      %109 = dma.hbm_to_vmem [thread:$0]  %s7, 1024, %s104, [#allocation12], 128, 128, 8
    $region33: #{model_forward.1} parent=1 // pred_fallthru
      _
    // Predicated region
    $region34: #{model_forward.1} parent=1 // pred_check
      _
    $region35: #{model_forward.1} parent=1 // pred_check_branch
      %111 = sbr.rel (0) target = $region37
    $region36: #{model_forward.1} parent=1 // pred_region
      %s113 = ssub.s32 256, 256
      %114 = vsyncadd [#allocation15], %s113
      %s115 = sshll.u32 [#allocation14], 4
      %s116 = int_to_ptr.vmem [resolvable:$true] %s115
      %121 = dma.hbm_to_vmem [thread:$0]  %s8, 256, %s116, [#allocation15], 128, 128, 8
    $region37: #{model_forward.1} parent=1 // pred_fallthru
      _
    // Predicated region
    $region38: #{model_forward.1} parent=1 // pred_check
      _
    $region39: #{model_forward.1} parent=1 // pred_check_branch
      %123 = sbr.rel (0) target = $region41
    $region40: #{model_forward.1} parent=1 // pred_region
      %s125 = ssub.s32 512, 512
      %126 = vsyncadd [#allocation15], %s125
      %s127 = sshll.u32 [#allocation16], 4
      %s128 = int_to_ptr.vmem [resolvable:$true] %s127
      %133 = dma.hbm_to_vmem [thread:$0]  %s9, 512, %s128, [#allocation15], 128, 128, 8
    $region41: #{model_forward.1} parent=1 // pred_fallthru
      _
    // Predicated region
    $region42: #{model_forward.1} parent=1 // pred_check
      _
    $region43: #{model_forward.1} parent=1 // pred_check_branch
      %135 = sbr.rel (0) target = $region45
    $region44: #{model_forward.1} parent=1 // pred_region
      _
    $region45: #{model_forward.1} parent=1 // pred_fallthru
      _
    // Predicated region
    $region46: #{model_forward.1} parent=1 // pred_check
      _
    $region47: #{model_forward.1} parent=1 // pred_check_branch
      %137 = sbr.rel (0) target = $region49
    $region48: #{model_forward.1} parent=1 // pred_region
      %s139 = ssub.s32 768, 768
      %140 = vsyncadd [#allocation18], %s139
      %s141 = sshll.u32 [#allocation17], 4
      %s142 = int_to_ptr.vmem [resolvable:$true] %s141
      %147 = dma.hbm_to_vmem [thread:$0]  %s11, 768, %s142, [#allocation18], 128, 128, 8
    $region49: #{model_forward.1} parent=1 // pred_fallthru
      _
    // Predicated region
    $region50: #{model_forward.1} parent=1 // pred_check
      _
    $region51: #{model_forward.1} parent=1 // pred_check_branch
      %149 = sbr.rel (0) target = $region53
    $region52: #{model_forward.1} parent=1 // pred_region
      %s151 = ssub.s32 640, 640
      %152 = vsyncadd [#allocation18], %s151
      %s153 = sshll.u32 [#allocation19], 4
      %s154 = int_to_ptr.vmem [resolvable:$true] %s153
      %159 = dma.hbm_to_vmem [thread:$0]  %s12, 640, %s154, [#allocation18], 128, 128, 8
    $region53: #{model_forward.1} parent=1 // pred_fallthru
      _
    // Predicated region
    $region54: #{model_forward.1} parent=1 // pred_check
      _
    $region55: #{model_forward.1} parent=1 // pred_check_branch
      %161 = sbr.rel (0) target = $region57
    $region56: #{model_forward.1} parent=1 // pred_region
      _
    $region57: #{model_forward.1} parent=1 // pred_fallthru
      _
    // Predicated region
    $region58: #{model_forward.1} parent=1 // pred_check
      _
    $region59: #{model_forward.1} parent=1 // pred_check_branch
      %163 = sbr.rel (0) target = $region61
    $region60: #{model_forward.1} parent=1 // pred_region
      %164 = dma.done [#allocation3], 4608
    $region61: #{model_forward.1} parent=1 // pred_fallthru
      _
    // Predicated region
    $region62: #{model_forward.1} parent=1 // pred_check
      _
    $region63: #{model_forward.1} parent=1 // pred_check_branch
      %166 = sbr.rel (0) target = $region65
    $region64: #{model_forward.1} parent=1 // pred_region
      %167 = dma.done [#allocation6], 192
    $region65: #{model_forward.1} parent=1 // pred_fallthru
      _
    // Predicated region
    $region66: #{model_forward.1} parent=1 // pred_check
      _
    $region67: #{model_forward.1} parent=1 // pred_check_branch
      %169 = sbr.rel (0) target = $region69
    $region68: #{model_forward.1} parent=1 // pred_region
      %170 = dma.done [#allocation6], 18432
    $region69: #{model_forward.1} parent=1 // pred_fallthru
      _
    // Predicated region
    $region70: #{model_forward.1} parent=1 // pred_check
      _
    $region71: #{model_forward.1} parent=1 // pred_check_branch
      %172 = sbr.rel (0) target = $region73
    $region72: #{model_forward.1} parent=1 // pred_region
      %173 = dma.done [#allocation9], 192
    $region73: #{model_forward.1} parent=1 // pred_fallthru
      _
    // Predicated region
    $region74: #{model_forward.1} parent=1 // pred_check
      _
    $region75: #{model_forward.1} parent=1 // pred_check_branch
      %175 = sbr.rel (0) target = $region77
    $region76: #{model_forward.1} parent=1 // pred_region
      %176 = dma.done [#allocation9], 128
    $region77: #{model_forward.1} parent=1 // pred_fallthru
      _
    // Predicated region
    $region78: #{model_forward.1} parent=1 // pred_check
      _
    $region79: #{model_forward.1} parent=1 // pred_check_branch
      %178 = sbr.rel (0) target = $region81
    $region80: #{model_forward.1} parent=1 // pred_region
      %179 = dma.done [#allocation12], 512
    $region81: #{model_forward.1} parent=1 // pred_fallthru
      _
    // Predicated region
    $region82: #{model_forward.1} parent=1 // pred_check
      _
    $region83: #{model_forward.1} parent=1 // pred_check_branch
      %181 = sbr.rel (0) target = $region85
    $region84: #{model_forward.1} parent=1 // pred_region
      %182 = dma.done [#allocation12], 1024
    $region85: #{model_forward.1} parent=1 // pred_fallthru
      _
    // Predicated region
    $region86: #{model_forward.1} parent=1 // pred_check
      _
    $region87: #{model_forward.1} parent=1 // pred_check_branch
      %184 = sbr.rel (0) target = $region89
    $region88: #{model_forward.1} parent=1 // pred_region
      %185 = dma.done [#allocation15], 256
    $region89: #{model_forward.1} parent=1 // pred_fallthru
      _
    // Predicated region
    $region90: #{model_forward.1} parent=1 // pred_check
      _
    $region91: #{model_forward.1} parent=1 // pred_check_branch
      %187 = sbr.rel (0) target = $region93
    $region92: #{model_forward.1} parent=1 // pred_region
      %188 = dma.done [#allocation15], 512
    $region93: #{model_forward.1} parent=1 // pred_fallthru
      _
    // Predicated region
    $region94: #{model_forward.1} parent=1 // pred_check
      _
    $region95: #{model_forward.1} parent=1 // pred_check_branch
      %190 = sbr.rel (0) target = $region97
    $region96: #{model_forward.1} parent=1 // pred_region
      %191 = dma.done [#allocation18], 768
    $region97: #{model_forward.1} parent=1 // pred_fallthru
      _
    // Predicated region
    $region98: #{model_forward.1} parent=1 // pred_check
      _
    $region99: #{model_forward.1} parent=1 // pred_check_branch
      %193 = sbr.rel (0) target = $region101
    $region100: #{model_forward.1} parent=1 // pred_region
      %194 = dma.done [#allocation18], 640
    $region101: #{model_forward.1} parent=1 // pred_fallthru
      _
    %v195 = vld [vmem:[%s0] sm:$0xff]
    %v196 = vld [vmem:[%s0 + $0x8] sm:$0xff]
    %v197 = vld [vmem:[%s0 + $0x10] sm:$0xff]
    %v198 = vld [vmem:[%s0 + $0x18] sm:$0xff]
    %v199 = vld [vmem:[%s10] sm:$0xff]
    %v200 = vld [vmem:[%s10 + $0x8] sm:$0xff]
    %v201 = vld [vmem:[%s10 + $0x10] sm:$0xff]
    %v202 = vld [vmem:[%s10 + $0x18] sm:$0xff]
    %v203 = vld [vmem:[%s10 + $0x20] sm:$0xff]
    %v204 = vld [vmem:[%s10 + $0x28] sm:$0xff]
    %v205 = vld [vmem:[%s10 + $0x30] sm:$0xff]
    %v206 = vld [vmem:[%s10 + $0x38] sm:$0xf]
    %v207 = vld [vmem:[#allocation17] sm:$0xff]
    %v208 = vld [vmem:[#allocation17 + $0x8] sm:$0xff]
    %v209 = vld [vmem:[#allocation17 + $0x10] sm:$0xff]
    %v210 = vld [vmem:[#allocation17 + $0x18] sm:$0xff]
    %v211 = vld [vmem:[#allocation17 + $0x20] sm:$0xff]
    %v212 = vld [vmem:[#allocation17 + $0x28] sm:$0xff]
    %v213 = vld [vmem:[#allocation19] sm:$0xff]
    %v214 = vld [vmem:[#allocation19 + $0x8] sm:$0xff]
    %v215 = vld [vmem:[#allocation19 + $0x10] sm:$0xff]
    %v216 = vld [vmem:[#allocation19 + $0x18] sm:$0xff]
    %v217 = vld [vmem:[#allocation19 + $0x20] sm:$0xf]
    %v218 = vld [vmem:[%s13] sm:$0xff]
    %v219 = vld [vmem:[%s13 + $0x8] sm:$0xff]
    %v220 = vld [vmem:[%s13 + $0x10] sm:$0xff]
    %v221 = vld [vmem:[#allocation11] sm:$0xff]
    %v222 = vld [vmem:[#allocation11 + $0x8] sm:$0xff]
    %s223 = scalar_lea.vmem [#allocation11], 16
    %v224 = vld [vmem:[%s223] sm:$0xff]
    %v225 = vld [vmem:[%s223 + $0x8] sm:$0xff]
    %vm226 = vcmask 261120
    %v228 = vsel %vm226, %v221, 0
    %v231 = vsel %vm226, %v222, 0
    %233 = vmatprep.subr.mxu0 0.0
    %234 = vmatpush1.msra.mxu0 %v195
    %235 = vmatprep.subr.mxu0 0.0
    %236 = vmatpush1.msra.mxu0 %v196
    %237 = vmatprep.subr.mxu0 0.0
    %238 = vmatpush1.msra.mxu0 %v197
    %239 = vmatprep.subr.mxu0 0.0
    %240 = vmatpush1.msra.mxu0 %v198
    %241 = vmatprep.subr.mxu0 0.0
    %242 = vmatpush1.msra.mxu0 0.0
    %243 = vmatprep.subr.mxu0 0.0
    %244 = vmatpush1.msra.mxu0 0.0
    %245 = vmatprep.subr.mxu0 0.0
    %246 = vmatpush1.msra.mxu0 0.0
    %247 = vmatprep.subr.mxu0 0.0
    %248 = vmatpush1.msra.mxu0 0.0
    %249 = vmatprep.subr.mxu0 0.0
    %250 = vmatpush1.msra.mxu0 0.0
    %251 = vmatprep.subr.mxu0 0.0
    %252 = vmatpush1.msra.mxu0 0.0
    %253 = vmatprep.subr.mxu0 0.0
    %254 = vmatpush1.msra.mxu0 0.0
    %255 = vmatprep.subr.mxu0 0.0
    %256 = vmatpush1.msra.mxu0 0.0
    %257 = vmatprep.subr.mxu0 0.0
    %258 = vmatpush1.msra.mxu0 0.0
    %259 = vmatprep.subr.mxu0 0.0
    %260 = vmatpush1.msra.mxu0 0.0
    %261 = vmatprep.subr.mxu0 0.0
    %262 = vmatpush1.msra.mxu0 0.0
    %263 = vmatprep.subr.mxu0 0.0
    %264 = vmatpush1.msra.mxu0 0.0
    %265 = vmatprep.subr.mxu0 0.0
    %266 = vmatpush1.msra.mxu0 0.0
    %267 = vmatprep.subr.mxu0 0.0
    %268 = vmatpush1.msra.mxu0 0.0
    %269 = vmatprep.subr.mxu0 0.0
    %270 = vmatpush1.msra.mxu0 0.0
    %271 = vmatprep.subr.mxu0 0.0
    %272 = vmatpush1.msra.mxu0 0.0
    %273 = vmatprep.subr.mxu0 0.0
    %274 = vmatpush1.msra.mxu0 0.0
    %275 = vmatprep.subr.mxu0 0.0
    %276 = vmatpush1.msra.mxu0 0.0
    %277 = vmatprep.subr.mxu0 0.0
    %278 = vmatpush1.msra.mxu0 0.0
    %279 = vmatprep.subr.mxu0 0.0
    %280 = vmatpush1.msra.mxu0 0.0
    %281 = vmatprep.subr.mxu0 0.0
    %282 = vmatpush1.msra.mxu0 0.0
    %283 = vmatprep.subr.mxu0 0.0
    %284 = vmatpush1.msra.mxu0 0.0
    %285 = vmatprep.subr.mxu0 0.0
    %286 = vmatpush1.msra.mxu0 0.0
    %287 = vmatprep.subr.mxu0 0.0
    %288 = vmatpush1.msra.mxu0 0.0
    %289 = vmatprep.subr.mxu0 0.0
    %290 = vmatpush1.msra.mxu0 0.0
    %291 = vmatprep.subr.mxu0 0.0
    %292 = vmatpush1.msra.mxu0 0.0
    %293 = vmatprep.subr.mxu0 0.0
    %294 = vmatpush1.msra.mxu0 0.0
    %295 = vmatprep.subr.mxu0 0.0
    %296 = vmatpush1.msra.mxu0 0.0
    %297 = vmatprep.mubr.f32.mxu0 0.0
    %298 = vmatmul.mubr.f32.gmra.mrb[0].mxu0 %v228
    %v299 = vpop.f32.mrb[0].mxu0
    %v300 = vadd.f32 0.0, %v299
    %v301 = vpop.f32.mrb[0].mxu0
    %302 = vmatprep.mubr.f32.mxu0 0.0
    %303 = vmatmul.mubr.f32.gmra.mrb[0].mxu0 %v231
    %v304 = vpop.f32.mrb[0].mxu0
    %v305 = vadd.f32 0.0, %v304
    %v306 = vpop.f32.mrb[0].mxu0
    %307 = vdwg.mxu0
    %v309 = vsel %vm226, %v224, 0
    %v312 = vsel %vm226, %v225, 0
    %314 = vmatprep.subr.mxu0 0.0
    %315 = vmatpush1.msra.mxu0 %v195
    %316 = vmatprep.subr.mxu0 0.0
    %317 = vmatpush1.msra.mxu0 %v196
    %318 = vmatprep.subr.mxu0 0.0
    %319 = vmatpush1.msra.mxu0 %v197
    %320 = vmatprep.subr.mxu0 0.0
    %321 = vmatpush1.msra.mxu0 %v198
    %322 = vmatprep.subr.mxu0 0.0
    %323 = vmatpush1.msra.mxu0 0.0
    %324 = vmatprep.subr.mxu0 0.0
    %325 = vmatpush1.msra.mxu0 0.0
    %326 = vmatprep.subr.mxu0 0.0
    %327 = vmatpush1.msra.mxu0 0.0
    %328 = vmatprep.subr.mxu0 0.0
    %329 = vmatpush1.msra.mxu0 0.0
    %330 = vmatprep.subr.mxu0 0.0
    %331 = vmatpush1.msra.mxu0 0.0
    %332 = vmatprep.subr.mxu0 0.0
    %333 = vmatpush1.msra.mxu0 0.0
    %334 = vmatprep.subr.mxu0 0.0
    %335 = vmatpush1.msra.mxu0 0.0
    %336 = vmatprep.subr.mxu0 0.0
    %337 = vmatpush1.msra.mxu0 0.0
    %338 = vmatprep.subr.mxu0 0.0
    %339 = vmatpush1.msra.mxu0 0.0
    %340 = vmatprep.subr.mxu0 0.0
    %341 = vmatpush1.msra.mxu0 0.0
    %342 = vmatprep.subr.mxu0 0.0
    %343 = vmatpush1.msra.mxu0 0.0
    %344 = vmatprep.subr.mxu0 0.0
    %345 = vmatpush1.msra.mxu0 0.0
    %346 = vmatprep.subr.mxu0 0.0
    %347 = vmatpush1.msra.mxu0 0.0
    %348 = vmatprep.subr.mxu0 0.0
    %349 = vmatpush1.msra.mxu0 0.0
    %350 = vmatprep.subr.mxu0 0.0
    %351 = vmatpush1.msra.mxu0 0.0
    %352 = vmatprep.subr.mxu0 0.0
    %353 = vmatpush1.msra.mxu0 0.0
    %354 = vmatprep.subr.mxu0 0.0
    %355 = vmatpush1.msra.mxu0 0.0
    %356 = vmatprep.subr.mxu0 0.0
    %357 = vmatpush1.msra.mxu0 0.0
    %358 = vmatprep.subr.mxu0 0.0
    %359 = vmatpush1.msra.mxu0 0.0
    %360 = vmatprep.subr.mxu0 0.0
    %361 = vmatpush1.msra.mxu0 0.0
    %362 = vmatprep.subr.mxu0 0.0
    %363 = vmatpush1.msra.mxu0 0.0
    %364 = vmatprep.subr.mxu0 0.0
    %365 = vmatpush1.msra.mxu0 0.0
    %366 = vmatprep.subr.mxu0 0.0
    %367 = vmatpush1.msra.mxu0 0.0
    %368 = vmatprep.subr.mxu0 0.0
    %369 = vmatpush1.msra.mxu0 0.0
    %370 = vmatprep.subr.mxu0 0.0
    %371 = vmatpush1.msra.mxu0 0.0
    %372 = vmatprep.subr.mxu0 0.0
    %373 = vmatpush1.msra.mxu0 0.0
    %374 = vmatprep.subr.mxu0 0.0
    %375 = vmatpush1.msra.mxu0 0.0
    %376 = vmatprep.subr.mxu0 0.0
    %377 = vmatpush1.msra.mxu0 0.0
    %378 = vmatprep.mubr.f32.mxu0 0.0
    %379 = vmatmul.mubr.f32.gmra.mrb[0].mxu0 %v309
    %v380 = vpop.f32.mrb[0].mxu0
    %v381 = vadd.f32 0.0, %v380
    %v382 = vpop.f32.mrb[0].mxu0
    %383 = vmatprep.mubr.f32.mxu0 0.0
    %384 = vmatmul.mubr.f32.gmra.mrb[0].mxu0 %v312
    %v385 = vpop.f32.mrb[0].mxu0
    %v386 = vadd.f32 0.0, %v385
    %v387 = vpop.f32.mrb[0].mxu0
    %388 = vdwg.mxu0
    %vm389 = vcmask 130048
    %v391 = vsel %vm389, %v199, 0
    %v394 = vsel %vm389, %v200, 0
    %v397 = vsel %vm389, %v201, 0
    %v400 = vsel %vm389, %v202, 0
    %v403 = vsel %vm389, %v203, 0
    %v406 = vsel %vm389, %v204, 0
    %v409 = vsel %vm389, %v205, 0
    %v412 = vsel %vm389, %v206, 0
    %414 = vmatprep.subr.mxu0 0.0
    %415 = vmatpush1.msra.mxu0 %v300
    %416 = vmatprep.subr.mxu0 0.0
    %417 = vmatpush1.msra.mxu0 %v305
    %418 = vmatprep.subr.mxu0 0.0
    %419 = vmatpush1.msra.mxu0 0.0
    %420 = vmatprep.subr.mxu0 0.0
    %421 = vmatpush1.msra.mxu0 0.0
    %422 = vmatprep.subr.mxu0 0.0
    %423 = vmatpush1.msra.mxu0 0.0
    %424 = vmatprep.subr.mxu0 0.0
    %425 = vmatpush1.msra.mxu0 0.0
    %426 = vmatprep.subr.mxu0 0.0
    %427 = vmatpush1.msra.mxu0 0.0
    %428 = vmatprep.subr.mxu0 0.0
    %429 = vmatpush1.msra.mxu0 0.0
    %430 = vmatprep.subr.mxu0 0.0
    %431 = vmatpush1.msra.mxu0 0.0
    %432 = vmatprep.subr.mxu0 0.0
    %433 = vmatpush1.msra.mxu0 0.0
    %434 = vmatprep.subr.mxu0 0.0
    %435 = vmatpush1.msra.mxu0 0.0
    %436 = vmatprep.subr.mxu0 0.0
    %437 = vmatpush1.msra.mxu0 0.0
    %438 = vmatprep.subr.mxu0 0.0
    %439 = vmatpush1.msra.mxu0 0.0
    %440 = vmatprep.subr.mxu0 0.0
    %441 = vmatpush1.msra.mxu0 0.0
    %442 = vmatprep.subr.mxu0 0.0
    %443 = vmatpush1.msra.mxu0 0.0
    %444 = vmatprep.subr.mxu0 0.0
    %445 = vmatpush1.msra.mxu0 0.0
    %446 = vmatprep.subr.mxu0 0.0
    %447 = vmatpush1.msra.mxu0 0.0
    %448 = vmatprep.subr.mxu0 0.0
    %449 = vmatpush1.msra.mxu0 0.0
    %450 = vmatprep.subr.mxu0 0.0
    %451 = vmatpush1.msra.mxu0 0.0
    %452 = vmatprep.subr.mxu0 0.0
    %453 = vmatpush1.msra.mxu0 0.0
    %454 = vmatprep.subr.mxu0 0.0
    %455 = vmatpush1.msra.mxu0 0.0
    %456 = vmatprep.subr.mxu0 0.0
    %457 = vmatpush1.msra.mxu0 0.0
    %458 = vmatprep.subr.mxu0 0.0
    %459 = vmatpush1.msra.mxu0 0.0
    %460 = vmatprep.subr.mxu0 0.0
    %461 = vmatpush1.msra.mxu0 0.0
    %462 = vmatprep.subr.mxu0 0.0
    %463 = vmatpush1.msra.mxu0 0.0
    %464 = vmatprep.subr.mxu0 0.0
    %465 = vmatpush1.msra.mxu0 0.0
    %466 = vmatprep.subr.mxu0 0.0
    %467 = vmatpush1.msra.mxu0 0.0
    %468 = vmatprep.subr.mxu0 0.0
    %469 = vmatpush1.msra.mxu0 0.0
    %470 = vmatprep.subr.mxu0 0.0
    %471 = vmatpush1.msra.mxu0 0.0
    %472 = vmatprep.subr.mxu0 0.0
    %473 = vmatpush1.msra.mxu0 0.0
    %474 = vmatprep.subr.mxu0 0.0
    %475 = vmatpush1.msra.mxu0 0.0
    %476 = vmatprep.subr.mxu0 0.0
    %477 = vmatpush1.msra.mxu0 0.0
    %478 = vmatprep.mubr.f32.mxu0 0.0
    %479 = vmatmul.mubr.f32.gmra.mrb[0].mxu0 %v391
    %v480 = vpop.f32.mrb[0].mxu0
    %v481 = vadd.f32 0.0, %v480
    %v482 = vpop.f32.mrb[0].mxu0
    %483 = vmatprep.mubr.f32.mxu0 0.0
    %484 = vmatmul.mubr.f32.gmra.mrb[0].mxu0 %v394
    %v485 = vpop.f32.mrb[0].mxu0
    %v486 = vadd.f32 0.0, %v485
    %v487 = vpop.f32.mrb[0].mxu0
    %488 = vmatprep.mubr.f32.mxu0 0.0
    %489 = vmatmul.mubr.f32.gmra.mrb[0].mxu0 %v397
    %v490 = vpop.f32.mrb[0].mxu0
    %v491 = vadd.f32 0.0, %v490
    %v492 = vpop.f32.mrb[0].mxu0
    %493 = vmatprep.mubr.f32.mxu0 0.0
    %494 = vmatmul.mubr.f32.gmra.mrb[0].mxu0 %v400
    %v495 = vpop.f32.mrb[0].mxu0
    %v496 = vadd.f32 0.0, %v495
    %v497 = vpop.f32.mrb[0].mxu0
    %498 = vmatprep.mubr.f32.mxu0 0.0
    %499 = vmatmul.mubr.f32.gmra.mrb[0].mxu0 %v403
    %v500 = vpop.f32.mrb[0].mxu0
    %v501 = vadd.f32 0.0, %v500
    %v502 = vpop.f32.mrb[0].mxu0
    %503 = vmatprep.mubr.f32.mxu0 0.0
    %504 = vmatmul.mubr.f32.gmra.mrb[0].mxu0 %v406
    %v505 = vpop.f32.mrb[0].mxu0
    %v506 = vadd.f32 0.0, %v505
    %v507 = vpop.f32.mrb[0].mxu0
    %508 = vmatprep.mubr.f32.mxu0 0.0
    %509 = vmatmul.mubr.f32.gmra.mrb[0].mxu0 %v409
    %v510 = vpop.f32.mrb[0].mxu0
    %v511 = vadd.f32 0.0, %v510
    %v512 = vpop.f32.mrb[0].mxu0
    %513 = vmatprep.mubr.f32.mxu0 0.0
    %514 = vmatmul.mubr.f32.gmra.mrb[0].mxu0 %v412
    %v515 = vpop.f32.mrb[0].mxu0
    %v516 = vadd.f32 0.0, %v515
    %v517 = vpop.f32.mrb[0].mxu0
    %518 = vdwg.mxu0
    %v519 = vld [vmem:[#allocation2] sm:$0xff]
    %s520 = scalar_lea.vmem [#allocation2], 8
    %v521 = vld [vmem:[%s520] sm:$0xff]
    %vm525 = vcmask 1043456
    %v526 = vrot.slane %v491, 4
    %v527 = vrot.slane %v496, 4
    %v528 = vsel %vm525, %v526, %v527
    %v529 = vrot.slane %v501, 4
    %v530 = vsel %vm525, %v527, %v529
    %vm531 = vcmask 64512
    %v532 = vsel %vm531, %v528, 0
    %v534 = vsel %vm531, %v530, 0
    %v536 = vsel %vm531, %v529, 0
    %538 = vmatprep.subr.mxu0 0.0
    %539 = vmatpush1.msra.mxu0 %v521
    %540 = vmatprep.subr.mxu0 0.0
    %541 = vmatpush1.msra.mxu0 0.0
    %542 = vmatprep.subr.mxu0 0.0
    %543 = vmatpush1.msra.mxu0 0.0
    %544 = vmatprep.subr.mxu0 0.0
    %545 = vmatpush1.msra.mxu0 0.0
    %546 = vmatprep.subr.mxu0 0.0
    %547 = vmatpush1.msra.mxu0 0.0
    %548 = vmatprep.subr.mxu0 0.0
    %549 = vmatpush1.msra.mxu0 0.0
    %550 = vmatprep.subr.mxu0 0.0
    %551 = vmatpush1.msra.mxu0 0.0
    %552 = vmatprep.subr.mxu0 0.0
    %553 = vmatpush1.msra.mxu0 0.0
    %554 = vmatprep.subr.mxu0 0.0
    %555 = vmatpush1.msra.mxu0 0.0
    %556 = vmatprep.subr.mxu0 0.0
    %557 = vmatpush1.msra.mxu0 0.0
    %558 = vmatprep.subr.mxu0 0.0
    %559 = vmatpush1.msra.mxu0 0.0
    %560 = vmatprep.subr.mxu0 0.0
    %561 = vmatpush1.msra.mxu0 0.0
    %562 = vmatprep.subr.mxu0 0.0
    %563 = vmatpush1.msra.mxu0 0.0
    %564 = vmatprep.subr.mxu0 0.0
    %565 = vmatpush1.msra.mxu0 0.0
    %566 = vmatprep.subr.mxu0 0.0
    %567 = vmatpush1.msra.mxu0 0.0
    %568 = vmatprep.subr.mxu0 0.0
    %569 = vmatpush1.msra.mxu0 0.0
    %570 = vmatprep.subr.mxu0 0.0
    %571 = vmatpush1.msra.mxu0 0.0
    %572 = vmatprep.subr.mxu0 0.0
    %573 = vmatpush1.msra.mxu0 0.0
    %574 = vmatprep.subr.mxu0 0.0
    %575 = vmatpush1.msra.mxu0 0.0
    %576 = vmatprep.subr.mxu0 0.0
    %577 = vmatpush1.msra.mxu0 0.0
    %578 = vmatprep.subr.mxu0 0.0
    %579 = vmatpush1.msra.mxu0 0.0
    %580 = vmatprep.subr.mxu0 0.0
    %581 = vmatpush1.msra.mxu0 0.0
    %582 = vmatprep.subr.mxu0 0.0
    %583 = vmatpush1.msra.mxu0 0.0
    %584 = vmatprep.subr.mxu0 0.0
    %585 = vmatpush1.msra.mxu0 0.0
    %586 = vmatprep.subr.mxu0 0.0
    %587 = vmatpush1.msra.mxu0 0.0
    %588 = vmatprep.subr.mxu0 0.0
    %589 = vmatpush1.msra.mxu0 0.0
    %590 = vmatprep.subr.mxu0 0.0
    %591 = vmatpush1.msra.mxu0 0.0
    %592 = vmatprep.subr.mxu0 0.0
    %593 = vmatpush1.msra.mxu0 0.0
    %594 = vmatprep.subr.mxu0 0.0
    %595 = vmatpush1.msra.mxu0 0.0
    %596 = vmatprep.subr.mxu0 0.0
    %597 = vmatpush1.msra.mxu0 0.0
    %598 = vmatprep.subr.mxu0 0.0
    %599 = vmatpush1.msra.mxu0 0.0
    %600 = vmatprep.subr.mxu0 0.0
    %601 = vmatpush1.msra.mxu0 0.0
    %602 = vmatprep.mubr.f32.mxu0 0.0
    %603 = vmatmul.mubr.f32.gmra.mrb[0].mxu0 %v532
    %v604 = vpop.f32.mrb[0].mxu0
    %v605 = vadd.f32 0.0, %v604
    %v606 = vpop.f32.mrb[0].mxu0
    %607 = vmatprep.mubr.f32.mxu0 0.0
    %608 = vmatmul.mubr.f32.gmra.mrb[0].mxu0 %v534
    %v609 = vpop.f32.mrb[0].mxu0
    %v610 = vadd.f32 0.0, %v609
    %v611 = vpop.f32.mrb[0].mxu0
    %612 = vmatprep.mubr.f32.mxu0 0.0
    %613 = vmatmul.mubr.f32.gmra.mrb[0].mxu0 %v536
    %v614 = vpop.f32.mrb[0].mxu0
    %v615 = vadd.f32 0.0, %v614
    %v616 = vpop.f32.mrb[0].mxu0
    %617 = vdwg.mxu0
    %v619 = vsel %vm531, %v481, 0
    %v622 = vsel %vm531, %v486, 0
    %v624 = vsel %vm531, %v491, 0
    %626 = vmatprep.subr.mxu0 0.0
    %627 = vmatpush1.msra.mxu0 %v519
    %628 = vmatprep.subr.mxu0 0.0
    %629 = vmatpush1.msra.mxu0 0.0
    %630 = vmatprep.subr.mxu0 0.0
    %631 = vmatpush1.msra.mxu0 0.0
    %632 = vmatprep.subr.mxu0 0.0
    %633 = vmatpush1.msra.mxu0 0.0
    %634 = vmatprep.subr.mxu0 0.0
    %635 = vmatpush1.msra.mxu0 0.0
    %636 = vmatprep.subr.mxu0 0.0
    %637 = vmatpush1.msra.mxu0 0.0
    %638 = vmatprep.subr.mxu0 0.0
    %639 = vmatpush1.msra.mxu0 0.0
    %640 = vmatprep.subr.mxu0 0.0
    %641 = vmatpush1.msra.mxu0 0.0
    %642 = vmatprep.subr.mxu0 0.0
    %643 = vmatpush1.msra.mxu0 0.0
    %644 = vmatprep.subr.mxu0 0.0
    %645 = vmatpush1.msra.mxu0 0.0
    %646 = vmatprep.subr.mxu0 0.0
    %647 = vmatpush1.msra.mxu0 0.0
    %648 = vmatprep.subr.mxu0 0.0
    %649 = vmatpush1.msra.mxu0 0.0
    %650 = vmatprep.subr.mxu0 0.0
    %651 = vmatpush1.msra.mxu0 0.0
    %652 = vmatprep.subr.mxu0 0.0
    %653 = vmatpush1.msra.mxu0 0.0
    %654 = vmatprep.subr.mxu0 0.0
    %655 = vmatpush1.msra.mxu0 0.0
    %656 = vmatprep.subr.mxu0 0.0
    %657 = vmatpush1.msra.mxu0 0.0
    %658 = vmatprep.subr.mxu0 0.0
    %659 = vmatpush1.msra.mxu0 0.0
    %660 = vmatprep.subr.mxu0 0.0
    %661 = vmatpush1.msra.mxu0 0.0
    %662 = vmatprep.subr.mxu0 0.0
    %663 = vmatpush1.msra.mxu0 0.0
    %664 = vmatprep.subr.mxu0 0.0
    %665 = vmatpush1.msra.mxu0 0.0
    %666 = vmatprep.subr.mxu0 0.0
    %667 = vmatpush1.msra.mxu0 0.0
    %668 = vmatprep.subr.mxu0 0.0
    %669 = vmatpush1.msra.mxu0 0.0
    %670 = vmatprep.subr.mxu0 0.0
    %671 = vmatpush1.msra.mxu0 0.0
    %672 = vmatprep.subr.mxu0 0.0
    %673 = vmatpush1.msra.mxu0 0.0
    %674 = vmatprep.subr.mxu0 0.0
    %675 = vmatpush1.msra.mxu0 0.0
    %676 = vmatprep.subr.mxu0 0.0
    %677 = vmatpush1.msra.mxu0 0.0
    %678 = vmatprep.subr.mxu0 0.0
    %679 = vmatpush1.msra.mxu0 0.0
    %680 = vmatprep.subr.mxu0 0.0
    %681 = vmatpush1.msra.mxu0 0.0
    %682 = vmatprep.subr.mxu0 0.0
    %683 = vmatpush1.msra.mxu0 0.0
    %684 = vmatprep.subr.mxu0 0.0
    %685 = vmatpush1.msra.mxu0 0.0
    %686 = vmatprep.subr.mxu0 0.0
    %687 = vmatpush1.msra.mxu0 0.0
    %688 = vmatprep.subr.mxu0 0.0
    %689 = vmatpush1.msra.mxu0 0.0
    %690 = vmatprep.mubr.f32.mxu0 0.0
    %691 = vmatmul.mubr.f32.gmra.mrb[0].mxu0 %v619
    %v692 = vpop.f32.mrb[0].mxu0
    %v693 = vadd.f32 %v605, %v692
    %v694 = vpop.f32.mrb[0].mxu0
    %695 = vmatprep.mubr.f32.mxu0 0.0
    %696 = vmatmul.mubr.f32.gmra.mrb[0].mxu0 %v622
    %v697 = vpop.f32.mrb[0].mxu0
    %v698 = vadd.f32 %v610, %v697
    %v699 = vpop.f32.mrb[0].mxu0
    %700 = vmatprep.mubr.f32.mxu0 0.0
    %701 = vmatmul.mubr.f32.gmra.mrb[0].mxu0 %v624
    %v702 = vpop.f32.mrb[0].mxu0
    %v703 = vadd.f32 %v615, %v702
    %v704 = vpop.f32.mrb[0].mxu0
    %705 = vdwg.mxu0
    %s706 = scalar_lea.vmem [#allocation2], 16
    %v707 = vld [vmem:[%s706] sm:$0xff]
    %v709 = vsel %vm531, %v506, 0
    %v712 = vsel %vm531, %v511, 0
    %v715 = vsel %vm531, %v516, 0
    %717 = vmatprep.subr.mxu0 0.0
    %718 = vmatpush1.msra.mxu0 %v707
    %719 = vmatprep.subr.mxu0 0.0
    %720 = vmatpush1.msra.mxu0 0.0
    %721 = vmatprep.subr.mxu0 0.0
    %722 = vmatpush1.msra.mxu0 0.0
    %723 = vmatprep.subr.mxu0 0.0
    %724 = vmatpush1.msra.mxu0 0.0
    %725 = vmatprep.subr.mxu0 0.0
    %726 = vmatpush1.msra.mxu0 0.0
    %727 = vmatprep.subr.mxu0 0.0
    %728 = vmatpush1.msra.mxu0 0.0
    %729 = vmatprep.subr.mxu0 0.0
    %730 = vmatpush1.msra.mxu0 0.0
    %731 = vmatprep.subr.mxu0 0.0
    %732 = vmatpush1.msra.mxu0 0.0
    %733 = vmatprep.subr.mxu0 0.0
    %734 = vmatpush1.msra.mxu0 0.0
    %735 = vmatprep.subr.mxu0 0.0
    %736 = vmatpush1.msra.mxu0 0.0
    %737 = vmatprep.subr.mxu0 0.0
    %738 = vmatpush1.msra.mxu0 0.0
    %739 = vmatprep.subr.mxu0 0.0
    %740 = vmatpush1.msra.mxu0 0.0
    %741 = vmatprep.subr.mxu0 0.0
    %742 = vmatpush1.msra.mxu0 0.0
    %743 = vmatprep.subr.mxu0 0.0
    %744 = vmatpush1.msra.mxu0 0.0
    %745 = vmatprep.subr.mxu0 0.0
    %746 = vmatpush1.msra.mxu0 0.0
    %747 = vmatprep.subr.mxu0 0.0
    %748 = vmatpush1.msra.mxu0 0.0
    %749 = vmatprep.subr.mxu0 0.0
    %750 = vmatpush1.msra.mxu0 0.0
    %751 = vmatprep.subr.mxu0 0.0
    %752 = vmatpush1.msra.mxu0 0.0
    %753 = vmatprep.subr.mxu0 0.0
    %754 = vmatpush1.msra.mxu0 0.0
    %755 = vmatprep.subr.mxu0 0.0
    %756 = vmatpush1.msra.mxu0 0.0
    %757 = vmatprep.subr.mxu0 0.0
    %758 = vmatpush1.msra.mxu0 0.0
    %759 = vmatprep.subr.mxu0 0.0
    %760 = vmatpush1.msra.mxu0 0.0
    %761 = vmatprep.subr.mxu0 0.0
    %762 = vmatpush1.msra.mxu0 0.0
    %763 = vmatprep.subr.mxu0 0.0
    %764 = vmatpush1.msra.mxu0 0.0
    %765 = vmatprep.subr.mxu0 0.0
    %766 = vmatpush1.msra.mxu0 0.0
    %767 = vmatprep.subr.mxu0 0.0
    %768 = vmatpush1.msra.mxu0 0.0
    %769 = vmatprep.subr.mxu0 0.0
    %770 = vmatpush1.msra.mxu0 0.0
    %771 = vmatprep.subr.mxu0 0.0
    %772 = vmatpush1.msra.mxu0 0.0
    %773 = vmatprep.subr.mxu0 0.0
    %774 = vmatpush1.msra.mxu0 0.0
    %775 = vmatprep.subr.mxu0 0.0
    %776 = vmatpush1.msra.mxu0 0.0
    %777 = vmatprep.subr.mxu0 0.0
    %778 = vmatpush1.msra.mxu0 0.0
    %779 = vmatprep.subr.mxu0 0.0
    %780 = vmatpush1.msra.mxu0 0.0
    %781 = vmatprep.mubr.f32.mxu0 0.0
    %782 = vmatmul.mubr.f32.gmra.mrb[0].mxu0 %v709
    %v783 = vpop.f32.mrb[0].mxu0
    %v784 = vadd.f32 0.0, %v783
    %v785 = vpop.f32.mrb[0].mxu0
    %786 = vmatprep.mubr.f32.mxu0 0.0
    %787 = vmatmul.mubr.f32.gmra.mrb[0].mxu0 %v712
    %v788 = vpop.f32.mrb[0].mxu0
    %v789 = vadd.f32 0.0, %v788
    %v790 = vpop.f32.mrb[0].mxu0
    %791 = vmatprep.mubr.f32.mxu0 0.0
    %792 = vmatmul.mubr.f32.gmra.mrb[0].mxu0 %v715
    %v793 = vpop.f32.mrb[0].mxu0
    %v794 = vadd.f32 0.0, %v793
    %v795 = vpop.f32.mrb[0].mxu0
    %796 = vdwg.mxu0
    %v797 = vadd.f32 %v693, %v784
    %v798 = vadd.f32 %v698, %v789
    %v799 = vadd.f32 %v703, %v794
    %v800 = vld [vmem:[#allocation5] sm:$0x1]
    %v802 = vlaneseq
    %v803 = vshrl.u32 %v802, 7
    %v804 = vsub.s32 0, %v803
    %v805 = vrot.slane %v800, %v804
    %v807 = vadd.f32 %v797, %v805
    %v808 = vadd.f32 %v798, %v805
    %v809 = vadd.f32 %v799, %v805
    %vm810 = vcmp.ge.f32.partialorder %v807, 0.0
    %vm811 = vcmp.ge.f32.partialorder %v808, 0.0
    %vm812 = vcmp.ge.f32.partialorder %v809, 0.0
    %v813 = vmul.f32 %v807, 0.01
    %v814 = vmul.f32 %v808, 0.01
    %v815 = vmul.f32 %v809, 0.01
    %v816 = vsel %vm810, %v807, %v813
    %v817 = vsel %vm811, %v808, %v814
    %v818 = vsel %vm812, %v809, %v815
    %vm819 = vcmask 162816
    %v821 = vsel %vm819, %v207, 0
    %v824 = vsel %vm819, %v208, 0
    %v827 = vsel %vm819, %v209, 0
    %v830 = vsel %vm819, %v210, 0
    %v833 = vsel %vm819, %v211, 0
    %v836 = vsel %vm819, %v212, 0
    %v839 = vsel %vm525, %v818, 0
    %841 = vmatprep.subr.mxu0 0.0
    %842 = vmatpush1.msra.mxu0 %v816
    %843 = vmatprep.subr.mxu0 0.0
    %844 = vmatpush1.msra.mxu0 %v817
    %845 = vmatprep.subr.mxu0 0.0
    %846 = vmatpush1.msra.mxu0 %v839
    %847 = vmatprep.subr.mxu0 0.0
    %848 = vmatpush1.msra.mxu0 0.0
    %849 = vmatprep.subr.mxu0 0.0
    %850 = vmatpush1.msra.mxu0 0.0
    %851 = vmatprep.subr.mxu0 0.0
    %852 = vmatpush1.msra.mxu0 0.0
    %853 = vmatprep.subr.mxu0 0.0
    %854 = vmatpush1.msra.mxu0 0.0
    %855 = vmatprep.subr.mxu0 0.0
    %856 = vmatpush1.msra.mxu0 0.0
    %857 = vmatprep.subr.mxu0 0.0
    %858 = vmatpush1.msra.mxu0 0.0
    %859 = vmatprep.subr.mxu0 0.0
    %860 = vmatpush1.msra.mxu0 0.0
    %861 = vmatprep.subr.mxu0 0.0
    %862 = vmatpush1.msra.mxu0 0.0
    %863 = vmatprep.subr.mxu0 0.0
    %864 = vmatpush1.msra.mxu0 0.0
    %865 = vmatprep.subr.mxu0 0.0
    %866 = vmatpush1.msra.mxu0 0.0
    %867 = vmatprep.subr.mxu0 0.0
    %868 = vmatpush1.msra.mxu0 0.0
    %869 = vmatprep.subr.mxu0 0.0
    %870 = vmatpush1.msra.mxu0 0.0
    %871 = vmatprep.subr.mxu0 0.0
    %872 = vmatpush1.msra.mxu0 0.0
    %873 = vmatprep.subr.mxu0 0.0
    %874 = vmatpush1.msra.mxu0 0.0
    %875 = vmatprep.subr.mxu0 0.0
    %876 = vmatpush1.msra.mxu0 0.0
    %877 = vmatprep.subr.mxu0 0.0
    %878 = vmatpush1.msra.mxu0 0.0
    %879 = vmatprep.subr.mxu0 0.0
    %880 = vmatpush1.msra.mxu0 0.0
    %881 = vmatprep.subr.mxu0 0.0
    %882 = vmatpush1.msra.mxu0 0.0
    %883 = vmatprep.subr.mxu0 0.0
    %884 = vmatpush1.msra.mxu0 0.0
    %885 = vmatprep.subr.mxu0 0.0
    %886 = vmatpush1.msra.mxu0 0.0
    %887 = vmatprep.subr.mxu0 0.0
    %888 = vmatpush1.msra.mxu0 0.0
    %889 = vmatprep.subr.mxu0 0.0
    %890 = vmatpush1.msra.mxu0 0.0
    %891 = vmatprep.subr.mxu0 0.0
    %892 = vmatpush1.msra.mxu0 0.0
    %893 = vmatprep.subr.mxu0 0.0
    %894 = vmatpush1.msra.mxu0 0.0
    %895 = vmatprep.subr.mxu0 0.0
    %896 = vmatpush1.msra.mxu0 0.0
    %897 = vmatprep.subr.mxu0 0.0
    %898 = vmatpush1.msra.mxu0 0.0
    %899 = vmatprep.subr.mxu0 0.0
    %900 = vmatpush1.msra.mxu0 0.0
    %901 = vmatprep.subr.mxu0 0.0
    %902 = vmatpush1.msra.mxu0 0.0
    %903 = vmatprep.subr.mxu0 0.0
    %904 = vmatpush1.msra.mxu0 0.0
    %905 = vmatprep.mubr.f32.mxu0 0.0
    %906 = vmatmul.mubr.f32.gmra.mrb[0].mxu0 %v821
    %v907 = vpop.f32.mrb[0].mxu0
    %v908 = vadd.f32 0.0, %v907
    %v909 = vpop.f32.mrb[0].mxu0
    %910 = vmatprep.mubr.f32.mxu0 0.0
    %911 = vmatmul.mubr.f32.gmra.mrb[0].mxu0 %v824
    %v912 = vpop.f32.mrb[0].mxu0
    %v913 = vadd.f32 0.0, %v912
    %v914 = vpop.f32.mrb[0].mxu0
    %915 = vmatprep.mubr.f32.mxu0 0.0
    %916 = vmatmul.mubr.f32.gmra.mrb[0].mxu0 %v827
    %v917 = vpop.f32.mrb[0].mxu0
    %v918 = vadd.f32 0.0, %v917
    %v919 = vpop.f32.mrb[0].mxu0
    %920 = vmatprep.mubr.f32.mxu0 0.0
    %921 = vmatmul.mubr.f32.gmra.mrb[0].mxu0 %v830
    %v922 = vpop.f32.mrb[0].mxu0
    %v923 = vadd.f32 0.0, %v922
    %v924 = vpop.f32.mrb[0].mxu0
    %925 = vmatprep.mubr.f32.mxu0 0.0
    %926 = vmatmul.mubr.f32.gmra.mrb[0].mxu0 %v833
    %v927 = vpop.f32.mrb[0].mxu0
    %v928 = vadd.f32 0.0, %v927
    %v929 = vpop.f32.mrb[0].mxu0
    %930 = vmatprep.mubr.f32.mxu0 0.0
    %931 = vmatmul.mubr.f32.gmra.mrb[0].mxu0 %v836
    %v932 = vpop.f32.mrb[0].mxu0
    %v933 = vadd.f32 0.0, %v932
    %v934 = vpop.f32.mrb[0].mxu0
    %935 = vdwg.mxu0
    %v936 = vld [vmem:[#allocation7] sm:$0xff]
    %v937 = vld [vmem:[#allocation7 + $0x8] sm:$0xff]
    %v938 = vld [vmem:[#allocation7 + $0x10] sm:$0xff]
    %v939 = vld [vmem:[#allocation7 + $0x18] sm:$0xff]
    %s940 = scalar_lea.vmem [#allocation7], 32
    %v941 = vld [vmem:[%s940] sm:$0xff]
    %v942 = vld [vmem:[%s940 + $0x8] sm:$0xff]
    %v943 = vld [vmem:[%s940 + $0x10] sm:$0xff]
    %v944 = vld [vmem:[%s940 + $0x18] sm:$0xff]
    %v946 = vsel %vm226, %v918, 0
    %v949 = vsel %vm226, %v923, 0
    %951 = vmatprep.subr.mxu0 0.0
    %952 = vmatpush1.msra.mxu0 %v941
    %953 = vmatprep.subr.mxu0 0.0
    %954 = vmatpush1.msra.mxu0 %v942
    %955 = vmatprep.subr.mxu0 0.0
    %956 = vmatpush1.msra.mxu0 %v943
    %957 = vmatprep.subr.mxu0 0.0
    %958 = vmatpush1.msra.mxu0 %v944
    %959 = vmatprep.subr.mxu0 0.0
    %960 = vmatpush1.msra.mxu0 0.0
    %961 = vmatprep.subr.mxu0 0.0
    %962 = vmatpush1.msra.mxu0 0.0
    %963 = vmatprep.subr.mxu0 0.0
    %964 = vmatpush1.msra.mxu0 0.0
    %965 = vmatprep.subr.mxu0 0.0
    %966 = vmatpush1.msra.mxu0 0.0
    %967 = vmatprep.subr.mxu0 0.0
    %968 = vmatpush1.msra.mxu0 0.0
    %969 = vmatprep.subr.mxu0 0.0
    %970 = vmatpush1.msra.mxu0 0.0
    %971 = vmatprep.subr.mxu0 0.0
    %972 = vmatpush1.msra.mxu0 0.0
    %973 = vmatprep.subr.mxu0 0.0
    %974 = vmatpush1.msra.mxu0 0.0
    %975 = vmatprep.subr.mxu0 0.0
    %976 = vmatpush1.msra.mxu0 0.0
    %977 = vmatprep.subr.mxu0 0.0
    %978 = vmatpush1.msra.mxu0 0.0
    %979 = vmatprep.subr.mxu0 0.0
    %980 = vmatpush1.msra.mxu0 0.0
    %981 = vmatprep.subr.mxu0 0.0
    %982 = vmatpush1.msra.mxu0 0.0
    %983 = vmatprep.subr.mxu0 0.0
    %984 = vmatpush1.msra.mxu0 0.0
    %985 = vmatprep.subr.mxu0 0.0
    %986 = vmatpush1.msra.mxu0 0.0
    %987 = vmatprep.subr.mxu0 0.0
    %988 = vmatpush1.msra.mxu0 0.0
    %989 = vmatprep.subr.mxu0 0.0
    %990 = vmatpush1.msra.mxu0 0.0
    %991 = vmatprep.subr.mxu0 0.0
    %992 = vmatpush1.msra.mxu0 0.0
    %993 = vmatprep.subr.mxu0 0.0
    %994 = vmatpush1.msra.mxu0 0.0
    %995 = vmatprep.subr.mxu0 0.0
    %996 = vmatpush1.msra.mxu0 0.0
    %997 = vmatprep.subr.mxu0 0.0
    %998 = vmatpush1.msra.mxu0 0.0
    %999 = vmatprep.subr.mxu0 0.0
    %1000 = vmatpush1.msra.mxu0 0.0
    %1001 = vmatprep.subr.mxu0 0.0
    %1002 = vmatpush1.msra.mxu0 0.0
    %1003 = vmatprep.subr.mxu0 0.0
    %1004 = vmatpush1.msra.mxu0 0.0
    %1005 = vmatprep.subr.mxu0 0.0
    %1006 = vmatpush1.msra.mxu0 0.0
    %1007 = vmatprep.subr.mxu0 0.0
    %1008 = vmatpush1.msra.mxu0 0.0
    %1009 = vmatprep.subr.mxu0 0.0
    %1010 = vmatpush1.msra.mxu0 0.0
    %1011 = vmatprep.subr.mxu0 0.0
    %1012 = vmatpush1.msra.mxu0 0.0
    %1013 = vmatprep.subr.mxu0 0.0
    %1014 = vmatpush1.msra.mxu0 0.0
    %1015 = vmatprep.mubr.f32.mxu0 0.0
    %1016 = vmatmul.mubr.f32.gmra.mrb[0].mxu0 %v946
    %v1017 = vpop.f32.mrb[0].mxu0
    %v1018 = vadd.f32 0.0, %v1017
    %v1019 = vpop.f32.mrb[0].mxu0
    %1020 = vmatprep.mubr.f32.mxu0 0.0
    %1021 = vmatmul.mubr.f32.gmra.mrb[0].mxu0 %v949
    %v1022 = vpop.f32.mrb[0].mxu0
    %v1023 = vadd.f32 0.0, %v1022
    %v1024 = vpop.f32.mrb[0].mxu0
    %1025 = vdwg.mxu0
    %v1027 = vsel %vm226, %v908, 0
    %v1030 = vsel %vm226, %v913, 0
    %1032 = vmatprep.subr.mxu0 0.0
    %1033 = vmatpush1.msra.mxu0 %v936
    %1034 = vmatprep.subr.mxu0 0.0
    %1035 = vmatpush1.msra.mxu0 %v937
    %1036 = vmatprep.subr.mxu0 0.0
    %1037 = vmatpush1.msra.mxu0 %v938
    %1038 = vmatprep.subr.mxu0 0.0
    %1039 = vmatpush1.msra.mxu0 %v939
    %1040 = vmatprep.subr.mxu0 0.0
    %1041 = vmatpush1.msra.mxu0 0.0
    %1042 = vmatprep.subr.mxu0 0.0
    %1043 = vmatpush1.msra.mxu0 0.0
    %1044 = vmatprep.subr.mxu0 0.0
    %1045 = vmatpush1.msra.mxu0 0.0
    %1046 = vmatprep.subr.mxu0 0.0
    %1047 = vmatpush1.msra.mxu0 0.0
    %1048 = vmatprep.subr.mxu0 0.0
    %1049 = vmatpush1.msra.mxu0 0.0
    %1050 = vmatprep.subr.mxu0 0.0
    %1051 = vmatpush1.msra.mxu0 0.0
    %1052 = vmatprep.subr.mxu0 0.0
    %1053 = vmatpush1.msra.mxu0 0.0
    %1054 = vmatprep.subr.mxu0 0.0
    %1055 = vmatpush1.msra.mxu0 0.0
    %1056 = vmatprep.subr.mxu0 0.0
    %1057 = vmatpush1.msra.mxu0 0.0
    %1058 = vmatprep.subr.mxu0 0.0
    %1059 = vmatpush1.msra.mxu0 0.0
    %1060 = vmatprep.subr.mxu0 0.0
    %1061 = vmatpush1.msra.mxu0 0.0
    %1062 = vmatprep.subr.mxu0 0.0
    %1063 = vmatpush1.msra.mxu0 0.0
    %1064 = vmatprep.subr.mxu0 0.0
    %1065 = vmatpush1.msra.mxu0 0.0
    %1066 = vmatprep.subr.mxu0 0.0
    %1067 = vmatpush1.msra.mxu0 0.0
    %1068 = vmatprep.subr.mxu0 0.0
    %1069 = vmatpush1.msra.mxu0 0.0
    %1070 = vmatprep.subr.mxu0 0.0
    %1071 = vmatpush1.msra.mxu0 0.0
    %1072 = vmatprep.subr.mxu0 0.0
    %1073 = vmatpush1.msra.mxu0 0.0
    %1074 = vmatprep.subr.mxu0 0.0
    %1075 = vmatpush1.msra.mxu0 0.0
    %1076 = vmatprep.subr.mxu0 0.0
    %1077 = vmatpush1.msra.mxu0 0.0
    %1078 = vmatprep.subr.mxu0 0.0
    %1079 = vmatpush1.msra.mxu0 0.0
    %1080 = vmatprep.subr.mxu0 0.0
    %1081 = vmatpush1.msra.mxu0 0.0
    %1082 = vmatprep.subr.mxu0 0.0
    %1083 = vmatpush1.msra.mxu0 0.0
    %1084 = vmatprep.subr.mxu0 0.0
    %1085 = vmatpush1.msra.mxu0 0.0
    %1086 = vmatprep.subr.mxu0 0.0
    %1087 = vmatpush1.msra.mxu0 0.0
    %1088 = vmatprep.subr.mxu0 0.0
    %1089 = vmatpush1.msra.mxu0 0.0
    %1090 = vmatprep.subr.mxu0 0.0
    %1091 = vmatpush1.msra.mxu0 0.0
    %1092 = vmatprep.subr.mxu0 0.0
    %1093 = vmatpush1.msra.mxu0 0.0
    %1094 = vmatprep.subr.mxu0 0.0
    %1095 = vmatpush1.msra.mxu0 0.0
    %1096 = vmatprep.mubr.f32.mxu0 0.0
    %1097 = vmatmul.mubr.f32.gmra.mrb[0].mxu0 %v1027
    %v1098 = vpop.f32.mrb[0].mxu0
    %v1099 = vadd.f32 %v1018, %v1098
    %v1100 = vpop.f32.mrb[0].mxu0
    %1101 = vmatprep.mubr.f32.mxu0 0.0
    %1102 = vmatmul.mubr.f32.gmra.mrb[0].mxu0 %v1030
    %v1103 = vpop.f32.mrb[0].mxu0
    %v1104 = vadd.f32 %v1023, %v1103
    %v1105 = vpop.f32.mrb[0].mxu0
    %1106 = vdwg.mxu0
    %s1107 = scalar_lea.vmem [#allocation7], 64
    %v1108 = vld [vmem:[%s1107] sm:$0xff]
    %v1109 = vld [vmem:[%s1107 + $0x8] sm:$0xff]
    %v1110 = vld [vmem:[%s1107 + $0x10] sm:$0xff]
    %v1111 = vld [vmem:[%s1107 + $0x18] sm:$0xff]
    %v1113 = vsel %vm226, %v928, 0
    %v1116 = vsel %vm226, %v933, 0
    %1118 = vmatprep.subr.mxu0 0.0
    %1119 = vmatpush1.msra.mxu0 %v1108
    %1120 = vmatprep.subr.mxu0 0.0
    %1121 = vmatpush1.msra.mxu0 %v1109
    %1122 = vmatprep.subr.mxu0 0.0
    %1123 = vmatpush1.msra.mxu0 %v1110
    %1124 = vmatprep.subr.mxu0 0.0
    %1125 = vmatpush1.msra.mxu0 %v1111
    %1126 = vmatprep.subr.mxu0 0.0
    %1127 = vmatpush1.msra.mxu0 0.0
    %1128 = vmatprep.subr.mxu0 0.0
    %1129 = vmatpush1.msra.mxu0 0.0
    %1130 = vmatprep.subr.mxu0 0.0
    %1131 = vmatpush1.msra.mxu0 0.0
    %1132 = vmatprep.subr.mxu0 0.0
    %1133 = vmatpush1.msra.mxu0 0.0
    %1134 = vmatprep.subr.mxu0 0.0
    %1135 = vmatpush1.msra.mxu0 0.0
    %1136 = vmatprep.subr.mxu0 0.0
    %1137 = vmatpush1.msra.mxu0 0.0
    %1138 = vmatprep.subr.mxu0 0.0
    %1139 = vmatpush1.msra.mxu0 0.0
    %1140 = vmatprep.subr.mxu0 0.0
    %1141 = vmatpush1.msra.mxu0 0.0
    %1142 = vmatprep.subr.mxu0 0.0
    %1143 = vmatpush1.msra.mxu0 0.0
    %1144 = vmatprep.subr.mxu0 0.0
    %1145 = vmatpush1.msra.mxu0 0.0
    %1146 = vmatprep.subr.mxu0 0.0
    %1147 = vmatpush1.msra.mxu0 0.0
    %1148 = vmatprep.subr.mxu0 0.0
    %1149 = vmatpush1.msra.mxu0 0.0
    %1150 = vmatprep.subr.mxu0 0.0
    %1151 = vmatpush1.msra.mxu0 0.0
    %1152 = vmatprep.subr.mxu0 0.0
    %1153 = vmatpush1.msra.mxu0 0.0
    %1154 = vmatprep.subr.mxu0 0.0
    %1155 = vmatpush1.msra.mxu0 0.0
    %1156 = vmatprep.subr.mxu0 0.0
    %1157 = vmatpush1.msra.mxu0 0.0
    %1158 = vmatprep.subr.mxu0 0.0
    %1159 = vmatpush1.msra.mxu0 0.0
    %1160 = vmatprep.subr.mxu0 0.0
    %1161 = vmatpush1.msra.mxu0 0.0
    %1162 = vmatprep.subr.mxu0 0.0
    %1163 = vmatpush1.msra.mxu0 0.0
    %1164 = vmatprep.subr.mxu0 0.0
    %1165 = vmatpush1.msra.mxu0 0.0
    %1166 = vmatprep.subr.mxu0 0.0
    %1167 = vmatpush1.msra.mxu0 0.0
    %1168 = vmatprep.subr.mxu0 0.0
    %1169 = vmatpush1.msra.mxu0 0.0
    %1170 = vmatprep.subr.mxu0 0.0
    %1171 = vmatpush1.msra.mxu0 0.0
    %1172 = vmatprep.subr.mxu0 0.0
    %1173 = vmatpush1.msra.mxu0 0.0
    %1174 = vmatprep.subr.mxu0 0.0
    %1175 = vmatpush1.msra.mxu0 0.0
    %1176 = vmatprep.subr.mxu0 0.0
    %1177 = vmatpush1.msra.mxu0 0.0
    %1178 = vmatprep.subr.mxu0 0.0
    %1179 = vmatpush1.msra.mxu0 0.0
    %1180 = vmatprep.subr.mxu0 0.0
    %1181 = vmatpush1.msra.mxu0 0.0
    %1182 = vmatprep.mubr.f32.mxu0 0.0
    %1183 = vmatmul.mubr.f32.gmra.mrb[0].mxu0 %v1113
    %v1184 = vpop.f32.mrb[0].mxu0
    %v1185 = vadd.f32 0.0, %v1184
    %v1186 = vpop.f32.mrb[0].mxu0
    %1187 = vmatprep.mubr.f32.mxu0 0.0
    %1188 = vmatmul.mubr.f32.gmra.mrb[0].mxu0 %v1116
    %v1189 = vpop.f32.mrb[0].mxu0
    %v1190 = vadd.f32 0.0, %v1189
    %v1191 = vpop.f32.mrb[0].mxu0
    %1192 = vdwg.mxu0
    %v1193 = vadd.f32 %v1099, %v1185
    %v1194 = vadd.f32 %v1104, %v1190
    %v1195 = vld [vmem:[#allocation8] sm:$0x1]
    %v1197 = vlaneseq
    %v1198 = vshrl.u32 %v1197, 7
    %v1199 = vsub.s32 0, %v1198
    %v1200 = vrot.slane %v1195, %v1199
    %v1202 = vadd.f32 %v1193, %v1200
    %v1203 = vadd.f32 %v1194, %v1200
    %v1204 = vtanh.pop %v1202
    %v1205 = vtanh.pop %v1203
    %v1206 = vmul.f32 %v1204, 1.442695
    %v1207 = vpow.pop %v1206
    %v1208 = vmul.f32 %v1205, 1.442695
    %v1209 = vpow.pop %v1208
    %v1210 = vmul.f32 %v381, %v1207
    %v1211 = vmul.f32 %v386, %v1209
    %1212 = vmatprep.subr.mxu0 0.0
    %1213 = vmatpush1.msra.mxu0 %v381
    %1214 = vmatprep.subr.mxu0 0.0
    %1215 = vmatpush1.msra.mxu0 %v386
    %1216 = vmatprep.subr.mxu0 0.0
    %1217 = vmatpush1.msra.mxu0 0.0
    %1218 = vmatprep.subr.mxu0 0.0
    %1219 = vmatpush1.msra.mxu0 0.0
    %1220 = vmatprep.subr.mxu0 0.0
    %1221 = vmatpush1.msra.mxu0 0.0
    %1222 = vmatprep.subr.mxu0 0.0
    %1223 = vmatpush1.msra.mxu0 0.0
    %1224 = vmatprep.subr.mxu0 0.0
    %1225 = vmatpush1.msra.mxu0 0.0
    %1226 = vmatprep.subr.mxu0 0.0
    %1227 = vmatpush1.msra.mxu0 0.0
    %1228 = vmatprep.subr.mxu0 0.0
    %1229 = vmatpush1.msra.mxu0 0.0
    %1230 = vmatprep.subr.mxu0 0.0
    %1231 = vmatpush1.msra.mxu0 0.0
    %1232 = vmatprep.subr.mxu0 0.0
    %1233 = vmatpush1.msra.mxu0 0.0
    %1234 = vmatprep.subr.mxu0 0.0
    %1235 = vmatpush1.msra.mxu0 0.0
    %1236 = vmatprep.subr.mxu0 0.0
    %1237 = vmatpush1.msra.mxu0 0.0
    %1238 = vmatprep.subr.mxu0 0.0
    %1239 = vmatpush1.msra.mxu0 0.0
    %1240 = vmatprep.subr.mxu0 0.0
    %1241 = vmatpush1.msra.mxu0 0.0
    %1242 = vmatprep.subr.mxu0 0.0
    %1243 = vmatpush1.msra.mxu0 0.0
    %1244 = vmatprep.subr.mxu0 0.0
    %1245 = vmatpush1.msra.mxu0 0.0
    %1246 = vmatprep.subr.mxu0 0.0
    %1247 = vmatpush1.msra.mxu0 0.0
    %1248 = vmatprep.subr.mxu0 0.0
    %1249 = vmatpush1.msra.mxu0 0.0
    %1250 = vmatprep.subr.mxu0 0.0
    %1251 = vmatpush1.msra.mxu0 0.0
    %1252 = vmatprep.subr.mxu0 0.0
    %1253 = vmatpush1.msra.mxu0 0.0
    %1254 = vmatprep.subr.mxu0 0.0
    %1255 = vmatpush1.msra.mxu0 0.0
    %1256 = vmatprep.subr.mxu0 0.0
    %1257 = vmatpush1.msra.mxu0 0.0
    %1258 = vmatprep.subr.mxu0 0.0
    %1259 = vmatpush1.msra.mxu0 0.0
    %1260 = vmatprep.subr.mxu0 0.0
    %1261 = vmatpush1.msra.mxu0 0.0
    %1262 = vmatprep.subr.mxu0 0.0
    %1263 = vmatpush1.msra.mxu0 0.0
    %1264 = vmatprep.subr.mxu0 0.0
    %1265 = vmatpush1.msra.mxu0 0.0
    %1266 = vmatprep.subr.mxu0 0.0
    %1267 = vmatpush1.msra.mxu0 0.0
    %1268 = vmatprep.subr.mxu0 0.0
    %1269 = vmatpush1.msra.mxu0 0.0
    %1270 = vmatprep.subr.mxu0 0.0
    %1271 = vmatpush1.msra.mxu0 0.0
    %1272 = vmatprep.subr.mxu0 0.0
    %1273 = vmatpush1.msra.mxu0 0.0
    %1274 = vmatprep.subr.mxu0 0.0
    %1275 = vmatpush1.msra.mxu0 0.0
    %1276 = vmatprep.mubr.f32.mxu0 0.0
    %1277 = vmatmul.mubr.f32.gmra.mrb[0].mxu0 %v391
    %v1278 = vpop.f32.mrb[0].mxu0
    %v1279 = vadd.f32 0.0, %v1278
    %v1280 = vpop.f32.mrb[0].mxu0
    %1281 = vmatprep.mubr.f32.mxu0 0.0
    %1282 = vmatmul.mubr.f32.gmra.mrb[0].mxu0 %v394
    %v1283 = vpop.f32.mrb[0].mxu0
    %v1284 = vadd.f32 0.0, %v1283
    %v1285 = vpop.f32.mrb[0].mxu0
    %1286 = vmatprep.mubr.f32.mxu0 0.0
    %1287 = vmatmul.mubr.f32.gmra.mrb[0].mxu0 %v397
    %v1288 = vpop.f32.mrb[0].mxu0
    %v1289 = vadd.f32 0.0, %v1288
    %v1290 = vpop.f32.mrb[0].mxu0
    %1291 = vmatprep.mubr.f32.mxu0 0.0
    %1292 = vmatmul.mubr.f32.gmra.mrb[0].mxu0 %v400
    %v1293 = vpop.f32.mrb[0].mxu0
    %v1294 = vadd.f32 0.0, %v1293
    %v1295 = vpop.f32.mrb[0].mxu0
    %1296 = vmatprep.mubr.f32.mxu0 0.0
    %1297 = vmatmul.mubr.f32.gmra.mrb[0].mxu0 %v403
    %v1298 = vpop.f32.mrb[0].mxu0
    %v1299 = vadd.f32 0.0, %v1298
    %v1300 = vpop.f32.mrb[0].mxu0
    %1301 = vmatprep.mubr.f32.mxu0 0.0
    %1302 = vmatmul.mubr.f32.gmra.mrb[0].mxu0 %v406
    %v1303 = vpop.f32.mrb[0].mxu0
    %v1304 = vadd.f32 0.0, %v1303
    %v1305 = vpop.f32.mrb[0].mxu0
    %1306 = vmatprep.mubr.f32.mxu0 0.0
    %1307 = vmatmul.mubr.f32.gmra.mrb[0].mxu0 %v409
    %v1308 = vpop.f32.mrb[0].mxu0
    %v1309 = vadd.f32 0.0, %v1308
    %v1310 = vpop.f32.mrb[0].mxu0
    %1311 = vmatprep.mubr.f32.mxu0 0.0
    %1312 = vmatmul.mubr.f32.gmra.mrb[0].mxu0 %v412
    %v1313 = vpop.f32.mrb[0].mxu0
    %v1314 = vadd.f32 0.0, %v1313
    %v1315 = vpop.f32.mrb[0].mxu0
    %1316 = vdwg.mxu0
    %s1317 = scalar_lea.vmem [#allocation2], 24
    %v1318 = vld [vmem:[%s1317] sm:$0xff]
    %s1319 = scalar_lea.vmem [#allocation2], 32
    %v1320 = vld [vmem:[%s1319] sm:$0xff]
    %v1324 = vrot.slane %v1289, 4
    %v1325 = vrot.slane %v1294, 4
    %v1326 = vsel %vm525, %v1324, %v1325
    %v1327 = vrot.slane %v1299, 4
    %v1328 = vsel %vm525, %v1325, %v1327
    %v1329 = vsel %vm531, %v1326, 0
    %v1331 = vsel %vm531, %v1328, 0
    %v1333 = vsel %vm531, %v1327, 0
    %1335 = vmatprep.subr.mxu0 0.0
    %1336 = vmatpush1.msra.mxu0 %v1320
    %1337 = vmatprep.subr.mxu0 0.0
    %1338 = vmatpush1.msra.mxu0 0.0
    %1339 = vmatprep.subr.mxu0 0.0
    %1340 = vmatpush1.msra.mxu0 0.0
    %1341 = vmatprep.subr.mxu0 0.0
    %1342 = vmatpush1.msra.mxu0 0.0
    %1343 = vmatprep.subr.mxu0 0.0
    %1344 = vmatpush1.msra.mxu0 0.0
    %1345 = vmatprep.subr.mxu0 0.0
    %1346 = vmatpush1.msra.mxu0 0.0
    %1347 = vmatprep.subr.mxu0 0.0
    %1348 = vmatpush1.msra.mxu0 0.0
    %1349 = vmatprep.subr.mxu0 0.0
    %1350 = vmatpush1.msra.mxu0 0.0
    %1351 = vmatprep.subr.mxu0 0.0
    %1352 = vmatpush1.msra.mxu0 0.0
    %1353 = vmatprep.subr.mxu0 0.0
    %1354 = vmatpush1.msra.mxu0 0.0
    %1355 = vmatprep.subr.mxu0 0.0
    %1356 = vmatpush1.msra.mxu0 0.0
    %1357 = vmatprep.subr.mxu0 0.0
    %1358 = vmatpush1.msra.mxu0 0.0
    %1359 = vmatprep.subr.mxu0 0.0
    %1360 = vmatpush1.msra.mxu0 0.0
    %1361 = vmatprep.subr.mxu0 0.0
    %1362 = vmatpush1.msra.mxu0 0.0
    %1363 = vmatprep.subr.mxu0 0.0
    %1364 = vmatpush1.msra.mxu0 0.0
    %1365 = vmatprep.subr.mxu0 0.0
    %1366 = vmatpush1.msra.mxu0 0.0
    %1367 = vmatprep.subr.mxu0 0.0
    %1368 = vmatpush1.msra.mxu0 0.0
    %1369 = vmatprep.subr.mxu0 0.0
    %1370 = vmatpush1.msra.mxu0 0.0
    %1371 = vmatprep.subr.mxu0 0.0
    %1372 = vmatpush1.msra.mxu0 0.0
    %1373 = vmatprep.subr.mxu0 0.0
    %1374 = vmatpush1.msra.mxu0 0.0
    %1375 = vmatprep.subr.mxu0 0.0
    %1376 = vmatpush1.msra.mxu0 0.0
    %1377 = vmatprep.subr.mxu0 0.0
    %1378 = vmatpush1.msra.mxu0 0.0
    %1379 = vmatprep.subr.mxu0 0.0
    %1380 = vmatpush1.msra.mxu0 0.0
    %1381 = vmatprep.subr.mxu0 0.0
    %1382 = vmatpush1.msra.mxu0 0.0
    %1383 = vmatprep.subr.mxu0 0.0
    %1384 = vmatpush1.msra.mxu0 0.0
    %1385 = vmatprep.subr.mxu0 0.0
    %1386 = vmatpush1.msra.mxu0 0.0
    %1387 = vmatprep.subr.mxu0 0.0
    %1388 = vmatpush1.msra.mxu0 0.0
    %1389 = vmatprep.subr.mxu0 0.0
    %1390 = vmatpush1.msra.mxu0 0.0
    %1391 = vmatprep.subr.mxu0 0.0
    %1392 = vmatpush1.msra.mxu0 0.0
    %1393 = vmatprep.subr.mxu0 0.0
    %1394 = vmatpush1.msra.mxu0 0.0
    %1395 = vmatprep.subr.mxu0 0.0
    %1396 = vmatpush1.msra.mxu0 0.0
    %1397 = vmatprep.subr.mxu0 0.0
    %1398 = vmatpush1.msra.mxu0 0.0
    %1399 = vmatprep.mubr.f32.mxu0 0.0
    %1400 = vmatmul.mubr.f32.gmra.mrb[0].mxu0 %v1329
    %v1401 = vpop.f32.mrb[0].mxu0
    %v1402 = vadd.f32 0.0, %v1401
    %v1403 = vpop.f32.mrb[0].mxu0
    %1404 = vmatprep.mubr.f32.mxu0 0.0
    %1405 = vmatmul.mubr.f32.gmra.mrb[0].mxu0 %v1331
    %v1406 = vpop.f32.mrb[0].mxu0
    %v1407 = vadd.f32 0.0, %v1406
    %v1408 = vpop.f32.mrb[0].mxu0
    %1409 = vmatprep.mubr.f32.mxu0 0.0
    %1410 = vmatmul.mubr.f32.gmra.mrb[0].mxu0 %v1333
    %v1411 = vpop.f32.mrb[0].mxu0
    %v1412 = vadd.f32 0.0, %v1411
    %v1413 = vpop.f32.mrb[0].mxu0
    %1414 = vdwg.mxu0
    %v1416 = vsel %vm531, %v1279, 0
    %v1419 = vsel %vm531, %v1284, 0
    %v1421 = vsel %vm531, %v1289, 0
    %1423 = vmatprep.subr.mxu0 0.0
    %1424 = vmatpush1.msra.mxu0 %v1318
    %1425 = vmatprep.subr.mxu0 0.0
    %1426 = vmatpush1.msra.mxu0 0.0
    %1427 = vmatprep.subr.mxu0 0.0
    %1428 = vmatpush1.msra.mxu0 0.0
    %1429 = vmatprep.subr.mxu0 0.0
    %1430 = vmatpush1.msra.mxu0 0.0
    %1431 = vmatprep.subr.mxu0 0.0
    %1432 = vmatpush1.msra.mxu0 0.0
    %1433 = vmatprep.subr.mxu0 0.0
    %1434 = vmatpush1.msra.mxu0 0.0
    %1435 = vmatprep.subr.mxu0 0.0
    %1436 = vmatpush1.msra.mxu0 0.0
    %1437 = vmatprep.subr.mxu0 0.0
    %1438 = vmatpush1.msra.mxu0 0.0
    %1439 = vmatprep.subr.mxu0 0.0
    %1440 = vmatpush1.msra.mxu0 0.0
    %1441 = vmatprep.subr.mxu0 0.0
    %1442 = vmatpush1.msra.mxu0 0.0
    %1443 = vmatprep.subr.mxu0 0.0
    %1444 = vmatpush1.msra.mxu0 0.0
    %1445 = vmatprep.subr.mxu0 0.0
    %1446 = vmatpush1.msra.mxu0 0.0
    %1447 = vmatprep.subr.mxu0 0.0
    %1448 = vmatpush1.msra.mxu0 0.0
    %1449 = vmatprep.subr.mxu0 0.0
    %1450 = vmatpush1.msra.mxu0 0.0
    %1451 = vmatprep.subr.mxu0 0.0
    %1452 = vmatpush1.msra.mxu0 0.0
    %1453 = vmatprep.subr.mxu0 0.0
    %1454 = vmatpush1.msra.mxu0 0.0
    %1455 = vmatprep.subr.mxu0 0.0
    %1456 = vmatpush1.msra.mxu0 0.0
    %1457 = vmatprep.subr.mxu0 0.0
    %1458 = vmatpush1.msra.mxu0 0.0
    %1459 = vmatprep.subr.mxu0 0.0
    %1460 = vmatpush1.msra.mxu0 0.0
    %1461 = vmatprep.subr.mxu0 0.0
    %1462 = vmatpush1.msra.mxu0 0.0
    %1463 = vmatprep.subr.mxu0 0.0
    %1464 = vmatpush1.msra.mxu0 0.0
    %1465 = vmatprep.subr.mxu0 0.0
    %1466 = vmatpush1.msra.mxu0 0.0
    %1467 = vmatprep.subr.mxu0 0.0
    %1468 = vmatpush1.msra.mxu0 0.0
    %1469 = vmatprep.subr.mxu0 0.0
    %1470 = vmatpush1.msra.mxu0 0.0
    %1471 = vmatprep.subr.mxu0 0.0
    %1472 = vmatpush1.msra.mxu0 0.0
    %1473 = vmatprep.subr.mxu0 0.0
    %1474 = vmatpush1.msra.mxu0 0.0
    %1475 = vmatprep.subr.mxu0 0.0
    %1476 = vmatpush1.msra.mxu0 0.0
    %1477 = vmatprep.subr.mxu0 0.0
    %1478 = vmatpush1.msra.mxu0 0.0
    %1479 = vmatprep.subr.mxu0 0.0
    %1480 = vmatpush1.msra.mxu0 0.0
    %1481 = vmatprep.subr.mxu0 0.0
    %1482 = vmatpush1.msra.mxu0 0.0
    %1483 = vmatprep.subr.mxu0 0.0
    %1484 = vmatpush1.msra.mxu0 0.0
    %1485 = vmatprep.subr.mxu0 0.0
    %1486 = vmatpush1.msra.mxu0 0.0
    %1487 = vmatprep.mubr.f32.mxu0 0.0
    %1488 = vmatmul.mubr.f32.gmra.mrb[0].mxu0 %v1416
    %v1489 = vpop.f32.mrb[0].mxu0
    %v1490 = vadd.f32 %v1402, %v1489
    %v1491 = vpop.f32.mrb[0].mxu0
    %1492 = vmatprep.mubr.f32.mxu0 0.0
    %1493 = vmatmul.mubr.f32.gmra.mrb[0].mxu0 %v1419
    %v1494 = vpop.f32.mrb[0].mxu0
    %v1495 = vadd.f32 %v1407, %v1494
    %v1496 = vpop.f32.mrb[0].mxu0
    %1497 = vmatprep.mubr.f32.mxu0 0.0
    %1498 = vmatmul.mubr.f32.gmra.mrb[0].mxu0 %v1421
    %v1499 = vpop.f32.mrb[0].mxu0
    %v1500 = vadd.f32 %v1412, %v1499
    %v1501 = vpop.f32.mrb[0].mxu0
    %1502 = vdwg.mxu0
    %s1503 = scalar_lea.vmem [#allocation2], 40
    %v1504 = vld [vmem:[%s1503] sm:$0xff]
    %v1506 = vsel %vm531, %v1304, 0
    %v1509 = vsel %vm531, %v1309, 0
    %v1512 = vsel %vm531, %v1314, 0
    %1514 = vmatprep.subr.mxu0 0.0
    %1515 = vmatpush1.msra.mxu0 %v1504
    %1516 = vmatprep.subr.mxu0 0.0
    %1517 = vmatpush1.msra.mxu0 0.0
    %1518 = vmatprep.subr.mxu0 0.0
    %1519 = vmatpush1.msra.mxu0 0.0
    %1520 = vmatprep.subr.mxu0 0.0
    %1521 = vmatpush1.msra.mxu0 0.0
    %1522 = vmatprep.subr.mxu0 0.0
    %1523 = vmatpush1.msra.mxu0 0.0
    %1524 = vmatprep.subr.mxu0 0.0
    %1525 = vmatpush1.msra.mxu0 0.0
    %1526 = vmatprep.subr.mxu0 0.0
    %1527 = vmatpush1.msra.mxu0 0.0
    %1528 = vmatprep.subr.mxu0 0.0
    %1529 = vmatpush1.msra.mxu0 0.0
    %1530 = vmatprep.subr.mxu0 0.0
    %1531 = vmatpush1.msra.mxu0 0.0
    %1532 = vmatprep.subr.mxu0 0.0
    %1533 = vmatpush1.msra.mxu0 0.0
    %1534 = vmatprep.subr.mxu0 0.0
    %1535 = vmatpush1.msra.mxu0 0.0
    %1536 = vmatprep.subr.mxu0 0.0
    %1537 = vmatpush1.msra.mxu0 0.0
    %1538 = vmatprep.subr.mxu0 0.0
    %1539 = vmatpush1.msra.mxu0 0.0
    %1540 = vmatprep.subr.mxu0 0.0
    %1541 = vmatpush1.msra.mxu0 0.0
    %1542 = vmatprep.subr.mxu0 0.0
    %1543 = vmatpush1.msra.mxu0 0.0
    %1544 = vmatprep.subr.mxu0 0.0
    %1545 = vmatpush1.msra.mxu0 0.0
    %1546 = vmatprep.subr.mxu0 0.0
    %1547 = vmatpush1.msra.mxu0 0.0
    %1548 = vmatprep.subr.mxu0 0.0
    %1549 = vmatpush1.msra.mxu0 0.0
    %1550 = vmatprep.subr.mxu0 0.0
    %1551 = vmatpush1.msra.mxu0 0.0
    %1552 = vmatprep.subr.mxu0 0.0
    %1553 = vmatpush1.msra.mxu0 0.0
    %1554 = vmatprep.subr.mxu0 0.0
    %1555 = vmatpush1.msra.mxu0 0.0
    %1556 = vmatprep.subr.mxu0 0.0
    %1557 = vmatpush1.msra.mxu0 0.0
    %1558 = vmatprep.subr.mxu0 0.0
    %1559 = vmatpush1.msra.mxu0 0.0
    %1560 = vmatprep.subr.mxu0 0.0
    %1561 = vmatpush1.msra.mxu0 0.0
    %1562 = vmatprep.subr.mxu0 0.0
    %1563 = vmatpush1.msra.mxu0 0.0
    %1564 = vmatprep.subr.mxu0 0.0
    %1565 = vmatpush1.msra.mxu0 0.0
    %1566 = vmatprep.subr.mxu0 0.0
    %1567 = vmatpush1.msra.mxu0 0.0
    %1568 = vmatprep.subr.mxu0 0.0
    %1569 = vmatpush1.msra.mxu0 0.0
    %1570 = vmatprep.subr.mxu0 0.0
    %1571 = vmatpush1.msra.mxu0 0.0
    %1572 = vmatprep.subr.mxu0 0.0
    %1573 = vmatpush1.msra.mxu0 0.0
    %1574 = vmatprep.subr.mxu0 0.0
    %1575 = vmatpush1.msra.mxu0 0.0
    %1576 = vmatprep.subr.mxu0 0.0
    %1577 = vmatpush1.msra.mxu0 0.0
    %1578 = vmatprep.mubr.f32.mxu0 0.0
    %1579 = vmatmul.mubr.f32.gmra.mrb[0].mxu0 %v1506
    %v1580 = vpop.f32.mrb[0].mxu0
    %v1581 = vadd.f32 0.0, %v1580
    %v1582 = vpop.f32.mrb[0].mxu0
    %1583 = vmatprep.mubr.f32.mxu0 0.0
    %1584 = vmatmul.mubr.f32.gmra.mrb[0].mxu0 %v1509
    %v1585 = vpop.f32.mrb[0].mxu0
    %v1586 = vadd.f32 0.0, %v1585
    %v1587 = vpop.f32.mrb[0].mxu0
    %1588 = vmatprep.mubr.f32.mxu0 0.0
    %1589 = vmatmul.mubr.f32.gmra.mrb[0].mxu0 %v1512
    %v1590 = vpop.f32.mrb[0].mxu0
    %v1591 = vadd.f32 0.0, %v1590
    %v1592 = vpop.f32.mrb[0].mxu0
    %1593 = vdwg.mxu0
    %v1594 = vadd.f32 %v1490, %v1581
    %v1595 = vadd.f32 %v1495, %v1586
    %v1596 = vadd.f32 %v1500, %v1591
    %s1597 = scalar_lea.vmem [#allocation5], 1
    %v1598 = vld [vmem:[%s1597] sm:$0x1]
    %v1600 = vlaneseq
    %v1601 = vshrl.u32 %v1600, 7
    %v1602 = vsub.s32 0, %v1601
    %v1603 = vrot.slane %v1598, %v1602
    %v1605 = vadd.f32 %v1594, %v1603
    %v1606 = vadd.f32 %v1595, %v1603
    %v1607 = vadd.f32 %v1596, %v1603
    %vm1608 = vcmp.ge.f32.partialorder %v1605, 0.0
    %vm1609 = vcmp.ge.f32.partialorder %v1606, 0.0
    %vm1610 = vcmp.ge.f32.partialorder %v1607, 0.0
    %v1611 = vmul.f32 %v1605, 0.01
    %v1612 = vmul.f32 %v1606, 0.01
    %v1613 = vmul.f32 %v1607, 0.01
    %v1614 = vsel %vm1608, %v1605, %v1611
    %v1615 = vsel %vm1609, %v1606, %v1612
    %v1616 = vsel %vm1610, %v1607, %v1613
    %v1618 = vsel %vm525, %v1616, 0
    %1620 = vmatprep.subr.mxu0 0.0
    %1621 = vmatpush1.msra.mxu0 %v1614
    %1622 = vmatprep.subr.mxu0 0.0
    %1623 = vmatpush1.msra.mxu0 %v1615
    %1624 = vmatprep.subr.mxu0 0.0
    %1625 = vmatpush1.msra.mxu0 %v1618
    %1626 = vmatprep.subr.mxu0 0.0
    %1627 = vmatpush1.msra.mxu0 0.0
    %1628 = vmatprep.subr.mxu0 0.0
    %1629 = vmatpush1.msra.mxu0 0.0
    %1630 = vmatprep.subr.mxu0 0.0
    %1631 = vmatpush1.msra.mxu0 0.0
    %1632 = vmatprep.subr.mxu0 0.0
    %1633 = vmatpush1.msra.mxu0 0.0
    %1634 = vmatprep.subr.mxu0 0.0
    %1635 = vmatpush1.msra.mxu0 0.0
    %1636 = vmatprep.subr.mxu0 0.0
    %1637 = vmatpush1.msra.mxu0 0.0
    %1638 = vmatprep.subr.mxu0 0.0
    %1639 = vmatpush1.msra.mxu0 0.0
    %1640 = vmatprep.subr.mxu0 0.0
    %1641 = vmatpush1.msra.mxu0 0.0
    %1642 = vmatprep.subr.mxu0 0.0
    %1643 = vmatpush1.msra.mxu0 0.0
    %1644 = vmatprep.subr.mxu0 0.0
    %1645 = vmatpush1.msra.mxu0 0.0
    %1646 = vmatprep.subr.mxu0 0.0
    %1647 = vmatpush1.msra.mxu0 0.0
    %1648 = vmatprep.subr.mxu0 0.0
    %1649 = vmatpush1.msra.mxu0 0.0
    %1650 = vmatprep.subr.mxu0 0.0
    %1651 = vmatpush1.msra.mxu0 0.0
    %1652 = vmatprep.subr.mxu0 0.0
    %1653 = vmatpush1.msra.mxu0 0.0
    %1654 = vmatprep.subr.mxu0 0.0
    %1655 = vmatpush1.msra.mxu0 0.0
    %1656 = vmatprep.subr.mxu0 0.0
    %1657 = vmatpush1.msra.mxu0 0.0
    %1658 = vmatprep.subr.mxu0 0.0
    %1659 = vmatpush1.msra.mxu0 0.0
    %1660 = vmatprep.subr.mxu0 0.0
    %1661 = vmatpush1.msra.mxu0 0.0
    %1662 = vmatprep.subr.mxu0 0.0
    %1663 = vmatpush1.msra.mxu0 0.0
    %1664 = vmatprep.subr.mxu0 0.0
    %1665 = vmatpush1.msra.mxu0 0.0
    %1666 = vmatprep.subr.mxu0 0.0
    %1667 = vmatpush1.msra.mxu0 0.0
    %1668 = vmatprep.subr.mxu0 0.0
    %1669 = vmatpush1.msra.mxu0 0.0
    %1670 = vmatprep.subr.mxu0 0.0
    %1671 = vmatpush1.msra.mxu0 0.0
    %1672 = vmatprep.subr.mxu0 0.0
    %1673 = vmatpush1.msra.mxu0 0.0
    %1674 = vmatprep.subr.mxu0 0.0
    %1675 = vmatpush1.msra.mxu0 0.0
    %1676 = vmatprep.subr.mxu0 0.0
    %1677 = vmatpush1.msra.mxu0 0.0
    %1678 = vmatprep.subr.mxu0 0.0
    %1679 = vmatpush1.msra.mxu0 0.0
    %1680 = vmatprep.subr.mxu0 0.0
    %1681 = vmatpush1.msra.mxu0 0.0
    %1682 = vmatprep.subr.mxu0 0.0
    %1683 = vmatpush1.msra.mxu0 0.0
    %1684 = vmatprep.mubr.f32.mxu0 0.0
    %1685 = vmatmul.mubr.f32.gmra.mrb[0].mxu0 %v821
    %v1686 = vpop.f32.mrb[0].mxu0
    %v1687 = vadd.f32 0.0, %v1686
    %v1688 = vpop.f32.mrb[0].mxu0
    %1689 = vmatprep.mubr.f32.mxu0 0.0
    %1690 = vmatmul.mubr.f32.gmra.mrb[0].mxu0 %v824
    %v1691 = vpop.f32.mrb[0].mxu0
    %v1692 = vadd.f32 0.0, %v1691
    %v1693 = vpop.f32.mrb[0].mxu0
    %1694 = vmatprep.mubr.f32.mxu0 0.0
    %1695 = vmatmul.mubr.f32.gmra.mrb[0].mxu0 %v827
    %v1696 = vpop.f32.mrb[0].mxu0
    %v1697 = vadd.f32 0.0, %v1696
    %v1698 = vpop.f32.mrb[0].mxu0
    %1699 = vmatprep.mubr.f32.mxu0 0.0
    %1700 = vmatmul.mubr.f32.gmra.mrb[0].mxu0 %v830
    %v1701 = vpop.f32.mrb[0].mxu0
    %v1702 = vadd.f32 0.0, %v1701
    %v1703 = vpop.f32.mrb[0].mxu0
    %1704 = vmatprep.mubr.f32.mxu0 0.0
    %1705 = vmatmul.mubr.f32.gmra.mrb[0].mxu0 %v833
    %v1706 = vpop.f32.mrb[0].mxu0
    %v1707 = vadd.f32 0.0, %v1706
    %v1708 = vpop.f32.mrb[0].mxu0
    %1709 = vmatprep.mubr.f32.mxu0 0.0
    %1710 = vmatmul.mubr.f32.gmra.mrb[0].mxu0 %v836
    %v1711 = vpop.f32.mrb[0].mxu0
    %v1712 = vadd.f32 0.0, %v1711
    %v1713 = vpop.f32.mrb[0].mxu0
    %1714 = vdwg.mxu0
    %s1715 = scalar_lea.vmem [#allocation7], 96
    %v1716 = vld [vmem:[%s1715] sm:$0xff]
    %v1717 = vld [vmem:[%s1715 + $0x8] sm:$0xff]
    %v1718 = vld [vmem:[%s1715 + $0x10] sm:$0xff]
    %v1719 = vld [vmem:[%s1715 + $0x18] sm:$0xff]
    %s1720 = scalar_lea.vmem [#allocation7], 128
    %v1721 = vld [vmem:[%s1720] sm:$0xff]
    %v1722 = vld [vmem:[%s1720 + $0x8] sm:$0xff]
    %v1723 = vld [vmem:[%s1720 + $0x10] sm:$0xff]
    %v1724 = vld [vmem:[%s1720 + $0x18] sm:$0xff]
    %v1726 = vsel %vm226, %v1697, 0
    %v1729 = vsel %vm226, %v1702, 0
    %1731 = vmatprep.subr.mxu0 0.0
    %1732 = vmatpush1.msra.mxu0 %v1721
    %1733 = vmatprep.subr.mxu0 0.0
    %1734 = vmatpush1.msra.mxu0 %v1722
    %1735 = vmatprep.subr.mxu0 0.0
    %1736 = vmatpush1.msra.mxu0 %v1723
    %1737 = vmatprep.subr.mxu0 0.0
    %1738 = vmatpush1.msra.mxu0 %v1724
    %1739 = vmatprep.subr.mxu0 0.0
    %1740 = vmatpush1.msra.mxu0 0.0
    %1741 = vmatprep.subr.mxu0 0.0
    %1742 = vmatpush1.msra.mxu0 0.0
    %1743 = vmatprep.subr.mxu0 0.0
    %1744 = vmatpush1.msra.mxu0 0.0
    %1745 = vmatprep.subr.mxu0 0.0
    %1746 = vmatpush1.msra.mxu0 0.0
    %1747 = vmatprep.subr.mxu0 0.0
    %1748 = vmatpush1.msra.mxu0 0.0
    %1749 = vmatprep.subr.mxu0 0.0
    %1750 = vmatpush1.msra.mxu0 0.0
    %1751 = vmatprep.subr.mxu0 0.0
    %1752 = vmatpush1.msra.mxu0 0.0
    %1753 = vmatprep.subr.mxu0 0.0
    %1754 = vmatpush1.msra.mxu0 0.0
    %1755 = vmatprep.subr.mxu0 0.0
    %1756 = vmatpush1.msra.mxu0 0.0
    %1757 = vmatprep.subr.mxu0 0.0
    %1758 = vmatpush1.msra.mxu0 0.0
    %1759 = vmatprep.subr.mxu0 0.0
    %1760 = vmatpush1.msra.mxu0 0.0
    %1761 = vmatprep.subr.mxu0 0.0
    %1762 = vmatpush1.msra.mxu0 0.0
    %1763 = vmatprep.subr.mxu0 0.0
    %1764 = vmatpush1.msra.mxu0 0.0
    %1765 = vmatprep.subr.mxu0 0.0
    %1766 = vmatpush1.msra.mxu0 0.0
    %1767 = vmatprep.subr.mxu0 0.0
    %1768 = vmatpush1.msra.mxu0 0.0
    %1769 = vmatprep.subr.mxu0 0.0
    %1770 = vmatpush1.msra.mxu0 0.0
    %1771 = vmatprep.subr.mxu0 0.0
    %1772 = vmatpush1.msra.mxu0 0.0
    %1773 = vmatprep.subr.mxu0 0.0
    %1774 = vmatpush1.msra.mxu0 0.0
    %1775 = vmatprep.subr.mxu0 0.0
    %1776 = vmatpush1.msra.mxu0 0.0
    %1777 = vmatprep.subr.mxu0 0.0
    %1778 = vmatpush1.msra.mxu0 0.0
    %1779 = vmatprep.subr.mxu0 0.0
    %1780 = vmatpush1.msra.mxu0 0.0
    %1781 = vmatprep.subr.mxu0 0.0
    %1782 = vmatpush1.msra.mxu0 0.0
    %1783 = vmatprep.subr.mxu0 0.0
    %1784 = vmatpush1.msra.mxu0 0.0
    %1785 = vmatprep.subr.mxu0 0.0
    %1786 = vmatpush1.msra.mxu0 0.0
    %1787 = vmatprep.subr.mxu0 0.0
    %1788 = vmatpush1.msra.mxu0 0.0
    %1789 = vmatprep.subr.mxu0 0.0
    %1790 = vmatpush1.msra.mxu0 0.0
    %1791 = vmatprep.subr.mxu0 0.0
    %1792 = vmatpush1.msra.mxu0 0.0
    %1793 = vmatprep.subr.mxu0 0.0
    %1794 = vmatpush1.msra.mxu0 0.0
    %1795 = vmatprep.mubr.f32.mxu0 0.0
    %1796 = vmatmul.mubr.f32.gmra.mrb[0].mxu0 %v1726
    %v1797 = vpop.f32.mrb[0].mxu0
    %v1798 = vadd.f32 0.0, %v1797
    %v1799 = vpop.f32.mrb[0].mxu0
    %1800 = vmatprep.mubr.f32.mxu0 0.0
    %1801 = vmatmul.mubr.f32.gmra.mrb[0].mxu0 %v1729
    %v1802 = vpop.f32.mrb[0].mxu0
    %v1803 = vadd.f32 0.0, %v1802
    %v1804 = vpop.f32.mrb[0].mxu0
    %1805 = vdwg.mxu0
    %v1807 = vsel %vm226, %v1687, 0
    %v1810 = vsel %vm226, %v1692, 0
    %1812 = vmatprep.subr.mxu0 0.0
    %1813 = vmatpush1.msra.mxu0 %v1716
    %1814 = vmatprep.subr.mxu0 0.0
    %1815 = vmatpush1.msra.mxu0 %v1717
    %1816 = vmatprep.subr.mxu0 0.0
    %1817 = vmatpush1.msra.mxu0 %v1718
    %1818 = vmatprep.subr.mxu0 0.0
    %1819 = vmatpush1.msra.mxu0 %v1719
    %1820 = vmatprep.subr.mxu0 0.0
    %1821 = vmatpush1.msra.mxu0 0.0
    %1822 = vmatprep.subr.mxu0 0.0
    %1823 = vmatpush1.msra.mxu0 0.0
    %1824 = vmatprep.subr.mxu0 0.0
    %1825 = vmatpush1.msra.mxu0 0.0
    %1826 = vmatprep.subr.mxu0 0.0
    %1827 = vmatpush1.msra.mxu0 0.0
    %1828 = vmatprep.subr.mxu0 0.0
    %1829 = vmatpush1.msra.mxu0 0.0
    %1830 = vmatprep.subr.mxu0 0.0
    %1831 = vmatpush1.msra.mxu0 0.0
    %1832 = vmatprep.subr.mxu0 0.0
    %1833 = vmatpush1.msra.mxu0 0.0
    %1834 = vmatprep.subr.mxu0 0.0
    %1835 = vmatpush1.msra.mxu0 0.0
    %1836 = vmatprep.subr.mxu0 0.0
    %1837 = vmatpush1.msra.mxu0 0.0
    %1838 = vmatprep.subr.mxu0 0.0
    %1839 = vmatpush1.msra.mxu0 0.0
    %1840 = vmatprep.subr.mxu0 0.0
    %1841 = vmatpush1.msra.mxu0 0.0
    %1842 = vmatprep.subr.mxu0 0.0
    %1843 = vmatpush1.msra.mxu0 0.0
    %1844 = vmatprep.subr.mxu0 0.0
    %1845 = vmatpush1.msra.mxu0 0.0
    %1846 = vmatprep.subr.mxu0 0.0
    %1847 = vmatpush1.msra.mxu0 0.0
    %1848 = vmatprep.subr.mxu0 0.0
    %1849 = vmatpush1.msra.mxu0 0.0
    %1850 = vmatprep.subr.mxu0 0.0
    %1851 = vmatpush1.msra.mxu0 0.0
    %1852 = vmatprep.subr.mxu0 0.0
    %1853 = vmatpush1.msra.mxu0 0.0
    %1854 = vmatprep.subr.mxu0 0.0
    %1855 = vmatpush1.msra.mxu0 0.0
    %1856 = vmatprep.subr.mxu0 0.0
    %1857 = vmatpush1.msra.mxu0 0.0
    %1858 = vmatprep.subr.mxu0 0.0
    %1859 = vmatpush1.msra.mxu0 0.0
    %1860 = vmatprep.subr.mxu0 0.0
    %1861 = vmatpush1.msra.mxu0 0.0
    %1862 = vmatprep.subr.mxu0 0.0
    %1863 = vmatpush1.msra.mxu0 0.0
    %1864 = vmatprep.subr.mxu0 0.0
    %1865 = vmatpush1.msra.mxu0 0.0
    %1866 = vmatprep.subr.mxu0 0.0
    %1867 = vmatpush1.msra.mxu0 0.0
    %1868 = vmatprep.subr.mxu0 0.0
    %1869 = vmatpush1.msra.mxu0 0.0
    %1870 = vmatprep.subr.mxu0 0.0
    %1871 = vmatpush1.msra.mxu0 0.0
    %1872 = vmatprep.subr.mxu0 0.0
    %1873 = vmatpush1.msra.mxu0 0.0
    %1874 = vmatprep.subr.mxu0 0.0
    %1875 = vmatpush1.msra.mxu0 0.0
    %1876 = vmatprep.mubr.f32.mxu0 0.0
    %1877 = vmatmul.mubr.f32.gmra.mrb[0].mxu0 %v1807
    %v1878 = vpop.f32.mrb[0].mxu0
    %v1879 = vadd.f32 %v1798, %v1878
    %v1880 = vpop.f32.mrb[0].mxu0
    %1881 = vmatprep.mubr.f32.mxu0 0.0
    %1882 = vmatmul.mubr.f32.gmra.mrb[0].mxu0 %v1810
    %v1883 = vpop.f32.mrb[0].mxu0
    %v1884 = vadd.f32 %v1803, %v1883
    %v1885 = vpop.f32.mrb[0].mxu0
    %1886 = vdwg.mxu0
    %s1887 = scalar_lea.vmem [#allocation7], 160
    %v1888 = vld [vmem:[%s1887] sm:$0xff]
    %v1889 = vld [vmem:[%s1887 + $0x8] sm:$0xff]
    %v1890 = vld [vmem:[%s1887 + $0x10] sm:$0xff]
    %v1891 = vld [vmem:[%s1887 + $0x18] sm:$0xff]
    %v1893 = vsel %vm226, %v1707, 0
    %v1896 = vsel %vm226, %v1712, 0
    %1898 = vmatprep.subr.mxu0 0.0
    %1899 = vmatpush1.msra.mxu0 %v1888
    %1900 = vmatprep.subr.mxu0 0.0
    %1901 = vmatpush1.msra.mxu0 %v1889
    %1902 = vmatprep.subr.mxu0 0.0
    %1903 = vmatpush1.msra.mxu0 %v1890
    %1904 = vmatprep.subr.mxu0 0.0
    %1905 = vmatpush1.msra.mxu0 %v1891
    %1906 = vmatprep.subr.mxu0 0.0
    %1907 = vmatpush1.msra.mxu0 0.0
    %1908 = vmatprep.subr.mxu0 0.0
    %1909 = vmatpush1.msra.mxu0 0.0
    %1910 = vmatprep.subr.mxu0 0.0
    %1911 = vmatpush1.msra.mxu0 0.0
    %1912 = vmatprep.subr.mxu0 0.0
    %1913 = vmatpush1.msra.mxu0 0.0
    %1914 = vmatprep.subr.mxu0 0.0
    %1915 = vmatpush1.msra.mxu0 0.0
    %1916 = vmatprep.subr.mxu0 0.0
    %1917 = vmatpush1.msra.mxu0 0.0
    %1918 = vmatprep.subr.mxu0 0.0
    %1919 = vmatpush1.msra.mxu0 0.0
    %1920 = vmatprep.subr.mxu0 0.0
    %1921 = vmatpush1.msra.mxu0 0.0
    %1922 = vmatprep.subr.mxu0 0.0
    %1923 = vmatpush1.msra.mxu0 0.0
    %1924 = vmatprep.subr.mxu0 0.0
    %1925 = vmatpush1.msra.mxu0 0.0
    %1926 = vmatprep.subr.mxu0 0.0
    %1927 = vmatpush1.msra.mxu0 0.0
    %1928 = vmatprep.subr.mxu0 0.0
    %1929 = vmatpush1.msra.mxu0 0.0
    %1930 = vmatprep.subr.mxu0 0.0
    %1931 = vmatpush1.msra.mxu0 0.0
    %1932 = vmatprep.subr.mxu0 0.0
    %1933 = vmatpush1.msra.mxu0 0.0
    %1934 = vmatprep.subr.mxu0 0.0
    %1935 = vmatpush1.msra.mxu0 0.0
    %1936 = vmatprep.subr.mxu0 0.0
    %1937 = vmatpush1.msra.mxu0 0.0
    %1938 = vmatprep.subr.mxu0 0.0
    %1939 = vmatpush1.msra.mxu0 0.0
    %1940 = vmatprep.subr.mxu0 0.0
    %1941 = vmatpush1.msra.mxu0 0.0
    %1942 = vmatprep.subr.mxu0 0.0
    %1943 = vmatpush1.msra.mxu0 0.0
    %1944 = vmatprep.subr.mxu0 0.0
    %1945 = vmatpush1.msra.mxu0 0.0
    %1946 = vmatprep.subr.mxu0 0.0
    %1947 = vmatpush1.msra.mxu0 0.0
    %1948 = vmatprep.subr.mxu0 0.0
    %1949 = vmatpush1.msra.mxu0 0.0
    %1950 = vmatprep.subr.mxu0 0.0
    %1951 = vmatpush1.msra.mxu0 0.0
    %1952 = vmatprep.subr.mxu0 0.0
    %1953 = vmatpush1.msra.mxu0 0.0
    %1954 = vmatprep.subr.mxu0 0.0
    %1955 = vmatpush1.msra.mxu0 0.0
    %1956 = vmatprep.subr.mxu0 0.0
    %1957 = vmatpush1.msra.mxu0 0.0
    %1958 = vmatprep.subr.mxu0 0.0
    %1959 = vmatpush1.msra.mxu0 0.0
    %1960 = vmatprep.subr.mxu0 0.0
    %1961 = vmatpush1.msra.mxu0 0.0
    %1962 = vmatprep.mubr.f32.mxu0 0.0
    %1963 = vmatmul.mubr.f32.gmra.mrb[0].mxu0 %v1893
    %v1964 = vpop.f32.mrb[0].mxu0
    %v1965 = vadd.f32 0.0, %v1964
    %v1966 = vpop.f32.mrb[0].mxu0
    %1967 = vmatprep.mubr.f32.mxu0 0.0
    %1968 = vmatmul.mubr.f32.gmra.mrb[0].mxu0 %v1896
    %v1969 = vpop.f32.mrb[0].mxu0
    %v1970 = vadd.f32 0.0, %v1969
    %v1971 = vpop.f32.mrb[0].mxu0
    %1972 = vdwg.mxu0
    %v1973 = vadd.f32 %v1879, %v1965
    %v1974 = vadd.f32 %v1884, %v1970
    %s1975 = scalar_lea.vmem [#allocation8], 1
    %v1976 = vld [vmem:[%s1975] sm:$0x1]
    %v1978 = vlaneseq
    %v1979 = vshrl.u32 %v1978, 7
    %v1980 = vsub.s32 0, %v1979
    %v1981 = vrot.slane %v1976, %v1980
    %v1983 = vadd.f32 %v1973, %v1981
    %v1984 = vadd.f32 %v1974, %v1981
    %v1985 = vtanh.pop %v1983
    %v1986 = vtanh.pop %v1984
    %v1987 = vmul.f32 %v1985, 1.442695
    %v1988 = vpow.pop %v1987
    %v1989 = vmul.f32 %v1986, 1.442695
    %v1990 = vpow.pop %v1989
    %v1991 = vmul.f32 %v300, %v1988
    %v1992 = vmul.f32 %v305, %v1990
    %1993 = vmatprep.subr.mxu0 0.0
    %1994 = vmatpush1.msra.mxu0 %v1210
    %1995 = vmatprep.subr.mxu0 0.0
    %1996 = vmatpush1.msra.mxu0 %v1211
    %1997 = vmatprep.subr.mxu0 0.0
    %1998 = vmatpush1.msra.mxu0 0.0
    %1999 = vmatprep.subr.mxu0 0.0
    %2000 = vmatpush1.msra.mxu0 0.0
    %2001 = vmatprep.subr.mxu0 0.0
    %2002 = vmatpush1.msra.mxu0 0.0
    %2003 = vmatprep.subr.mxu0 0.0
    %2004 = vmatpush1.msra.mxu0 0.0
    %2005 = vmatprep.subr.mxu0 0.0
    %2006 = vmatpush1.msra.mxu0 0.0
    %2007 = vmatprep.subr.mxu0 0.0
    %2008 = vmatpush1.msra.mxu0 0.0
    %2009 = vmatprep.subr.mxu0 0.0
    %2010 = vmatpush1.msra.mxu0 0.0
    %2011 = vmatprep.subr.mxu0 0.0
    %2012 = vmatpush1.msra.mxu0 0.0
    %2013 = vmatprep.subr.mxu0 0.0
    %2014 = vmatpush1.msra.mxu0 0.0
    %2015 = vmatprep.subr.mxu0 0.0
    %2016 = vmatpush1.msra.mxu0 0.0
    %2017 = vmatprep.subr.mxu0 0.0
    %2018 = vmatpush1.msra.mxu0 0.0
    %2019 = vmatprep.subr.mxu0 0.0
    %2020 = vmatpush1.msra.mxu0 0.0
    %2021 = vmatprep.subr.mxu0 0.0
    %2022 = vmatpush1.msra.mxu0 0.0
    %2023 = vmatprep.subr.mxu0 0.0
    %2024 = vmatpush1.msra.mxu0 0.0
    %2025 = vmatprep.subr.mxu0 0.0
    %2026 = vmatpush1.msra.mxu0 0.0
    %2027 = vmatprep.subr.mxu0 0.0
    %2028 = vmatpush1.msra.mxu0 0.0
    %2029 = vmatprep.subr.mxu0 0.0
    %2030 = vmatpush1.msra.mxu0 0.0
    %2031 = vmatprep.subr.mxu0 0.0
    %2032 = vmatpush1.msra.mxu0 0.0
    %2033 = vmatprep.subr.mxu0 0.0
    %2034 = vmatpush1.msra.mxu0 0.0
    %2035 = vmatprep.subr.mxu0 0.0
    %2036 = vmatpush1.msra.mxu0 0.0
    %2037 = vmatprep.subr.mxu0 0.0
    %2038 = vmatpush1.msra.mxu0 0.0
    %2039 = vmatprep.subr.mxu0 0.0
    %2040 = vmatpush1.msra.mxu0 0.0
    %2041 = vmatprep.subr.mxu0 0.0
    %2042 = vmatpush1.msra.mxu0 0.0
    %2043 = vmatprep.subr.mxu0 0.0
    %2044 = vmatpush1.msra.mxu0 0.0
    %2045 = vmatprep.subr.mxu0 0.0
    %2046 = vmatpush1.msra.mxu0 0.0
    %2047 = vmatprep.subr.mxu0 0.0
    %2048 = vmatpush1.msra.mxu0 0.0
    %2049 = vmatprep.subr.mxu0 0.0
    %2050 = vmatpush1.msra.mxu0 0.0
    %2051 = vmatprep.subr.mxu0 0.0
    %2052 = vmatpush1.msra.mxu0 0.0
    %2053 = vmatprep.subr.mxu0 0.0
    %2054 = vmatpush1.msra.mxu0 0.0
    %2055 = vmatprep.subr.mxu0 0.0
    %2056 = vmatpush1.msra.mxu0 0.0
    %2057 = vmatprep.mubr.f32.mxu0 0.0
    %2058 = vmatmul.mubr.f32.gmra.mrb[0].mxu0 %v391
    %v2059 = vpop.f32.mrb[0].mxu0
    %v2060 = vadd.f32 0.0, %v2059
    %v2061 = vpop.f32.mrb[0].mxu0
    %2062 = vmatprep.mubr.f32.mxu0 0.0
    %2063 = vmatmul.mubr.f32.gmra.mrb[0].mxu0 %v394
    %v2064 = vpop.f32.mrb[0].mxu0
    %v2065 = vadd.f32 0.0, %v2064
    %v2066 = vpop.f32.mrb[0].mxu0
    %2067 = vmatprep.mubr.f32.mxu0 0.0
    %2068 = vmatmul.mubr.f32.gmra.mrb[0].mxu0 %v397
    %v2069 = vpop.f32.mrb[0].mxu0
    %v2070 = vadd.f32 0.0, %v2069
    %v2071 = vpop.f32.mrb[0].mxu0
    %2072 = vmatprep.mubr.f32.mxu0 0.0
    %2073 = vmatmul.mubr.f32.gmra.mrb[0].mxu0 %v400
    %v2074 = vpop.f32.mrb[0].mxu0
    %v2075 = vadd.f32 0.0, %v2074
    %v2076 = vpop.f32.mrb[0].mxu0
    %2077 = vmatprep.mubr.f32.mxu0 0.0
    %2078 = vmatmul.mubr.f32.gmra.mrb[0].mxu0 %v403
    %v2079 = vpop.f32.mrb[0].mxu0
    %v2080 = vadd.f32 0.0, %v2079
    %v2081 = vpop.f32.mrb[0].mxu0
    %2082 = vmatprep.mubr.f32.mxu0 0.0
    %2083 = vmatmul.mubr.f32.gmra.mrb[0].mxu0 %v406
    %v2084 = vpop.f32.mrb[0].mxu0
    %v2085 = vadd.f32 0.0, %v2084
    %v2086 = vpop.f32.mrb[0].mxu0
    %2087 = vmatprep.mubr.f32.mxu0 0.0
    %2088 = vmatmul.mubr.f32.gmra.mrb[0].mxu0 %v409
    %v2089 = vpop.f32.mrb[0].mxu0
    %v2090 = vadd.f32 0.0, %v2089
    %v2091 = vpop.f32.mrb[0].mxu0
    %2092 = vmatprep.mubr.f32.mxu0 0.0
    %2093 = vmatmul.mubr.f32.gmra.mrb[0].mxu0 %v412
    %v2094 = vpop.f32.mrb[0].mxu0
    %v2095 = vadd.f32 0.0, %v2094
    %v2096 = vpop.f32.mrb[0].mxu0
    %2097 = vdwg.mxu0
    %s2098 = scalar_lea.vmem [#allocation2], 72
    %v2099 = vld [vmem:[%s2098] sm:$0xff]
    %s2100 = scalar_lea.vmem [#allocation2], 80
    %v2101 = vld [vmem:[%s2100] sm:$0xff]
    %v2105 = vrot.slane %v2070, 4
    %v2106 = vrot.slane %v2075, 4
    %v2107 = vsel %vm525, %v2105, %v2106
    %v2108 = vrot.slane %v2080, 4
    %v2109 = vsel %vm525, %v2106, %v2108
    %v2110 = vsel %vm531, %v2107, 0
    %v2112 = vsel %vm531, %v2109, 0
    %v2114 = vsel %vm531, %v2108, 0
    %2116 = vmatprep.subr.mxu0 0.0
    %2117 = vmatpush1.msra.mxu0 %v2101
    %2118 = vmatprep.subr.mxu0 0.0
    %2119 = vmatpush1.msra.mxu0 0.0
    %2120 = vmatprep.subr.mxu0 0.0
    %2121 = vmatpush1.msra.mxu0 0.0
    %2122 = vmatprep.subr.mxu0 0.0
    %2123 = vmatpush1.msra.mxu0 0.0
    %2124 = vmatprep.subr.mxu0 0.0
    %2125 = vmatpush1.msra.mxu0 0.0
    %2126 = vmatprep.subr.mxu0 0.0
    %2127 = vmatpush1.msra.mxu0 0.0
    %2128 = vmatprep.subr.mxu0 0.0
    %2129 = vmatpush1.msra.mxu0 0.0
    %2130 = vmatprep.subr.mxu0 0.0
    %2131 = vmatpush1.msra.mxu0 0.0
    %2132 = vmatprep.subr.mxu0 0.0
    %2133 = vmatpush1.msra.mxu0 0.0
    %2134 = vmatprep.subr.mxu0 0.0
    %2135 = vmatpush1.msra.mxu0 0.0
    %2136 = vmatprep.subr.mxu0 0.0
    %2137 = vmatpush1.msra.mxu0 0.0
    %2138 = vmatprep.subr.mxu0 0.0
    %2139 = vmatpush1.msra.mxu0 0.0
    %2140 = vmatprep.subr.mxu0 0.0
    %2141 = vmatpush1.msra.mxu0 0.0
    %2142 = vmatprep.subr.mxu0 0.0
    %2143 = vmatpush1.msra.mxu0 0.0
    %2144 = vmatprep.subr.mxu0 0.0
    %2145 = vmatpush1.msra.mxu0 0.0
    %2146 = vmatprep.subr.mxu0 0.0
    %2147 = vmatpush1.msra.mxu0 0.0
    %2148 = vmatprep.subr.mxu0 0.0
    %2149 = vmatpush1.msra.mxu0 0.0
    %2150 = vmatprep.subr.mxu0 0.0
    %2151 = vmatpush1.msra.mxu0 0.0
    %2152 = vmatprep.subr.mxu0 0.0
    %2153 = vmatpush1.msra.mxu0 0.0
    %2154 = vmatprep.subr.mxu0 0.0
    %2155 = vmatpush1.msra.mxu0 0.0
    %2156 = vmatprep.subr.mxu0 0.0
    %2157 = vmatpush1.msra.mxu0 0.0
    %2158 = vmatprep.subr.mxu0 0.0
    %2159 = vmatpush1.msra.mxu0 0.0
    %2160 = vmatprep.subr.mxu0 0.0
    %2161 = vmatpush1.msra.mxu0 0.0
    %2162 = vmatprep.subr.mxu0 0.0
    %2163 = vmatpush1.msra.mxu0 0.0
    %2164 = vmatprep.subr.mxu0 0.0
    %2165 = vmatpush1.msra.mxu0 0.0
    %2166 = vmatprep.subr.mxu0 0.0
    %2167 = vmatpush1.msra.mxu0 0.0
    %2168 = vmatprep.subr.mxu0 0.0
    %2169 = vmatpush1.msra.mxu0 0.0
    %2170 = vmatprep.subr.mxu0 0.0
    %2171 = vmatpush1.msra.mxu0 0.0
    %2172 = vmatprep.subr.mxu0 0.0
    %2173 = vmatpush1.msra.mxu0 0.0
    %2174 = vmatprep.subr.mxu0 0.0
    %2175 = vmatpush1.msra.mxu0 0.0
    %2176 = vmatprep.subr.mxu0 0.0
    %2177 = vmatpush1.msra.mxu0 0.0
    %2178 = vmatprep.subr.mxu0 0.0
    %2179 = vmatpush1.msra.mxu0 0.0
    %2180 = vmatprep.mubr.f32.mxu0 0.0
    %2181 = vmatmul.mubr.f32.gmra.mrb[0].mxu0 %v2110
    %v2182 = vpop.f32.mrb[0].mxu0
    %v2183 = vadd.f32 0.0, %v2182
    %v2184 = vpop.f32.mrb[0].mxu0
    %2185 = vmatprep.mubr.f32.mxu0 0.0
    %2186 = vmatmul.mubr.f32.gmra.mrb[0].mxu0 %v2112
    %v2187 = vpop.f32.mrb[0].mxu0
    %v2188 = vadd.f32 0.0, %v2187
    %v2189 = vpop.f32.mrb[0].mxu0
    %2190 = vmatprep.mubr.f32.mxu0 0.0
    %2191 = vmatmul.mubr.f32.gmra.mrb[0].mxu0 %v2114
    %v2192 = vpop.f32.mrb[0].mxu0
    %v2193 = vadd.f32 0.0, %v2192
    %v2194 = vpop.f32.mrb[0].mxu0
    %2195 = vdwg.mxu0
    %v2197 = vsel %vm531, %v2060, 0
    %v2200 = vsel %vm531, %v2065, 0
    %v2202 = vsel %vm531, %v2070, 0
    %2204 = vmatprep.subr.mxu0 0.0
    %2205 = vmatpush1.msra.mxu0 %v2099
    %2206 = vmatprep.subr.mxu0 0.0
    %2207 = vmatpush1.msra.mxu0 0.0
    %2208 = vmatprep.subr.mxu0 0.0
    %2209 = vmatpush1.msra.mxu0 0.0
    %2210 = vmatprep.subr.mxu0 0.0
    %2211 = vmatpush1.msra.mxu0 0.0
    %2212 = vmatprep.subr.mxu0 0.0
    %2213 = vmatpush1.msra.mxu0 0.0
    %2214 = vmatprep.subr.mxu0 0.0
    %2215 = vmatpush1.msra.mxu0 0.0
    %2216 = vmatprep.subr.mxu0 0.0
    %2217 = vmatpush1.msra.mxu0 0.0
    %2218 = vmatprep.subr.mxu0 0.0
    %2219 = vmatpush1.msra.mxu0 0.0
    %2220 = vmatprep.subr.mxu0 0.0
    %2221 = vmatpush1.msra.mxu0 0.0
    %2222 = vmatprep.subr.mxu0 0.0
    %2223 = vmatpush1.msra.mxu0 0.0
    %2224 = vmatprep.subr.mxu0 0.0
    %2225 = vmatpush1.msra.mxu0 0.0
    %2226 = vmatprep.subr.mxu0 0.0
    %2227 = vmatpush1.msra.mxu0 0.0
    %2228 = vmatprep.subr.mxu0 0.0
    %2229 = vmatpush1.msra.mxu0 0.0
    %2230 = vmatprep.subr.mxu0 0.0
    %2231 = vmatpush1.msra.mxu0 0.0
    %2232 = vmatprep.subr.mxu0 0.0
    %2233 = vmatpush1.msra.mxu0 0.0
    %2234 = vmatprep.subr.mxu0 0.0
    %2235 = vmatpush1.msra.mxu0 0.0
    %2236 = vmatprep.subr.mxu0 0.0
    %2237 = vmatpush1.msra.mxu0 0.0
    %2238 = vmatprep.subr.mxu0 0.0
    %2239 = vmatpush1.msra.mxu0 0.0
    %2240 = vmatprep.subr.mxu0 0.0
    %2241 = vmatpush1.msra.mxu0 0.0
    %2242 = vmatprep.subr.mxu0 0.0
    %2243 = vmatpush1.msra.mxu0 0.0
    %2244 = vmatprep.subr.mxu0 0.0
    %2245 = vmatpush1.msra.mxu0 0.0
    %2246 = vmatprep.subr.mxu0 0.0
    %2247 = vmatpush1.msra.mxu0 0.0
    %2248 = vmatprep.subr.mxu0 0.0
    %2249 = vmatpush1.msra.mxu0 0.0
    %2250 = vmatprep.subr.mxu0 0.0
    %2251 = vmatpush1.msra.mxu0 0.0
    %2252 = vmatprep.subr.mxu0 0.0
    %2253 = vmatpush1.msra.mxu0 0.0
    %2254 = vmatprep.subr.mxu0 0.0
    %2255 = vmatpush1.msra.mxu0 0.0
    %2256 = vmatprep.subr.mxu0 0.0
    %2257 = vmatpush1.msra.mxu0 0.0
    %2258 = vmatprep.subr.mxu0 0.0
    %2259 = vmatpush1.msra.mxu0 0.0
    %2260 = vmatprep.subr.mxu0 0.0
    %2261 = vmatpush1.msra.mxu0 0.0
    %2262 = vmatprep.subr.mxu0 0.0
    %2263 = vmatpush1.msra.mxu0 0.0
    %2264 = vmatprep.subr.mxu0 0.0
    %2265 = vmatpush1.msra.mxu0 0.0
    %2266 = vmatprep.subr.mxu0 0.0
    %2267 = vmatpush1.msra.mxu0 0.0
    %2268 = vmatprep.mubr.f32.mxu0 0.0
    %2269 = vmatmul.mubr.f32.gmra.mrb[0].mxu0 %v2197
    %v2270 = vpop.f32.mrb[0].mxu0
    %v2271 = vadd.f32 %v2183, %v2270
    %v2272 = vpop.f32.mrb[0].mxu0
    %2273 = vmatprep.mubr.f32.mxu0 0.0
    %2274 = vmatmul.mubr.f32.gmra.mrb[0].mxu0 %v2200
    %v2275 = vpop.f32.mrb[0].mxu0
    %v2276 = vadd.f32 %v2188, %v2275
    %v2277 = vpop.f32.mrb[0].mxu0
    %2278 = vmatprep.mubr.f32.mxu0 0.0
    %2279 = vmatmul.mubr.f32.gmra.mrb[0].mxu0 %v2202
    %v2280 = vpop.f32.mrb[0].mxu0
    %v2281 = vadd.f32 %v2193, %v2280
    %v2282 = vpop.f32.mrb[0].mxu0
    %2283 = vdwg.mxu0
    %s2284 = scalar_lea.vmem [#allocation2], 88
    %v2285 = vld [vmem:[%s2284] sm:$0xff]
    %v2287 = vsel %vm531, %v2085, 0
    %v2290 = vsel %vm531, %v2090, 0
    %v2293 = vsel %vm531, %v2095, 0
    %2295 = vmatprep.subr.mxu0 0.0
    %2296 = vmatpush1.msra.mxu0 %v2285
    %2297 = vmatprep.subr.mxu0 0.0
    %2298 = vmatpush1.msra.mxu0 0.0
    %2299 = vmatprep.subr.mxu0 0.0
    %2300 = vmatpush1.msra.mxu0 0.0
    %2301 = vmatprep.subr.mxu0 0.0
    %2302 = vmatpush1.msra.mxu0 0.0
    %2303 = vmatprep.subr.mxu0 0.0
    %2304 = vmatpush1.msra.mxu0 0.0
    %2305 = vmatprep.subr.mxu0 0.0
    %2306 = vmatpush1.msra.mxu0 0.0
    %2307 = vmatprep.subr.mxu0 0.0
    %2308 = vmatpush1.msra.mxu0 0.0
    %2309 = vmatprep.subr.mxu0 0.0
    %2310 = vmatpush1.msra.mxu0 0.0
    %2311 = vmatprep.subr.mxu0 0.0
    %2312 = vmatpush1.msra.mxu0 0.0
    %2313 = vmatprep.subr.mxu0 0.0
    %2314 = vmatpush1.msra.mxu0 0.0
    %2315 = vmatprep.subr.mxu0 0.0
    %2316 = vmatpush1.msra.mxu0 0.0
    %2317 = vmatprep.subr.mxu0 0.0
    %2318 = vmatpush1.msra.mxu0 0.0
    %2319 = vmatprep.subr.mxu0 0.0
    %2320 = vmatpush1.msra.mxu0 0.0
    %2321 = vmatprep.subr.mxu0 0.0
    %2322 = vmatpush1.msra.mxu0 0.0
    %2323 = vmatprep.subr.mxu0 0.0
    %2324 = vmatpush1.msra.mxu0 0.0
    %2325 = vmatprep.subr.mxu0 0.0
    %2326 = vmatpush1.msra.mxu0 0.0
    %2327 = vmatprep.subr.mxu0 0.0
    %2328 = vmatpush1.msra.mxu0 0.0
    %2329 = vmatprep.subr.mxu0 0.0
    %2330 = vmatpush1.msra.mxu0 0.0
    %2331 = vmatprep.subr.mxu0 0.0
    %2332 = vmatpush1.msra.mxu0 0.0
    %2333 = vmatprep.subr.mxu0 0.0
    %2334 = vmatpush1.msra.mxu0 0.0
    %2335 = vmatprep.subr.mxu0 0.0
    %2336 = vmatpush1.msra.mxu0 0.0
    %2337 = vmatprep.subr.mxu0 0.0
    %2338 = vmatpush1.msra.mxu0 0.0
    %2339 = vmatprep.subr.mxu0 0.0
    %2340 = vmatpush1.msra.mxu0 0.0
    %2341 = vmatprep.subr.mxu0 0.0
    %2342 = vmatpush1.msra.mxu0 0.0
    %2343 = vmatprep.subr.mxu0 0.0
    %2344 = vmatpush1.msra.mxu0 0.0
    %2345 = vmatprep.subr.mxu0 0.0
    %2346 = vmatpush1.msra.mxu0 0.0
    %2347 = vmatprep.subr.mxu0 0.0
    %2348 = vmatpush1.msra.mxu0 0.0
    %2349 = vmatprep.subr.mxu0 0.0
    %2350 = vmatpush1.msra.mxu0 0.0
    %2351 = vmatprep.subr.mxu0 0.0
    %2352 = vmatpush1.msra.mxu0 0.0
    %2353 = vmatprep.subr.mxu0 0.0
    %2354 = vmatpush1.msra.mxu0 0.0
    %2355 = vmatprep.subr.mxu0 0.0
    %2356 = vmatpush1.msra.mxu0 0.0
    %2357 = vmatprep.subr.mxu0 0.0
    %2358 = vmatpush1.msra.mxu0 0.0
    %2359 = vmatprep.mubr.f32.mxu0 0.0
    %2360 = vmatmul.mubr.f32.gmra.mrb[0].mxu0 %v2287
    %v2361 = vpop.f32.mrb[0].mxu0
    %v2362 = vadd.f32 0.0, %v2361
    %v2363 = vpop.f32.mrb[0].mxu0
    %2364 = vmatprep.mubr.f32.mxu0 0.0
    %2365 = vmatmul.mubr.f32.gmra.mrb[0].mxu0 %v2290
    %v2366 = vpop.f32.mrb[0].mxu0
    %v2367 = vadd.f32 0.0, %v2366
    %v2368 = vpop.f32.mrb[0].mxu0
    %2369 = vmatprep.mubr.f32.mxu0 0.0
    %2370 = vmatmul.mubr.f32.gmra.mrb[0].mxu0 %v2293
    %v2371 = vpop.f32.mrb[0].mxu0
    %v2372 = vadd.f32 0.0, %v2371
    %v2373 = vpop.f32.mrb[0].mxu0
    %2374 = vdwg.mxu0
    %v2375 = vadd.f32 %v2271, %v2362
    %v2376 = vadd.f32 %v2276, %v2367
    %v2377 = vadd.f32 %v2281, %v2372
    %s2378 = scalar_lea.vmem [#allocation5], 3
    %v2379 = vld [vmem:[%s2378] sm:$0x1]
    %v2381 = vlaneseq
    %v2382 = vshrl.u32 %v2381, 7
    %v2383 = vsub.s32 0, %v2382
    %v2384 = vrot.slane %v2379, %v2383
    %v2386 = vadd.f32 %v2375, %v2384
    %v2387 = vadd.f32 %v2376, %v2384
    %v2388 = vadd.f32 %v2377, %v2384
    %vm2389 = vcmp.ge.f32.partialorder %v2386, 0.0
    %vm2390 = vcmp.ge.f32.partialorder %v2387, 0.0
    %vm2391 = vcmp.ge.f32.partialorder %v2388, 0.0
    %v2392 = vmul.f32 %v2386, 0.01
    %v2393 = vmul.f32 %v2387, 0.01
    %v2394 = vmul.f32 %v2388, 0.01
    %v2395 = vsel %vm2389, %v2386, %v2392
    %v2396 = vsel %vm2390, %v2387, %v2393
    %v2397 = vsel %vm2391, %v2388, %v2394
    %v2399 = vsel %vm525, %v2397, 0
    %2401 = vmatprep.subr.mxu0 0.0
    %2402 = vmatpush1.msra.mxu0 %v2395
    %2403 = vmatprep.subr.mxu0 0.0
    %2404 = vmatpush1.msra.mxu0 %v2396
    %2405 = vmatprep.subr.mxu0 0.0
    %2406 = vmatpush1.msra.mxu0 %v2399
    %2407 = vmatprep.subr.mxu0 0.0
    %2408 = vmatpush1.msra.mxu0 0.0
    %2409 = vmatprep.subr.mxu0 0.0
    %2410 = vmatpush1.msra.mxu0 0.0
    %2411 = vmatprep.subr.mxu0 0.0
    %2412 = vmatpush1.msra.mxu0 0.0
    %2413 = vmatprep.subr.mxu0 0.0
    %2414 = vmatpush1.msra.mxu0 0.0
    %2415 = vmatprep.subr.mxu0 0.0
    %2416 = vmatpush1.msra.mxu0 0.0
    %2417 = vmatprep.subr.mxu0 0.0
    %2418 = vmatpush1.msra.mxu0 0.0
    %2419 = vmatprep.subr.mxu0 0.0
    %2420 = vmatpush1.msra.mxu0 0.0
    %2421 = vmatprep.subr.mxu0 0.0
    %2422 = vmatpush1.msra.mxu0 0.0
    %2423 = vmatprep.subr.mxu0 0.0
    %2424 = vmatpush1.msra.mxu0 0.0
    %2425 = vmatprep.subr.mxu0 0.0
    %2426 = vmatpush1.msra.mxu0 0.0
    %2427 = vmatprep.subr.mxu0 0.0
    %2428 = vmatpush1.msra.mxu0 0.0
    %2429 = vmatprep.subr.mxu0 0.0
    %2430 = vmatpush1.msra.mxu0 0.0
    %2431 = vmatprep.subr.mxu0 0.0
    %2432 = vmatpush1.msra.mxu0 0.0
    %2433 = vmatprep.subr.mxu0 0.0
    %2434 = vmatpush1.msra.mxu0 0.0
    %2435 = vmatprep.subr.mxu0 0.0
    %2436 = vmatpush1.msra.mxu0 0.0
    %2437 = vmatprep.subr.mxu0 0.0
    %2438 = vmatpush1.msra.mxu0 0.0
    %2439 = vmatprep.subr.mxu0 0.0
    %2440 = vmatpush1.msra.mxu0 0.0
    %2441 = vmatprep.subr.mxu0 0.0
    %2442 = vmatpush1.msra.mxu0 0.0
    %2443 = vmatprep.subr.mxu0 0.0
    %2444 = vmatpush1.msra.mxu0 0.0
    %2445 = vmatprep.subr.mxu0 0.0
    %2446 = vmatpush1.msra.mxu0 0.0
    %2447 = vmatprep.subr.mxu0 0.0
    %2448 = vmatpush1.msra.mxu0 0.0
    %2449 = vmatprep.subr.mxu0 0.0
    %2450 = vmatpush1.msra.mxu0 0.0
    %2451 = vmatprep.subr.mxu0 0.0
    %2452 = vmatpush1.msra.mxu0 0.0
    %2453 = vmatprep.subr.mxu0 0.0
    %2454 = vmatpush1.msra.mxu0 0.0
    %2455 = vmatprep.subr.mxu0 0.0
    %2456 = vmatpush1.msra.mxu0 0.0
    %2457 = vmatprep.subr.mxu0 0.0
    %2458 = vmatpush1.msra.mxu0 0.0
    %2459 = vmatprep.subr.mxu0 0.0
    %2460 = vmatpush1.msra.mxu0 0.0
    %2461 = vmatprep.subr.mxu0 0.0
    %2462 = vmatpush1.msra.mxu0 0.0
    %2463 = vmatprep.subr.mxu0 0.0
    %2464 = vmatpush1.msra.mxu0 0.0
    %2465 = vmatprep.mubr.f32.mxu0 0.0
    %2466 = vmatmul.mubr.f32.gmra.mrb[0].mxu0 %v821
    %v2467 = vpop.f32.mrb[0].mxu0
    %v2468 = vadd.f32 0.0, %v2467
    %v2469 = vpop.f32.mrb[0].mxu0
    %2470 = vmatprep.mubr.f32.mxu0 0.0
    %2471 = vmatmul.mubr.f32.gmra.mrb[0].mxu0 %v824
    %v2472 = vpop.f32.mrb[0].mxu0
    %v2473 = vadd.f32 0.0, %v2472
    %v2474 = vpop.f32.mrb[0].mxu0
    %2475 = vmatprep.mubr.f32.mxu0 0.0
    %2476 = vmatmul.mubr.f32.gmra.mrb[0].mxu0 %v827
    %v2477 = vpop.f32.mrb[0].mxu0
    %v2478 = vadd.f32 0.0, %v2477
    %v2479 = vpop.f32.mrb[0].mxu0
    %2480 = vmatprep.mubr.f32.mxu0 0.0
    %2481 = vmatmul.mubr.f32.gmra.mrb[0].mxu0 %v830
    %v2482 = vpop.f32.mrb[0].mxu0
    %v2483 = vadd.f32 0.0, %v2482
    %v2484 = vpop.f32.mrb[0].mxu0
    %2485 = vmatprep.mubr.f32.mxu0 0.0
    %2486 = vmatmul.mubr.f32.gmra.mrb[0].mxu0 %v833
    %v2487 = vpop.f32.mrb[0].mxu0
    %v2488 = vadd.f32 0.0, %v2487
    %v2489 = vpop.f32.mrb[0].mxu0
    %2490 = vmatprep.mubr.f32.mxu0 0.0
    %2491 = vmatmul.mubr.f32.gmra.mrb[0].mxu0 %v836
    %v2492 = vpop.f32.mrb[0].mxu0
    %v2493 = vadd.f32 0.0, %v2492
    %v2494 = vpop.f32.mrb[0].mxu0
    %2495 = vdwg.mxu0
    %s2496 = scalar_lea.vmem [#allocation7], 288
    %v2497 = vld [vmem:[%s2496] sm:$0xff]
    %v2498 = vld [vmem:[%s2496 + $0x8] sm:$0xff]
    %v2499 = vld [vmem:[%s2496 + $0x10] sm:$0xff]
    %v2500 = vld [vmem:[%s2496 + $0x18] sm:$0xff]
    %s2501 = scalar_lea.vmem [#allocation7], 320
    %v2502 = vld [vmem:[%s2501] sm:$0xff]
    %v2503 = vld [vmem:[%s2501 + $0x8] sm:$0xff]
    %v2504 = vld [vmem:[%s2501 + $0x10] sm:$0xff]
    %v2505 = vld [vmem:[%s2501 + $0x18] sm:$0xff]
    %v2507 = vsel %vm226, %v2478, 0
    %v2510 = vsel %vm226, %v2483, 0
    %2512 = vmatprep.subr.mxu0 0.0
    %2513 = vmatpush1.msra.mxu0 %v2502
    %2514 = vmatprep.subr.mxu0 0.0
    %2515 = vmatpush1.msra.mxu0 %v2503
    %2516 = vmatprep.subr.mxu0 0.0
    %2517 = vmatpush1.msra.mxu0 %v2504
    %2518 = vmatprep.subr.mxu0 0.0
    %2519 = vmatpush1.msra.mxu0 %v2505
    %2520 = vmatprep.subr.mxu0 0.0
    %2521 = vmatpush1.msra.mxu0 0.0
    %2522 = vmatprep.subr.mxu0 0.0
    %2523 = vmatpush1.msra.mxu0 0.0
    %2524 = vmatprep.subr.mxu0 0.0
    %2525 = vmatpush1.msra.mxu0 0.0
    %2526 = vmatprep.subr.mxu0 0.0
    %2527 = vmatpush1.msra.mxu0 0.0
    %2528 = vmatprep.subr.mxu0 0.0
    %2529 = vmatpush1.msra.mxu0 0.0
    %2530 = vmatprep.subr.mxu0 0.0
    %2531 = vmatpush1.msra.mxu0 0.0
    %2532 = vmatprep.subr.mxu0 0.0
    %2533 = vmatpush1.msra.mxu0 0.0
    %2534 = vmatprep.subr.mxu0 0.0
    %2535 = vmatpush1.msra.mxu0 0.0
    %2536 = vmatprep.subr.mxu0 0.0
    %2537 = vmatpush1.msra.mxu0 0.0
    %2538 = vmatprep.subr.mxu0 0.0
    %2539 = vmatpush1.msra.mxu0 0.0
    %2540 = vmatprep.subr.mxu0 0.0
    %2541 = vmatpush1.msra.mxu0 0.0
    %2542 = vmatprep.subr.mxu0 0.0
    %2543 = vmatpush1.msra.mxu0 0.0
    %2544 = vmatprep.subr.mxu0 0.0
    %2545 = vmatpush1.msra.mxu0 0.0
    %2546 = vmatprep.subr.mxu0 0.0
    %2547 = vmatpush1.msra.mxu0 0.0
    %2548 = vmatprep.subr.mxu0 0.0
    %2549 = vmatpush1.msra.mxu0 0.0
    %2550 = vmatprep.subr.mxu0 0.0
    %2551 = vmatpush1.msra.mxu0 0.0
    %2552 = vmatprep.subr.mxu0 0.0
    %2553 = vmatpush1.msra.mxu0 0.0
    %2554 = vmatprep.subr.mxu0 0.0
    %2555 = vmatpush1.msra.mxu0 0.0
    %2556 = vmatprep.subr.mxu0 0.0
    %2557 = vmatpush1.msra.mxu0 0.0
    %2558 = vmatprep.subr.mxu0 0.0
    %2559 = vmatpush1.msra.mxu0 0.0
    %2560 = vmatprep.subr.mxu0 0.0
    %2561 = vmatpush1.msra.mxu0 0.0
    %2562 = vmatprep.subr.mxu0 0.0
    %2563 = vmatpush1.msra.mxu0 0.0
    %2564 = vmatprep.subr.mxu0 0.0
    %2565 = vmatpush1.msra.mxu0 0.0
    %2566 = vmatprep.subr.mxu0 0.0
    %2567 = vmatpush1.msra.mxu0 0.0
    %2568 = vmatprep.subr.mxu0 0.0
    %2569 = vmatpush1.msra.mxu0 0.0
    %2570 = vmatprep.subr.mxu0 0.0
    %2571 = vmatpush1.msra.mxu0 0.0
    %2572 = vmatprep.subr.mxu0 0.0
    %2573 = vmatpush1.msra.mxu0 0.0
    %2574 = vmatprep.subr.mxu0 0.0
    %2575 = vmatpush1.msra.mxu0 0.0
    %2576 = vmatprep.mubr.f32.mxu0 0.0
    %2577 = vmatmul.mubr.f32.gmra.mrb[0].mxu0 %v2507
    %v2578 = vpop.f32.mrb[0].mxu0
    %v2579 = vadd.f32 0.0, %v2578
    %v2580 = vpop.f32.mrb[0].mxu0
    %2581 = vmatprep.mubr.f32.mxu0 0.0
    %2582 = vmatmul.mubr.f32.gmra.mrb[0].mxu0 %v2510
    %v2583 = vpop.f32.mrb[0].mxu0
    %v2584 = vadd.f32 0.0, %v2583
    %v2585 = vpop.f32.mrb[0].mxu0
    %2586 = vdwg.mxu0
    %v2588 = vsel %vm226, %v2468, 0
    %v2591 = vsel %vm226, %v2473, 0
    %2593 = vmatprep.subr.mxu0 0.0
    %2594 = vmatpush1.msra.mxu0 %v2497
    %2595 = vmatprep.subr.mxu0 0.0
    %2596 = vmatpush1.msra.mxu0 %v2498
    %2597 = vmatprep.subr.mxu0 0.0
    %2598 = vmatpush1.msra.mxu0 %v2499
    %2599 = vmatprep.subr.mxu0 0.0
    %2600 = vmatpush1.msra.mxu0 %v2500
    %2601 = vmatprep.subr.mxu0 0.0
    %2602 = vmatpush1.msra.mxu0 0.0
    %2603 = vmatprep.subr.mxu0 0.0
    %2604 = vmatpush1.msra.mxu0 0.0
    %2605 = vmatprep.subr.mxu0 0.0
    %2606 = vmatpush1.msra.mxu0 0.0
    %2607 = vmatprep.subr.mxu0 0.0
    %2608 = vmatpush1.msra.mxu0 0.0
    %2609 = vmatprep.subr.mxu0 0.0
    %2610 = vmatpush1.msra.mxu0 0.0
    %2611 = vmatprep.subr.mxu0 0.0
    %2612 = vmatpush1.msra.mxu0 0.0
    %2613 = vmatprep.subr.mxu0 0.0
    %2614 = vmatpush1.msra.mxu0 0.0
    %2615 = vmatprep.subr.mxu0 0.0
    %2616 = vmatpush1.msra.mxu0 0.0
    %2617 = vmatprep.subr.mxu0 0.0
    %2618 = vmatpush1.msra.mxu0 0.0
    %2619 = vmatprep.subr.mxu0 0.0
    %2620 = vmatpush1.msra.mxu0 0.0
    %2621 = vmatprep.subr.mxu0 0.0
    %2622 = vmatpush1.msra.mxu0 0.0
    %2623 = vmatprep.subr.mxu0 0.0
    %2624 = vmatpush1.msra.mxu0 0.0
    %2625 = vmatprep.subr.mxu0 0.0
    %2626 = vmatpush1.msra.mxu0 0.0
    %2627 = vmatprep.subr.mxu0 0.0
    %2628 = vmatpush1.msra.mxu0 0.0
    %2629 = vmatprep.subr.mxu0 0.0
    %2630 = vmatpush1.msra.mxu0 0.0
    %2631 = vmatprep.subr.mxu0 0.0
    %2632 = vmatpush1.msra.mxu0 0.0
    %2633 = vmatprep.subr.mxu0 0.0
    %2634 = vmatpush1.msra.mxu0 0.0
    %2635 = vmatprep.subr.mxu0 0.0
    %2636 = vmatpush1.msra.mxu0 0.0
    %2637 = vmatprep.subr.mxu0 0.0
    %2638 = vmatpush1.msra.mxu0 0.0
    %2639 = vmatprep.subr.mxu0 0.0
    %2640 = vmatpush1.msra.mxu0 0.0
    %2641 = vmatprep.subr.mxu0 0.0
    %2642 = vmatpush1.msra.mxu0 0.0
    %2643 = vmatprep.subr.mxu0 0.0
    %2644 = vmatpush1.msra.mxu0 0.0
    %2645 = vmatprep.subr.mxu0 0.0
    %2646 = vmatpush1.msra.mxu0 0.0
    %2647 = vmatprep.subr.mxu0 0.0
    %2648 = vmatpush1.msra.mxu0 0.0
    %2649 = vmatprep.subr.mxu0 0.0
    %2650 = vmatpush1.msra.mxu0 0.0
    %2651 = vmatprep.subr.mxu0 0.0
    %2652 = vmatpush1.msra.mxu0 0.0
    %2653 = vmatprep.subr.mxu0 0.0
    %2654 = vmatpush1.msra.mxu0 0.0
    %2655 = vmatprep.subr.mxu0 0.0
    %2656 = vmatpush1.msra.mxu0 0.0
    %2657 = vmatprep.mubr.f32.mxu0 0.0
    %2658 = vmatmul.mubr.f32.gmra.mrb[0].mxu0 %v2588
    %v2659 = vpop.f32.mrb[0].mxu0
    %v2660 = vadd.f32 %v2579, %v2659
    %v2661 = vpop.f32.mrb[0].mxu0
    %2662 = vmatprep.mubr.f32.mxu0 0.0
    %2663 = vmatmul.mubr.f32.gmra.mrb[0].mxu0 %v2591
    %v2664 = vpop.f32.mrb[0].mxu0
    %v2665 = vadd.f32 %v2584, %v2664
    %v2666 = vpop.f32.mrb[0].mxu0
    %2667 = vdwg.mxu0
    %s2668 = scalar_lea.vmem [#allocation7], 352
    %v2669 = vld [vmem:[%s2668] sm:$0xff]
    %v2670 = vld [vmem:[%s2668 + $0x8] sm:$0xff]
    %v2671 = vld [vmem:[%s2668 + $0x10] sm:$0xff]
    %v2672 = vld [vmem:[%s2668 + $0x18] sm:$0xff]
    %v2674 = vsel %vm226, %v2488, 0
    %v2677 = vsel %vm226, %v2493, 0
    %2679 = vmatprep.subr.mxu0 0.0
    %2680 = vmatpush1.msra.mxu0 %v2669
    %2681 = vmatprep.subr.mxu0 0.0
    %2682 = vmatpush1.msra.mxu0 %v2670
    %2683 = vmatprep.subr.mxu0 0.0
    %2684 = vmatpush1.msra.mxu0 %v2671
    %2685 = vmatprep.subr.mxu0 0.0
    %2686 = vmatpush1.msra.mxu0 %v2672
    %2687 = vmatprep.subr.mxu0 0.0
    %2688 = vmatpush1.msra.mxu0 0.0
    %2689 = vmatprep.subr.mxu0 0.0
    %2690 = vmatpush1.msra.mxu0 0.0
    %2691 = vmatprep.subr.mxu0 0.0
    %2692 = vmatpush1.msra.mxu0 0.0
    %2693 = vmatprep.subr.mxu0 0.0
    %2694 = vmatpush1.msra.mxu0 0.0
    %2695 = vmatprep.subr.mxu0 0.0
    %2696 = vmatpush1.msra.mxu0 0.0
    %2697 = vmatprep.subr.mxu0 0.0
    %2698 = vmatpush1.msra.mxu0 0.0
    %2699 = vmatprep.subr.mxu0 0.0
    %2700 = vmatpush1.msra.mxu0 0.0
    %2701 = vmatprep.subr.mxu0 0.0
    %2702 = vmatpush1.msra.mxu0 0.0
    %2703 = vmatprep.subr.mxu0 0.0
    %2704 = vmatpush1.msra.mxu0 0.0
    %2705 = vmatprep.subr.mxu0 0.0
    %2706 = vmatpush1.msra.mxu0 0.0
    %2707 = vmatprep.subr.mxu0 0.0
    %2708 = vmatpush1.msra.mxu0 0.0
    %2709 = vmatprep.subr.mxu0 0.0
    %2710 = vmatpush1.msra.mxu0 0.0
    %2711 = vmatprep.subr.mxu0 0.0
    %2712 = vmatpush1.msra.mxu0 0.0
    %2713 = vmatprep.subr.mxu0 0.0
    %2714 = vmatpush1.msra.mxu0 0.0
    %2715 = vmatprep.subr.mxu0 0.0
    %2716 = vmatpush1.msra.mxu0 0.0
    %2717 = vmatprep.subr.mxu0 0.0
    %2718 = vmatpush1.msra.mxu0 0.0
    %2719 = vmatprep.subr.mxu0 0.0
    %2720 = vmatpush1.msra.mxu0 0.0
    %2721 = vmatprep.subr.mxu0 0.0
    %2722 = vmatpush1.msra.mxu0 0.0
    %2723 = vmatprep.subr.mxu0 0.0
    %2724 = vmatpush1.msra.mxu0 0.0
    %2725 = vmatprep.subr.mxu0 0.0
    %2726 = vmatpush1.msra.mxu0 0.0
    %2727 = vmatprep.subr.mxu0 0.0
    %2728 = vmatpush1.msra.mxu0 0.0
    %2729 = vmatprep.subr.mxu0 0.0
    %2730 = vmatpush1.msra.mxu0 0.0
    %2731 = vmatprep.subr.mxu0 0.0
    %2732 = vmatpush1.msra.mxu0 0.0
    %2733 = vmatprep.subr.mxu0 0.0
    %2734 = vmatpush1.msra.mxu0 0.0
    %2735 = vmatprep.subr.mxu0 0.0
    %2736 = vmatpush1.msra.mxu0 0.0
    %2737 = vmatprep.subr.mxu0 0.0
    %2738 = vmatpush1.msra.mxu0 0.0
    %2739 = vmatprep.subr.mxu0 0.0
    %2740 = vmatpush1.msra.mxu0 0.0
    %2741 = vmatprep.subr.mxu0 0.0
    %2742 = vmatpush1.msra.mxu0 0.0
    %2743 = vmatprep.mubr.f32.mxu0 0.0
    %2744 = vmatmul.mubr.f32.gmra.mrb[0].mxu0 %v2674
    %v2745 = vpop.f32.mrb[0].mxu0
    %v2746 = vadd.f32 0.0, %v2745
    %v2747 = vpop.f32.mrb[0].mxu0
    %2748 = vmatprep.mubr.f32.mxu0 0.0
    %2749 = vmatmul.mubr.f32.gmra.mrb[0].mxu0 %v2677
    %v2750 = vpop.f32.mrb[0].mxu0
    %v2751 = vadd.f32 0.0, %v2750
    %v2752 = vpop.f32.mrb[0].mxu0
    %2753 = vdwg.mxu0
    %v2754 = vadd.f32 %v2660, %v2746
    %v2755 = vadd.f32 %v2665, %v2751
    %s2756 = scalar_lea.vmem [#allocation8], 3
    %v2757 = vld [vmem:[%s2756] sm:$0x1]
    %v2759 = vlaneseq
    %v2760 = vshrl.u32 %v2759, 7
    %v2761 = vsub.s32 0, %v2760
    %v2762 = vrot.slane %v2757, %v2761
    %v2764 = vadd.f32 %v2754, %v2762
    %v2765 = vadd.f32 %v2755, %v2762
    %v2766 = vtanh.pop %v2764
    %v2767 = vtanh.pop %v2765
    %v2768 = vadd.f32 %v1991, %v2766
    %v2769 = vadd.f32 %v1992, %v2767
    %2770 = vmatprep.subr.mxu0 0.0
    %2771 = vmatpush1.msra.mxu0 %v1991
    %2772 = vmatprep.subr.mxu0 0.0
    %2773 = vmatpush1.msra.mxu0 %v1992
    %2774 = vmatprep.subr.mxu0 0.0
    %2775 = vmatpush1.msra.mxu0 0.0
    %2776 = vmatprep.subr.mxu0 0.0
    %2777 = vmatpush1.msra.mxu0 0.0
    %2778 = vmatprep.subr.mxu0 0.0
    %2779 = vmatpush1.msra.mxu0 0.0
    %2780 = vmatprep.subr.mxu0 0.0
    %2781 = vmatpush1.msra.mxu0 0.0
    %2782 = vmatprep.subr.mxu0 0.0
    %2783 = vmatpush1.msra.mxu0 0.0
    %2784 = vmatprep.subr.mxu0 0.0
    %2785 = vmatpush1.msra.mxu0 0.0
    %2786 = vmatprep.subr.mxu0 0.0
    %2787 = vmatpush1.msra.mxu0 0.0
    %2788 = vmatprep.subr.mxu0 0.0
    %2789 = vmatpush1.msra.mxu0 0.0
    %2790 = vmatprep.subr.mxu0 0.0
    %2791 = vmatpush1.msra.mxu0 0.0
    %2792 = vmatprep.subr.mxu0 0.0
    %2793 = vmatpush1.msra.mxu0 0.0
    %2794 = vmatprep.subr.mxu0 0.0
    %2795 = vmatpush1.msra.mxu0 0.0
    %2796 = vmatprep.subr.mxu0 0.0
    %2797 = vmatpush1.msra.mxu0 0.0
    %2798 = vmatprep.subr.mxu0 0.0
    %2799 = vmatpush1.msra.mxu0 0.0
    %2800 = vmatprep.subr.mxu0 0.0
    %2801 = vmatpush1.msra.mxu0 0.0
    %2802 = vmatprep.subr.mxu0 0.0
    %2803 = vmatpush1.msra.mxu0 0.0
    %2804 = vmatprep.subr.mxu0 0.0
    %2805 = vmatpush1.msra.mxu0 0.0
    %2806 = vmatprep.subr.mxu0 0.0
    %2807 = vmatpush1.msra.mxu0 0.0
    %2808 = vmatprep.subr.mxu0 0.0
    %2809 = vmatpush1.msra.mxu0 0.0
    %2810 = vmatprep.subr.mxu0 0.0
    %2811 = vmatpush1.msra.mxu0 0.0
    %2812 = vmatprep.subr.mxu0 0.0
    %2813 = vmatpush1.msra.mxu0 0.0
    %2814 = vmatprep.subr.mxu0 0.0
    %2815 = vmatpush1.msra.mxu0 0.0
    %2816 = vmatprep.subr.mxu0 0.0
    %2817 = vmatpush1.msra.mxu0 0.0
    %2818 = vmatprep.subr.mxu0 0.0
    %2819 = vmatpush1.msra.mxu0 0.0
    %2820 = vmatprep.subr.mxu0 0.0
    %2821 = vmatpush1.msra.mxu0 0.0
    %2822 = vmatprep.subr.mxu0 0.0
    %2823 = vmatpush1.msra.mxu0 0.0
    %2824 = vmatprep.subr.mxu0 0.0
    %2825 = vmatpush1.msra.mxu0 0.0
    %2826 = vmatprep.subr.mxu0 0.0
    %2827 = vmatpush1.msra.mxu0 0.0
    %2828 = vmatprep.subr.mxu0 0.0
    %2829 = vmatpush1.msra.mxu0 0.0
    %2830 = vmatprep.subr.mxu0 0.0
    %2831 = vmatpush1.msra.mxu0 0.0
    %2832 = vmatprep.subr.mxu0 0.0
    %2833 = vmatpush1.msra.mxu0 0.0
    %2834 = vmatprep.mubr.f32.mxu0 0.0
    %2835 = vmatmul.mubr.f32.gmra.mrb[0].mxu0 %v391
    %v2836 = vpop.f32.mrb[0].mxu0
    %v2837 = vadd.f32 0.0, %v2836
    %v2838 = vpop.f32.mrb[0].mxu0
    %2839 = vmatprep.mubr.f32.mxu0 0.0
    %2840 = vmatmul.mubr.f32.gmra.mrb[0].mxu0 %v394
    %v2841 = vpop.f32.mrb[0].mxu0
    %v2842 = vadd.f32 0.0, %v2841
    %v2843 = vpop.f32.mrb[0].mxu0
    %2844 = vmatprep.mubr.f32.mxu0 0.0
    %2845 = vmatmul.mubr.f32.gmra.mrb[0].mxu0 %v397
    %v2846 = vpop.f32.mrb[0].mxu0
    %v2847 = vadd.f32 0.0, %v2846
    %v2848 = vpop.f32.mrb[0].mxu0
    %2849 = vmatprep.mubr.f32.mxu0 0.0
    %2850 = vmatmul.mubr.f32.gmra.mrb[0].mxu0 %v400
    %v2851 = vpop.f32.mrb[0].mxu0
    %v2852 = vadd.f32 0.0, %v2851
    %v2853 = vpop.f32.mrb[0].mxu0
    %2854 = vmatprep.mubr.f32.mxu0 0.0
    %2855 = vmatmul.mubr.f32.gmra.mrb[0].mxu0 %v403
    %v2856 = vpop.f32.mrb[0].mxu0
    %v2857 = vadd.f32 0.0, %v2856
    %v2858 = vpop.f32.mrb[0].mxu0
    %2859 = vmatprep.mubr.f32.mxu0 0.0
    %2860 = vmatmul.mubr.f32.gmra.mrb[0].mxu0 %v406
    %v2861 = vpop.f32.mrb[0].mxu0
    %v2862 = vadd.f32 0.0, %v2861
    %v2863 = vpop.f32.mrb[0].mxu0
    %2864 = vmatprep.mubr.f32.mxu0 0.0
    %2865 = vmatmul.mubr.f32.gmra.mrb[0].mxu0 %v409
    %v2866 = vpop.f32.mrb[0].mxu0
    %v2867 = vadd.f32 0.0, %v2866
    %v2868 = vpop.f32.mrb[0].mxu0
    %2869 = vmatprep.mubr.f32.mxu0 0.0
    %2870 = vmatmul.mubr.f32.gmra.mrb[0].mxu0 %v412
    %v2871 = vpop.f32.mrb[0].mxu0
    %v2872 = vadd.f32 0.0, %v2871
    %v2873 = vpop.f32.mrb[0].mxu0
    %2874 = vdwg.mxu0
    %s2875 = scalar_lea.vmem [#allocation2], 48
    %v2876 = vld [vmem:[%s2875] sm:$0xff]
    %s2877 = scalar_lea.vmem [#allocation2], 56
    %v2878 = vld [vmem:[%s2877] sm:$0xff]
    %v2882 = vrot.slane %v2847, 4
    %v2883 = vrot.slane %v2852, 4
    %v2884 = vsel %vm525, %v2882, %v2883
    %v2885 = vrot.slane %v2857, 4
    %v2886 = vsel %vm525, %v2883, %v2885
    %v2887 = vsel %vm531, %v2884, 0
    %v2889 = vsel %vm531, %v2886, 0
    %v2891 = vsel %vm531, %v2885, 0
    %2893 = vmatprep.subr.mxu0 0.0
    %2894 = vmatpush1.msra.mxu0 %v2878
    %2895 = vmatprep.subr.mxu0 0.0
    %2896 = vmatpush1.msra.mxu0 0.0
    %2897 = vmatprep.subr.mxu0 0.0
    %2898 = vmatpush1.msra.mxu0 0.0
    %2899 = vmatprep.subr.mxu0 0.0
    %2900 = vmatpush1.msra.mxu0 0.0
    %2901 = vmatprep.subr.mxu0 0.0
    %2902 = vmatpush1.msra.mxu0 0.0
    %2903 = vmatprep.subr.mxu0 0.0
    %2904 = vmatpush1.msra.mxu0 0.0
    %2905 = vmatprep.subr.mxu0 0.0
    %2906 = vmatpush1.msra.mxu0 0.0
    %2907 = vmatprep.subr.mxu0 0.0
    %2908 = vmatpush1.msra.mxu0 0.0
    %2909 = vmatprep.subr.mxu0 0.0
    %2910 = vmatpush1.msra.mxu0 0.0
    %2911 = vmatprep.subr.mxu0 0.0
    %2912 = vmatpush1.msra.mxu0 0.0
    %2913 = vmatprep.subr.mxu0 0.0
    %2914 = vmatpush1.msra.mxu0 0.0
    %2915 = vmatprep.subr.mxu0 0.0
    %2916 = vmatpush1.msra.mxu0 0.0
    %2917 = vmatprep.subr.mxu0 0.0
    %2918 = vmatpush1.msra.mxu0 0.0
    %2919 = vmatprep.subr.mxu0 0.0
    %2920 = vmatpush1.msra.mxu0 0.0
    %2921 = vmatprep.subr.mxu0 0.0
    %2922 = vmatpush1.msra.mxu0 0.0
    %2923 = vmatprep.subr.mxu0 0.0
    %2924 = vmatpush1.msra.mxu0 0.0
    %2925 = vmatprep.subr.mxu0 0.0
    %2926 = vmatpush1.msra.mxu0 0.0
    %2927 = vmatprep.subr.mxu0 0.0
    %2928 = vmatpush1.msra.mxu0 0.0
    %2929 = vmatprep.subr.mxu0 0.0
    %2930 = vmatpush1.msra.mxu0 0.0
    %2931 = vmatprep.subr.mxu0 0.0
    %2932 = vmatpush1.msra.mxu0 0.0
    %2933 = vmatprep.subr.mxu0 0.0
    %2934 = vmatpush1.msra.mxu0 0.0
    %2935 = vmatprep.subr.mxu0 0.0
    %2936 = vmatpush1.msra.mxu0 0.0
    %2937 = vmatprep.subr.mxu0 0.0
    %2938 = vmatpush1.msra.mxu0 0.0
    %2939 = vmatprep.subr.mxu0 0.0
    %2940 = vmatpush1.msra.mxu0 0.0
    %2941 = vmatprep.subr.mxu0 0.0
    %2942 = vmatpush1.msra.mxu0 0.0
    %2943 = vmatprep.subr.mxu0 0.0
    %2944 = vmatpush1.msra.mxu0 0.0
    %2945 = vmatprep.subr.mxu0 0.0
    %2946 = vmatpush1.msra.mxu0 0.0
    %2947 = vmatprep.subr.mxu0 0.0
    %2948 = vmatpush1.msra.mxu0 0.0
    %2949 = vmatprep.subr.mxu0 0.0
    %2950 = vmatpush1.msra.mxu0 0.0
    %2951 = vmatprep.subr.mxu0 0.0
    %2952 = vmatpush1.msra.mxu0 0.0
    %2953 = vmatprep.subr.mxu0 0.0
    %2954 = vmatpush1.msra.mxu0 0.0
    %2955 = vmatprep.subr.mxu0 0.0
    %2956 = vmatpush1.msra.mxu0 0.0
    %2957 = vmatprep.mubr.f32.mxu0 0.0
    %2958 = vmatmul.mubr.f32.gmra.mrb[0].mxu0 %v2887
    %v2959 = vpop.f32.mrb[0].mxu0
    %v2960 = vadd.f32 0.0, %v2959
    %v2961 = vpop.f32.mrb[0].mxu0
    %2962 = vmatprep.mubr.f32.mxu0 0.0
    %2963 = vmatmul.mubr.f32.gmra.mrb[0].mxu0 %v2889
    %v2964 = vpop.f32.mrb[0].mxu0
    %v2965 = vadd.f32 0.0, %v2964
    %v2966 = vpop.f32.mrb[0].mxu0
    %2967 = vmatprep.mubr.f32.mxu0 0.0
    %2968 = vmatmul.mubr.f32.gmra.mrb[0].mxu0 %v2891
    %v2969 = vpop.f32.mrb[0].mxu0
    %v2970 = vadd.f32 0.0, %v2969
    %v2971 = vpop.f32.mrb[0].mxu0
    %2972 = vdwg.mxu0
    %v2974 = vsel %vm531, %v2837, 0
    %v2977 = vsel %vm531, %v2842, 0
    %v2979 = vsel %vm531, %v2847, 0
    %2981 = vmatprep.subr.mxu0 0.0
    %2982 = vmatpush1.msra.mxu0 %v2876
    %2983 = vmatprep.subr.mxu0 0.0
    %2984 = vmatpush1.msra.mxu0 0.0
    %2985 = vmatprep.subr.mxu0 0.0
    %2986 = vmatpush1.msra.mxu0 0.0
    %2987 = vmatprep.subr.mxu0 0.0
    %2988 = vmatpush1.msra.mxu0 0.0
    %2989 = vmatprep.subr.mxu0 0.0
    %2990 = vmatpush1.msra.mxu0 0.0
    %2991 = vmatprep.subr.mxu0 0.0
    %2992 = vmatpush1.msra.mxu0 0.0
    %2993 = vmatprep.subr.mxu0 0.0
    %2994 = vmatpush1.msra.mxu0 0.0
    %2995 = vmatprep.subr.mxu0 0.0
    %2996 = vmatpush1.msra.mxu0 0.0
    %2997 = vmatprep.subr.mxu0 0.0
    %2998 = vmatpush1.msra.mxu0 0.0
    %2999 = vmatprep.subr.mxu0 0.0
    %3000 = vmatpush1.msra.mxu0 0.0
    %3001 = vmatprep.subr.mxu0 0.0
    %3002 = vmatpush1.msra.mxu0 0.0
    %3003 = vmatprep.subr.mxu0 0.0
    %3004 = vmatpush1.msra.mxu0 0.0
    %3005 = vmatprep.subr.mxu0 0.0
    %3006 = vmatpush1.msra.mxu0 0.0
    %3007 = vmatprep.subr.mxu0 0.0
    %3008 = vmatpush1.msra.mxu0 0.0
    %3009 = vmatprep.subr.mxu0 0.0
    %3010 = vmatpush1.msra.mxu0 0.0
    %3011 = vmatprep.subr.mxu0 0.0
    %3012 = vmatpush1.msra.mxu0 0.0
    %3013 = vmatprep.subr.mxu0 0.0
    %3014 = vmatpush1.msra.mxu0 0.0
    %3015 = vmatprep.subr.mxu0 0.0
    %3016 = vmatpush1.msra.mxu0 0.0
    %3017 = vmatprep.subr.mxu0 0.0
    %3018 = vmatpush1.msra.mxu0 0.0
    %3019 = vmatprep.subr.mxu0 0.0
    %3020 = vmatpush1.msra.mxu0 0.0
    %3021 = vmatprep.subr.mxu0 0.0
    %3022 = vmatpush1.msra.mxu0 0.0
    %3023 = vmatprep.subr.mxu0 0.0
    %3024 = vmatpush1.msra.mxu0 0.0
    %3025 = vmatprep.subr.mxu0 0.0
    %3026 = vmatpush1.msra.mxu0 0.0
    %3027 = vmatprep.subr.mxu0 0.0
    %3028 = vmatpush1.msra.mxu0 0.0
    %3029 = vmatprep.subr.mxu0 0.0
    %3030 = vmatpush1.msra.mxu0 0.0
    %3031 = vmatprep.subr.mxu0 0.0
    %3032 = vmatpush1.msra.mxu0 0.0
    %3033 = vmatprep.subr.mxu0 0.0
    %3034 = vmatpush1.msra.mxu0 0.0
    %3035 = vmatprep.subr.mxu0 0.0
    %3036 = vmatpush1.msra.mxu0 0.0
    %3037 = vmatprep.subr.mxu0 0.0
    %3038 = vmatpush1.msra.mxu0 0.0
    %3039 = vmatprep.subr.mxu0 0.0
    %3040 = vmatpush1.msra.mxu0 0.0
    %3041 = vmatprep.subr.mxu0 0.0
    %3042 = vmatpush1.msra.mxu0 0.0
    %3043 = vmatprep.subr.mxu0 0.0
    %3044 = vmatpush1.msra.mxu0 0.0
    %3045 = vmatprep.mubr.f32.mxu0 0.0
    %3046 = vmatmul.mubr.f32.gmra.mrb[0].mxu0 %v2974
    %v3047 = vpop.f32.mrb[0].mxu0
    %v3048 = vadd.f32 %v2960, %v3047
    %v3049 = vpop.f32.mrb[0].mxu0
    %3050 = vmatprep.mubr.f32.mxu0 0.0
    %3051 = vmatmul.mubr.f32.gmra.mrb[0].mxu0 %v2977
    %v3052 = vpop.f32.mrb[0].mxu0
    %v3053 = vadd.f32 %v2965, %v3052
    %v3054 = vpop.f32.mrb[0].mxu0
    %3055 = vmatprep.mubr.f32.mxu0 0.0
    %3056 = vmatmul.mubr.f32.gmra.mrb[0].mxu0 %v2979
    %v3057 = vpop.f32.mrb[0].mxu0
    %v3058 = vadd.f32 %v2970, %v3057
    %v3059 = vpop.f32.mrb[0].mxu0
    %3060 = vdwg.mxu0
    %s3061 = scalar_lea.vmem [#allocation2], 64
    %v3062 = vld [vmem:[%s3061] sm:$0xff]
    %v3064 = vsel %vm531, %v2862, 0
    %v3067 = vsel %vm531, %v2867, 0
    %v3070 = vsel %vm531, %v2872, 0
    %3072 = vmatprep.subr.mxu0 0.0
    %3073 = vmatpush1.msra.mxu0 %v3062
    %3074 = vmatprep.subr.mxu0 0.0
    %3075 = vmatpush1.msra.mxu0 0.0
    %3076 = vmatprep.subr.mxu0 0.0
    %3077 = vmatpush1.msra.mxu0 0.0
    %3078 = vmatprep.subr.mxu0 0.0
    %3079 = vmatpush1.msra.mxu0 0.0
    %3080 = vmatprep.subr.mxu0 0.0
    %3081 = vmatpush1.msra.mxu0 0.0
    %3082 = vmatprep.subr.mxu0 0.0
    %3083 = vmatpush1.msra.mxu0 0.0
    %3084 = vmatprep.subr.mxu0 0.0
    %3085 = vmatpush1.msra.mxu0 0.0
    %3086 = vmatprep.subr.mxu0 0.0
    %3087 = vmatpush1.msra.mxu0 0.0
    %3088 = vmatprep.subr.mxu0 0.0
    %3089 = vmatpush1.msra.mxu0 0.0
    %3090 = vmatprep.subr.mxu0 0.0
    %3091 = vmatpush1.msra.mxu0 0.0
    %3092 = vmatprep.subr.mxu0 0.0
    %3093 = vmatpush1.msra.mxu0 0.0
    %3094 = vmatprep.subr.mxu0 0.0
    %3095 = vmatpush1.msra.mxu0 0.0
    %3096 = vmatprep.subr.mxu0 0.0
    %3097 = vmatpush1.msra.mxu0 0.0
    %3098 = vmatprep.subr.mxu0 0.0
    %3099 = vmatpush1.msra.mxu0 0.0
    %3100 = vmatprep.subr.mxu0 0.0
    %3101 = vmatpush1.msra.mxu0 0.0
    %3102 = vmatprep.subr.mxu0 0.0
    %3103 = vmatpush1.msra.mxu0 0.0
    %3104 = vmatprep.subr.mxu0 0.0
    %3105 = vmatpush1.msra.mxu0 0.0
    %3106 = vmatprep.subr.mxu0 0.0
    %3107 = vmatpush1.msra.mxu0 0.0
    %3108 = vmatprep.subr.mxu0 0.0
    %3109 = vmatpush1.msra.mxu0 0.0
    %3110 = vmatprep.subr.mxu0 0.0
    %3111 = vmatpush1.msra.mxu0 0.0
    %3112 = vmatprep.subr.mxu0 0.0
    %3113 = vmatpush1.msra.mxu0 0.0
    %3114 = vmatprep.subr.mxu0 0.0
    %3115 = vmatpush1.msra.mxu0 0.0
    %3116 = vmatprep.subr.mxu0 0.0
    %3117 = vmatpush1.msra.mxu0 0.0
    %3118 = vmatprep.subr.mxu0 0.0
    %3119 = vmatpush1.msra.mxu0 0.0
    %3120 = vmatprep.subr.mxu0 0.0
    %3121 = vmatpush1.msra.mxu0 0.0
    %3122 = vmatprep.subr.mxu0 0.0
    %3123 = vmatpush1.msra.mxu0 0.0
    %3124 = vmatprep.subr.mxu0 0.0
    %3125 = vmatpush1.msra.mxu0 0.0
    %3126 = vmatprep.subr.mxu0 0.0
    %3127 = vmatpush1.msra.mxu0 0.0
    %3128 = vmatprep.subr.mxu0 0.0
    %3129 = vmatpush1.msra.mxu0 0.0
    %3130 = vmatprep.subr.mxu0 0.0
    %3131 = vmatpush1.msra.mxu0 0.0
    %3132 = vmatprep.subr.mxu0 0.0
    %3133 = vmatpush1.msra.mxu0 0.0
    %3134 = vmatprep.subr.mxu0 0.0
    %3135 = vmatpush1.msra.mxu0 0.0
    %3136 = vmatprep.mubr.f32.mxu0 0.0
    %3137 = vmatmul.mubr.f32.gmra.mrb[0].mxu0 %v3064
    %v3138 = vpop.f32.mrb[0].mxu0
    %v3139 = vadd.f32 0.0, %v3138
    %v3140 = vpop.f32.mrb[0].mxu0
    %3141 = vmatprep.mubr.f32.mxu0 0.0
    %3142 = vmatmul.mubr.f32.gmra.mrb[0].mxu0 %v3067
    %v3143 = vpop.f32.mrb[0].mxu0
    %v3144 = vadd.f32 0.0, %v3143
    %v3145 = vpop.f32.mrb[0].mxu0
    %3146 = vmatprep.mubr.f32.mxu0 0.0
    %3147 = vmatmul.mubr.f32.gmra.mrb[0].mxu0 %v3070
    %v3148 = vpop.f32.mrb[0].mxu0
    %v3149 = vadd.f32 0.0, %v3148
    %v3150 = vpop.f32.mrb[0].mxu0
    %3151 = vdwg.mxu0
    %v3152 = vadd.f32 %v3048, %v3139
    %v3153 = vadd.f32 %v3053, %v3144
    %v3154 = vadd.f32 %v3058, %v3149
    %s3155 = scalar_lea.vmem [#allocation5], 2
    %v3156 = vld [vmem:[%s3155] sm:$0x1]
    %v3158 = vlaneseq
    %v3159 = vshrl.u32 %v3158, 7
    %v3160 = vsub.s32 0, %v3159
    %v3161 = vrot.slane %v3156, %v3160
    %v3163 = vadd.f32 %v3152, %v3161
    %v3164 = vadd.f32 %v3153, %v3161
    %v3165 = vadd.f32 %v3154, %v3161
    %vm3166 = vcmp.ge.f32.partialorder %v3163, 0.0
    %vm3167 = vcmp.ge.f32.partialorder %v3164, 0.0
    %vm3168 = vcmp.ge.f32.partialorder %v3165, 0.0
    %v3169 = vmul.f32 %v3163, 0.01
    %v3170 = vmul.f32 %v3164, 0.01
    %v3171 = vmul.f32 %v3165, 0.01
    %v3172 = vsel %vm3166, %v3163, %v3169
    %v3173 = vsel %vm3167, %v3164, %v3170
    %v3174 = vsel %vm3168, %v3165, %v3171
    %v3176 = vsel %vm525, %v3174, 0
    %3178 = vmatprep.subr.mxu0 0.0
    %3179 = vmatpush1.msra.mxu0 %v3172
    %3180 = vmatprep.subr.mxu0 0.0
    %3181 = vmatpush1.msra.mxu0 %v3173
    %3182 = vmatprep.subr.mxu0 0.0
    %3183 = vmatpush1.msra.mxu0 %v3176
    %3184 = vmatprep.subr.mxu0 0.0
    %3185 = vmatpush1.msra.mxu0 0.0
    %3186 = vmatprep.subr.mxu0 0.0
    %3187 = vmatpush1.msra.mxu0 0.0
    %3188 = vmatprep.subr.mxu0 0.0
    %3189 = vmatpush1.msra.mxu0 0.0
    %3190 = vmatprep.subr.mxu0 0.0
    %3191 = vmatpush1.msra.mxu0 0.0
    %3192 = vmatprep.subr.mxu0 0.0
    %3193 = vmatpush1.msra.mxu0 0.0
    %3194 = vmatprep.subr.mxu0 0.0
    %3195 = vmatpush1.msra.mxu0 0.0
    %3196 = vmatprep.subr.mxu0 0.0
    %3197 = vmatpush1.msra.mxu0 0.0
    %3198 = vmatprep.subr.mxu0 0.0
    %3199 = vmatpush1.msra.mxu0 0.0
    %3200 = vmatprep.subr.mxu0 0.0
    %3201 = vmatpush1.msra.mxu0 0.0
    %3202 = vmatprep.subr.mxu0 0.0
    %3203 = vmatpush1.msra.mxu0 0.0
    %3204 = vmatprep.subr.mxu0 0.0
    %3205 = vmatpush1.msra.mxu0 0.0
    %3206 = vmatprep.subr.mxu0 0.0
    %3207 = vmatpush1.msra.mxu0 0.0
    %3208 = vmatprep.subr.mxu0 0.0
    %3209 = vmatpush1.msra.mxu0 0.0
    %3210 = vmatprep.subr.mxu0 0.0
    %3211 = vmatpush1.msra.mxu0 0.0
    %3212 = vmatprep.subr.mxu0 0.0
    %3213 = vmatpush1.msra.mxu0 0.0
    %3214 = vmatprep.subr.mxu0 0.0
    %3215 = vmatpush1.msra.mxu0 0.0
    %3216 = vmatprep.subr.mxu0 0.0
    %3217 = vmatpush1.msra.mxu0 0.0
    %3218 = vmatprep.subr.mxu0 0.0
    %3219 = vmatpush1.msra.mxu0 0.0
    %3220 = vmatprep.subr.mxu0 0.0
    %3221 = vmatpush1.msra.mxu0 0.0
    %3222 = vmatprep.subr.mxu0 0.0
    %3223 = vmatpush1.msra.mxu0 0.0
    %3224 = vmatprep.subr.mxu0 0.0
    %3225 = vmatpush1.msra.mxu0 0.0
    %3226 = vmatprep.subr.mxu0 0.0
    %3227 = vmatpush1.msra.mxu0 0.0
    %3228 = vmatprep.subr.mxu0 0.0
    %3229 = vmatpush1.msra.mxu0 0.0
    %3230 = vmatprep.subr.mxu0 0.0
    %3231 = vmatpush1.msra.mxu0 0.0
    %3232 = vmatprep.subr.mxu0 0.0
    %3233 = vmatpush1.msra.mxu0 0.0
    %3234 = vmatprep.subr.mxu0 0.0
    %3235 = vmatpush1.msra.mxu0 0.0
    %3236 = vmatprep.subr.mxu0 0.0
    %3237 = vmatpush1.msra.mxu0 0.0
    %3238 = vmatprep.subr.mxu0 0.0
    %3239 = vmatpush1.msra.mxu0 0.0
    %3240 = vmatprep.subr.mxu0 0.0
    %3241 = vmatpush1.msra.mxu0 0.0
    %3242 = vmatprep.mubr.f32.mxu0 0.0
    %3243 = vmatmul.mubr.f32.gmra.mrb[0].mxu0 %v821
    %v3244 = vpop.f32.mrb[0].mxu0
    %v3245 = vadd.f32 0.0, %v3244
    %v3246 = vpop.f32.mrb[0].mxu0
    %3247 = vmatprep.mubr.f32.mxu0 0.0
    %3248 = vmatmul.mubr.f32.gmra.mrb[0].mxu0 %v824
    %v3249 = vpop.f32.mrb[0].mxu0
    %v3250 = vadd.f32 0.0, %v3249
    %v3251 = vpop.f32.mrb[0].mxu0
    %3252 = vmatprep.mubr.f32.mxu0 0.0
    %3253 = vmatmul.mubr.f32.gmra.mrb[0].mxu0 %v827
    %v3254 = vpop.f32.mrb[0].mxu0
    %v3255 = vadd.f32 0.0, %v3254
    %v3256 = vpop.f32.mrb[0].mxu0
    %3257 = vmatprep.mubr.f32.mxu0 0.0
    %3258 = vmatmul.mubr.f32.gmra.mrb[0].mxu0 %v830
    %v3259 = vpop.f32.mrb[0].mxu0
    %v3260 = vadd.f32 0.0, %v3259
    %v3261 = vpop.f32.mrb[0].mxu0
    %3262 = vmatprep.mubr.f32.mxu0 0.0
    %3263 = vmatmul.mubr.f32.gmra.mrb[0].mxu0 %v833
    %v3264 = vpop.f32.mrb[0].mxu0
    %v3265 = vadd.f32 0.0, %v3264
    %v3266 = vpop.f32.mrb[0].mxu0
    %3267 = vmatprep.mubr.f32.mxu0 0.0
    %3268 = vmatmul.mubr.f32.gmra.mrb[0].mxu0 %v836
    %v3269 = vpop.f32.mrb[0].mxu0
    %v3270 = vadd.f32 0.0, %v3269
    %v3271 = vpop.f32.mrb[0].mxu0
    %3272 = vdwg.mxu0
    %s3273 = scalar_lea.vmem [#allocation7], 192
    %v3274 = vld [vmem:[%s3273] sm:$0xff]
    %v3275 = vld [vmem:[%s3273 + $0x8] sm:$0xff]
    %v3276 = vld [vmem:[%s3273 + $0x10] sm:$0xff]
    %v3277 = vld [vmem:[%s3273 + $0x18] sm:$0xff]
    %s3278 = scalar_lea.vmem [#allocation7], 224
    %v3279 = vld [vmem:[%s3278] sm:$0xff]
    %v3280 = vld [vmem:[%s3278 + $0x8] sm:$0xff]
    %v3281 = vld [vmem:[%s3278 + $0x10] sm:$0xff]
    %v3282 = vld [vmem:[%s3278 + $0x18] sm:$0xff]
    %v3284 = vsel %vm226, %v3255, 0
    %v3287 = vsel %vm226, %v3260, 0
    %3289 = vmatprep.subr.mxu0 0.0
    %3290 = vmatpush1.msra.mxu0 %v3279
    %3291 = vmatprep.subr.mxu0 0.0
    %3292 = vmatpush1.msra.mxu0 %v3280
    %3293 = vmatprep.subr.mxu0 0.0
    %3294 = vmatpush1.msra.mxu0 %v3281
    %3295 = vmatprep.subr.mxu0 0.0
    %3296 = vmatpush1.msra.mxu0 %v3282
    %3297 = vmatprep.subr.mxu0 0.0
    %3298 = vmatpush1.msra.mxu0 0.0
    %3299 = vmatprep.subr.mxu0 0.0
    %3300 = vmatpush1.msra.mxu0 0.0
    %3301 = vmatprep.subr.mxu0 0.0
    %3302 = vmatpush1.msra.mxu0 0.0
    %3303 = vmatprep.subr.mxu0 0.0
    %3304 = vmatpush1.msra.mxu0 0.0
    %3305 = vmatprep.subr.mxu0 0.0
    %3306 = vmatpush1.msra.mxu0 0.0
    %3307 = vmatprep.subr.mxu0 0.0
    %3308 = vmatpush1.msra.mxu0 0.0
    %3309 = vmatprep.subr.mxu0 0.0
    %3310 = vmatpush1.msra.mxu0 0.0
    %3311 = vmatprep.subr.mxu0 0.0
    %3312 = vmatpush1.msra.mxu0 0.0
    %3313 = vmatprep.subr.mxu0 0.0
    %3314 = vmatpush1.msra.mxu0 0.0
    %3315 = vmatprep.subr.mxu0 0.0
    %3316 = vmatpush1.msra.mxu0 0.0
    %3317 = vmatprep.subr.mxu0 0.0
    %3318 = vmatpush1.msra.mxu0 0.0
    %3319 = vmatprep.subr.mxu0 0.0
    %3320 = vmatpush1.msra.mxu0 0.0
    %3321 = vmatprep.subr.mxu0 0.0
    %3322 = vmatpush1.msra.mxu0 0.0
    %3323 = vmatprep.subr.mxu0 0.0
    %3324 = vmatpush1.msra.mxu0 0.0
    %3325 = vmatprep.subr.mxu0 0.0
    %3326 = vmatpush1.msra.mxu0 0.0
    %3327 = vmatprep.subr.mxu0 0.0
    %3328 = vmatpush1.msra.mxu0 0.0
    %3329 = vmatprep.subr.mxu0 0.0
    %3330 = vmatpush1.msra.mxu0 0.0
    %3331 = vmatprep.subr.mxu0 0.0
    %3332 = vmatpush1.msra.mxu0 0.0
    %3333 = vmatprep.subr.mxu0 0.0
    %3334 = vmatpush1.msra.mxu0 0.0
    %3335 = vmatprep.subr.mxu0 0.0
    %3336 = vmatpush1.msra.mxu0 0.0
    %3337 = vmatprep.subr.mxu0 0.0
    %3338 = vmatpush1.msra.mxu0 0.0
    %3339 = vmatprep.subr.mxu0 0.0
    %3340 = vmatpush1.msra.mxu0 0.0
    %3341 = vmatprep.subr.mxu0 0.0
    %3342 = vmatpush1.msra.mxu0 0.0
    %3343 = vmatprep.subr.mxu0 0.0
    %3344 = vmatpush1.msra.mxu0 0.0
    %3345 = vmatprep.subr.mxu0 0.0
    %3346 = vmatpush1.msra.mxu0 0.0
    %3347 = vmatprep.subr.mxu0 0.0
    %3348 = vmatpush1.msra.mxu0 0.0
    %3349 = vmatprep.subr.mxu0 0.0
    %3350 = vmatpush1.msra.mxu0 0.0
    %3351 = vmatprep.subr.mxu0 0.0
    %3352 = vmatpush1.msra.mxu0 0.0
    %3353 = vmatprep.mubr.f32.mxu0 0.0
    %3354 = vmatmul.mubr.f32.gmra.mrb[0].mxu0 %v3284
    %v3355 = vpop.f32.mrb[0].mxu0
    %v3356 = vadd.f32 0.0, %v3355
    %v3357 = vpop.f32.mrb[0].mxu0
    %3358 = vmatprep.mubr.f32.mxu0 0.0
    %3359 = vmatmul.mubr.f32.gmra.mrb[0].mxu0 %v3287
    %v3360 = vpop.f32.mrb[0].mxu0
    %v3361 = vadd.f32 0.0, %v3360
    %v3362 = vpop.f32.mrb[0].mxu0
    %3363 = vdwg.mxu0
    %v3365 = vsel %vm226, %v3245, 0
    %v3368 = vsel %vm226, %v3250, 0
    %3370 = vmatprep.subr.mxu0 0.0
    %3371 = vmatpush1.msra.mxu0 %v3274
    %3372 = vmatprep.subr.mxu0 0.0
    %3373 = vmatpush1.msra.mxu0 %v3275
    %3374 = vmatprep.subr.mxu0 0.0
    %3375 = vmatpush1.msra.mxu0 %v3276
    %3376 = vmatprep.subr.mxu0 0.0
    %3377 = vmatpush1.msra.mxu0 %v3277
    %3378 = vmatprep.subr.mxu0 0.0
    %3379 = vmatpush1.msra.mxu0 0.0
    %3380 = vmatprep.subr.mxu0 0.0
    %3381 = vmatpush1.msra.mxu0 0.0
    %3382 = vmatprep.subr.mxu0 0.0
    %3383 = vmatpush1.msra.mxu0 0.0
    %3384 = vmatprep.subr.mxu0 0.0
    %3385 = vmatpush1.msra.mxu0 0.0
    %3386 = vmatprep.subr.mxu0 0.0
    %3387 = vmatpush1.msra.mxu0 0.0
    %3388 = vmatprep.subr.mxu0 0.0
    %3389 = vmatpush1.msra.mxu0 0.0
    %3390 = vmatprep.subr.mxu0 0.0
    %3391 = vmatpush1.msra.mxu0 0.0
    %3392 = vmatprep.subr.mxu0 0.0
    %3393 = vmatpush1.msra.mxu0 0.0
    %3394 = vmatprep.subr.mxu0 0.0
    %3395 = vmatpush1.msra.mxu0 0.0
    %3396 = vmatprep.subr.mxu0 0.0
    %3397 = vmatpush1.msra.mxu0 0.0
    %3398 = vmatprep.subr.mxu0 0.0
    %3399 = vmatpush1.msra.mxu0 0.0
    %3400 = vmatprep.subr.mxu0 0.0
    %3401 = vmatpush1.msra.mxu0 0.0
    %3402 = vmatprep.subr.mxu0 0.0
    %3403 = vmatpush1.msra.mxu0 0.0
    %3404 = vmatprep.subr.mxu0 0.0
    %3405 = vmatpush1.msra.mxu0 0.0
    %3406 = vmatprep.subr.mxu0 0.0
    %3407 = vmatpush1.msra.mxu0 0.0
    %3408 = vmatprep.subr.mxu0 0.0
    %3409 = vmatpush1.msra.mxu0 0.0
    %3410 = vmatprep.subr.mxu0 0.0
    %3411 = vmatpush1.msra.mxu0 0.0
    %3412 = vmatprep.subr.mxu0 0.0
    %3413 = vmatpush1.msra.mxu0 0.0
    %3414 = vmatprep.subr.mxu0 0.0
    %3415 = vmatpush1.msra.mxu0 0.0
    %3416 = vmatprep.subr.mxu0 0.0
    %3417 = vmatpush1.msra.mxu0 0.0
    %3418 = vmatprep.subr.mxu0 0.0
    %3419 = vmatpush1.msra.mxu0 0.0
    %3420 = vmatprep.subr.mxu0 0.0
    %3421 = vmatpush1.msra.mxu0 0.0
    %3422 = vmatprep.subr.mxu0 0.0
    %3423 = vmatpush1.msra.mxu0 0.0
    %3424 = vmatprep.subr.mxu0 0.0
    %3425 = vmatpush1.msra.mxu0 0.0
    %3426 = vmatprep.subr.mxu0 0.0
    %3427 = vmatpush1.msra.mxu0 0.0
    %3428 = vmatprep.subr.mxu0 0.0
    %3429 = vmatpush1.msra.mxu0 0.0
    %3430 = vmatprep.subr.mxu0 0.0
    %3431 = vmatpush1.msra.mxu0 0.0
    %3432 = vmatprep.subr.mxu0 0.0
    %3433 = vmatpush1.msra.mxu0 0.0
    %3434 = vmatprep.mubr.f32.mxu0 0.0
    %3435 = vmatmul.mubr.f32.gmra.mrb[0].mxu0 %v3365
    %v3436 = vpop.f32.mrb[0].mxu0
    %v3437 = vadd.f32 %v3356, %v3436
    %v3438 = vpop.f32.mrb[0].mxu0
    %3439 = vmatprep.mubr.f32.mxu0 0.0
    %3440 = vmatmul.mubr.f32.gmra.mrb[0].mxu0 %v3368
    %v3441 = vpop.f32.mrb[0].mxu0
    %v3442 = vadd.f32 %v3361, %v3441
    %v3443 = vpop.f32.mrb[0].mxu0
    %3444 = vdwg.mxu0
    %s3445 = scalar_lea.vmem [#allocation7], 256
    %v3446 = vld [vmem:[%s3445] sm:$0xff]
    %v3447 = vld [vmem:[%s3445 + $0x8] sm:$0xff]
    %v3448 = vld [vmem:[%s3445 + $0x10] sm:$0xff]
    %v3449 = vld [vmem:[%s3445 + $0x18] sm:$0xff]
    %v3451 = vsel %vm226, %v3265, 0
    %v3454 = vsel %vm226, %v3270, 0
    %3456 = vmatprep.subr.mxu0 0.0
    %3457 = vmatpush1.msra.mxu0 %v3446
    %3458 = vmatprep.subr.mxu0 0.0
    %3459 = vmatpush1.msra.mxu0 %v3447
    %3460 = vmatprep.subr.mxu0 0.0
    %3461 = vmatpush1.msra.mxu0 %v3448
    %3462 = vmatprep.subr.mxu0 0.0
    %3463 = vmatpush1.msra.mxu0 %v3449
    %3464 = vmatprep.subr.mxu0 0.0
    %3465 = vmatpush1.msra.mxu0 0.0
    %3466 = vmatprep.subr.mxu0 0.0
    %3467 = vmatpush1.msra.mxu0 0.0
    %3468 = vmatprep.subr.mxu0 0.0
    %3469 = vmatpush1.msra.mxu0 0.0
    %3470 = vmatprep.subr.mxu0 0.0
    %3471 = vmatpush1.msra.mxu0 0.0
    %3472 = vmatprep.subr.mxu0 0.0
    %3473 = vmatpush1.msra.mxu0 0.0
    %3474 = vmatprep.subr.mxu0 0.0
    %3475 = vmatpush1.msra.mxu0 0.0
    %3476 = vmatprep.subr.mxu0 0.0
    %3477 = vmatpush1.msra.mxu0 0.0
    %3478 = vmatprep.subr.mxu0 0.0
    %3479 = vmatpush1.msra.mxu0 0.0
    %3480 = vmatprep.subr.mxu0 0.0
    %3481 = vmatpush1.msra.mxu0 0.0
    %3482 = vmatprep.subr.mxu0 0.0
    %3483 = vmatpush1.msra.mxu0 0.0
    %3484 = vmatprep.subr.mxu0 0.0
    %3485 = vmatpush1.msra.mxu0 0.0
    %3486 = vmatprep.subr.mxu0 0.0
    %3487 = vmatpush1.msra.mxu0 0.0
    %3488 = vmatprep.subr.mxu0 0.0
    %3489 = vmatpush1.msra.mxu0 0.0
    %3490 = vmatprep.subr.mxu0 0.0
    %3491 = vmatpush1.msra.mxu0 0.0
    %3492 = vmatprep.subr.mxu0 0.0
    %3493 = vmatpush1.msra.mxu0 0.0
    %3494 = vmatprep.subr.mxu0 0.0
    %3495 = vmatpush1.msra.mxu0 0.0
    %3496 = vmatprep.subr.mxu0 0.0
    %3497 = vmatpush1.msra.mxu0 0.0
    %3498 = vmatprep.subr.mxu0 0.0
    %3499 = vmatpush1.msra.mxu0 0.0
    %3500 = vmatprep.subr.mxu0 0.0
    %3501 = vmatpush1.msra.mxu0 0.0
    %3502 = vmatprep.subr.mxu0 0.0
    %3503 = vmatpush1.msra.mxu0 0.0
    %3504 = vmatprep.subr.mxu0 0.0
    %3505 = vmatpush1.msra.mxu0 0.0
    %3506 = vmatprep.subr.mxu0 0.0
    %3507 = vmatpush1.msra.mxu0 0.0
    %3508 = vmatprep.subr.mxu0 0.0
    %3509 = vmatpush1.msra.mxu0 0.0
    %3510 = vmatprep.subr.mxu0 0.0
    %3511 = vmatpush1.msra.mxu0 0.0
    %3512 = vmatprep.subr.mxu0 0.0
    %3513 = vmatpush1.msra.mxu0 0.0
    %3514 = vmatprep.subr.mxu0 0.0
    %3515 = vmatpush1.msra.mxu0 0.0
    %3516 = vmatprep.subr.mxu0 0.0
    %3517 = vmatpush1.msra.mxu0 0.0
    %3518 = vmatprep.subr.mxu0 0.0
    %3519 = vmatpush1.msra.mxu0 0.0
    %3520 = vmatprep.mubr.f32.mxu0 0.0
    %3521 = vmatmul.mubr.f32.gmra.mrb[0].mxu0 %v3451
    %v3522 = vpop.f32.mrb[0].mxu0
    %v3523 = vadd.f32 0.0, %v3522
    %v3524 = vpop.f32.mrb[0].mxu0
    %3525 = vmatprep.mubr.f32.mxu0 0.0
    %3526 = vmatmul.mubr.f32.gmra.mrb[0].mxu0 %v3454
    %v3527 = vpop.f32.mrb[0].mxu0
    %v3528 = vadd.f32 0.0, %v3527
    %v3529 = vpop.f32.mrb[0].mxu0
    %3530 = vdwg.mxu0
    %v3531 = vadd.f32 %v3437, %v3523
    %v3532 = vadd.f32 %v3442, %v3528
    %s3533 = scalar_lea.vmem [#allocation8], 2
    %v3534 = vld [vmem:[%s3533] sm:$0x1]
    %v3536 = vlaneseq
    %v3537 = vshrl.u32 %v3536, 7
    %v3538 = vsub.s32 0, %v3537
    %v3539 = vrot.slane %v3534, %v3538
    %v3541 = vadd.f32 %v3531, %v3539
    %v3542 = vadd.f32 %v3532, %v3539
    %v3543 = vtanh.pop %v3541
    %v3544 = vtanh.pop %v3542
    %v3545 = vsub.f32 %v1210, %v3543
    %v3546 = vsub.f32 %v1211, %v3544
    %v3547 = vld [vmem:[#allocation14] sm:$0xff]
    %s3548 = scalar_lea.vmem [#allocation14], 8
    %v3549 = vld [vmem:[%s3548] sm:$0xff]
    %v3551 = vsel %vm389, %v3547, 0
    %3553 = vmatprep.subr.mxu0 0.0
    %3554 = vmatpush1.msra.mxu0 %v2768
    %3555 = vmatprep.subr.mxu0 0.0
    %3556 = vmatpush1.msra.mxu0 %v2769
    %3557 = vmatprep.subr.mxu0 0.0
    %3558 = vmatpush1.msra.mxu0 0.0
    %3559 = vmatprep.subr.mxu0 0.0
    %3560 = vmatpush1.msra.mxu0 0.0
    %3561 = vmatprep.subr.mxu0 0.0
    %3562 = vmatpush1.msra.mxu0 0.0
    %3563 = vmatprep.subr.mxu0 0.0
    %3564 = vmatpush1.msra.mxu0 0.0
    %3565 = vmatprep.subr.mxu0 0.0
    %3566 = vmatpush1.msra.mxu0 0.0
    %3567 = vmatprep.subr.mxu0 0.0
    %3568 = vmatpush1.msra.mxu0 0.0
    %3569 = vmatprep.subr.mxu0 0.0
    %3570 = vmatpush1.msra.mxu0 0.0
    %3571 = vmatprep.subr.mxu0 0.0
    %3572 = vmatpush1.msra.mxu0 0.0
    %3573 = vmatprep.subr.mxu0 0.0
    %3574 = vmatpush1.msra.mxu0 0.0
    %3575 = vmatprep.subr.mxu0 0.0
    %3576 = vmatpush1.msra.mxu0 0.0
    %3577 = vmatprep.subr.mxu0 0.0
    %3578 = vmatpush1.msra.mxu0 0.0
    %3579 = vmatprep.subr.mxu0 0.0
    %3580 = vmatpush1.msra.mxu0 0.0
    %3581 = vmatprep.subr.mxu0 0.0
    %3582 = vmatpush1.msra.mxu0 0.0
    %3583 = vmatprep.subr.mxu0 0.0
    %3584 = vmatpush1.msra.mxu0 0.0
    %3585 = vmatprep.subr.mxu0 0.0
    %3586 = vmatpush1.msra.mxu0 0.0
    %3587 = vmatprep.subr.mxu0 0.0
    %3588 = vmatpush1.msra.mxu0 0.0
    %3589 = vmatprep.subr.mxu0 0.0
    %3590 = vmatpush1.msra.mxu0 0.0
    %3591 = vmatprep.subr.mxu0 0.0
    %3592 = vmatpush1.msra.mxu0 0.0
    %3593 = vmatprep.subr.mxu0 0.0
    %3594 = vmatpush1.msra.mxu0 0.0
    %3595 = vmatprep.subr.mxu0 0.0
    %3596 = vmatpush1.msra.mxu0 0.0
    %3597 = vmatprep.subr.mxu0 0.0
    %3598 = vmatpush1.msra.mxu0 0.0
    %3599 = vmatprep.subr.mxu0 0.0
    %3600 = vmatpush1.msra.mxu0 0.0
    %3601 = vmatprep.subr.mxu0 0.0
    %3602 = vmatpush1.msra.mxu0 0.0
    %3603 = vmatprep.subr.mxu0 0.0
    %3604 = vmatpush1.msra.mxu0 0.0
    %3605 = vmatprep.subr.mxu0 0.0
    %3606 = vmatpush1.msra.mxu0 0.0
    %3607 = vmatprep.subr.mxu0 0.0
    %3608 = vmatpush1.msra.mxu0 0.0
    %3609 = vmatprep.subr.mxu0 0.0
    %3610 = vmatpush1.msra.mxu0 0.0
    %3611 = vmatprep.subr.mxu0 0.0
    %3612 = vmatpush1.msra.mxu0 0.0
    %3613 = vmatprep.subr.mxu0 0.0
    %3614 = vmatpush1.msra.mxu0 0.0
    %3615 = vmatprep.subr.mxu0 0.0
    %3616 = vmatpush1.msra.mxu0 0.0
    %3617 = vmatprep.mubr.f32.mxu0 0.0
    %3618 = vmatmul.mubr.f32.gmra.mrb[0].mxu0 %v3551
    %v3619 = vpop.f32.mrb[0].mxu0
    %v3620 = vadd.f32 0.0, %v3619
    %v3621 = vpop.f32.mrb[0].mxu0
    %3622 = vdwg.mxu0
    %v3624 = vsel %vm389, %v3549, 0
    %3626 = vmatprep.subr.mxu0 0.0
    %3627 = vmatpush1.msra.mxu0 %v2768
    %3628 = vmatprep.subr.mxu0 0.0
    %3629 = vmatpush1.msra.mxu0 %v2769
    %3630 = vmatprep.subr.mxu0 0.0
    %3631 = vmatpush1.msra.mxu0 0.0
    %3632 = vmatprep.subr.mxu0 0.0
    %3633 = vmatpush1.msra.mxu0 0.0
    %3634 = vmatprep.subr.mxu0 0.0
    %3635 = vmatpush1.msra.mxu0 0.0
    %3636 = vmatprep.subr.mxu0 0.0
    %3637 = vmatpush1.msra.mxu0 0.0
    %3638 = vmatprep.subr.mxu0 0.0
    %3639 = vmatpush1.msra.mxu0 0.0
    %3640 = vmatprep.subr.mxu0 0.0
    %3641 = vmatpush1.msra.mxu0 0.0
    %3642 = vmatprep.subr.mxu0 0.0
    %3643 = vmatpush1.msra.mxu0 0.0
    %3644 = vmatprep.subr.mxu0 0.0
    %3645 = vmatpush1.msra.mxu0 0.0
    %3646 = vmatprep.subr.mxu0 0.0
    %3647 = vmatpush1.msra.mxu0 0.0
    %3648 = vmatprep.subr.mxu0 0.0
    %3649 = vmatpush1.msra.mxu0 0.0
    %3650 = vmatprep.subr.mxu0 0.0
    %3651 = vmatpush1.msra.mxu0 0.0
    %3652 = vmatprep.subr.mxu0 0.0
    %3653 = vmatpush1.msra.mxu0 0.0
    %3654 = vmatprep.subr.mxu0 0.0
    %3655 = vmatpush1.msra.mxu0 0.0
    %3656 = vmatprep.subr.mxu0 0.0
    %3657 = vmatpush1.msra.mxu0 0.0
    %3658 = vmatprep.subr.mxu0 0.0
    %3659 = vmatpush1.msra.mxu0 0.0
    %3660 = vmatprep.subr.mxu0 0.0
    %3661 = vmatpush1.msra.mxu0 0.0
    %3662 = vmatprep.subr.mxu0 0.0
    %3663 = vmatpush1.msra.mxu0 0.0
    %3664 = vmatprep.subr.mxu0 0.0
    %3665 = vmatpush1.msra.mxu0 0.0
    %3666 = vmatprep.subr.mxu0 0.0
    %3667 = vmatpush1.msra.mxu0 0.0
    %3668 = vmatprep.subr.mxu0 0.0
    %3669 = vmatpush1.msra.mxu0 0.0
    %3670 = vmatprep.subr.mxu0 0.0
    %3671 = vmatpush1.msra.mxu0 0.0
    %3672 = vmatprep.subr.mxu0 0.0
    %3673 = vmatpush1.msra.mxu0 0.0
    %3674 = vmatprep.subr.mxu0 0.0
    %3675 = vmatpush1.msra.mxu0 0.0
    %3676 = vmatprep.subr.mxu0 0.0
    %3677 = vmatpush1.msra.mxu0 0.0
    %3678 = vmatprep.subr.mxu0 0.0
    %3679 = vmatpush1.msra.mxu0 0.0
    %3680 = vmatprep.subr.mxu0 0.0
    %3681 = vmatpush1.msra.mxu0 0.0
    %3682 = vmatprep.subr.mxu0 0.0
    %3683 = vmatpush1.msra.mxu0 0.0
    %3684 = vmatprep.subr.mxu0 0.0
    %3685 = vmatpush1.msra.mxu0 0.0
    %3686 = vmatprep.subr.mxu0 0.0
    %3687 = vmatpush1.msra.mxu0 0.0
    %3688 = vmatprep.subr.mxu0 0.0
    %3689 = vmatpush1.msra.mxu0 0.0
    %3690 = vmatprep.mubr.f32.mxu0 0.0
    %3691 = vmatmul.mubr.f32.gmra.mrb[0].mxu0 %v3624
    %v3692 = vpop.f32.mrb[0].mxu0
    %v3693 = vadd.f32 0.0, %v3692
    %v3694 = vpop.f32.mrb[0].mxu0
    %3695 = vdwg.mxu0
    %v3697 = vsel %vm531, %v213, 0
    %v3700 = vsel %vm531, %v214, 0
    %v3703 = vsel %vm531, %v215, 0
    %v3706 = vsel %vm531, %v216, 0
    %v3709 = vsel %vm531, %v217, 0
    %3711 = vmatprep.subr.mxu0 0.0
    %3712 = vmatpush1.msra.mxu0 %v3620
    %3713 = vmatprep.subr.mxu0 0.0
    %3714 = vmatpush1.msra.mxu0 0.0
    %3715 = vmatprep.subr.mxu0 0.0
    %3716 = vmatpush1.msra.mxu0 0.0
    %3717 = vmatprep.subr.mxu0 0.0
    %3718 = vmatpush1.msra.mxu0 0.0
    %3719 = vmatprep.subr.mxu0 0.0
    %3720 = vmatpush1.msra.mxu0 0.0
    %3721 = vmatprep.subr.mxu0 0.0
    %3722 = vmatpush1.msra.mxu0 0.0
    %3723 = vmatprep.subr.mxu0 0.0
    %3724 = vmatpush1.msra.mxu0 0.0
    %3725 = vmatprep.subr.mxu0 0.0
    %3726 = vmatpush1.msra.mxu0 0.0
    %3727 = vmatprep.subr.mxu0 0.0
    %3728 = vmatpush1.msra.mxu0 0.0
    %3729 = vmatprep.subr.mxu0 0.0
    %3730 = vmatpush1.msra.mxu0 0.0
    %3731 = vmatprep.subr.mxu0 0.0
    %3732 = vmatpush1.msra.mxu0 0.0
    %3733 = vmatprep.subr.mxu0 0.0
    %3734 = vmatpush1.msra.mxu0 0.0
    %3735 = vmatprep.subr.mxu0 0.0
    %3736 = vmatpush1.msra.mxu0 0.0
    %3737 = vmatprep.subr.mxu0 0.0
    %3738 = vmatpush1.msra.mxu0 0.0
    %3739 = vmatprep.subr.mxu0 0.0
    %3740 = vmatpush1.msra.mxu0 0.0
    %3741 = vmatprep.subr.mxu0 0.0
    %3742 = vmatpush1.msra.mxu0 0.0
    %3743 = vmatprep.subr.mxu0 0.0
    %3744 = vmatpush1.msra.mxu0 0.0
    %3745 = vmatprep.subr.mxu0 0.0
    %3746 = vmatpush1.msra.mxu0 0.0
    %3747 = vmatprep.subr.mxu0 0.0
    %3748 = vmatpush1.msra.mxu0 0.0
    %3749 = vmatprep.subr.mxu0 0.0
    %3750 = vmatpush1.msra.mxu0 0.0
    %3751 = vmatprep.subr.mxu0 0.0
    %3752 = vmatpush1.msra.mxu0 0.0
    %3753 = vmatprep.subr.mxu0 0.0
    %3754 = vmatpush1.msra.mxu0 0.0
    %3755 = vmatprep.subr.mxu0 0.0
    %3756 = vmatpush1.msra.mxu0 0.0
    %3757 = vmatprep.subr.mxu0 0.0
    %3758 = vmatpush1.msra.mxu0 0.0
    %3759 = vmatprep.subr.mxu0 0.0
    %3760 = vmatpush1.msra.mxu0 0.0
    %3761 = vmatprep.subr.mxu0 0.0
    %3762 = vmatpush1.msra.mxu0 0.0
    %3763 = vmatprep.subr.mxu0 0.0
    %3764 = vmatpush1.msra.mxu0 0.0
    %3765 = vmatprep.subr.mxu0 0.0
    %3766 = vmatpush1.msra.mxu0 0.0
    %3767 = vmatprep.subr.mxu0 0.0
    %3768 = vmatpush1.msra.mxu0 0.0
    %3769 = vmatprep.subr.mxu0 0.0
    %3770 = vmatpush1.msra.mxu0 0.0
    %3771 = vmatprep.subr.mxu0 0.0
    %3772 = vmatpush1.msra.mxu0 0.0
    %3773 = vmatprep.subr.mxu0 0.0
    %3774 = vmatpush1.msra.mxu0 0.0
    %3775 = vmatprep.mubr.f32.mxu0 0.0
    %3776 = vmatmul.mubr.f32.gmra.mrb[0].mxu0 %v3697
    %v3777 = vpop.f32.mrb[0].mxu0
    %v3778 = vadd.f32 0.0, %v3777
    %v3779 = vpop.f32.mrb[0].mxu0
    %3780 = vmatprep.mubr.f32.mxu0 0.0
    %3781 = vmatmul.mubr.f32.gmra.mrb[0].mxu0 %v3700
    %v3782 = vpop.f32.mrb[0].mxu0
    %v3783 = vadd.f32 0.0, %v3782
    %v3784 = vpop.f32.mrb[0].mxu0
    %3785 = vmatprep.mubr.f32.mxu0 0.0
    %3786 = vmatmul.mubr.f32.gmra.mrb[0].mxu0 %v3703
    %v3787 = vpop.f32.mrb[0].mxu0
    %v3788 = vadd.f32 0.0, %v3787
    %v3789 = vpop.f32.mrb[0].mxu0
    %3790 = vmatprep.mubr.f32.mxu0 0.0
    %3791 = vmatmul.mubr.f32.gmra.mrb[0].mxu0 %v3706
    %v3792 = vpop.f32.mrb[0].mxu0
    %v3793 = vadd.f32 0.0, %v3792
    %v3794 = vpop.f32.mrb[0].mxu0
    %3795 = vmatprep.mubr.f32.mxu0 0.0
    %3796 = vmatmul.mubr.f32.gmra.mrb[0].mxu0 %v3709
    %v3797 = vpop.f32.mrb[0].mxu0
    %v3798 = vadd.f32 0.0, %v3797
    %v3799 = vpop.f32.mrb[0].mxu0
    %3800 = vdwg.mxu0
    %s3801 = scalar_lea.vmem [#allocation2], 96
    %v3802 = vld [vmem:[%s3801] sm:$0xff]
    %s3803 = scalar_lea.vmem [#allocation2], 104
    %v3804 = vld [vmem:[%s3803] sm:$0xff]
    %v3807 = vrot.slane %v3783, 4
    %v3808 = vrot.slane %v3788, 4
    %v3809 = vsel %vm525, %v3807, %v3808
    %v3810 = vsel %vm531, %v3809, 0
    %v3812 = vsel %vm531, %v3808, 0
    %3814 = vmatprep.subr.mxu0 0.0
    %3815 = vmatpush1.msra.mxu0 %v3804
    %3816 = vmatprep.subr.mxu0 0.0
    %3817 = vmatpush1.msra.mxu0 0.0
    %3818 = vmatprep.subr.mxu0 0.0
    %3819 = vmatpush1.msra.mxu0 0.0
    %3820 = vmatprep.subr.mxu0 0.0
    %3821 = vmatpush1.msra.mxu0 0.0
    %3822 = vmatprep.subr.mxu0 0.0
    %3823 = vmatpush1.msra.mxu0 0.0
    %3824 = vmatprep.subr.mxu0 0.0
    %3825 = vmatpush1.msra.mxu0 0.0
    %3826 = vmatprep.subr.mxu0 0.0
    %3827 = vmatpush1.msra.mxu0 0.0
    %3828 = vmatprep.subr.mxu0 0.0
    %3829 = vmatpush1.msra.mxu0 0.0
    %3830 = vmatprep.subr.mxu0 0.0
    %3831 = vmatpush1.msra.mxu0 0.0
    %3832 = vmatprep.subr.mxu0 0.0
    %3833 = vmatpush1.msra.mxu0 0.0
    %3834 = vmatprep.subr.mxu0 0.0
    %3835 = vmatpush1.msra.mxu0 0.0
    %3836 = vmatprep.subr.mxu0 0.0
    %3837 = vmatpush1.msra.mxu0 0.0
    %3838 = vmatprep.subr.mxu0 0.0
    %3839 = vmatpush1.msra.mxu0 0.0
    %3840 = vmatprep.subr.mxu0 0.0
    %3841 = vmatpush1.msra.mxu0 0.0
    %3842 = vmatprep.subr.mxu0 0.0
    %3843 = vmatpush1.msra.mxu0 0.0
    %3844 = vmatprep.subr.mxu0 0.0
    %3845 = vmatpush1.msra.mxu0 0.0
    %3846 = vmatprep.subr.mxu0 0.0
    %3847 = vmatpush1.msra.mxu0 0.0
    %3848 = vmatprep.subr.mxu0 0.0
    %3849 = vmatpush1.msra.mxu0 0.0
    %3850 = vmatprep.subr.mxu0 0.0
    %3851 = vmatpush1.msra.mxu0 0.0
    %3852 = vmatprep.subr.mxu0 0.0
    %3853 = vmatpush1.msra.mxu0 0.0
    %3854 = vmatprep.subr.mxu0 0.0
    %3855 = vmatpush1.msra.mxu0 0.0
    %3856 = vmatprep.subr.mxu0 0.0
    %3857 = vmatpush1.msra.mxu0 0.0
    %3858 = vmatprep.subr.mxu0 0.0
    %3859 = vmatpush1.msra.mxu0 0.0
    %3860 = vmatprep.subr.mxu0 0.0
    %3861 = vmatpush1.msra.mxu0 0.0
    %3862 = vmatprep.subr.mxu0 0.0
    %3863 = vmatpush1.msra.mxu0 0.0
    %3864 = vmatprep.subr.mxu0 0.0
    %3865 = vmatpush1.msra.mxu0 0.0
    %3866 = vmatprep.subr.mxu0 0.0
    %3867 = vmatpush1.msra.mxu0 0.0
    %3868 = vmatprep.subr.mxu0 0.0
    %3869 = vmatpush1.msra.mxu0 0.0
    %3870 = vmatprep.subr.mxu0 0.0
    %3871 = vmatpush1.msra.mxu0 0.0
    %3872 = vmatprep.subr.mxu0 0.0
    %3873 = vmatpush1.msra.mxu0 0.0
    %3874 = vmatprep.subr.mxu0 0.0
    %3875 = vmatpush1.msra.mxu0 0.0
    %3876 = vmatprep.subr.mxu0 0.0
    %3877 = vmatpush1.msra.mxu0 0.0
    %3878 = vmatprep.mubr.f32.mxu0 0.0
    %3879 = vmatmul.mubr.f32.gmra.mrb[0].mxu0 %v3810
    %v3880 = vpop.f32.mrb[0].mxu0
    %v3881 = vadd.f32 0.0, %v3880
    %v3882 = vpop.f32.mrb[0].mxu0
    %3883 = vmatprep.mubr.f32.mxu0 0.0
    %3884 = vmatmul.mubr.f32.gmra.mrb[0].mxu0 %v3812
    %v3885 = vpop.f32.mrb[0].mxu0
    %v3886 = vadd.f32 0.0, %v3885
    %v3887 = vpop.f32.mrb[0].mxu0
    %3888 = vdwg.mxu0
    %v3890 = vsel %vm531, %v3778, 0
    %v3892 = vsel %vm531, %v3783, 0
    %3894 = vmatprep.subr.mxu0 0.0
    %3895 = vmatpush1.msra.mxu0 %v3802
    %3896 = vmatprep.subr.mxu0 0.0
    %3897 = vmatpush1.msra.mxu0 0.0
    %3898 = vmatprep.subr.mxu0 0.0
    %3899 = vmatpush1.msra.mxu0 0.0
    %3900 = vmatprep.subr.mxu0 0.0
    %3901 = vmatpush1.msra.mxu0 0.0
    %3902 = vmatprep.subr.mxu0 0.0
    %3903 = vmatpush1.msra.mxu0 0.0
    %3904 = vmatprep.subr.mxu0 0.0
    %3905 = vmatpush1.msra.mxu0 0.0
    %3906 = vmatprep.subr.mxu0 0.0
    %3907 = vmatpush1.msra.mxu0 0.0
    %3908 = vmatprep.subr.mxu0 0.0
    %3909 = vmatpush1.msra.mxu0 0.0
    %3910 = vmatprep.subr.mxu0 0.0
    %3911 = vmatpush1.msra.mxu0 0.0
    %3912 = vmatprep.subr.mxu0 0.0
    %3913 = vmatpush1.msra.mxu0 0.0
    %3914 = vmatprep.subr.mxu0 0.0
    %3915 = vmatpush1.msra.mxu0 0.0
    %3916 = vmatprep.subr.mxu0 0.0
    %3917 = vmatpush1.msra.mxu0 0.0
    %3918 = vmatprep.subr.mxu0 0.0
    %3919 = vmatpush1.msra.mxu0 0.0
    %3920 = vmatprep.subr.mxu0 0.0
    %3921 = vmatpush1.msra.mxu0 0.0
    %3922 = vmatprep.subr.mxu0 0.0
    %3923 = vmatpush1.msra.mxu0 0.0
    %3924 = vmatprep.subr.mxu0 0.0
    %3925 = vmatpush1.msra.mxu0 0.0
    %3926 = vmatprep.subr.mxu0 0.0
    %3927 = vmatpush1.msra.mxu0 0.0
    %3928 = vmatprep.subr.mxu0 0.0
    %3929 = vmatpush1.msra.mxu0 0.0
    %3930 = vmatprep.subr.mxu0 0.0
    %3931 = vmatpush1.msra.mxu0 0.0
    %3932 = vmatprep.subr.mxu0 0.0
    %3933 = vmatpush1.msra.mxu0 0.0
    %3934 = vmatprep.subr.mxu0 0.0
    %3935 = vmatpush1.msra.mxu0 0.0
    %3936 = vmatprep.subr.mxu0 0.0
    %3937 = vmatpush1.msra.mxu0 0.0
    %3938 = vmatprep.subr.mxu0 0.0
    %3939 = vmatpush1.msra.mxu0 0.0
    %3940 = vmatprep.subr.mxu0 0.0
    %3941 = vmatpush1.msra.mxu0 0.0
    %3942 = vmatprep.subr.mxu0 0.0
    %3943 = vmatpush1.msra.mxu0 0.0
    %3944 = vmatprep.subr.mxu0 0.0
    %3945 = vmatpush1.msra.mxu0 0.0
    %3946 = vmatprep.subr.mxu0 0.0
    %3947 = vmatpush1.msra.mxu0 0.0
    %3948 = vmatprep.subr.mxu0 0.0
    %3949 = vmatpush1.msra.mxu0 0.0
    %3950 = vmatprep.subr.mxu0 0.0
    %3951 = vmatpush1.msra.mxu0 0.0
    %3952 = vmatprep.subr.mxu0 0.0
    %3953 = vmatpush1.msra.mxu0 0.0
    %3954 = vmatprep.subr.mxu0 0.0
    %3955 = vmatpush1.msra.mxu0 0.0
    %3956 = vmatprep.subr.mxu0 0.0
    %3957 = vmatpush1.msra.mxu0 0.0
    %3958 = vmatprep.mubr.f32.mxu0 0.0
    %3959 = vmatmul.mubr.f32.gmra.mrb[0].mxu0 %v3890
    %v3960 = vpop.f32.mrb[0].mxu0
    %v3961 = vadd.f32 %v3881, %v3960
    %v3962 = vpop.f32.mrb[0].mxu0
    %3963 = vmatprep.mubr.f32.mxu0 0.0
    %3964 = vmatmul.mubr.f32.gmra.mrb[0].mxu0 %v3892
    %v3965 = vpop.f32.mrb[0].mxu0
    %v3966 = vadd.f32 %v3886, %v3965
    %v3967 = vpop.f32.mrb[0].mxu0
    %3968 = vdwg.mxu0
    %s3969 = scalar_lea.vmem [#allocation2], 112
    %v3970 = vld [vmem:[%s3969] sm:$0xff]
    %v3972 = vsel %vm531, %v3793, 0
    %v3975 = vsel %vm531, %v3798, 0
    %3977 = vmatprep.subr.mxu0 0.0
    %3978 = vmatpush1.msra.mxu0 %v3970
    %3979 = vmatprep.subr.mxu0 0.0
    %3980 = vmatpush1.msra.mxu0 0.0
    %3981 = vmatprep.subr.mxu0 0.0
    %3982 = vmatpush1.msra.mxu0 0.0
    %3983 = vmatprep.subr.mxu0 0.0
    %3984 = vmatpush1.msra.mxu0 0.0
    %3985 = vmatprep.subr.mxu0 0.0
    %3986 = vmatpush1.msra.mxu0 0.0
    %3987 = vmatprep.subr.mxu0 0.0
    %3988 = vmatpush1.msra.mxu0 0.0
    %3989 = vmatprep.subr.mxu0 0.0
    %3990 = vmatpush1.msra.mxu0 0.0
    %3991 = vmatprep.subr.mxu0 0.0
    %3992 = vmatpush1.msra.mxu0 0.0
    %3993 = vmatprep.subr.mxu0 0.0
    %3994 = vmatpush1.msra.mxu0 0.0
    %3995 = vmatprep.subr.mxu0 0.0
    %3996 = vmatpush1.msra.mxu0 0.0
    %3997 = vmatprep.subr.mxu0 0.0
    %3998 = vmatpush1.msra.mxu0 0.0
    %3999 = vmatprep.subr.mxu0 0.0
    %4000 = vmatpush1.msra.mxu0 0.0
    %4001 = vmatprep.subr.mxu0 0.0
    %4002 = vmatpush1.msra.mxu0 0.0
    %4003 = vmatprep.subr.mxu0 0.0
    %4004 = vmatpush1.msra.mxu0 0.0
    %4005 = vmatprep.subr.mxu0 0.0
    %4006 = vmatpush1.msra.mxu0 0.0
    %4007 = vmatprep.subr.mxu0 0.0
    %4008 = vmatpush1.msra.mxu0 0.0
    %4009 = vmatprep.subr.mxu0 0.0
    %4010 = vmatpush1.msra.mxu0 0.0
    %4011 = vmatprep.subr.mxu0 0.0
    %4012 = vmatpush1.msra.mxu0 0.0
    %4013 = vmatprep.subr.mxu0 0.0
    %4014 = vmatpush1.msra.mxu0 0.0
    %4015 = vmatprep.subr.mxu0 0.0
    %4016 = vmatpush1.msra.mxu0 0.0
    %4017 = vmatprep.subr.mxu0 0.0
    %4018 = vmatpush1.msra.mxu0 0.0
    %4019 = vmatprep.subr.mxu0 0.0
    %4020 = vmatpush1.msra.mxu0 0.0
    %4021 = vmatprep.subr.mxu0 0.0
    %4022 = vmatpush1.msra.mxu0 0.0
    %4023 = vmatprep.subr.mxu0 0.0
    %4024 = vmatpush1.msra.mxu0 0.0
    %4025 = vmatprep.subr.mxu0 0.0
    %4026 = vmatpush1.msra.mxu0 0.0
    %4027 = vmatprep.subr.mxu0 0.0
    %4028 = vmatpush1.msra.mxu0 0.0
    %4029 = vmatprep.subr.mxu0 0.0
    %4030 = vmatpush1.msra.mxu0 0.0
    %4031 = vmatprep.subr.mxu0 0.0
    %4032 = vmatpush1.msra.mxu0 0.0
    %4033 = vmatprep.subr.mxu0 0.0
    %4034 = vmatpush1.msra.mxu0 0.0
    %4035 = vmatprep.subr.mxu0 0.0
    %4036 = vmatpush1.msra.mxu0 0.0
    %4037 = vmatprep.subr.mxu0 0.0
    %4038 = vmatpush1.msra.mxu0 0.0
    %4039 = vmatprep.subr.mxu0 0.0
    %4040 = vmatpush1.msra.mxu0 0.0
    %4041 = vmatprep.mubr.f32.mxu0 0.0
    %4042 = vmatmul.mubr.f32.gmra.mrb[0].mxu0 %v3972
    %v4043 = vpop.f32.mrb[0].mxu0
    %v4044 = vadd.f32 0.0, %v4043
    %v4045 = vpop.f32.mrb[0].mxu0
    %4046 = vmatprep.mubr.f32.mxu0 0.0
    %4047 = vmatmul.mubr.f32.gmra.mrb[0].mxu0 %v3975
    %v4048 = vpop.f32.mrb[0].mxu0
    %v4049 = vadd.f32 0.0, %v4048
    %v4050 = vpop.f32.mrb[0].mxu0
    %4051 = vdwg.mxu0
    %v4052 = vadd.f32 %v3961, %v4044
    %v4053 = vadd.f32 %v3966, %v4049
    %s4054 = scalar_lea.vmem [#allocation5], 4
    %v4055 = vld [vmem:[%s4054] sm:$0x1]
    %v4057 = vlaneseq
    %v4058 = vshrl.u32 %v4057, 7
    %v4059 = vsub.s32 0, %v4058
    %v4060 = vrot.slane %v4055, %v4059
    %v4062 = vadd.f32 %v4052, %v4060
    %v4063 = vadd.f32 %v4053, %v4060
    %vm4064 = vcmp.ge.f32.partialorder %v4062, 0.0
    %vm4065 = vcmp.ge.f32.partialorder %v4063, 0.0
    %v4066 = vmul.f32 %v4062, 0.01
    %v4067 = vmul.f32 %v4063, 0.01
    %v4068 = vsel %vm4064, %v4062, %v4066
    %v4069 = vsel %vm4065, %v4063, %v4067
    %vm4070 = vcmask 97280
    %v4072 = vsel %vm4070, %v218, 0
    %v4075 = vsel %vm4070, %v219, 0
    %v4078 = vsel %vm4070, %v220, 0
    %v4081 = vsel %vm525, %v4069, 0
    %4083 = vmatprep.subr.mxu0 0.0
    %4084 = vmatpush1.msra.mxu0 %v4068
    %4085 = vmatprep.subr.mxu0 0.0
    %4086 = vmatpush1.msra.mxu0 %v4081
    %4087 = vmatprep.subr.mxu0 0.0
    %4088 = vmatpush1.msra.mxu0 0.0
    %4089 = vmatprep.subr.mxu0 0.0
    %4090 = vmatpush1.msra.mxu0 0.0
    %4091 = vmatprep.subr.mxu0 0.0
    %4092 = vmatpush1.msra.mxu0 0.0
    %4093 = vmatprep.subr.mxu0 0.0
    %4094 = vmatpush1.msra.mxu0 0.0
    %4095 = vmatprep.subr.mxu0 0.0
    %4096 = vmatpush1.msra.mxu0 0.0
    %4097 = vmatprep.subr.mxu0 0.0
    %4098 = vmatpush1.msra.mxu0 0.0
    %4099 = vmatprep.subr.mxu0 0.0
    %4100 = vmatpush1.msra.mxu0 0.0
    %4101 = vmatprep.subr.mxu0 0.0
    %4102 = vmatpush1.msra.mxu0 0.0
    %4103 = vmatprep.subr.mxu0 0.0
    %4104 = vmatpush1.msra.mxu0 0.0
    %4105 = vmatprep.subr.mxu0 0.0
    %4106 = vmatpush1.msra.mxu0 0.0
    %4107 = vmatprep.subr.mxu0 0.0
    %4108 = vmatpush1.msra.mxu0 0.0
    %4109 = vmatprep.subr.mxu0 0.0
    %4110 = vmatpush1.msra.mxu0 0.0
    %4111 = vmatprep.subr.mxu0 0.0
    %4112 = vmatpush1.msra.mxu0 0.0
    %4113 = vmatprep.subr.mxu0 0.0
    %4114 = vmatpush1.msra.mxu0 0.0
    %4115 = vmatprep.subr.mxu0 0.0
    %4116 = vmatpush1.msra.mxu0 0.0
    %4117 = vmatprep.subr.mxu0 0.0
    %4118 = vmatpush1.msra.mxu0 0.0
    %4119 = vmatprep.subr.mxu0 0.0
    %4120 = vmatpush1.msra.mxu0 0.0
    %4121 = vmatprep.subr.mxu0 0.0
    %4122 = vmatpush1.msra.mxu0 0.0
    %4123 = vmatprep.subr.mxu0 0.0
    %4124 = vmatpush1.msra.mxu0 0.0
    %4125 = vmatprep.subr.mxu0 0.0
    %4126 = vmatpush1.msra.mxu0 0.0
    %4127 = vmatprep.subr.mxu0 0.0
    %4128 = vmatpush1.msra.mxu0 0.0
    %4129 = vmatprep.subr.mxu0 0.0
    %4130 = vmatpush1.msra.mxu0 0.0
    %4131 = vmatprep.subr.mxu0 0.0
    %4132 = vmatpush1.msra.mxu0 0.0
    %4133 = vmatprep.subr.mxu0 0.0
    %4134 = vmatpush1.msra.mxu0 0.0
    %4135 = vmatprep.subr.mxu0 0.0
    %4136 = vmatpush1.msra.mxu0 0.0
    %4137 = vmatprep.subr.mxu0 0.0
    %4138 = vmatpush1.msra.mxu0 0.0
    %4139 = vmatprep.subr.mxu0 0.0
    %4140 = vmatpush1.msra.mxu0 0.0
    %4141 = vmatprep.subr.mxu0 0.0
    %4142 = vmatpush1.msra.mxu0 0.0
    %4143 = vmatprep.subr.mxu0 0.0
    %4144 = vmatpush1.msra.mxu0 0.0
    %4145 = vmatprep.subr.mxu0 0.0
    %4146 = vmatpush1.msra.mxu0 0.0
    %4147 = vmatprep.mubr.f32.mxu0 0.0
    %4148 = vmatmul.mubr.f32.gmra.mrb[0].mxu0 %v4072
    %v4149 = vpop.f32.mrb[0].mxu0
    %v4150 = vadd.f32 0.0, %v4149
    %v4151 = vpop.f32.mrb[0].mxu0
    %4152 = vmatprep.mubr.f32.mxu0 0.0
    %4153 = vmatmul.mubr.f32.gmra.mrb[0].mxu0 %v4075
    %v4154 = vpop.f32.mrb[0].mxu0
    %v4155 = vadd.f32 0.0, %v4154
    %v4156 = vpop.f32.mrb[0].mxu0
    %4157 = vmatprep.mubr.f32.mxu0 0.0
    %4158 = vmatmul.mubr.f32.gmra.mrb[0].mxu0 %v4078
    %v4159 = vpop.f32.mrb[0].mxu0
    %v4160 = vadd.f32 0.0, %v4159
    %v4161 = vpop.f32.mrb[0].mxu0
    %4162 = vdwg.mxu0
    %s4163 = scalar_lea.vmem [#allocation7], 384
    %v4164 = vld [vmem:[%s4163] sm:$0xff]
    %v4165 = vld [vmem:[%s4163 + $0x8] sm:$0xff]
    %v4166 = vld [vmem:[%s4163 + $0x10] sm:$0xff]
    %v4167 = vld [vmem:[%s4163 + $0x18] sm:$0xff]
    %s4168 = scalar_lea.vmem [#allocation7], 416
    %v4169 = vld [vmem:[%s4168] sm:$0xff]
    %v4170 = vld [vmem:[%s4168 + $0x8] sm:$0xff]
    %v4171 = vld [vmem:[%s4168 + $0x10] sm:$0xff]
    %v4172 = vld [vmem:[%s4168 + $0x18] sm:$0xff]
    %v4174 = vsel %vm226, %v4155, 0
    %4176 = vmatprep.subr.mxu0 0.0
    %4177 = vmatpush1.msra.mxu0 %v4169
    %4178 = vmatprep.subr.mxu0 0.0
    %4179 = vmatpush1.msra.mxu0 %v4170
    %4180 = vmatprep.subr.mxu0 0.0
    %4181 = vmatpush1.msra.mxu0 %v4171
    %4182 = vmatprep.subr.mxu0 0.0
    %4183 = vmatpush1.msra.mxu0 %v4172
    %4184 = vmatprep.subr.mxu0 0.0
    %4185 = vmatpush1.msra.mxu0 0.0
    %4186 = vmatprep.subr.mxu0 0.0
    %4187 = vmatpush1.msra.mxu0 0.0
    %4188 = vmatprep.subr.mxu0 0.0
    %4189 = vmatpush1.msra.mxu0 0.0
    %4190 = vmatprep.subr.mxu0 0.0
    %4191 = vmatpush1.msra.mxu0 0.0
    %4192 = vmatprep.subr.mxu0 0.0
    %4193 = vmatpush1.msra.mxu0 0.0
    %4194 = vmatprep.subr.mxu0 0.0
    %4195 = vmatpush1.msra.mxu0 0.0
    %4196 = vmatprep.subr.mxu0 0.0
    %4197 = vmatpush1.msra.mxu0 0.0
    %4198 = vmatprep.subr.mxu0 0.0
    %4199 = vmatpush1.msra.mxu0 0.0
    %4200 = vmatprep.subr.mxu0 0.0
    %4201 = vmatpush1.msra.mxu0 0.0
    %4202 = vmatprep.subr.mxu0 0.0
    %4203 = vmatpush1.msra.mxu0 0.0
    %4204 = vmatprep.subr.mxu0 0.0
    %4205 = vmatpush1.msra.mxu0 0.0
    %4206 = vmatprep.subr.mxu0 0.0
    %4207 = vmatpush1.msra.mxu0 0.0
    %4208 = vmatprep.subr.mxu0 0.0
    %4209 = vmatpush1.msra.mxu0 0.0
    %4210 = vmatprep.subr.mxu0 0.0
    %4211 = vmatpush1.msra.mxu0 0.0
    %4212 = vmatprep.subr.mxu0 0.0
    %4213 = vmatpush1.msra.mxu0 0.0
    %4214 = vmatprep.subr.mxu0 0.0
    %4215 = vmatpush1.msra.mxu0 0.0
    %4216 = vmatprep.subr.mxu0 0.0
    %4217 = vmatpush1.msra.mxu0 0.0
    %4218 = vmatprep.subr.mxu0 0.0
    %4219 = vmatpush1.msra.mxu0 0.0
    %4220 = vmatprep.subr.mxu0 0.0
    %4221 = vmatpush1.msra.mxu0 0.0
    %4222 = vmatprep.subr.mxu0 0.0
    %4223 = vmatpush1.msra.mxu0 0.0
    %4224 = vmatprep.subr.mxu0 0.0
    %4225 = vmatpush1.msra.mxu0 0.0
    %4226 = vmatprep.subr.mxu0 0.0
    %4227 = vmatpush1.msra.mxu0 0.0
    %4228 = vmatprep.subr.mxu0 0.0
    %4229 = vmatpush1.msra.mxu0 0.0
    %4230 = vmatprep.subr.mxu0 0.0
    %4231 = vmatpush1.msra.mxu0 0.0
    %4232 = vmatprep.subr.mxu0 0.0
    %4233 = vmatpush1.msra.mxu0 0.0
    %4234 = vmatprep.subr.mxu0 0.0
    %4235 = vmatpush1.msra.mxu0 0.0
    %4236 = vmatprep.subr.mxu0 0.0
    %4237 = vmatpush1.msra.mxu0 0.0
    %4238 = vmatprep.subr.mxu0 0.0
    %4239 = vmatpush1.msra.mxu0 0.0
    %4240 = vmatprep.mubr.f32.mxu0 0.0
    %4241 = vmatmul.mubr.f32.gmra.mrb[0].mxu0 %v4174
    %v4242 = vpop.f32.mrb[0].mxu0
    %v4243 = vadd.f32 0.0, %v4242
    %v4244 = vpop.f32.mrb[0].mxu0
    %4245 = vdwg.mxu0
    %v4247 = vsel %vm226, %v4150, 0
    %4249 = vmatprep.subr.mxu0 0.0
    %4250 = vmatpush1.msra.mxu0 %v4164
    %4251 = vmatprep.subr.mxu0 0.0
    %4252 = vmatpush1.msra.mxu0 %v4165
    %4253 = vmatprep.subr.mxu0 0.0
    %4254 = vmatpush1.msra.mxu0 %v4166
    %4255 = vmatprep.subr.mxu0 0.0
    %4256 = vmatpush1.msra.mxu0 %v4167
    %4257 = vmatprep.subr.mxu0 0.0
    %4258 = vmatpush1.msra.mxu0 0.0
    %4259 = vmatprep.subr.mxu0 0.0
    %4260 = vmatpush1.msra.mxu0 0.0
    %4261 = vmatprep.subr.mxu0 0.0
    %4262 = vmatpush1.msra.mxu0 0.0
    %4263 = vmatprep.subr.mxu0 0.0
    %4264 = vmatpush1.msra.mxu0 0.0
    %4265 = vmatprep.subr.mxu0 0.0
    %4266 = vmatpush1.msra.mxu0 0.0
    %4267 = vmatprep.subr.mxu0 0.0
    %4268 = vmatpush1.msra.mxu0 0.0
    %4269 = vmatprep.subr.mxu0 0.0
    %4270 = vmatpush1.msra.mxu0 0.0
    %4271 = vmatprep.subr.mxu0 0.0
    %4272 = vmatpush1.msra.mxu0 0.0
    %4273 = vmatprep.subr.mxu0 0.0
    %4274 = vmatpush1.msra.mxu0 0.0
    %4275 = vmatprep.subr.mxu0 0.0
    %4276 = vmatpush1.msra.mxu0 0.0
    %4277 = vmatprep.subr.mxu0 0.0
    %4278 = vmatpush1.msra.mxu0 0.0
    %4279 = vmatprep.subr.mxu0 0.0
    %4280 = vmatpush1.msra.mxu0 0.0
    %4281 = vmatprep.subr.mxu0 0.0
    %4282 = vmatpush1.msra.mxu0 0.0
    %4283 = vmatprep.subr.mxu0 0.0
    %4284 = vmatpush1.msra.mxu0 0.0
    %4285 = vmatprep.subr.mxu0 0.0
    %4286 = vmatpush1.msra.mxu0 0.0
    %4287 = vmatprep.subr.mxu0 0.0
    %4288 = vmatpush1.msra.mxu0 0.0
    %4289 = vmatprep.subr.mxu0 0.0
    %4290 = vmatpush1.msra.mxu0 0.0
    %4291 = vmatprep.subr.mxu0 0.0
    %4292 = vmatpush1.msra.mxu0 0.0
    %4293 = vmatprep.subr.mxu0 0.0
    %4294 = vmatpush1.msra.mxu0 0.0
    %4295 = vmatprep.subr.mxu0 0.0
    %4296 = vmatpush1.msra.mxu0 0.0
    %4297 = vmatprep.subr.mxu0 0.0
    %4298 = vmatpush1.msra.mxu0 0.0
    %4299 = vmatprep.subr.mxu0 0.0
    %4300 = vmatpush1.msra.mxu0 0.0
    %4301 = vmatprep.subr.mxu0 0.0
    %4302 = vmatpush1.msra.mxu0 0.0
    %4303 = vmatprep.subr.mxu0 0.0
    %4304 = vmatpush1.msra.mxu0 0.0
    %4305 = vmatprep.subr.mxu0 0.0
    %4306 = vmatpush1.msra.mxu0 0.0
    %4307 = vmatprep.subr.mxu0 0.0
    %4308 = vmatpush1.msra.mxu0 0.0
    %4309 = vmatprep.subr.mxu0 0.0
    %4310 = vmatpush1.msra.mxu0 0.0
    %4311 = vmatprep.subr.mxu0 0.0
    %4312 = vmatpush1.msra.mxu0 0.0
    %4313 = vmatprep.mubr.f32.mxu0 0.0
    %4314 = vmatmul.mubr.f32.gmra.mrb[0].mxu0 %v4247
    %v4315 = vpop.f32.mrb[0].mxu0
    %v4316 = vadd.f32 %v4243, %v4315
    %v4317 = vpop.f32.mrb[0].mxu0
    %4318 = vdwg.mxu0
    %s4319 = scalar_lea.vmem [#allocation7], 448
    %v4320 = vld [vmem:[%s4319] sm:$0xff]
    %v4321 = vld [vmem:[%s4319 + $0x8] sm:$0xff]
    %v4322 = vld [vmem:[%s4319 + $0x10] sm:$0xff]
    %v4323 = vld [vmem:[%s4319 + $0x18] sm:$0xff]
    %v4325 = vsel %vm226, %v4160, 0
    %4327 = vmatprep.subr.mxu0 0.0
    %4328 = vmatpush1.msra.mxu0 %v4320
    %4329 = vmatprep.subr.mxu0 0.0
    %4330 = vmatpush1.msra.mxu0 %v4321
    %4331 = vmatprep.subr.mxu0 0.0
    %4332 = vmatpush1.msra.mxu0 %v4322
    %4333 = vmatprep.subr.mxu0 0.0
    %4334 = vmatpush1.msra.mxu0 %v4323
    %4335 = vmatprep.subr.mxu0 0.0
    %4336 = vmatpush1.msra.mxu0 0.0
    %4337 = vmatprep.subr.mxu0 0.0
    %4338 = vmatpush1.msra.mxu0 0.0
    %4339 = vmatprep.subr.mxu0 0.0
    %4340 = vmatpush1.msra.mxu0 0.0
    %4341 = vmatprep.subr.mxu0 0.0
    %4342 = vmatpush1.msra.mxu0 0.0
    %4343 = vmatprep.subr.mxu0 0.0
    %4344 = vmatpush1.msra.mxu0 0.0
    %4345 = vmatprep.subr.mxu0 0.0
    %4346 = vmatpush1.msra.mxu0 0.0
    %4347 = vmatprep.subr.mxu0 0.0
    %4348 = vmatpush1.msra.mxu0 0.0
    %4349 = vmatprep.subr.mxu0 0.0
    %4350 = vmatpush1.msra.mxu0 0.0
    %4351 = vmatprep.subr.mxu0 0.0
    %4352 = vmatpush1.msra.mxu0 0.0
    %4353 = vmatprep.subr.mxu0 0.0
    %4354 = vmatpush1.msra.mxu0 0.0
    %4355 = vmatprep.subr.mxu0 0.0
    %4356 = vmatpush1.msra.mxu0 0.0
    %4357 = vmatprep.subr.mxu0 0.0
    %4358 = vmatpush1.msra.mxu0 0.0
    %4359 = vmatprep.subr.mxu0 0.0
    %4360 = vmatpush1.msra.mxu0 0.0
    %4361 = vmatprep.subr.mxu0 0.0
    %4362 = vmatpush1.msra.mxu0 0.0
    %4363 = vmatprep.subr.mxu0 0.0
    %4364 = vmatpush1.msra.mxu0 0.0
    %4365 = vmatprep.subr.mxu0 0.0
    %4366 = vmatpush1.msra.mxu0 0.0
    %4367 = vmatprep.subr.mxu0 0.0
    %4368 = vmatpush1.msra.mxu0 0.0
    %4369 = vmatprep.subr.mxu0 0.0
    %4370 = vmatpush1.msra.mxu0 0.0
    %4371 = vmatprep.subr.mxu0 0.0
    %4372 = vmatpush1.msra.mxu0 0.0
    %4373 = vmatprep.subr.mxu0 0.0
    %4374 = vmatpush1.msra.mxu0 0.0
    %4375 = vmatprep.subr.mxu0 0.0
    %4376 = vmatpush1.msra.mxu0 0.0
    %4377 = vmatprep.subr.mxu0 0.0
    %4378 = vmatpush1.msra.mxu0 0.0
    %4379 = vmatprep.subr.mxu0 0.0
    %4380 = vmatpush1.msra.mxu0 0.0
    %4381 = vmatprep.subr.mxu0 0.0
    %4382 = vmatpush1.msra.mxu0 0.0
    %4383 = vmatprep.subr.mxu0 0.0
    %4384 = vmatpush1.msra.mxu0 0.0
    %4385 = vmatprep.subr.mxu0 0.0
    %4386 = vmatpush1.msra.mxu0 0.0
    %4387 = vmatprep.subr.mxu0 0.0
    %4388 = vmatpush1.msra.mxu0 0.0
    %4389 = vmatprep.subr.mxu0 0.0
    %4390 = vmatpush1.msra.mxu0 0.0
    %4391 = vmatprep.mubr.f32.mxu0 0.0
    %4392 = vmatmul.mubr.f32.gmra.mrb[0].mxu0 %v4325
    %v4393 = vpop.f32.mrb[0].mxu0
    %v4394 = vadd.f32 0.0, %v4393
    %v4395 = vpop.f32.mrb[0].mxu0
    %4396 = vdwg.mxu0
    %v4397 = vadd.f32 %v4316, %v4394
    %s4398 = scalar_lea.vmem [#allocation8], 4
    %v4399 = vld [vmem:[%s4398] sm:$0x1]
    %v4401 = vlaneseq
    %v4402 = vshrl.u32 %v4401, 7
    %v4403 = vsub.s32 0, %v4402
    %v4404 = vrot.slane %v4399, %v4403
    %v4406 = vadd.f32 %v4397, %v4404
    %v4407 = vtanh.pop %v4406
    %v4408 = vmul.f32 %v4407, 1.442695
    %v4409 = vpow.pop %v4408
    %v4410 = vmul.f32 %v3693, %v4409
    %4411 = vmatprep.subr.mxu0 0.0
    %4412 = vmatpush1.msra.mxu0 %v3693
    %4413 = vmatprep.subr.mxu0 0.0
    %4414 = vmatpush1.msra.mxu0 0.0
    %4415 = vmatprep.subr.mxu0 0.0
    %4416 = vmatpush1.msra.mxu0 0.0
    %4417 = vmatprep.subr.mxu0 0.0
    %4418 = vmatpush1.msra.mxu0 0.0
    %4419 = vmatprep.subr.mxu0 0.0
    %4420 = vmatpush1.msra.mxu0 0.0
    %4421 = vmatprep.subr.mxu0 0.0
    %4422 = vmatpush1.msra.mxu0 0.0
    %4423 = vmatprep.subr.mxu0 0.0
    %4424 = vmatpush1.msra.mxu0 0.0
    %4425 = vmatprep.subr.mxu0 0.0
    %4426 = vmatpush1.msra.mxu0 0.0
    %4427 = vmatprep.subr.mxu0 0.0
    %4428 = vmatpush1.msra.mxu0 0.0
    %4429 = vmatprep.subr.mxu0 0.0
    %4430 = vmatpush1.msra.mxu0 0.0
    %4431 = vmatprep.subr.mxu0 0.0
    %4432 = vmatpush1.msra.mxu0 0.0
    %4433 = vmatprep.subr.mxu0 0.0
    %4434 = vmatpush1.msra.mxu0 0.0
    %4435 = vmatprep.subr.mxu0 0.0
    %4436 = vmatpush1.msra.mxu0 0.0
    %4437 = vmatprep.subr.mxu0 0.0
    %4438 = vmatpush1.msra.mxu0 0.0
    %4439 = vmatprep.subr.mxu0 0.0
    %4440 = vmatpush1.msra.mxu0 0.0
    %4441 = vmatprep.subr.mxu0 0.0
    %4442 = vmatpush1.msra.mxu0 0.0
    %4443 = vmatprep.subr.mxu0 0.0
    %4444 = vmatpush1.msra.mxu0 0.0
    %4445 = vmatprep.subr.mxu0 0.0
    %4446 = vmatpush1.msra.mxu0 0.0
    %4447 = vmatprep.subr.mxu0 0.0
    %4448 = vmatpush1.msra.mxu0 0.0
    %4449 = vmatprep.subr.mxu0 0.0
    %4450 = vmatpush1.msra.mxu0 0.0
    %4451 = vmatprep.subr.mxu0 0.0
    %4452 = vmatpush1.msra.mxu0 0.0
    %4453 = vmatprep.subr.mxu0 0.0
    %4454 = vmatpush1.msra.mxu0 0.0
    %4455 = vmatprep.subr.mxu0 0.0
    %4456 = vmatpush1.msra.mxu0 0.0
    %4457 = vmatprep.subr.mxu0 0.0
    %4458 = vmatpush1.msra.mxu0 0.0
    %4459 = vmatprep.subr.mxu0 0.0
    %4460 = vmatpush1.msra.mxu0 0.0
    %4461 = vmatprep.subr.mxu0 0.0
    %4462 = vmatpush1.msra.mxu0 0.0
    %4463 = vmatprep.subr.mxu0 0.0
    %4464 = vmatpush1.msra.mxu0 0.0
    %4465 = vmatprep.subr.mxu0 0.0
    %4466 = vmatpush1.msra.mxu0 0.0
    %4467 = vmatprep.subr.mxu0 0.0
    %4468 = vmatpush1.msra.mxu0 0.0
    %4469 = vmatprep.subr.mxu0 0.0
    %4470 = vmatpush1.msra.mxu0 0.0
    %4471 = vmatprep.subr.mxu0 0.0
    %4472 = vmatpush1.msra.mxu0 0.0
    %4473 = vmatprep.subr.mxu0 0.0
    %4474 = vmatpush1.msra.mxu0 0.0
    %4475 = vmatprep.mubr.f32.mxu0 0.0
    %4476 = vmatmul.mubr.f32.gmra.mrb[0].mxu0 %v3697
    %v4477 = vpop.f32.mrb[0].mxu0
    %v4478 = vadd.f32 0.0, %v4477
    %v4479 = vpop.f32.mrb[0].mxu0
    %4480 = vmatprep.mubr.f32.mxu0 0.0
    %4481 = vmatmul.mubr.f32.gmra.mrb[0].mxu0 %v3700
    %v4482 = vpop.f32.mrb[0].mxu0
    %v4483 = vadd.f32 0.0, %v4482
    %v4484 = vpop.f32.mrb[0].mxu0
    %4485 = vmatprep.mubr.f32.mxu0 0.0
    %4486 = vmatmul.mubr.f32.gmra.mrb[0].mxu0 %v3703
    %v4487 = vpop.f32.mrb[0].mxu0
    %v4488 = vadd.f32 0.0, %v4487
    %v4489 = vpop.f32.mrb[0].mxu0
    %4490 = vmatprep.mubr.f32.mxu0 0.0
    %4491 = vmatmul.mubr.f32.gmra.mrb[0].mxu0 %v3706
    %v4492 = vpop.f32.mrb[0].mxu0
    %v4493 = vadd.f32 0.0, %v4492
    %v4494 = vpop.f32.mrb[0].mxu0
    %4495 = vmatprep.mubr.f32.mxu0 0.0
    %4496 = vmatmul.mubr.f32.gmra.mrb[0].mxu0 %v3709
    %v4497 = vpop.f32.mrb[0].mxu0
    %v4498 = vadd.f32 0.0, %v4497
    %v4499 = vpop.f32.mrb[0].mxu0
    %4500 = vdwg.mxu0
    %s4501 = scalar_lea.vmem [#allocation2], 120
    %v4502 = vld [vmem:[%s4501] sm:$0xff]
    %s4503 = scalar_lea.vmem [#allocation2], 128
    %v4504 = vld [vmem:[%s4503] sm:$0xff]
    %v4507 = vrot.slane %v4483, 4
    %v4508 = vrot.slane %v4488, 4
    %v4509 = vsel %vm525, %v4507, %v4508
    %v4510 = vsel %vm531, %v4509, 0
    %v4512 = vsel %vm531, %v4508, 0
    %4514 = vmatprep.subr.mxu0 0.0
    %4515 = vmatpush1.msra.mxu0 %v4504
    %4516 = vmatprep.subr.mxu0 0.0
    %4517 = vmatpush1.msra.mxu0 0.0
    %4518 = vmatprep.subr.mxu0 0.0
    %4519 = vmatpush1.msra.mxu0 0.0
    %4520 = vmatprep.subr.mxu0 0.0
    %4521 = vmatpush1.msra.mxu0 0.0
    %4522 = vmatprep.subr.mxu0 0.0
    %4523 = vmatpush1.msra.mxu0 0.0
    %4524 = vmatprep.subr.mxu0 0.0
    %4525 = vmatpush1.msra.mxu0 0.0
    %4526 = vmatprep.subr.mxu0 0.0
    %4527 = vmatpush1.msra.mxu0 0.0
    %4528 = vmatprep.subr.mxu0 0.0
    %4529 = vmatpush1.msra.mxu0 0.0
    %4530 = vmatprep.subr.mxu0 0.0
    %4531 = vmatpush1.msra.mxu0 0.0
    %4532 = vmatprep.subr.mxu0 0.0
    %4533 = vmatpush1.msra.mxu0 0.0
    %4534 = vmatprep.subr.mxu0 0.0
    %4535 = vmatpush1.msra.mxu0 0.0
    %4536 = vmatprep.subr.mxu0 0.0
    %4537 = vmatpush1.msra.mxu0 0.0
    %4538 = vmatprep.subr.mxu0 0.0
    %4539 = vmatpush1.msra.mxu0 0.0
    %4540 = vmatprep.subr.mxu0 0.0
    %4541 = vmatpush1.msra.mxu0 0.0
    %4542 = vmatprep.subr.mxu0 0.0
    %4543 = vmatpush1.msra.mxu0 0.0
    %4544 = vmatprep.subr.mxu0 0.0
    %4545 = vmatpush1.msra.mxu0 0.0
    %4546 = vmatprep.subr.mxu0 0.0
    %4547 = vmatpush1.msra.mxu0 0.0
    %4548 = vmatprep.subr.mxu0 0.0
    %4549 = vmatpush1.msra.mxu0 0.0
    %4550 = vmatprep.subr.mxu0 0.0
    %4551 = vmatpush1.msra.mxu0 0.0
    %4552 = vmatprep.subr.mxu0 0.0
    %4553 = vmatpush1.msra.mxu0 0.0
    %4554 = vmatprep.subr.mxu0 0.0
    %4555 = vmatpush1.msra.mxu0 0.0
    %4556 = vmatprep.subr.mxu0 0.0
    %4557 = vmatpush1.msra.mxu0 0.0
    %4558 = vmatprep.subr.mxu0 0.0
    %4559 = vmatpush1.msra.mxu0 0.0
    %4560 = vmatprep.subr.mxu0 0.0
    %4561 = vmatpush1.msra.mxu0 0.0
    %4562 = vmatprep.subr.mxu0 0.0
    %4563 = vmatpush1.msra.mxu0 0.0
    %4564 = vmatprep.subr.mxu0 0.0
    %4565 = vmatpush1.msra.mxu0 0.0
    %4566 = vmatprep.subr.mxu0 0.0
    %4567 = vmatpush1.msra.mxu0 0.0
    %4568 = vmatprep.subr.mxu0 0.0
    %4569 = vmatpush1.msra.mxu0 0.0
    %4570 = vmatprep.subr.mxu0 0.0
    %4571 = vmatpush1.msra.mxu0 0.0
    %4572 = vmatprep.subr.mxu0 0.0
    %4573 = vmatpush1.msra.mxu0 0.0
    %4574 = vmatprep.subr.mxu0 0.0
    %4575 = vmatpush1.msra.mxu0 0.0
    %4576 = vmatprep.subr.mxu0 0.0
    %4577 = vmatpush1.msra.mxu0 0.0
    %4578 = vmatprep.mubr.f32.mxu0 0.0
    %4579 = vmatmul.mubr.f32.gmra.mrb[0].mxu0 %v4510
    %v4580 = vpop.f32.mrb[0].mxu0
    %v4581 = vadd.f32 0.0, %v4580
    %v4582 = vpop.f32.mrb[0].mxu0
    %4583 = vmatprep.mubr.f32.mxu0 0.0
    %4584 = vmatmul.mubr.f32.gmra.mrb[0].mxu0 %v4512
    %v4585 = vpop.f32.mrb[0].mxu0
    %v4586 = vadd.f32 0.0, %v4585
    %v4587 = vpop.f32.mrb[0].mxu0
    %4588 = vdwg.mxu0
    %v4590 = vsel %vm531, %v4478, 0
    %v4592 = vsel %vm531, %v4483, 0
    %4594 = vmatprep.subr.mxu0 0.0
    %4595 = vmatpush1.msra.mxu0 %v4502
    %4596 = vmatprep.subr.mxu0 0.0
    %4597 = vmatpush1.msra.mxu0 0.0
    %4598 = vmatprep.subr.mxu0 0.0
    %4599 = vmatpush1.msra.mxu0 0.0
    %4600 = vmatprep.subr.mxu0 0.0
    %4601 = vmatpush1.msra.mxu0 0.0
    %4602 = vmatprep.subr.mxu0 0.0
    %4603 = vmatpush1.msra.mxu0 0.0
    %4604 = vmatprep.subr.mxu0 0.0
    %4605 = vmatpush1.msra.mxu0 0.0
    %4606 = vmatprep.subr.mxu0 0.0
    %4607 = vmatpush1.msra.mxu0 0.0
    %4608 = vmatprep.subr.mxu0 0.0
    %4609 = vmatpush1.msra.mxu0 0.0
    %4610 = vmatprep.subr.mxu0 0.0
    %4611 = vmatpush1.msra.mxu0 0.0
    %4612 = vmatprep.subr.mxu0 0.0
    %4613 = vmatpush1.msra.mxu0 0.0
    %4614 = vmatprep.subr.mxu0 0.0
    %4615 = vmatpush1.msra.mxu0 0.0
    %4616 = vmatprep.subr.mxu0 0.0
    %4617 = vmatpush1.msra.mxu0 0.0
    %4618 = vmatprep.subr.mxu0 0.0
    %4619 = vmatpush1.msra.mxu0 0.0
    %4620 = vmatprep.subr.mxu0 0.0
    %4621 = vmatpush1.msra.mxu0 0.0
    %4622 = vmatprep.subr.mxu0 0.0
    %4623 = vmatpush1.msra.mxu0 0.0
    %4624 = vmatprep.subr.mxu0 0.0
    %4625 = vmatpush1.msra.mxu0 0.0
    %4626 = vmatprep.subr.mxu0 0.0
    %4627 = vmatpush1.msra.mxu0 0.0
    %4628 = vmatprep.subr.mxu0 0.0
    %4629 = vmatpush1.msra.mxu0 0.0
    %4630 = vmatprep.subr.mxu0 0.0
    %4631 = vmatpush1.msra.mxu0 0.0
    %4632 = vmatprep.subr.mxu0 0.0
    %4633 = vmatpush1.msra.mxu0 0.0
    %4634 = vmatprep.subr.mxu0 0.0
    %4635 = vmatpush1.msra.mxu0 0.0
    %4636 = vmatprep.subr.mxu0 0.0
    %4637 = vmatpush1.msra.mxu0 0.0
    %4638 = vmatprep.subr.mxu0 0.0
    %4639 = vmatpush1.msra.mxu0 0.0
    %4640 = vmatprep.subr.mxu0 0.0
    %4641 = vmatpush1.msra.mxu0 0.0
    %4642 = vmatprep.subr.mxu0 0.0
    %4643 = vmatpush1.msra.mxu0 0.0
    %4644 = vmatprep.subr.mxu0 0.0
    %4645 = vmatpush1.msra.mxu0 0.0
    %4646 = vmatprep.subr.mxu0 0.0
    %4647 = vmatpush1.msra.mxu0 0.0
    %4648 = vmatprep.subr.mxu0 0.0
    %4649 = vmatpush1.msra.mxu0 0.0
    %4650 = vmatprep.subr.mxu0 0.0
    %4651 = vmatpush1.msra.mxu0 0.0
    %4652 = vmatprep.subr.mxu0 0.0
    %4653 = vmatpush1.msra.mxu0 0.0
    %4654 = vmatprep.subr.mxu0 0.0
    %4655 = vmatpush1.msra.mxu0 0.0
    %4656 = vmatprep.subr.mxu0 0.0
    %4657 = vmatpush1.msra.mxu0 0.0
    %4658 = vmatprep.mubr.f32.mxu0 0.0
    %4659 = vmatmul.mubr.f32.gmra.mrb[0].mxu0 %v4590
    %v4660 = vpop.f32.mrb[0].mxu0
    %v4661 = vadd.f32 %v4581, %v4660
    %v4662 = vpop.f32.mrb[0].mxu0
    %4663 = vmatprep.mubr.f32.mxu0 0.0
    %4664 = vmatmul.mubr.f32.gmra.mrb[0].mxu0 %v4592
    %v4665 = vpop.f32.mrb[0].mxu0
    %v4666 = vadd.f32 %v4586, %v4665
    %v4667 = vpop.f32.mrb[0].mxu0
    %4668 = vdwg.mxu0
    %s4669 = scalar_lea.vmem [#allocation2], 136
    %v4670 = vld [vmem:[%s4669] sm:$0xff]
    %v4672 = vsel %vm531, %v4493, 0
    %v4675 = vsel %vm531, %v4498, 0
    %4677 = vmatprep.subr.mxu0 0.0
    %4678 = vmatpush1.msra.mxu0 %v4670
    %4679 = vmatprep.subr.mxu0 0.0
    %4680 = vmatpush1.msra.mxu0 0.0
    %4681 = vmatprep.subr.mxu0 0.0
    %4682 = vmatpush1.msra.mxu0 0.0
    %4683 = vmatprep.subr.mxu0 0.0
    %4684 = vmatpush1.msra.mxu0 0.0
    %4685 = vmatprep.subr.mxu0 0.0
    %4686 = vmatpush1.msra.mxu0 0.0
    %4687 = vmatprep.subr.mxu0 0.0
    %4688 = vmatpush1.msra.mxu0 0.0
    %4689 = vmatprep.subr.mxu0 0.0
    %4690 = vmatpush1.msra.mxu0 0.0
    %4691 = vmatprep.subr.mxu0 0.0
    %4692 = vmatpush1.msra.mxu0 0.0
    %4693 = vmatprep.subr.mxu0 0.0
    %4694 = vmatpush1.msra.mxu0 0.0
    %4695 = vmatprep.subr.mxu0 0.0
    %4696 = vmatpush1.msra.mxu0 0.0
    %4697 = vmatprep.subr.mxu0 0.0
    %4698 = vmatpush1.msra.mxu0 0.0
    %4699 = vmatprep.subr.mxu0 0.0
    %4700 = vmatpush1.msra.mxu0 0.0
    %4701 = vmatprep.subr.mxu0 0.0
    %4702 = vmatpush1.msra.mxu0 0.0
    %4703 = vmatprep.subr.mxu0 0.0
    %4704 = vmatpush1.msra.mxu0 0.0
    %4705 = vmatprep.subr.mxu0 0.0
    %4706 = vmatpush1.msra.mxu0 0.0
    %4707 = vmatprep.subr.mxu0 0.0
    %4708 = vmatpush1.msra.mxu0 0.0
    %4709 = vmatprep.subr.mxu0 0.0
    %4710 = vmatpush1.msra.mxu0 0.0
    %4711 = vmatprep.subr.mxu0 0.0
    %4712 = vmatpush1.msra.mxu0 0.0
    %4713 = vmatprep.subr.mxu0 0.0
    %4714 = vmatpush1.msra.mxu0 0.0
    %4715 = vmatprep.subr.mxu0 0.0
    %4716 = vmatpush1.msra.mxu0 0.0
    %4717 = vmatprep.subr.mxu0 0.0
    %4718 = vmatpush1.msra.mxu0 0.0
    %4719 = vmatprep.subr.mxu0 0.0
    %4720 = vmatpush1.msra.mxu0 0.0
    %4721 = vmatprep.subr.mxu0 0.0
    %4722 = vmatpush1.msra.mxu0 0.0
    %4723 = vmatprep.subr.mxu0 0.0
    %4724 = vmatpush1.msra.mxu0 0.0
    %4725 = vmatprep.subr.mxu0 0.0
    %4726 = vmatpush1.msra.mxu0 0.0
    %4727 = vmatprep.subr.mxu0 0.0
    %4728 = vmatpush1.msra.mxu0 0.0
    %4729 = vmatprep.subr.mxu0 0.0
    %4730 = vmatpush1.msra.mxu0 0.0
    %4731 = vmatprep.subr.mxu0 0.0
    %4732 = vmatpush1.msra.mxu0 0.0
    %4733 = vmatprep.subr.mxu0 0.0
    %4734 = vmatpush1.msra.mxu0 0.0
    %4735 = vmatprep.subr.mxu0 0.0
    %4736 = vmatpush1.msra.mxu0 0.0
    %4737 = vmatprep.subr.mxu0 0.0
    %4738 = vmatpush1.msra.mxu0 0.0
    %4739 = vmatprep.subr.mxu0 0.0
    %4740 = vmatpush1.msra.mxu0 0.0
    %4741 = vmatprep.mubr.f32.mxu0 0.0
    %4742 = vmatmul.mubr.f32.gmra.mrb[0].mxu0 %v4672
    %v4743 = vpop.f32.mrb[0].mxu0
    %v4744 = vadd.f32 0.0, %v4743
    %v4745 = vpop.f32.mrb[0].mxu0
    %4746 = vmatprep.mubr.f32.mxu0 0.0
    %4747 = vmatmul.mubr.f32.gmra.mrb[0].mxu0 %v4675
    %v4748 = vpop.f32.mrb[0].mxu0
    %v4749 = vadd.f32 0.0, %v4748
    %v4750 = vpop.f32.mrb[0].mxu0
    %4751 = vdwg.mxu0
    %v4752 = vadd.f32 %v4661, %v4744
    %v4753 = vadd.f32 %v4666, %v4749
    %s4754 = scalar_lea.vmem [#allocation5], 5
    %v4755 = vld [vmem:[%s4754] sm:$0x1]
    %v4757 = vlaneseq
    %v4758 = vshrl.u32 %v4757, 7
    %v4759 = vsub.s32 0, %v4758
    %v4760 = vrot.slane %v4755, %v4759
    %v4762 = vadd.f32 %v4752, %v4760
    %v4763 = vadd.f32 %v4753, %v4760
    %vm4764 = vcmp.ge.f32.partialorder %v4762, 0.0
    %vm4765 = vcmp.ge.f32.partialorder %v4763, 0.0
    %v4766 = vmul.f32 %v4762, 0.01
    %v4767 = vmul.f32 %v4763, 0.01
    %v4768 = vsel %vm4764, %v4762, %v4766
    %v4769 = vsel %vm4765, %v4763, %v4767
    %v4771 = vsel %vm525, %v4769, 0
    %4773 = vmatprep.subr.mxu0 0.0
    %4774 = vmatpush1.msra.mxu0 %v4768
    %4775 = vmatprep.subr.mxu0 0.0
    %4776 = vmatpush1.msra.mxu0 %v4771
    %4777 = vmatprep.subr.mxu0 0.0
    %4778 = vmatpush1.msra.mxu0 0.0
    %4779 = vmatprep.subr.mxu0 0.0
    %4780 = vmatpush1.msra.mxu0 0.0
    %4781 = vmatprep.subr.mxu0 0.0
    %4782 = vmatpush1.msra.mxu0 0.0
    %4783 = vmatprep.subr.mxu0 0.0
    %4784 = vmatpush1.msra.mxu0 0.0
    %4785 = vmatprep.subr.mxu0 0.0
    %4786 = vmatpush1.msra.mxu0 0.0
    %4787 = vmatprep.subr.mxu0 0.0
    %4788 = vmatpush1.msra.mxu0 0.0
    %4789 = vmatprep.subr.mxu0 0.0
    %4790 = vmatpush1.msra.mxu0 0.0
    %4791 = vmatprep.subr.mxu0 0.0
    %4792 = vmatpush1.msra.mxu0 0.0
    %4793 = vmatprep.subr.mxu0 0.0
    %4794 = vmatpush1.msra.mxu0 0.0
    %4795 = vmatprep.subr.mxu0 0.0
    %4796 = vmatpush1.msra.mxu0 0.0
    %4797 = vmatprep.subr.mxu0 0.0
    %4798 = vmatpush1.msra.mxu0 0.0
    %4799 = vmatprep.subr.mxu0 0.0
    %4800 = vmatpush1.msra.mxu0 0.0
    %4801 = vmatprep.subr.mxu0 0.0
    %4802 = vmatpush1.msra.mxu0 0.0
    %4803 = vmatprep.subr.mxu0 0.0
    %4804 = vmatpush1.msra.mxu0 0.0
    %4805 = vmatprep.subr.mxu0 0.0
    %4806 = vmatpush1.msra.mxu0 0.0
    %4807 = vmatprep.subr.mxu0 0.0
    %4808 = vmatpush1.msra.mxu0 0.0
    %4809 = vmatprep.subr.mxu0 0.0
    %4810 = vmatpush1.msra.mxu0 0.0
    %4811 = vmatprep.subr.mxu0 0.0
    %4812 = vmatpush1.msra.mxu0 0.0
    %4813 = vmatprep.subr.mxu0 0.0
    %4814 = vmatpush1.msra.mxu0 0.0
    %4815 = vmatprep.subr.mxu0 0.0
    %4816 = vmatpush1.msra.mxu0 0.0
    %4817 = vmatprep.subr.mxu0 0.0
    %4818 = vmatpush1.msra.mxu0 0.0
    %4819 = vmatprep.subr.mxu0 0.0
    %4820 = vmatpush1.msra.mxu0 0.0
    %4821 = vmatprep.subr.mxu0 0.0
    %4822 = vmatpush1.msra.mxu0 0.0
    %4823 = vmatprep.subr.mxu0 0.0
    %4824 = vmatpush1.msra.mxu0 0.0
    %4825 = vmatprep.subr.mxu0 0.0
    %4826 = vmatpush1.msra.mxu0 0.0
    %4827 = vmatprep.subr.mxu0 0.0
    %4828 = vmatpush1.msra.mxu0 0.0
    %4829 = vmatprep.subr.mxu0 0.0
    %4830 = vmatpush1.msra.mxu0 0.0
    %4831 = vmatprep.subr.mxu0 0.0
    %4832 = vmatpush1.msra.mxu0 0.0
    %4833 = vmatprep.subr.mxu0 0.0
    %4834 = vmatpush1.msra.mxu0 0.0
    %4835 = vmatprep.subr.mxu0 0.0
    %4836 = vmatpush1.msra.mxu0 0.0
    %4837 = vmatprep.mubr.f32.mxu0 0.0
    %4838 = vmatmul.mubr.f32.gmra.mrb[0].mxu0 %v4072
    %v4839 = vpop.f32.mrb[0].mxu0
    %v4840 = vadd.f32 0.0, %v4839
    %v4841 = vpop.f32.mrb[0].mxu0
    %4842 = vmatprep.mubr.f32.mxu0 0.0
    %4843 = vmatmul.mubr.f32.gmra.mrb[0].mxu0 %v4075
    %v4844 = vpop.f32.mrb[0].mxu0
    %v4845 = vadd.f32 0.0, %v4844
    %v4846 = vpop.f32.mrb[0].mxu0
    %4847 = vmatprep.mubr.f32.mxu0 0.0
    %4848 = vmatmul.mubr.f32.gmra.mrb[0].mxu0 %v4078
    %v4849 = vpop.f32.mrb[0].mxu0
    %v4850 = vadd.f32 0.0, %v4849
    %v4851 = vpop.f32.mrb[0].mxu0
    %4852 = vdwg.mxu0
    %s4853 = scalar_lea.vmem [#allocation7], 480
    %v4854 = vld [vmem:[%s4853] sm:$0xff]
    %v4855 = vld [vmem:[%s4853 + $0x8] sm:$0xff]
    %v4856 = vld [vmem:[%s4853 + $0x10] sm:$0xff]
    %v4857 = vld [vmem:[%s4853 + $0x18] sm:$0xff]
    %s4858 = scalar_lea.vmem [#allocation7], 512
    %v4859 = vld [vmem:[%s4858] sm:$0xff]
    %v4860 = vld [vmem:[%s4858 + $0x8] sm:$0xff]
    %v4861 = vld [vmem:[%s4858 + $0x10] sm:$0xff]
    %v4862 = vld [vmem:[%s4858 + $0x18] sm:$0xff]
    %v4864 = vsel %vm226, %v4845, 0
    %4866 = vmatprep.subr.mxu0 0.0
    %4867 = vmatpush1.msra.mxu0 %v4859
    %4868 = vmatprep.subr.mxu0 0.0
    %4869 = vmatpush1.msra.mxu0 %v4860
    %4870 = vmatprep.subr.mxu0 0.0
    %4871 = vmatpush1.msra.mxu0 %v4861
    %4872 = vmatprep.subr.mxu0 0.0
    %4873 = vmatpush1.msra.mxu0 %v4862
    %4874 = vmatprep.subr.mxu0 0.0
    %4875 = vmatpush1.msra.mxu0 0.0
    %4876 = vmatprep.subr.mxu0 0.0
    %4877 = vmatpush1.msra.mxu0 0.0
    %4878 = vmatprep.subr.mxu0 0.0
    %4879 = vmatpush1.msra.mxu0 0.0
    %4880 = vmatprep.subr.mxu0 0.0
    %4881 = vmatpush1.msra.mxu0 0.0
    %4882 = vmatprep.subr.mxu0 0.0
    %4883 = vmatpush1.msra.mxu0 0.0
    %4884 = vmatprep.subr.mxu0 0.0
    %4885 = vmatpush1.msra.mxu0 0.0
    %4886 = vmatprep.subr.mxu0 0.0
    %4887 = vmatpush1.msra.mxu0 0.0
    %4888 = vmatprep.subr.mxu0 0.0
    %4889 = vmatpush1.msra.mxu0 0.0
    %4890 = vmatprep.subr.mxu0 0.0
    %4891 = vmatpush1.msra.mxu0 0.0
    %4892 = vmatprep.subr.mxu0 0.0
    %4893 = vmatpush1.msra.mxu0 0.0
    %4894 = vmatprep.subr.mxu0 0.0
    %4895 = vmatpush1.msra.mxu0 0.0
    %4896 = vmatprep.subr.mxu0 0.0
    %4897 = vmatpush1.msra.mxu0 0.0
    %4898 = vmatprep.subr.mxu0 0.0
    %4899 = vmatpush1.msra.mxu0 0.0
    %4900 = vmatprep.subr.mxu0 0.0
    %4901 = vmatpush1.msra.mxu0 0.0
    %4902 = vmatprep.subr.mxu0 0.0
    %4903 = vmatpush1.msra.mxu0 0.0
    %4904 = vmatprep.subr.mxu0 0.0
    %4905 = vmatpush1.msra.mxu0 0.0
    %4906 = vmatprep.subr.mxu0 0.0
    %4907 = vmatpush1.msra.mxu0 0.0
    %4908 = vmatprep.subr.mxu0 0.0
    %4909 = vmatpush1.msra.mxu0 0.0
    %4910 = vmatprep.subr.mxu0 0.0
    %4911 = vmatpush1.msra.mxu0 0.0
    %4912 = vmatprep.subr.mxu0 0.0
    %4913 = vmatpush1.msra.mxu0 0.0
    %4914 = vmatprep.subr.mxu0 0.0
    %4915 = vmatpush1.msra.mxu0 0.0
    %4916 = vmatprep.subr.mxu0 0.0
    %4917 = vmatpush1.msra.mxu0 0.0
    %4918 = vmatprep.subr.mxu0 0.0
    %4919 = vmatpush1.msra.mxu0 0.0
    %4920 = vmatprep.subr.mxu0 0.0
    %4921 = vmatpush1.msra.mxu0 0.0
    %4922 = vmatprep.subr.mxu0 0.0
    %4923 = vmatpush1.msra.mxu0 0.0
    %4924 = vmatprep.subr.mxu0 0.0
    %4925 = vmatpush1.msra.mxu0 0.0
    %4926 = vmatprep.subr.mxu0 0.0
    %4927 = vmatpush1.msra.mxu0 0.0
    %4928 = vmatprep.subr.mxu0 0.0
    %4929 = vmatpush1.msra.mxu0 0.0
    %4930 = vmatprep.mubr.f32.mxu0 0.0
    %4931 = vmatmul.mubr.f32.gmra.mrb[0].mxu0 %v4864
    %v4932 = vpop.f32.mrb[0].mxu0
    %v4933 = vadd.f32 0.0, %v4932
    %v4934 = vpop.f32.mrb[0].mxu0
    %4935 = vdwg.mxu0
    %v4937 = vsel %vm226, %v4840, 0
    %4939 = vmatprep.subr.mxu0 0.0
    %4940 = vmatpush1.msra.mxu0 %v4854
    %4941 = vmatprep.subr.mxu0 0.0
    %4942 = vmatpush1.msra.mxu0 %v4855
    %4943 = vmatprep.subr.mxu0 0.0
    %4944 = vmatpush1.msra.mxu0 %v4856
    %4945 = vmatprep.subr.mxu0 0.0
    %4946 = vmatpush1.msra.mxu0 %v4857
    %4947 = vmatprep.subr.mxu0 0.0
    %4948 = vmatpush1.msra.mxu0 0.0
    %4949 = vmatprep.subr.mxu0 0.0
    %4950 = vmatpush1.msra.mxu0 0.0
    %4951 = vmatprep.subr.mxu0 0.0
    %4952 = vmatpush1.msra.mxu0 0.0
    %4953 = vmatprep.subr.mxu0 0.0
    %4954 = vmatpush1.msra.mxu0 0.0
    %4955 = vmatprep.subr.mxu0 0.0
    %4956 = vmatpush1.msra.mxu0 0.0
    %4957 = vmatprep.subr.mxu0 0.0
    %4958 = vmatpush1.msra.mxu0 0.0
    %4959 = vmatprep.subr.mxu0 0.0
    %4960 = vmatpush1.msra.mxu0 0.0
    %4961 = vmatprep.subr.mxu0 0.0
    %4962 = vmatpush1.msra.mxu0 0.0
    %4963 = vmatprep.subr.mxu0 0.0
    %4964 = vmatpush1.msra.mxu0 0.0
    %4965 = vmatprep.subr.mxu0 0.0
    %4966 = vmatpush1.msra.mxu0 0.0
    %4967 = vmatprep.subr.mxu0 0.0
    %4968 = vmatpush1.msra.mxu0 0.0
    %4969 = vmatprep.subr.mxu0 0.0
    %4970 = vmatpush1.msra.mxu0 0.0
    %4971 = vmatprep.subr.mxu0 0.0
    %4972 = vmatpush1.msra.mxu0 0.0
    %4973 = vmatprep.subr.mxu0 0.0
    %4974 = vmatpush1.msra.mxu0 0.0
    %4975 = vmatprep.subr.mxu0 0.0
    %4976 = vmatpush1.msra.mxu0 0.0
    %4977 = vmatprep.subr.mxu0 0.0
    %4978 = vmatpush1.msra.mxu0 0.0
    %4979 = vmatprep.subr.mxu0 0.0
    %4980 = vmatpush1.msra.mxu0 0.0
    %4981 = vmatprep.subr.mxu0 0.0
    %4982 = vmatpush1.msra.mxu0 0.0
    %4983 = vmatprep.subr.mxu0 0.0
    %4984 = vmatpush1.msra.mxu0 0.0
    %4985 = vmatprep.subr.mxu0 0.0
    %4986 = vmatpush1.msra.mxu0 0.0
    %4987 = vmatprep.subr.mxu0 0.0
    %4988 = vmatpush1.msra.mxu0 0.0
    %4989 = vmatprep.subr.mxu0 0.0
    %4990 = vmatpush1.msra.mxu0 0.0
    %4991 = vmatprep.subr.mxu0 0.0
    %4992 = vmatpush1.msra.mxu0 0.0
    %4993 = vmatprep.subr.mxu0 0.0
    %4994 = vmatpush1.msra.mxu0 0.0
    %4995 = vmatprep.subr.mxu0 0.0
    %4996 = vmatpush1.msra.mxu0 0.0
    %4997 = vmatprep.subr.mxu0 0.0
    %4998 = vmatpush1.msra.mxu0 0.0
    %4999 = vmatprep.subr.mxu0 0.0
    %5000 = vmatpush1.msra.mxu0 0.0
    %5001 = vmatprep.subr.mxu0 0.0
    %5002 = vmatpush1.msra.mxu0 0.0
    %5003 = vmatprep.mubr.f32.mxu0 0.0
    %5004 = vmatmul.mubr.f32.gmra.mrb[0].mxu0 %v4937
    %v5005 = vpop.f32.mrb[0].mxu0
    %v5006 = vadd.f32 %v4933, %v5005
    %v5007 = vpop.f32.mrb[0].mxu0
    %5008 = vdwg.mxu0
    %s5009 = scalar_lea.vmem [#allocation7], 544
    %v5010 = vld [vmem:[%s5009] sm:$0xff]
    %v5011 = vld [vmem:[%s5009 + $0x8] sm:$0xff]
    %v5012 = vld [vmem:[%s5009 + $0x10] sm:$0xff]
    %v5013 = vld [vmem:[%s5009 + $0x18] sm:$0xff]
    %v5015 = vsel %vm226, %v4850, 0
    %5017 = vmatprep.subr.mxu0 0.0
    %5018 = vmatpush1.msra.mxu0 %v5010
    %5019 = vmatprep.subr.mxu0 0.0
    %5020 = vmatpush1.msra.mxu0 %v5011
    %5021 = vmatprep.subr.mxu0 0.0
    %5022 = vmatpush1.msra.mxu0 %v5012
    %5023 = vmatprep.subr.mxu0 0.0
    %5024 = vmatpush1.msra.mxu0 %v5013
    %5025 = vmatprep.subr.mxu0 0.0
    %5026 = vmatpush1.msra.mxu0 0.0
    %5027 = vmatprep.subr.mxu0 0.0
    %5028 = vmatpush1.msra.mxu0 0.0
    %5029 = vmatprep.subr.mxu0 0.0
    %5030 = vmatpush1.msra.mxu0 0.0
    %5031 = vmatprep.subr.mxu0 0.0
    %5032 = vmatpush1.msra.mxu0 0.0
    %5033 = vmatprep.subr.mxu0 0.0
    %5034 = vmatpush1.msra.mxu0 0.0
    %5035 = vmatprep.subr.mxu0 0.0
    %5036 = vmatpush1.msra.mxu0 0.0
    %5037 = vmatprep.subr.mxu0 0.0
    %5038 = vmatpush1.msra.mxu0 0.0
    %5039 = vmatprep.subr.mxu0 0.0
    %5040 = vmatpush1.msra.mxu0 0.0
    %5041 = vmatprep.subr.mxu0 0.0
    %5042 = vmatpush1.msra.mxu0 0.0
    %5043 = vmatprep.subr.mxu0 0.0
    %5044 = vmatpush1.msra.mxu0 0.0
    %5045 = vmatprep.subr.mxu0 0.0
    %5046 = vmatpush1.msra.mxu0 0.0
    %5047 = vmatprep.subr.mxu0 0.0
    %5048 = vmatpush1.msra.mxu0 0.0
    %5049 = vmatprep.subr.mxu0 0.0
    %5050 = vmatpush1.msra.mxu0 0.0
    %5051 = vmatprep.subr.mxu0 0.0
    %5052 = vmatpush1.msra.mxu0 0.0
    %5053 = vmatprep.subr.mxu0 0.0
    %5054 = vmatpush1.msra.mxu0 0.0
    %5055 = vmatprep.subr.mxu0 0.0
    %5056 = vmatpush1.msra.mxu0 0.0
    %5057 = vmatprep.subr.mxu0 0.0
    %5058 = vmatpush1.msra.mxu0 0.0
    %5059 = vmatprep.subr.mxu0 0.0
    %5060 = vmatpush1.msra.mxu0 0.0
    %5061 = vmatprep.subr.mxu0 0.0
    %5062 = vmatpush1.msra.mxu0 0.0
    %5063 = vmatprep.subr.mxu0 0.0
    %5064 = vmatpush1.msra.mxu0 0.0
    %5065 = vmatprep.subr.mxu0 0.0
    %5066 = vmatpush1.msra.mxu0 0.0
    %5067 = vmatprep.subr.mxu0 0.0
    %5068 = vmatpush1.msra.mxu0 0.0
    %5069 = vmatprep.subr.mxu0 0.0
    %5070 = vmatpush1.msra.mxu0 0.0
    %5071 = vmatprep.subr.mxu0 0.0
    %5072 = vmatpush1.msra.mxu0 0.0
    %5073 = vmatprep.subr.mxu0 0.0
    %5074 = vmatpush1.msra.mxu0 0.0
    %5075 = vmatprep.subr.mxu0 0.0
    %5076 = vmatpush1.msra.mxu0 0.0
    %5077 = vmatprep.subr.mxu0 0.0
    %5078 = vmatpush1.msra.mxu0 0.0
    %5079 = vmatprep.subr.mxu0 0.0
    %5080 = vmatpush1.msra.mxu0 0.0
    %5081 = vmatprep.mubr.f32.mxu0 0.0
    %5082 = vmatmul.mubr.f32.gmra.mrb[0].mxu0 %v5015
    %v5083 = vpop.f32.mrb[0].mxu0
    %v5084 = vadd.f32 0.0, %v5083
    %v5085 = vpop.f32.mrb[0].mxu0
    %5086 = vdwg.mxu0
    %v5087 = vadd.f32 %v5006, %v5084
    %s5088 = scalar_lea.vmem [#allocation8], 5
    %v5089 = vld [vmem:[%s5088] sm:$0x1]
    %v5091 = vlaneseq
    %v5092 = vshrl.u32 %v5091, 7
    %v5093 = vsub.s32 0, %v5092
    %v5094 = vrot.slane %v5089, %v5093
    %v5096 = vadd.f32 %v5087, %v5094
    %v5097 = vtanh.pop %v5096
    %v5098 = vmul.f32 %v5097, 1.442695
    %v5099 = vpow.pop %v5098
    %v5100 = vmul.f32 %v3620, %v5099
    %5101 = vmatprep.subr.mxu0 0.0
    %5102 = vmatpush1.msra.mxu0 %v4410
    %5103 = vmatprep.subr.mxu0 0.0
    %5104 = vmatpush1.msra.mxu0 0.0
    %5105 = vmatprep.subr.mxu0 0.0
    %5106 = vmatpush1.msra.mxu0 0.0
    %5107 = vmatprep.subr.mxu0 0.0
    %5108 = vmatpush1.msra.mxu0 0.0
    %5109 = vmatprep.subr.mxu0 0.0
    %5110 = vmatpush1.msra.mxu0 0.0
    %5111 = vmatprep.subr.mxu0 0.0
    %5112 = vmatpush1.msra.mxu0 0.0
    %5113 = vmatprep.subr.mxu0 0.0
    %5114 = vmatpush1.msra.mxu0 0.0
    %5115 = vmatprep.subr.mxu0 0.0
    %5116 = vmatpush1.msra.mxu0 0.0
    %5117 = vmatprep.subr.mxu0 0.0
    %5118 = vmatpush1.msra.mxu0 0.0
    %5119 = vmatprep.subr.mxu0 0.0
    %5120 = vmatpush1.msra.mxu0 0.0
    %5121 = vmatprep.subr.mxu0 0.0
    %5122 = vmatpush1.msra.mxu0 0.0
    %5123 = vmatprep.subr.mxu0 0.0
    %5124 = vmatpush1.msra.mxu0 0.0
    %5125 = vmatprep.subr.mxu0 0.0
    %5126 = vmatpush1.msra.mxu0 0.0
    %5127 = vmatprep.subr.mxu0 0.0
    %5128 = vmatpush1.msra.mxu0 0.0
    %5129 = vmatprep.subr.mxu0 0.0
    %5130 = vmatpush1.msra.mxu0 0.0
    %5131 = vmatprep.subr.mxu0 0.0
    %5132 = vmatpush1.msra.mxu0 0.0
    %5133 = vmatprep.subr.mxu0 0.0
    %5134 = vmatpush1.msra.mxu0 0.0
    %5135 = vmatprep.subr.mxu0 0.0
    %5136 = vmatpush1.msra.mxu0 0.0
    %5137 = vmatprep.subr.mxu0 0.0
    %5138 = vmatpush1.msra.mxu0 0.0
    %5139 = vmatprep.subr.mxu0 0.0
    %5140 = vmatpush1.msra.mxu0 0.0
    %5141 = vmatprep.subr.mxu0 0.0
    %5142 = vmatpush1.msra.mxu0 0.0
    %5143 = vmatprep.subr.mxu0 0.0
    %5144 = vmatpush1.msra.mxu0 0.0
    %5145 = vmatprep.subr.mxu0 0.0
    %5146 = vmatpush1.msra.mxu0 0.0
    %5147 = vmatprep.subr.mxu0 0.0
    %5148 = vmatpush1.msra.mxu0 0.0
    %5149 = vmatprep.subr.mxu0 0.0
    %5150 = vmatpush1.msra.mxu0 0.0
    %5151 = vmatprep.subr.mxu0 0.0
    %5152 = vmatpush1.msra.mxu0 0.0
    %5153 = vmatprep.subr.mxu0 0.0
    %5154 = vmatpush1.msra.mxu0 0.0
    %5155 = vmatprep.subr.mxu0 0.0
    %5156 = vmatpush1.msra.mxu0 0.0
    %5157 = vmatprep.subr.mxu0 0.0
    %5158 = vmatpush1.msra.mxu0 0.0
    %5159 = vmatprep.subr.mxu0 0.0
    %5160 = vmatpush1.msra.mxu0 0.0
    %5161 = vmatprep.subr.mxu0 0.0
    %5162 = vmatpush1.msra.mxu0 0.0
    %5163 = vmatprep.subr.mxu0 0.0
    %5164 = vmatpush1.msra.mxu0 0.0
    %5165 = vmatprep.mubr.f32.mxu0 0.0
    %5166 = vmatmul.mubr.f32.gmra.mrb[0].mxu0 %v3697
    %v5167 = vpop.f32.mrb[0].mxu0
    %v5168 = vadd.f32 0.0, %v5167
    %v5169 = vpop.f32.mrb[0].mxu0
    %5170 = vmatprep.mubr.f32.mxu0 0.0
    %5171 = vmatmul.mubr.f32.gmra.mrb[0].mxu0 %v3700
    %v5172 = vpop.f32.mrb[0].mxu0
    %v5173 = vadd.f32 0.0, %v5172
    %v5174 = vpop.f32.mrb[0].mxu0
    %5175 = vmatprep.mubr.f32.mxu0 0.0
    %5176 = vmatmul.mubr.f32.gmra.mrb[0].mxu0 %v3703
    %v5177 = vpop.f32.mrb[0].mxu0
    %v5178 = vadd.f32 0.0, %v5177
    %v5179 = vpop.f32.mrb[0].mxu0
    %5180 = vmatprep.mubr.f32.mxu0 0.0
    %5181 = vmatmul.mubr.f32.gmra.mrb[0].mxu0 %v3706
    %v5182 = vpop.f32.mrb[0].mxu0
    %v5183 = vadd.f32 0.0, %v5182
    %v5184 = vpop.f32.mrb[0].mxu0
    %5185 = vmatprep.mubr.f32.mxu0 0.0
    %5186 = vmatmul.mubr.f32.gmra.mrb[0].mxu0 %v3709
    %v5187 = vpop.f32.mrb[0].mxu0
    %v5188 = vadd.f32 0.0, %v5187
    %v5189 = vpop.f32.mrb[0].mxu0
    %5190 = vdwg.mxu0
    %s5191 = scalar_lea.vmem [#allocation2], 168
    %v5192 = vld [vmem:[%s5191] sm:$0xff]
    %s5193 = scalar_lea.vmem [#allocation2], 176
    %v5194 = vld [vmem:[%s5193] sm:$0xff]
    %v5197 = vrot.slane %v5173, 4
    %v5198 = vrot.slane %v5178, 4
    %v5199 = vsel %vm525, %v5197, %v5198
    %v5200 = vsel %vm531, %v5199, 0
    %v5202 = vsel %vm531, %v5198, 0
    %5204 = vmatprep.subr.mxu0 0.0
    %5205 = vmatpush1.msra.mxu0 %v5194
    %5206 = vmatprep.subr.mxu0 0.0
    %5207 = vmatpush1.msra.mxu0 0.0
    %5208 = vmatprep.subr.mxu0 0.0
    %5209 = vmatpush1.msra.mxu0 0.0
    %5210 = vmatprep.subr.mxu0 0.0
    %5211 = vmatpush1.msra.mxu0 0.0
    %5212 = vmatprep.subr.mxu0 0.0
    %5213 = vmatpush1.msra.mxu0 0.0
    %5214 = vmatprep.subr.mxu0 0.0
    %5215 = vmatpush1.msra.mxu0 0.0
    %5216 = vmatprep.subr.mxu0 0.0
    %5217 = vmatpush1.msra.mxu0 0.0
    %5218 = vmatprep.subr.mxu0 0.0
    %5219 = vmatpush1.msra.mxu0 0.0
    %5220 = vmatprep.subr.mxu0 0.0
    %5221 = vmatpush1.msra.mxu0 0.0
    %5222 = vmatprep.subr.mxu0 0.0
    %5223 = vmatpush1.msra.mxu0 0.0
    %5224 = vmatprep.subr.mxu0 0.0
    %5225 = vmatpush1.msra.mxu0 0.0
    %5226 = vmatprep.subr.mxu0 0.0
    %5227 = vmatpush1.msra.mxu0 0.0
    %5228 = vmatprep.subr.mxu0 0.0
    %5229 = vmatpush1.msra.mxu0 0.0
    %5230 = vmatprep.subr.mxu0 0.0
    %5231 = vmatpush1.msra.mxu0 0.0
    %5232 = vmatprep.subr.mxu0 0.0
    %5233 = vmatpush1.msra.mxu0 0.0
    %5234 = vmatprep.subr.mxu0 0.0
    %5235 = vmatpush1.msra.mxu0 0.0
    %5236 = vmatprep.subr.mxu0 0.0
    %5237 = vmatpush1.msra.mxu0 0.0
    %5238 = vmatprep.subr.mxu0 0.0
    %5239 = vmatpush1.msra.mxu0 0.0
    %5240 = vmatprep.subr.mxu0 0.0
    %5241 = vmatpush1.msra.mxu0 0.0
    %5242 = vmatprep.subr.mxu0 0.0
    %5243 = vmatpush1.msra.mxu0 0.0
    %5244 = vmatprep.subr.mxu0 0.0
    %5245 = vmatpush1.msra.mxu0 0.0
    %5246 = vmatprep.subr.mxu0 0.0
    %5247 = vmatpush1.msra.mxu0 0.0
    %5248 = vmatprep.subr.mxu0 0.0
    %5249 = vmatpush1.msra.mxu0 0.0
    %5250 = vmatprep.subr.mxu0 0.0
    %5251 = vmatpush1.msra.mxu0 0.0
    %5252 = vmatprep.subr.mxu0 0.0
    %5253 = vmatpush1.msra.mxu0 0.0
    %5254 = vmatprep.subr.mxu0 0.0
    %5255 = vmatpush1.msra.mxu0 0.0
    %5256 = vmatprep.subr.mxu0 0.0
    %5257 = vmatpush1.msra.mxu0 0.0
    %5258 = vmatprep.subr.mxu0 0.0
    %5259 = vmatpush1.msra.mxu0 0.0
    %5260 = vmatprep.subr.mxu0 0.0
    %5261 = vmatpush1.msra.mxu0 0.0
    %5262 = vmatprep.subr.mxu0 0.0
    %5263 = vmatpush1.msra.mxu0 0.0
    %5264 = vmatprep.subr.mxu0 0.0
    %5265 = vmatpush1.msra.mxu0 0.0
    %5266 = vmatprep.subr.mxu0 0.0
    %5267 = vmatpush1.msra.mxu0 0.0
    %5268 = vmatprep.mubr.f32.mxu0 0.0
    %5269 = vmatmul.mubr.f32.gmra.mrb[0].mxu0 %v5200
    %v5270 = vpop.f32.mrb[0].mxu0
    %v5271 = vadd.f32 0.0, %v5270
    %v5272 = vpop.f32.mrb[0].mxu0
    %5273 = vmatprep.mubr.f32.mxu0 0.0
    %5274 = vmatmul.mubr.f32.gmra.mrb[0].mxu0 %v5202
    %v5275 = vpop.f32.mrb[0].mxu0
    %v5276 = vadd.f32 0.0, %v5275
    %v5277 = vpop.f32.mrb[0].mxu0
    %5278 = vdwg.mxu0
    %v5280 = vsel %vm531, %v5168, 0
    %v5282 = vsel %vm531, %v5173, 0
    %5284 = vmatprep.subr.mxu0 0.0
    %5285 = vmatpush1.msra.mxu0 %v5192
    %5286 = vmatprep.subr.mxu0 0.0
    %5287 = vmatpush1.msra.mxu0 0.0
    %5288 = vmatprep.subr.mxu0 0.0
    %5289 = vmatpush1.msra.mxu0 0.0
    %5290 = vmatprep.subr.mxu0 0.0
    %5291 = vmatpush1.msra.mxu0 0.0
    %5292 = vmatprep.subr.mxu0 0.0
    %5293 = vmatpush1.msra.mxu0 0.0
    %5294 = vmatprep.subr.mxu0 0.0
    %5295 = vmatpush1.msra.mxu0 0.0
    %5296 = vmatprep.subr.mxu0 0.0
    %5297 = vmatpush1.msra.mxu0 0.0
    %5298 = vmatprep.subr.mxu0 0.0
    %5299 = vmatpush1.msra.mxu0 0.0
    %5300 = vmatprep.subr.mxu0 0.0
    %5301 = vmatpush1.msra.mxu0 0.0
    %5302 = vmatprep.subr.mxu0 0.0
    %5303 = vmatpush1.msra.mxu0 0.0
    %5304 = vmatprep.subr.mxu0 0.0
    %5305 = vmatpush1.msra.mxu0 0.0
    %5306 = vmatprep.subr.mxu0 0.0
    %5307 = vmatpush1.msra.mxu0 0.0
    %5308 = vmatprep.subr.mxu0 0.0
    %5309 = vmatpush1.msra.mxu0 0.0
    %5310 = vmatprep.subr.mxu0 0.0
    %5311 = vmatpush1.msra.mxu0 0.0
    %5312 = vmatprep.subr.mxu0 0.0
    %5313 = vmatpush1.msra.mxu0 0.0
    %5314 = vmatprep.subr.mxu0 0.0
    %5315 = vmatpush1.msra.mxu0 0.0
    %5316 = vmatprep.subr.mxu0 0.0
    %5317 = vmatpush1.msra.mxu0 0.0
    %5318 = vmatprep.subr.mxu0 0.0
    %5319 = vmatpush1.msra.mxu0 0.0
    %5320 = vmatprep.subr.mxu0 0.0
    %5321 = vmatpush1.msra.mxu0 0.0
    %5322 = vmatprep.subr.mxu0 0.0
    %5323 = vmatpush1.msra.mxu0 0.0
    %5324 = vmatprep.subr.mxu0 0.0
    %5325 = vmatpush1.msra.mxu0 0.0
    %5326 = vmatprep.subr.mxu0 0.0
    %5327 = vmatpush1.msra.mxu0 0.0
    %5328 = vmatprep.subr.mxu0 0.0
    %5329 = vmatpush1.msra.mxu0 0.0
    %5330 = vmatprep.subr.mxu0 0.0
    %5331 = vmatpush1.msra.mxu0 0.0
    %5332 = vmatprep.subr.mxu0 0.0
    %5333 = vmatpush1.msra.mxu0 0.0
    %5334 = vmatprep.subr.mxu0 0.0
    %5335 = vmatpush1.msra.mxu0 0.0
    %5336 = vmatprep.subr.mxu0 0.0
    %5337 = vmatpush1.msra.mxu0 0.0
    %5338 = vmatprep.subr.mxu0 0.0
    %5339 = vmatpush1.msra.mxu0 0.0
    %5340 = vmatprep.subr.mxu0 0.0
    %5341 = vmatpush1.msra.mxu0 0.0
    %5342 = vmatprep.subr.mxu0 0.0
    %5343 = vmatpush1.msra.mxu0 0.0
    %5344 = vmatprep.subr.mxu0 0.0
    %5345 = vmatpush1.msra.mxu0 0.0
    %5346 = vmatprep.subr.mxu0 0.0
    %5347 = vmatpush1.msra.mxu0 0.0
    %5348 = vmatprep.mubr.f32.mxu0 0.0
    %5349 = vmatmul.mubr.f32.gmra.mrb[0].mxu0 %v5280
    %v5350 = vpop.f32.mrb[0].mxu0
    %v5351 = vadd.f32 %v5271, %v5350
    %v5352 = vpop.f32.mrb[0].mxu0
    %5353 = vmatprep.mubr.f32.mxu0 0.0
    %5354 = vmatmul.mubr.f32.gmra.mrb[0].mxu0 %v5282
    %v5355 = vpop.f32.mrb[0].mxu0
    %v5356 = vadd.f32 %v5276, %v5355
    %v5357 = vpop.f32.mrb[0].mxu0
    %5358 = vdwg.mxu0
    %s5359 = scalar_lea.vmem [#allocation2], 184
    %v5360 = vld [vmem:[%s5359] sm:$0xff]
    %v5362 = vsel %vm531, %v5183, 0
    %v5365 = vsel %vm531, %v5188, 0
    %5367 = vmatprep.subr.mxu0 0.0
    %5368 = vmatpush1.msra.mxu0 %v5360
    %5369 = vmatprep.subr.mxu0 0.0
    %5370 = vmatpush1.msra.mxu0 0.0
    %5371 = vmatprep.subr.mxu0 0.0
    %5372 = vmatpush1.msra.mxu0 0.0
    %5373 = vmatprep.subr.mxu0 0.0
    %5374 = vmatpush1.msra.mxu0 0.0
    %5375 = vmatprep.subr.mxu0 0.0
    %5376 = vmatpush1.msra.mxu0 0.0
    %5377 = vmatprep.subr.mxu0 0.0
    %5378 = vmatpush1.msra.mxu0 0.0
    %5379 = vmatprep.subr.mxu0 0.0
    %5380 = vmatpush1.msra.mxu0 0.0
    %5381 = vmatprep.subr.mxu0 0.0
    %5382 = vmatpush1.msra.mxu0 0.0
    %5383 = vmatprep.subr.mxu0 0.0
    %5384 = vmatpush1.msra.mxu0 0.0
    %5385 = vmatprep.subr.mxu0 0.0
    %5386 = vmatpush1.msra.mxu0 0.0
    %5387 = vmatprep.subr.mxu0 0.0
    %5388 = vmatpush1.msra.mxu0 0.0
    %5389 = vmatprep.subr.mxu0 0.0
    %5390 = vmatpush1.msra.mxu0 0.0
    %5391 = vmatprep.subr.mxu0 0.0
    %5392 = vmatpush1.msra.mxu0 0.0
    %5393 = vmatprep.subr.mxu0 0.0
    %5394 = vmatpush1.msra.mxu0 0.0
    %5395 = vmatprep.subr.mxu0 0.0
    %5396 = vmatpush1.msra.mxu0 0.0
    %5397 = vmatprep.subr.mxu0 0.0
    %5398 = vmatpush1.msra.mxu0 0.0
    %5399 = vmatprep.subr.mxu0 0.0
    %5400 = vmatpush1.msra.mxu0 0.0
    %5401 = vmatprep.subr.mxu0 0.0
    %5402 = vmatpush1.msra.mxu0 0.0
    %5403 = vmatprep.subr.mxu0 0.0
    %5404 = vmatpush1.msra.mxu0 0.0
    %5405 = vmatprep.subr.mxu0 0.0
    %5406 = vmatpush1.msra.mxu0 0.0
    %5407 = vmatprep.subr.mxu0 0.0
    %5408 = vmatpush1.msra.mxu0 0.0
    %5409 = vmatprep.subr.mxu0 0.0
    %5410 = vmatpush1.msra.mxu0 0.0
    %5411 = vmatprep.subr.mxu0 0.0
    %5412 = vmatpush1.msra.mxu0 0.0
    %5413 = vmatprep.subr.mxu0 0.0
    %5414 = vmatpush1.msra.mxu0 0.0
    %5415 = vmatprep.subr.mxu0 0.0
    %5416 = vmatpush1.msra.mxu0 0.0
    %5417 = vmatprep.subr.mxu0 0.0
    %5418 = vmatpush1.msra.mxu0 0.0
    %5419 = vmatprep.subr.mxu0 0.0
    %5420 = vmatpush1.msra.mxu0 0.0
    %5421 = vmatprep.subr.mxu0 0.0
    %5422 = vmatpush1.msra.mxu0 0.0
    %5423 = vmatprep.subr.mxu0 0.0
    %5424 = vmatpush1.msra.mxu0 0.0
    %5425 = vmatprep.subr.mxu0 0.0
    %5426 = vmatpush1.msra.mxu0 0.0
    %5427 = vmatprep.subr.mxu0 0.0
    %5428 = vmatpush1.msra.mxu0 0.0
    %5429 = vmatprep.subr.mxu0 0.0
    %5430 = vmatpush1.msra.mxu0 0.0
    %5431 = vmatprep.mubr.f32.mxu0 0.0
    %5432 = vmatmul.mubr.f32.gmra.mrb[0].mxu0 %v5362
    %v5433 = vpop.f32.mrb[0].mxu0
    %v5434 = vadd.f32 0.0, %v5433
    %v5435 = vpop.f32.mrb[0].mxu0
    %5436 = vmatprep.mubr.f32.mxu0 0.0
    %5437 = vmatmul.mubr.f32.gmra.mrb[0].mxu0 %v5365
    %v5438 = vpop.f32.mrb[0].mxu0
    %v5439 = vadd.f32 0.0, %v5438
    %v5440 = vpop.f32.mrb[0].mxu0
    %5441 = vdwg.mxu0
    %v5442 = vadd.f32 %v5351, %v5434
    %v5443 = vadd.f32 %v5356, %v5439
    %s5444 = scalar_lea.vmem [#allocation5], 7
    %v5445 = vld [vmem:[%s5444] sm:$0x1]
    %v5447 = vlaneseq
    %v5448 = vshrl.u32 %v5447, 7
    %v5449 = vsub.s32 0, %v5448
    %v5450 = vrot.slane %v5445, %v5449
    %v5452 = vadd.f32 %v5442, %v5450
    %v5453 = vadd.f32 %v5443, %v5450
    %vm5454 = vcmp.ge.f32.partialorder %v5452, 0.0
    %vm5455 = vcmp.ge.f32.partialorder %v5453, 0.0
    %v5456 = vmul.f32 %v5452, 0.01
    %v5457 = vmul.f32 %v5453, 0.01
    %v5458 = vsel %vm5454, %v5452, %v5456
    %v5459 = vsel %vm5455, %v5453, %v5457
    %v5461 = vsel %vm525, %v5459, 0
    %5463 = vmatprep.subr.mxu0 0.0
    %5464 = vmatpush1.msra.mxu0 %v5458
    %5465 = vmatprep.subr.mxu0 0.0
    %5466 = vmatpush1.msra.mxu0 %v5461
    %5467 = vmatprep.subr.mxu0 0.0
    %5468 = vmatpush1.msra.mxu0 0.0
    %5469 = vmatprep.subr.mxu0 0.0
    %5470 = vmatpush1.msra.mxu0 0.0
    %5471 = vmatprep.subr.mxu0 0.0
    %5472 = vmatpush1.msra.mxu0 0.0
    %5473 = vmatprep.subr.mxu0 0.0
    %5474 = vmatpush1.msra.mxu0 0.0
    %5475 = vmatprep.subr.mxu0 0.0
    %5476 = vmatpush1.msra.mxu0 0.0
    %5477 = vmatprep.subr.mxu0 0.0
    %5478 = vmatpush1.msra.mxu0 0.0
    %5479 = vmatprep.subr.mxu0 0.0
    %5480 = vmatpush1.msra.mxu0 0.0
    %5481 = vmatprep.subr.mxu0 0.0
    %5482 = vmatpush1.msra.mxu0 0.0
    %5483 = vmatprep.subr.mxu0 0.0
    %5484 = vmatpush1.msra.mxu0 0.0
    %5485 = vmatprep.subr.mxu0 0.0
    %5486 = vmatpush1.msra.mxu0 0.0
    %5487 = vmatprep.subr.mxu0 0.0
    %5488 = vmatpush1.msra.mxu0 0.0
    %5489 = vmatprep.subr.mxu0 0.0
    %5490 = vmatpush1.msra.mxu0 0.0
    %5491 = vmatprep.subr.mxu0 0.0
    %5492 = vmatpush1.msra.mxu0 0.0
    %5493 = vmatprep.subr.mxu0 0.0
    %5494 = vmatpush1.msra.mxu0 0.0
    %5495 = vmatprep.subr.mxu0 0.0
    %5496 = vmatpush1.msra.mxu0 0.0
    %5497 = vmatprep.subr.mxu0 0.0
    %5498 = vmatpush1.msra.mxu0 0.0
    %5499 = vmatprep.subr.mxu0 0.0
    %5500 = vmatpush1.msra.mxu0 0.0
    %5501 = vmatprep.subr.mxu0 0.0
    %5502 = vmatpush1.msra.mxu0 0.0
    %5503 = vmatprep.subr.mxu0 0.0
    %5504 = vmatpush1.msra.mxu0 0.0
    %5505 = vmatprep.subr.mxu0 0.0
    %5506 = vmatpush1.msra.mxu0 0.0
    %5507 = vmatprep.subr.mxu0 0.0
    %5508 = vmatpush1.msra.mxu0 0.0
    %5509 = vmatprep.subr.mxu0 0.0
    %5510 = vmatpush1.msra.mxu0 0.0
    %5511 = vmatprep.subr.mxu0 0.0
    %5512 = vmatpush1.msra.mxu0 0.0
    %5513 = vmatprep.subr.mxu0 0.0
    %5514 = vmatpush1.msra.mxu0 0.0
    %5515 = vmatprep.subr.mxu0 0.0
    %5516 = vmatpush1.msra.mxu0 0.0
    %5517 = vmatprep.subr.mxu0 0.0
    %5518 = vmatpush1.msra.mxu0 0.0
    %5519 = vmatprep.subr.mxu0 0.0
    %5520 = vmatpush1.msra.mxu0 0.0
    %5521 = vmatprep.subr.mxu0 0.0
    %5522 = vmatpush1.msra.mxu0 0.0
    %5523 = vmatprep.subr.mxu0 0.0
    %5524 = vmatpush1.msra.mxu0 0.0
    %5525 = vmatprep.subr.mxu0 0.0
    %5526 = vmatpush1.msra.mxu0 0.0
    %5527 = vmatprep.mubr.f32.mxu0 0.0
    %5528 = vmatmul.mubr.f32.gmra.mrb[0].mxu0 %v4072
    %v5529 = vpop.f32.mrb[0].mxu0
    %v5530 = vadd.f32 0.0, %v5529
    %v5531 = vpop.f32.mrb[0].mxu0
    %5532 = vmatprep.mubr.f32.mxu0 0.0
    %5533 = vmatmul.mubr.f32.gmra.mrb[0].mxu0 %v4075
    %v5534 = vpop.f32.mrb[0].mxu0
    %v5535 = vadd.f32 0.0, %v5534
    %v5536 = vpop.f32.mrb[0].mxu0
    %5537 = vmatprep.mubr.f32.mxu0 0.0
    %5538 = vmatmul.mubr.f32.gmra.mrb[0].mxu0 %v4078
    %v5539 = vpop.f32.mrb[0].mxu0
    %v5540 = vadd.f32 0.0, %v5539
    %v5541 = vpop.f32.mrb[0].mxu0
    %5542 = vdwg.mxu0
    %s5543 = scalar_lea.vmem [#allocation7], 672
    %v5544 = vld [vmem:[%s5543] sm:$0xff]
    %v5545 = vld [vmem:[%s5543 + $0x8] sm:$0xff]
    %v5546 = vld [vmem:[%s5543 + $0x10] sm:$0xff]
    %v5547 = vld [vmem:[%s5543 + $0x18] sm:$0xff]
    %s5548 = scalar_lea.vmem [#allocation7], 704
    %v5549 = vld [vmem:[%s5548] sm:$0xff]
    %v5550 = vld [vmem:[%s5548 + $0x8] sm:$0xff]
    %v5551 = vld [vmem:[%s5548 + $0x10] sm:$0xff]
    %v5552 = vld [vmem:[%s5548 + $0x18] sm:$0xff]
    %v5554 = vsel %vm226, %v5535, 0
    %5556 = vmatprep.subr.mxu0 0.0
    %5557 = vmatpush1.msra.mxu0 %v5549
    %5558 = vmatprep.subr.mxu0 0.0
    %5559 = vmatpush1.msra.mxu0 %v5550
    %5560 = vmatprep.subr.mxu0 0.0
    %5561 = vmatpush1.msra.mxu0 %v5551
    %5562 = vmatprep.subr.mxu0 0.0
    %5563 = vmatpush1.msra.mxu0 %v5552
    %5564 = vmatprep.subr.mxu0 0.0
    %5565 = vmatpush1.msra.mxu0 0.0
    %5566 = vmatprep.subr.mxu0 0.0
    %5567 = vmatpush1.msra.mxu0 0.0
    %5568 = vmatprep.subr.mxu0 0.0
    %5569 = vmatpush1.msra.mxu0 0.0
    %5570 = vmatprep.subr.mxu0 0.0
    %5571 = vmatpush1.msra.mxu0 0.0
    %5572 = vmatprep.subr.mxu0 0.0
    %5573 = vmatpush1.msra.mxu0 0.0
    %5574 = vmatprep.subr.mxu0 0.0
    %5575 = vmatpush1.msra.mxu0 0.0
    %5576 = vmatprep.subr.mxu0 0.0
    %5577 = vmatpush1.msra.mxu0 0.0
    %5578 = vmatprep.subr.mxu0 0.0
    %5579 = vmatpush1.msra.mxu0 0.0
    %5580 = vmatprep.subr.mxu0 0.0
    %5581 = vmatpush1.msra.mxu0 0.0
    %5582 = vmatprep.subr.mxu0 0.0
    %5583 = vmatpush1.msra.mxu0 0.0
    %5584 = vmatprep.subr.mxu0 0.0
    %5585 = vmatpush1.msra.mxu0 0.0
    %5586 = vmatprep.subr.mxu0 0.0
    %5587 = vmatpush1.msra.mxu0 0.0
    %5588 = vmatprep.subr.mxu0 0.0
    %5589 = vmatpush1.msra.mxu0 0.0
    %5590 = vmatprep.subr.mxu0 0.0
    %5591 = vmatpush1.msra.mxu0 0.0
    %5592 = vmatprep.subr.mxu0 0.0
    %5593 = vmatpush1.msra.mxu0 0.0
    %5594 = vmatprep.subr.mxu0 0.0
    %5595 = vmatpush1.msra.mxu0 0.0
    %5596 = vmatprep.subr.mxu0 0.0
    %5597 = vmatpush1.msra.mxu0 0.0
    %5598 = vmatprep.subr.mxu0 0.0
    %5599 = vmatpush1.msra.mxu0 0.0
    %5600 = vmatprep.subr.mxu0 0.0
    %5601 = vmatpush1.msra.mxu0 0.0
    %5602 = vmatprep.subr.mxu0 0.0
    %5603 = vmatpush1.msra.mxu0 0.0
    %5604 = vmatprep.subr.mxu0 0.0
    %5605 = vmatpush1.msra.mxu0 0.0
    %5606 = vmatprep.subr.mxu0 0.0
    %5607 = vmatpush1.msra.mxu0 0.0
    %5608 = vmatprep.subr.mxu0 0.0
    %5609 = vmatpush1.msra.mxu0 0.0
    %5610 = vmatprep.subr.mxu0 0.0
    %5611 = vmatpush1.msra.mxu0 0.0
    %5612 = vmatprep.subr.mxu0 0.0
    %5613 = vmatpush1.msra.mxu0 0.0
    %5614 = vmatprep.subr.mxu0 0.0
    %5615 = vmatpush1.msra.mxu0 0.0
    %5616 = vmatprep.subr.mxu0 0.0
    %5617 = vmatpush1.msra.mxu0 0.0
    %5618 = vmatprep.subr.mxu0 0.0
    %5619 = vmatpush1.msra.mxu0 0.0
    %5620 = vmatprep.mubr.f32.mxu0 0.0
    %5621 = vmatmul.mubr.f32.gmra.mrb[0].mxu0 %v5554
    %v5622 = vpop.f32.mrb[0].mxu0
    %v5623 = vadd.f32 0.0, %v5622
    %v5624 = vpop.f32.mrb[0].mxu0
    %5625 = vdwg.mxu0
    %v5627 = vsel %vm226, %v5530, 0
    %5629 = vmatprep.subr.mxu0 0.0
    %5630 = vmatpush1.msra.mxu0 %v5544
    %5631 = vmatprep.subr.mxu0 0.0
    %5632 = vmatpush1.msra.mxu0 %v5545
    %5633 = vmatprep.subr.mxu0 0.0
    %5634 = vmatpush1.msra.mxu0 %v5546
    %5635 = vmatprep.subr.mxu0 0.0
    %5636 = vmatpush1.msra.mxu0 %v5547
    %5637 = vmatprep.subr.mxu0 0.0
    %5638 = vmatpush1.msra.mxu0 0.0
    %5639 = vmatprep.subr.mxu0 0.0
    %5640 = vmatpush1.msra.mxu0 0.0
    %5641 = vmatprep.subr.mxu0 0.0
    %5642 = vmatpush1.msra.mxu0 0.0
    %5643 = vmatprep.subr.mxu0 0.0
    %5644 = vmatpush1.msra.mxu0 0.0
    %5645 = vmatprep.subr.mxu0 0.0
    %5646 = vmatpush1.msra.mxu0 0.0
    %5647 = vmatprep.subr.mxu0 0.0
    %5648 = vmatpush1.msra.mxu0 0.0
    %5649 = vmatprep.subr.mxu0 0.0
    %5650 = vmatpush1.msra.mxu0 0.0
    %5651 = vmatprep.subr.mxu0 0.0
    %5652 = vmatpush1.msra.mxu0 0.0
    %5653 = vmatprep.subr.mxu0 0.0
    %5654 = vmatpush1.msra.mxu0 0.0
    %5655 = vmatprep.subr.mxu0 0.0
    %5656 = vmatpush1.msra.mxu0 0.0
    %5657 = vmatprep.subr.mxu0 0.0
    %5658 = vmatpush1.msra.mxu0 0.0
    %5659 = vmatprep.subr.mxu0 0.0
    %5660 = vmatpush1.msra.mxu0 0.0
    %5661 = vmatprep.subr.mxu0 0.0
    %5662 = vmatpush1.msra.mxu0 0.0
    %5663 = vmatprep.subr.mxu0 0.0
    %5664 = vmatpush1.msra.mxu0 0.0
    %5665 = vmatprep.subr.mxu0 0.0
    %5666 = vmatpush1.msra.mxu0 0.0
    %5667 = vmatprep.subr.mxu0 0.0
    %5668 = vmatpush1.msra.mxu0 0.0
    %5669 = vmatprep.subr.mxu0 0.0
    %5670 = vmatpush1.msra.mxu0 0.0
    %5671 = vmatprep.subr.mxu0 0.0
    %5672 = vmatpush1.msra.mxu0 0.0
    %5673 = vmatprep.subr.mxu0 0.0
    %5674 = vmatpush1.msra.mxu0 0.0
    %5675 = vmatprep.subr.mxu0 0.0
    %5676 = vmatpush1.msra.mxu0 0.0
    %5677 = vmatprep.subr.mxu0 0.0
    %5678 = vmatpush1.msra.mxu0 0.0
    %5679 = vmatprep.subr.mxu0 0.0
    %5680 = vmatpush1.msra.mxu0 0.0
    %5681 = vmatprep.subr.mxu0 0.0
    %5682 = vmatpush1.msra.mxu0 0.0
    %5683 = vmatprep.subr.mxu0 0.0
    %5684 = vmatpush1.msra.mxu0 0.0
    %5685 = vmatprep.subr.mxu0 0.0
    %5686 = vmatpush1.msra.mxu0 0.0
    %5687 = vmatprep.subr.mxu0 0.0
    %5688 = vmatpush1.msra.mxu0 0.0
    %5689 = vmatprep.subr.mxu0 0.0
    %5690 = vmatpush1.msra.mxu0 0.0
    %5691 = vmatprep.subr.mxu0 0.0
    %5692 = vmatpush1.msra.mxu0 0.0
    %5693 = vmatprep.mubr.f32.mxu0 0.0
    %5694 = vmatmul.mubr.f32.gmra.mrb[0].mxu0 %v5627
    %v5695 = vpop.f32.mrb[0].mxu0
    %v5696 = vadd.f32 %v5623, %v5695
    %v5697 = vpop.f32.mrb[0].mxu0
    %5698 = vdwg.mxu0
    %s5699 = scalar_lea.vmem [#allocation7], 736
    %v5700 = vld [vmem:[%s5699] sm:$0xff]
    %v5701 = vld [vmem:[%s5699 + $0x8] sm:$0xff]
    %v5702 = vld [vmem:[%s5699 + $0x10] sm:$0xff]
    %v5703 = vld [vmem:[%s5699 + $0x18] sm:$0xff]
    %v5705 = vsel %vm226, %v5540, 0
    %5707 = vmatprep.subr.mxu0 0.0
    %5708 = vmatpush1.msra.mxu0 %v5700
    %5709 = vmatprep.subr.mxu0 0.0
    %5710 = vmatpush1.msra.mxu0 %v5701
    %5711 = vmatprep.subr.mxu0 0.0
    %5712 = vmatpush1.msra.mxu0 %v5702
    %5713 = vmatprep.subr.mxu0 0.0
    %5714 = vmatpush1.msra.mxu0 %v5703
    %5715 = vmatprep.subr.mxu0 0.0
    %5716 = vmatpush1.msra.mxu0 0.0
    %5717 = vmatprep.subr.mxu0 0.0
    %5718 = vmatpush1.msra.mxu0 0.0
    %5719 = vmatprep.subr.mxu0 0.0
    %5720 = vmatpush1.msra.mxu0 0.0
    %5721 = vmatprep.subr.mxu0 0.0
    %5722 = vmatpush1.msra.mxu0 0.0
    %5723 = vmatprep.subr.mxu0 0.0
    %5724 = vmatpush1.msra.mxu0 0.0
    %5725 = vmatprep.subr.mxu0 0.0
    %5726 = vmatpush1.msra.mxu0 0.0
    %5727 = vmatprep.subr.mxu0 0.0
    %5728 = vmatpush1.msra.mxu0 0.0
    %5729 = vmatprep.subr.mxu0 0.0
    %5730 = vmatpush1.msra.mxu0 0.0
    %5731 = vmatprep.subr.mxu0 0.0
    %5732 = vmatpush1.msra.mxu0 0.0
    %5733 = vmatprep.subr.mxu0 0.0
    %5734 = vmatpush1.msra.mxu0 0.0
    %5735 = vmatprep.subr.mxu0 0.0
    %5736 = vmatpush1.msra.mxu0 0.0
    %5737 = vmatprep.subr.mxu0 0.0
    %5738 = vmatpush1.msra.mxu0 0.0
    %5739 = vmatprep.subr.mxu0 0.0
    %5740 = vmatpush1.msra.mxu0 0.0
    %5741 = vmatprep.subr.mxu0 0.0
    %5742 = vmatpush1.msra.mxu0 0.0
    %5743 = vmatprep.subr.mxu0 0.0
    %5744 = vmatpush1.msra.mxu0 0.0
    %5745 = vmatprep.subr.mxu0 0.0
    %5746 = vmatpush1.msra.mxu0 0.0
    %5747 = vmatprep.subr.mxu0 0.0
    %5748 = vmatpush1.msra.mxu0 0.0
    %5749 = vmatprep.subr.mxu0 0.0
    %5750 = vmatpush1.msra.mxu0 0.0
    %5751 = vmatprep.subr.mxu0 0.0
    %5752 = vmatpush1.msra.mxu0 0.0
    %5753 = vmatprep.subr.mxu0 0.0
    %5754 = vmatpush1.msra.mxu0 0.0
    %5755 = vmatprep.subr.mxu0 0.0
    %5756 = vmatpush1.msra.mxu0 0.0
    %5757 = vmatprep.subr.mxu0 0.0
    %5758 = vmatpush1.msra.mxu0 0.0
    %5759 = vmatprep.subr.mxu0 0.0
    %5760 = vmatpush1.msra.mxu0 0.0
    %5761 = vmatprep.subr.mxu0 0.0
    %5762 = vmatpush1.msra.mxu0 0.0
    %5763 = vmatprep.subr.mxu0 0.0
    %5764 = vmatpush1.msra.mxu0 0.0
    %5765 = vmatprep.subr.mxu0 0.0
    %5766 = vmatpush1.msra.mxu0 0.0
    %5767 = vmatprep.subr.mxu0 0.0
    %5768 = vmatpush1.msra.mxu0 0.0
    %5769 = vmatprep.subr.mxu0 0.0
    %5770 = vmatpush1.msra.mxu0 0.0
    %5771 = vmatprep.mubr.f32.mxu0 0.0
    %5772 = vmatmul.mubr.f32.gmra.mrb[0].mxu0 %v5705
    %v5773 = vpop.f32.mrb[0].mxu0
    %v5774 = vadd.f32 0.0, %v5773
    %v5775 = vpop.f32.mrb[0].mxu0
    %5776 = vdwg.mxu0
    %v5777 = vadd.f32 %v5696, %v5774
    %s5778 = scalar_lea.vmem [#allocation8], 7
    %v5779 = vld [vmem:[%s5778] sm:$0x1]
    %v5781 = vlaneseq
    %v5782 = vshrl.u32 %v5781, 7
    %v5783 = vsub.s32 0, %v5782
    %v5784 = vrot.slane %v5779, %v5783
    %v5786 = vadd.f32 %v5777, %v5784
    %v5787 = vtanh.pop %v5786
    %v5788 = vadd.f32 %v5100, %v5787
    %5789 = vmatprep.subr.mxu0 0.0
    %5790 = vmatpush1.msra.mxu0 %v5100
    %5791 = vmatprep.subr.mxu0 0.0
    %5792 = vmatpush1.msra.mxu0 0.0
    %5793 = vmatprep.subr.mxu0 0.0
    %5794 = vmatpush1.msra.mxu0 0.0
    %5795 = vmatprep.subr.mxu0 0.0
    %5796 = vmatpush1.msra.mxu0 0.0
    %5797 = vmatprep.subr.mxu0 0.0
    %5798 = vmatpush1.msra.mxu0 0.0
    %5799 = vmatprep.subr.mxu0 0.0
    %5800 = vmatpush1.msra.mxu0 0.0
    %5801 = vmatprep.subr.mxu0 0.0
    %5802 = vmatpush1.msra.mxu0 0.0
    %5803 = vmatprep.subr.mxu0 0.0
    %5804 = vmatpush1.msra.mxu0 0.0
    %5805 = vmatprep.subr.mxu0 0.0
    %5806 = vmatpush1.msra.mxu0 0.0
    %5807 = vmatprep.subr.mxu0 0.0
    %5808 = vmatpush1.msra.mxu0 0.0
    %5809 = vmatprep.subr.mxu0 0.0
    %5810 = vmatpush1.msra.mxu0 0.0
    %5811 = vmatprep.subr.mxu0 0.0
    %5812 = vmatpush1.msra.mxu0 0.0
    %5813 = vmatprep.subr.mxu0 0.0
    %5814 = vmatpush1.msra.mxu0 0.0
    %5815 = vmatprep.subr.mxu0 0.0
    %5816 = vmatpush1.msra.mxu0 0.0
    %5817 = vmatprep.subr.mxu0 0.0
    %5818 = vmatpush1.msra.mxu0 0.0
    %5819 = vmatprep.subr.mxu0 0.0
    %5820 = vmatpush1.msra.mxu0 0.0
    %5821 = vmatprep.subr.mxu0 0.0
    %5822 = vmatpush1.msra.mxu0 0.0
    %5823 = vmatprep.subr.mxu0 0.0
    %5824 = vmatpush1.msra.mxu0 0.0
    %5825 = vmatprep.subr.mxu0 0.0
    %5826 = vmatpush1.msra.mxu0 0.0
    %5827 = vmatprep.subr.mxu0 0.0
    %5828 = vmatpush1.msra.mxu0 0.0
    %5829 = vmatprep.subr.mxu0 0.0
    %5830 = vmatpush1.msra.mxu0 0.0
    %5831 = vmatprep.subr.mxu0 0.0
    %5832 = vmatpush1.msra.mxu0 0.0
    %5833 = vmatprep.subr.mxu0 0.0
    %5834 = vmatpush1.msra.mxu0 0.0
    %5835 = vmatprep.subr.mxu0 0.0
    %5836 = vmatpush1.msra.mxu0 0.0
    %5837 = vmatprep.subr.mxu0 0.0
    %5838 = vmatpush1.msra.mxu0 0.0
    %5839 = vmatprep.subr.mxu0 0.0
    %5840 = vmatpush1.msra.mxu0 0.0
    %5841 = vmatprep.subr.mxu0 0.0
    %5842 = vmatpush1.msra.mxu0 0.0
    %5843 = vmatprep.subr.mxu0 0.0
    %5844 = vmatpush1.msra.mxu0 0.0
    %5845 = vmatprep.subr.mxu0 0.0
    %5846 = vmatpush1.msra.mxu0 0.0
    %5847 = vmatprep.subr.mxu0 0.0
    %5848 = vmatpush1.msra.mxu0 0.0
    %5849 = vmatprep.subr.mxu0 0.0
    %5850 = vmatpush1.msra.mxu0 0.0
    %5851 = vmatprep.subr.mxu0 0.0
    %5852 = vmatpush1.msra.mxu0 0.0
    %5853 = vmatprep.mubr.f32.mxu0 0.0
    %5854 = vmatmul.mubr.f32.gmra.mrb[0].mxu0 %v3697
    %v5855 = vpop.f32.mrb[0].mxu0
    %v5856 = vadd.f32 0.0, %v5855
    %v5857 = vpop.f32.mrb[0].mxu0
    %5858 = vmatprep.mubr.f32.mxu0 0.0
    %5859 = vmatmul.mubr.f32.gmra.mrb[0].mxu0 %v3700
    %v5860 = vpop.f32.mrb[0].mxu0
    %v5861 = vadd.f32 0.0, %v5860
    %v5862 = vpop.f32.mrb[0].mxu0
    %5863 = vmatprep.mubr.f32.mxu0 0.0
    %5864 = vmatmul.mubr.f32.gmra.mrb[0].mxu0 %v3703
    %v5865 = vpop.f32.mrb[0].mxu0
    %v5866 = vadd.f32 0.0, %v5865
    %v5867 = vpop.f32.mrb[0].mxu0
    %5868 = vmatprep.mubr.f32.mxu0 0.0
    %5869 = vmatmul.mubr.f32.gmra.mrb[0].mxu0 %v3706
    %v5870 = vpop.f32.mrb[0].mxu0
    %v5871 = vadd.f32 0.0, %v5870
    %v5872 = vpop.f32.mrb[0].mxu0
    %5873 = vmatprep.mubr.f32.mxu0 0.0
    %5874 = vmatmul.mubr.f32.gmra.mrb[0].mxu0 %v3709
    %v5875 = vpop.f32.mrb[0].mxu0
    %v5876 = vadd.f32 0.0, %v5875
    %v5877 = vpop.f32.mrb[0].mxu0
    %5878 = vdwg.mxu0
    %s5879 = scalar_lea.vmem [#allocation2], 144
    %v5880 = vld [vmem:[%s5879] sm:$0xff]
    %s5881 = scalar_lea.vmem [#allocation2], 152
    %v5882 = vld [vmem:[%s5881] sm:$0xff]
    %v5885 = vrot.slane %v5861, 4
    %v5886 = vrot.slane %v5866, 4
    %v5887 = vsel %vm525, %v5885, %v5886
    %v5888 = vsel %vm531, %v5887, 0
    %v5890 = vsel %vm531, %v5886, 0
    %5892 = vmatprep.subr.mxu0 0.0
    %5893 = vmatpush1.msra.mxu0 %v5882
    %5894 = vmatprep.subr.mxu0 0.0
    %5895 = vmatpush1.msra.mxu0 0.0
    %5896 = vmatprep.subr.mxu0 0.0
    %5897 = vmatpush1.msra.mxu0 0.0
    %5898 = vmatprep.subr.mxu0 0.0
    %5899 = vmatpush1.msra.mxu0 0.0
    %5900 = vmatprep.subr.mxu0 0.0
    %5901 = vmatpush1.msra.mxu0 0.0
    %5902 = vmatprep.subr.mxu0 0.0
    %5903 = vmatpush1.msra.mxu0 0.0
    %5904 = vmatprep.subr.mxu0 0.0
    %5905 = vmatpush1.msra.mxu0 0.0
    %5906 = vmatprep.subr.mxu0 0.0
    %5907 = vmatpush1.msra.mxu0 0.0
    %5908 = vmatprep.subr.mxu0 0.0
    %5909 = vmatpush1.msra.mxu0 0.0
    %5910 = vmatprep.subr.mxu0 0.0
    %5911 = vmatpush1.msra.mxu0 0.0
    %5912 = vmatprep.subr.mxu0 0.0
    %5913 = vmatpush1.msra.mxu0 0.0
    %5914 = vmatprep.subr.mxu0 0.0
    %5915 = vmatpush1.msra.mxu0 0.0
    %5916 = vmatprep.subr.mxu0 0.0
    %5917 = vmatpush1.msra.mxu0 0.0
    %5918 = vmatprep.subr.mxu0 0.0
    %5919 = vmatpush1.msra.mxu0 0.0
    %5920 = vmatprep.subr.mxu0 0.0
    %5921 = vmatpush1.msra.mxu0 0.0
    %5922 = vmatprep.subr.mxu0 0.0
    %5923 = vmatpush1.msra.mxu0 0.0
    %5924 = vmatprep.subr.mxu0 0.0
    %5925 = vmatpush1.msra.mxu0 0.0
    %5926 = vmatprep.subr.mxu0 0.0
    %5927 = vmatpush1.msra.mxu0 0.0
    %5928 = vmatprep.subr.mxu0 0.0
    %5929 = vmatpush1.msra.mxu0 0.0
    %5930 = vmatprep.subr.mxu0 0.0
    %5931 = vmatpush1.msra.mxu0 0.0
    %5932 = vmatprep.subr.mxu0 0.0
    %5933 = vmatpush1.msra.mxu0 0.0
    %5934 = vmatprep.subr.mxu0 0.0
    %5935 = vmatpush1.msra.mxu0 0.0
    %5936 = vmatprep.subr.mxu0 0.0
    %5937 = vmatpush1.msra.mxu0 0.0
    %5938 = vmatprep.subr.mxu0 0.0
    %5939 = vmatpush1.msra.mxu0 0.0
    %5940 = vmatprep.subr.mxu0 0.0
    %5941 = vmatpush1.msra.mxu0 0.0
    %5942 = vmatprep.subr.mxu0 0.0
    %5943 = vmatpush1.msra.mxu0 0.0
    %5944 = vmatprep.subr.mxu0 0.0
    %5945 = vmatpush1.msra.mxu0 0.0
    %5946 = vmatprep.subr.mxu0 0.0
    %5947 = vmatpush1.msra.mxu0 0.0
    %5948 = vmatprep.subr.mxu0 0.0
    %5949 = vmatpush1.msra.mxu0 0.0
    %5950 = vmatprep.subr.mxu0 0.0
    %5951 = vmatpush1.msra.mxu0 0.0
    %5952 = vmatprep.subr.mxu0 0.0
    %5953 = vmatpush1.msra.mxu0 0.0
    %5954 = vmatprep.subr.mxu0 0.0
    %5955 = vmatpush1.msra.mxu0 0.0
    %5956 = vmatprep.mubr.f32.mxu0 0.0
    %5957 = vmatmul.mubr.f32.gmra.mrb[0].mxu0 %v5888
    %v5958 = vpop.f32.mrb[0].mxu0
    %v5959 = vadd.f32 0.0, %v5958
    %v5960 = vpop.f32.mrb[0].mxu0
    %5961 = vmatprep.mubr.f32.mxu0 0.0
    %5962 = vmatmul.mubr.f32.gmra.mrb[0].mxu0 %v5890
    %v5963 = vpop.f32.mrb[0].mxu0
    %v5964 = vadd.f32 0.0, %v5963
    %v5965 = vpop.f32.mrb[0].mxu0
    %5966 = vdwg.mxu0
    %v5968 = vsel %vm531, %v5856, 0
    %v5970 = vsel %vm531, %v5861, 0
    %5972 = vmatprep.subr.mxu0 0.0
    %5973 = vmatpush1.msra.mxu0 %v5880
    %5974 = vmatprep.subr.mxu0 0.0
    %5975 = vmatpush1.msra.mxu0 0.0
    %5976 = vmatprep.subr.mxu0 0.0
    %5977 = vmatpush1.msra.mxu0 0.0
    %5978 = vmatprep.subr.mxu0 0.0
    %5979 = vmatpush1.msra.mxu0 0.0
    %5980 = vmatprep.subr.mxu0 0.0
    %5981 = vmatpush1.msra.mxu0 0.0
    %5982 = vmatprep.subr.mxu0 0.0
    %5983 = vmatpush1.msra.mxu0 0.0
    %5984 = vmatprep.subr.mxu0 0.0
    %5985 = vmatpush1.msra.mxu0 0.0
    %5986 = vmatprep.subr.mxu0 0.0
    %5987 = vmatpush1.msra.mxu0 0.0
    %5988 = vmatprep.subr.mxu0 0.0
    %5989 = vmatpush1.msra.mxu0 0.0
    %5990 = vmatprep.subr.mxu0 0.0
    %5991 = vmatpush1.msra.mxu0 0.0
    %5992 = vmatprep.subr.mxu0 0.0
    %5993 = vmatpush1.msra.mxu0 0.0
    %5994 = vmatprep.subr.mxu0 0.0
    %5995 = vmatpush1.msra.mxu0 0.0
    %5996 = vmatprep.subr.mxu0 0.0
    %5997 = vmatpush1.msra.mxu0 0.0
    %5998 = vmatprep.subr.mxu0 0.0
    %5999 = vmatpush1.msra.mxu0 0.0
    %6000 = vmatprep.subr.mxu0 0.0
    %6001 = vmatpush1.msra.mxu0 0.0
    %6002 = vmatprep.subr.mxu0 0.0
    %6003 = vmatpush1.msra.mxu0 0.0
    %6004 = vmatprep.subr.mxu0 0.0
    %6005 = vmatpush1.msra.mxu0 0.0
    %6006 = vmatprep.subr.mxu0 0.0
    %6007 = vmatpush1.msra.mxu0 0.0
    %6008 = vmatprep.subr.mxu0 0.0
    %6009 = vmatpush1.msra.mxu0 0.0
    %6010 = vmatprep.subr.mxu0 0.0
    %6011 = vmatpush1.msra.mxu0 0.0
    %6012 = vmatprep.subr.mxu0 0.0
    %6013 = vmatpush1.msra.mxu0 0.0
    %6014 = vmatprep.subr.mxu0 0.0
    %6015 = vmatpush1.msra.mxu0 0.0
    %6016 = vmatprep.subr.mxu0 0.0
    %6017 = vmatpush1.msra.mxu0 0.0
    %6018 = vmatprep.subr.mxu0 0.0
    %6019 = vmatpush1.msra.mxu0 0.0
    %6020 = vmatprep.subr.mxu0 0.0
    %6021 = vmatpush1.msra.mxu0 0.0
    %6022 = vmatprep.subr.mxu0 0.0
    %6023 = vmatpush1.msra.mxu0 0.0
    %6024 = vmatprep.subr.mxu0 0.0
    %6025 = vmatpush1.msra.mxu0 0.0
    %6026 = vmatprep.subr.mxu0 0.0
    %6027 = vmatpush1.msra.mxu0 0.0
    %6028 = vmatprep.subr.mxu0 0.0
    %6029 = vmatpush1.msra.mxu0 0.0
    %6030 = vmatprep.subr.mxu0 0.0
    %6031 = vmatpush1.msra.mxu0 0.0
    %6032 = vmatprep.subr.mxu0 0.0
    %6033 = vmatpush1.msra.mxu0 0.0
    %6034 = vmatprep.subr.mxu0 0.0
    %6035 = vmatpush1.msra.mxu0 0.0
    %6036 = vmatprep.mubr.f32.mxu0 0.0
    %6037 = vmatmul.mubr.f32.gmra.mrb[0].mxu0 %v5968
    %v6038 = vpop.f32.mrb[0].mxu0
    %v6039 = vadd.f32 %v5959, %v6038
    %v6040 = vpop.f32.mrb[0].mxu0
    %6041 = vmatprep.mubr.f32.mxu0 0.0
    %6042 = vmatmul.mubr.f32.gmra.mrb[0].mxu0 %v5970
    %v6043 = vpop.f32.mrb[0].mxu0
    %v6044 = vadd.f32 %v5964, %v6043
    %v6045 = vpop.f32.mrb[0].mxu0
    %6046 = vdwg.mxu0
    %s6047 = scalar_lea.vmem [#allocation2], 160
    %v6048 = vld [vmem:[%s6047] sm:$0xff]
    %v6050 = vsel %vm531, %v5871, 0
    %v6053 = vsel %vm531, %v5876, 0
    %6055 = vmatprep.subr.mxu0 0.0
    %6056 = vmatpush1.msra.mxu0 %v6048
    %6057 = vmatprep.subr.mxu0 0.0
    %6058 = vmatpush1.msra.mxu0 0.0
    %6059 = vmatprep.subr.mxu0 0.0
    %6060 = vmatpush1.msra.mxu0 0.0
    %6061 = vmatprep.subr.mxu0 0.0
    %6062 = vmatpush1.msra.mxu0 0.0
    %6063 = vmatprep.subr.mxu0 0.0
    %6064 = vmatpush1.msra.mxu0 0.0
    %6065 = vmatprep.subr.mxu0 0.0
    %6066 = vmatpush1.msra.mxu0 0.0
    %6067 = vmatprep.subr.mxu0 0.0
    %6068 = vmatpush1.msra.mxu0 0.0
    %6069 = vmatprep.subr.mxu0 0.0
    %6070 = vmatpush1.msra.mxu0 0.0
    %6071 = vmatprep.subr.mxu0 0.0
    %6072 = vmatpush1.msra.mxu0 0.0
    %6073 = vmatprep.subr.mxu0 0.0
    %6074 = vmatpush1.msra.mxu0 0.0
    %6075 = vmatprep.subr.mxu0 0.0
    %6076 = vmatpush1.msra.mxu0 0.0
    %6077 = vmatprep.subr.mxu0 0.0
    %6078 = vmatpush1.msra.mxu0 0.0
    %6079 = vmatprep.subr.mxu0 0.0
    %6080 = vmatpush1.msra.mxu0 0.0
    %6081 = vmatprep.subr.mxu0 0.0
    %6082 = vmatpush1.msra.mxu0 0.0
    %6083 = vmatprep.subr.mxu0 0.0
    %6084 = vmatpush1.msra.mxu0 0.0
    %6085 = vmatprep.subr.mxu0 0.0
    %6086 = vmatpush1.msra.mxu0 0.0
    %6087 = vmatprep.subr.mxu0 0.0
    %6088 = vmatpush1.msra.mxu0 0.0
    %6089 = vmatprep.subr.mxu0 0.0
    %6090 = vmatpush1.msra.mxu0 0.0
    %6091 = vmatprep.subr.mxu0 0.0
    %6092 = vmatpush1.msra.mxu0 0.0
    %6093 = vmatprep.subr.mxu0 0.0
    %6094 = vmatpush1.msra.mxu0 0.0
    %6095 = vmatprep.subr.mxu0 0.0
    %6096 = vmatpush1.msra.mxu0 0.0
    %6097 = vmatprep.subr.mxu0 0.0
    %6098 = vmatpush1.msra.mxu0 0.0
    %6099 = vmatprep.subr.mxu0 0.0
    %6100 = vmatpush1.msra.mxu0 0.0
    %6101 = vmatprep.subr.mxu0 0.0
    %6102 = vmatpush1.msra.mxu0 0.0
    %6103 = vmatprep.subr.mxu0 0.0
    %6104 = vmatpush1.msra.mxu0 0.0
    %6105 = vmatprep.subr.mxu0 0.0
    %6106 = vmatpush1.msra.mxu0 0.0
    %6107 = vmatprep.subr.mxu0 0.0
    %6108 = vmatpush1.msra.mxu0 0.0
    %6109 = vmatprep.subr.mxu0 0.0
    %6110 = vmatpush1.msra.mxu0 0.0
    %6111 = vmatprep.subr.mxu0 0.0
    %6112 = vmatpush1.msra.mxu0 0.0
    %6113 = vmatprep.subr.mxu0 0.0
    %6114 = vmatpush1.msra.mxu0 0.0
    %6115 = vmatprep.subr.mxu0 0.0
    %6116 = vmatpush1.msra.mxu0 0.0
    %6117 = vmatprep.subr.mxu0 0.0
    %6118 = vmatpush1.msra.mxu0 0.0
    %6119 = vmatprep.mubr.f32.mxu0 0.0
    %6120 = vmatmul.mubr.f32.gmra.mrb[0].mxu0 %v6050
    %v6121 = vpop.f32.mrb[0].mxu0
    %v6122 = vadd.f32 0.0, %v6121
    %v6123 = vpop.f32.mrb[0].mxu0
    %6124 = vmatprep.mubr.f32.mxu0 0.0
    %6125 = vmatmul.mubr.f32.gmra.mrb[0].mxu0 %v6053
    %v6126 = vpop.f32.mrb[0].mxu0
    %v6127 = vadd.f32 0.0, %v6126
    %v6128 = vpop.f32.mrb[0].mxu0
    %6129 = vdwg.mxu0
    %v6130 = vadd.f32 %v6039, %v6122
    %v6131 = vadd.f32 %v6044, %v6127
    %s6132 = scalar_lea.vmem [#allocation5], 6
    %v6133 = vld [vmem:[%s6132] sm:$0x1]
    %v6135 = vlaneseq
    %v6136 = vshrl.u32 %v6135, 7
    %v6137 = vsub.s32 0, %v6136
    %v6138 = vrot.slane %v6133, %v6137
    %v6140 = vadd.f32 %v6130, %v6138
    %v6141 = vadd.f32 %v6131, %v6138
    %vm6142 = vcmp.ge.f32.partialorder %v6140, 0.0
    %vm6143 = vcmp.ge.f32.partialorder %v6141, 0.0
    %v6144 = vmul.f32 %v6140, 0.01
    %v6145 = vmul.f32 %v6141, 0.01
    %v6146 = vsel %vm6142, %v6140, %v6144
    %v6147 = vsel %vm6143, %v6141, %v6145
    %v6149 = vsel %vm525, %v6147, 0
    %6151 = vmatprep.subr.mxu0 0.0
    %6152 = vmatpush1.msra.mxu0 %v6146
    %6153 = vmatprep.subr.mxu0 0.0
    %6154 = vmatpush1.msra.mxu0 %v6149
    %6155 = vmatprep.subr.mxu0 0.0
    %6156 = vmatpush1.msra.mxu0 0.0
    %6157 = vmatprep.subr.mxu0 0.0
    %6158 = vmatpush1.msra.mxu0 0.0
    %6159 = vmatprep.subr.mxu0 0.0
    %6160 = vmatpush1.msra.mxu0 0.0
    %6161 = vmatprep.subr.mxu0 0.0
    %6162 = vmatpush1.msra.mxu0 0.0
    %6163 = vmatprep.subr.mxu0 0.0
    %6164 = vmatpush1.msra.mxu0 0.0
    %6165 = vmatprep.subr.mxu0 0.0
    %6166 = vmatpush1.msra.mxu0 0.0
    %6167 = vmatprep.subr.mxu0 0.0
    %6168 = vmatpush1.msra.mxu0 0.0
    %6169 = vmatprep.subr.mxu0 0.0
    %6170 = vmatpush1.msra.mxu0 0.0
    %6171 = vmatprep.subr.mxu0 0.0
    %6172 = vmatpush1.msra.mxu0 0.0
    %6173 = vmatprep.subr.mxu0 0.0
    %6174 = vmatpush1.msra.mxu0 0.0
    %6175 = vmatprep.subr.mxu0 0.0
    %6176 = vmatpush1.msra.mxu0 0.0
    %6177 = vmatprep.subr.mxu0 0.0
    %6178 = vmatpush1.msra.mxu0 0.0
    %6179 = vmatprep.subr.mxu0 0.0
    %6180 = vmatpush1.msra.mxu0 0.0
    %6181 = vmatprep.subr.mxu0 0.0
    %6182 = vmatpush1.msra.mxu0 0.0
    %6183 = vmatprep.subr.mxu0 0.0
    %6184 = vmatpush1.msra.mxu0 0.0
    %6185 = vmatprep.subr.mxu0 0.0
    %6186 = vmatpush1.msra.mxu0 0.0
    %6187 = vmatprep.subr.mxu0 0.0
    %6188 = vmatpush1.msra.mxu0 0.0
    %6189 = vmatprep.subr.mxu0 0.0
    %6190 = vmatpush1.msra.mxu0 0.0
    %6191 = vmatprep.subr.mxu0 0.0
    %6192 = vmatpush1.msra.mxu0 0.0
    %6193 = vmatprep.subr.mxu0 0.0
    %6194 = vmatpush1.msra.mxu0 0.0
    %6195 = vmatprep.subr.mxu0 0.0
    %6196 = vmatpush1.msra.mxu0 0.0
    %6197 = vmatprep.subr.mxu0 0.0
    %6198 = vmatpush1.msra.mxu0 0.0
    %6199 = vmatprep.subr.mxu0 0.0
    %6200 = vmatpush1.msra.mxu0 0.0
    %6201 = vmatprep.subr.mxu0 0.0
    %6202 = vmatpush1.msra.mxu0 0.0
    %6203 = vmatprep.subr.mxu0 0.0
    %6204 = vmatpush1.msra.mxu0 0.0
    %6205 = vmatprep.subr.mxu0 0.0
    %6206 = vmatpush1.msra.mxu0 0.0
    %6207 = vmatprep.subr.mxu0 0.0
    %6208 = vmatpush1.msra.mxu0 0.0
    %6209 = vmatprep.subr.mxu0 0.0
    %6210 = vmatpush1.msra.mxu0 0.0
    %6211 = vmatprep.subr.mxu0 0.0
    %6212 = vmatpush1.msra.mxu0 0.0
    %6213 = vmatprep.subr.mxu0 0.0
    %6214 = vmatpush1.msra.mxu0 0.0
    %6215 = vmatprep.mubr.f32.mxu0 0.0
    %6216 = vmatmul.mubr.f32.gmra.mrb[0].mxu0 %v4072
    %v6217 = vpop.f32.mrb[0].mxu0
    %v6218 = vadd.f32 0.0, %v6217
    %v6219 = vpop.f32.mrb[0].mxu0
    %6220 = vmatprep.mubr.f32.mxu0 0.0
    %6221 = vmatmul.mubr.f32.gmra.mrb[0].mxu0 %v4075
    %v6222 = vpop.f32.mrb[0].mxu0
    %v6223 = vadd.f32 0.0, %v6222
    %v6224 = vpop.f32.mrb[0].mxu0
    %6225 = vmatprep.mubr.f32.mxu0 0.0
    %6226 = vmatmul.mubr.f32.gmra.mrb[0].mxu0 %v4078
    %v6227 = vpop.f32.mrb[0].mxu0
    %v6228 = vadd.f32 0.0, %v6227
    %v6229 = vpop.f32.mrb[0].mxu0
    %6230 = vdwg.mxu0
    %s6231 = scalar_lea.vmem [#allocation7], 576
    %v6232 = vld [vmem:[%s6231] sm:$0xff]
    %v6233 = vld [vmem:[%s6231 + $0x8] sm:$0xff]
    %v6234 = vld [vmem:[%s6231 + $0x10] sm:$0xff]
    %v6235 = vld [vmem:[%s6231 + $0x18] sm:$0xff]
    %s6236 = scalar_lea.vmem [#allocation7], 608
    %v6237 = vld [vmem:[%s6236] sm:$0xff]
    %v6238 = vld [vmem:[%s6236 + $0x8] sm:$0xff]
    %v6239 = vld [vmem:[%s6236 + $0x10] sm:$0xff]
    %v6240 = vld [vmem:[%s6236 + $0x18] sm:$0xff]
    %v6242 = vsel %vm226, %v6223, 0
    %6244 = vmatprep.subr.mxu0 0.0
    %6245 = vmatpush1.msra.mxu0 %v6237
    %6246 = vmatprep.subr.mxu0 0.0
    %6247 = vmatpush1.msra.mxu0 %v6238
    %6248 = vmatprep.subr.mxu0 0.0
    %6249 = vmatpush1.msra.mxu0 %v6239
    %6250 = vmatprep.subr.mxu0 0.0
    %6251 = vmatpush1.msra.mxu0 %v6240
    %6252 = vmatprep.subr.mxu0 0.0
    %6253 = vmatpush1.msra.mxu0 0.0
    %6254 = vmatprep.subr.mxu0 0.0
    %6255 = vmatpush1.msra.mxu0 0.0
    %6256 = vmatprep.subr.mxu0 0.0
    %6257 = vmatpush1.msra.mxu0 0.0
    %6258 = vmatprep.subr.mxu0 0.0
    %6259 = vmatpush1.msra.mxu0 0.0
    %6260 = vmatprep.subr.mxu0 0.0
    %6261 = vmatpush1.msra.mxu0 0.0
    %6262 = vmatprep.subr.mxu0 0.0
    %6263 = vmatpush1.msra.mxu0 0.0
    %6264 = vmatprep.subr.mxu0 0.0
    %6265 = vmatpush1.msra.mxu0 0.0
    %6266 = vmatprep.subr.mxu0 0.0
    %6267 = vmatpush1.msra.mxu0 0.0
    %6268 = vmatprep.subr.mxu0 0.0
    %6269 = vmatpush1.msra.mxu0 0.0
    %6270 = vmatprep.subr.mxu0 0.0
    %6271 = vmatpush1.msra.mxu0 0.0
    %6272 = vmatprep.subr.mxu0 0.0
    %6273 = vmatpush1.msra.mxu0 0.0
    %6274 = vmatprep.subr.mxu0 0.0
    %6275 = vmatpush1.msra.mxu0 0.0
    %6276 = vmatprep.subr.mxu0 0.0
    %6277 = vmatpush1.msra.mxu0 0.0
    %6278 = vmatprep.subr.mxu0 0.0
    %6279 = vmatpush1.msra.mxu0 0.0
    %6280 = vmatprep.subr.mxu0 0.0
    %6281 = vmatpush1.msra.mxu0 0.0
    %6282 = vmatprep.subr.mxu0 0.0
    %6283 = vmatpush1.msra.mxu0 0.0
    %6284 = vmatprep.subr.mxu0 0.0
    %6285 = vmatpush1.msra.mxu0 0.0
    %6286 = vmatprep.subr.mxu0 0.0
    %6287 = vmatpush1.msra.mxu0 0.0
    %6288 = vmatprep.subr.mxu0 0.0
    %6289 = vmatpush1.msra.mxu0 0.0
    %6290 = vmatprep.subr.mxu0 0.0
    %6291 = vmatpush1.msra.mxu0 0.0
    %6292 = vmatprep.subr.mxu0 0.0
    %6293 = vmatpush1.msra.mxu0 0.0
    %6294 = vmatprep.subr.mxu0 0.0
    %6295 = vmatpush1.msra.mxu0 0.0
    %6296 = vmatprep.subr.mxu0 0.0
    %6297 = vmatpush1.msra.mxu0 0.0
    %6298 = vmatprep.subr.mxu0 0.0
    %6299 = vmatpush1.msra.mxu0 0.0
    %6300 = vmatprep.subr.mxu0 0.0
    %6301 = vmatpush1.msra.mxu0 0.0
    %6302 = vmatprep.subr.mxu0 0.0
    %6303 = vmatpush1.msra.mxu0 0.0
    %6304 = vmatprep.subr.mxu0 0.0
    %6305 = vmatpush1.msra.mxu0 0.0
    %6306 = vmatprep.subr.mxu0 0.0
    %6307 = vmatpush1.msra.mxu0 0.0
    %6308 = vmatprep.mubr.f32.mxu0 0.0
    %6309 = vmatmul.mubr.f32.gmra.mrb[0].mxu0 %v6242
    %v6310 = vpop.f32.mrb[0].mxu0
    %v6311 = vadd.f32 0.0, %v6310
    %v6312 = vpop.f32.mrb[0].mxu0
    %6313 = vdwg.mxu0
    %v6315 = vsel %vm226, %v6218, 0
    %6317 = vmatprep.subr.mxu0 0.0
    %6318 = vmatpush1.msra.mxu0 %v6232
    %6319 = vmatprep.subr.mxu0 0.0
    %6320 = vmatpush1.msra.mxu0 %v6233
    %6321 = vmatprep.subr.mxu0 0.0
    %6322 = vmatpush1.msra.mxu0 %v6234
    %6323 = vmatprep.subr.mxu0 0.0
    %6324 = vmatpush1.msra.mxu0 %v6235
    %6325 = vmatprep.subr.mxu0 0.0
    %6326 = vmatpush1.msra.mxu0 0.0
    %6327 = vmatprep.subr.mxu0 0.0
    %6328 = vmatpush1.msra.mxu0 0.0
    %6329 = vmatprep.subr.mxu0 0.0
    %6330 = vmatpush1.msra.mxu0 0.0
    %6331 = vmatprep.subr.mxu0 0.0
    %6332 = vmatpush1.msra.mxu0 0.0
    %6333 = vmatprep.subr.mxu0 0.0
    %6334 = vmatpush1.msra.mxu0 0.0
    %6335 = vmatprep.subr.mxu0 0.0
    %6336 = vmatpush1.msra.mxu0 0.0
    %6337 = vmatprep.subr.mxu0 0.0
    %6338 = vmatpush1.msra.mxu0 0.0
    %6339 = vmatprep.subr.mxu0 0.0
    %6340 = vmatpush1.msra.mxu0 0.0
    %6341 = vmatprep.subr.mxu0 0.0
    %6342 = vmatpush1.msra.mxu0 0.0
    %6343 = vmatprep.subr.mxu0 0.0
    %6344 = vmatpush1.msra.mxu0 0.0
    %6345 = vmatprep.subr.mxu0 0.0
    %6346 = vmatpush1.msra.mxu0 0.0
    %6347 = vmatprep.subr.mxu0 0.0
    %6348 = vmatpush1.msra.mxu0 0.0
    %6349 = vmatprep.subr.mxu0 0.0
    %6350 = vmatpush1.msra.mxu0 0.0
    %6351 = vmatprep.subr.mxu0 0.0
    %6352 = vmatpush1.msra.mxu0 0.0
    %6353 = vmatprep.subr.mxu0 0.0
    %6354 = vmatpush1.msra.mxu0 0.0
    %6355 = vmatprep.subr.mxu0 0.0
    %6356 = vmatpush1.msra.mxu0 0.0
    %6357 = vmatprep.subr.mxu0 0.0
    %6358 = vmatpush1.msra.mxu0 0.0
    %6359 = vmatprep.subr.mxu0 0.0
    %6360 = vmatpush1.msra.mxu0 0.0
    %6361 = vmatprep.subr.mxu0 0.0
    %6362 = vmatpush1.msra.mxu0 0.0
    %6363 = vmatprep.subr.mxu0 0.0
    %6364 = vmatpush1.msra.mxu0 0.0
    %6365 = vmatprep.subr.mxu0 0.0
    %6366 = vmatpush1.msra.mxu0 0.0
    %6367 = vmatprep.subr.mxu0 0.0
    %6368 = vmatpush1.msra.mxu0 0.0
    %6369 = vmatprep.subr.mxu0 0.0
    %6370 = vmatpush1.msra.mxu0 0.0
    %6371 = vmatprep.subr.mxu0 0.0
    %6372 = vmatpush1.msra.mxu0 0.0
    %6373 = vmatprep.subr.mxu0 0.0
    %6374 = vmatpush1.msra.mxu0 0.0
    %6375 = vmatprep.subr.mxu0 0.0
    %6376 = vmatpush1.msra.mxu0 0.0
    %6377 = vmatprep.subr.mxu0 0.0
    %6378 = vmatpush1.msra.mxu0 0.0
    %6379 = vmatprep.subr.mxu0 0.0
    %6380 = vmatpush1.msra.mxu0 0.0
    %6381 = vmatprep.mubr.f32.mxu0 0.0
    %6382 = vmatmul.mubr.f32.gmra.mrb[0].mxu0 %v6315
    %v6383 = vpop.f32.mrb[0].mxu0
    %v6384 = vadd.f32 %v6311, %v6383
    %v6385 = vpop.f32.mrb[0].mxu0
    %6386 = vdwg.mxu0
    %s6387 = scalar_lea.vmem [#allocation7], 640
    %v6388 = vld [vmem:[%s6387] sm:$0xff]
    %v6389 = vld [vmem:[%s6387 + $0x8] sm:$0xff]
    %v6390 = vld [vmem:[%s6387 + $0x10] sm:$0xff]
    %v6391 = vld [vmem:[%s6387 + $0x18] sm:$0xff]
    %v6393 = vsel %vm226, %v6228, 0
    %6395 = vmatprep.subr.mxu0 0.0
    %6396 = vmatpush1.msra.mxu0 %v6388
    %6397 = vmatprep.subr.mxu0 0.0
    %6398 = vmatpush1.msra.mxu0 %v6389
    %6399 = vmatprep.subr.mxu0 0.0
    %6400 = vmatpush1.msra.mxu0 %v6390
    %6401 = vmatprep.subr.mxu0 0.0
    %6402 = vmatpush1.msra.mxu0 %v6391
    %6403 = vmatprep.subr.mxu0 0.0
    %6404 = vmatpush1.msra.mxu0 0.0
    %6405 = vmatprep.subr.mxu0 0.0
    %6406 = vmatpush1.msra.mxu0 0.0
    %6407 = vmatprep.subr.mxu0 0.0
    %6408 = vmatpush1.msra.mxu0 0.0
    %6409 = vmatprep.subr.mxu0 0.0
    %6410 = vmatpush1.msra.mxu0 0.0
    %6411 = vmatprep.subr.mxu0 0.0
    %6412 = vmatpush1.msra.mxu0 0.0
    %6413 = vmatprep.subr.mxu0 0.0
    %6414 = vmatpush1.msra.mxu0 0.0
    %6415 = vmatprep.subr.mxu0 0.0
    %6416 = vmatpush1.msra.mxu0 0.0
    %6417 = vmatprep.subr.mxu0 0.0
    %6418 = vmatpush1.msra.mxu0 0.0
    %6419 = vmatprep.subr.mxu0 0.0
    %6420 = vmatpush1.msra.mxu0 0.0
    %6421 = vmatprep.subr.mxu0 0.0
    %6422 = vmatpush1.msra.mxu0 0.0
    %6423 = vmatprep.subr.mxu0 0.0
    %6424 = vmatpush1.msra.mxu0 0.0
    %6425 = vmatprep.subr.mxu0 0.0
    %6426 = vmatpush1.msra.mxu0 0.0
    %6427 = vmatprep.subr.mxu0 0.0
    %6428 = vmatpush1.msra.mxu0 0.0
    %6429 = vmatprep.subr.mxu0 0.0
    %6430 = vmatpush1.msra.mxu0 0.0
    %6431 = vmatprep.subr.mxu0 0.0
    %6432 = vmatpush1.msra.mxu0 0.0
    %6433 = vmatprep.subr.mxu0 0.0
    %6434 = vmatpush1.msra.mxu0 0.0
    %6435 = vmatprep.subr.mxu0 0.0
    %6436 = vmatpush1.msra.mxu0 0.0
    %6437 = vmatprep.subr.mxu0 0.0
    %6438 = vmatpush1.msra.mxu0 0.0
    %6439 = vmatprep.subr.mxu0 0.0
    %6440 = vmatpush1.msra.mxu0 0.0
    %6441 = vmatprep.subr.mxu0 0.0
    %6442 = vmatpush1.msra.mxu0 0.0
    %6443 = vmatprep.subr.mxu0 0.0
    %6444 = vmatpush1.msra.mxu0 0.0
    %6445 = vmatprep.subr.mxu0 0.0
    %6446 = vmatpush1.msra.mxu0 0.0
    %6447 = vmatprep.subr.mxu0 0.0
    %6448 = vmatpush1.msra.mxu0 0.0
    %6449 = vmatprep.subr.mxu0 0.0
    %6450 = vmatpush1.msra.mxu0 0.0
    %6451 = vmatprep.subr.mxu0 0.0
    %6452 = vmatpush1.msra.mxu0 0.0
    %6453 = vmatprep.subr.mxu0 0.0
    %6454 = vmatpush1.msra.mxu0 0.0
    %6455 = vmatprep.subr.mxu0 0.0
    %6456 = vmatpush1.msra.mxu0 0.0
    %6457 = vmatprep.subr.mxu0 0.0
    %6458 = vmatpush1.msra.mxu0 0.0
    %6459 = vmatprep.mubr.f32.mxu0 0.0
    %6460 = vmatmul.mubr.f32.gmra.mrb[0].mxu0 %v6393
    %v6461 = vpop.f32.mrb[0].mxu0
    %v6462 = vadd.f32 0.0, %v6461
    %v6463 = vpop.f32.mrb[0].mxu0
    %6464 = vdwg.mxu0
    %v6465 = vadd.f32 %v6384, %v6462
    %s6466 = scalar_lea.vmem [#allocation8], 6
    %v6467 = vld [vmem:[%s6466] sm:$0x1]
    %v6469 = vlaneseq
    %v6470 = vshrl.u32 %v6469, 7
    %v6471 = vsub.s32 0, %v6470
    %v6472 = vrot.slane %v6467, %v6471
    %v6474 = vadd.f32 %v6465, %v6472
    %v6475 = vtanh.pop %v6474
    %v6476 = vsub.f32 %v4410, %v6475
    %v6477 = vld [vmem:[#allocation16] sm:$0xff]
    %v6478 = vld [vmem:[#allocation16 + $0x8] sm:$0xff]
    %s6479 = scalar_lea.vmem [#allocation16], 16
    %v6480 = vld [vmem:[%s6479] sm:$0xff]
    %v6481 = vld [vmem:[%s6479 + $0x8] sm:$0xff]
    %v6483 = vsel %vm531, %v6480, 0
    %v6486 = vsel %vm531, %v6481, 0
    %6488 = vmatprep.subr.mxu0 0.0
    %6489 = vmatpush1.msra.mxu0 %v6476
    %6490 = vmatprep.subr.mxu0 0.0
    %6491 = vmatpush1.msra.mxu0 0.0
    %6492 = vmatprep.subr.mxu0 0.0
    %6493 = vmatpush1.msra.mxu0 0.0
    %6494 = vmatprep.subr.mxu0 0.0
    %6495 = vmatpush1.msra.mxu0 0.0
    %6496 = vmatprep.subr.mxu0 0.0
    %6497 = vmatpush1.msra.mxu0 0.0
    %6498 = vmatprep.subr.mxu0 0.0
    %6499 = vmatpush1.msra.mxu0 0.0
    %6500 = vmatprep.subr.mxu0 0.0
    %6501 = vmatpush1.msra.mxu0 0.0
    %6502 = vmatprep.subr.mxu0 0.0
    %6503 = vmatpush1.msra.mxu0 0.0
    %6504 = vmatprep.subr.mxu0 0.0
    %6505 = vmatpush1.msra.mxu0 0.0
    %6506 = vmatprep.subr.mxu0 0.0
    %6507 = vmatpush1.msra.mxu0 0.0
    %6508 = vmatprep.subr.mxu0 0.0
    %6509 = vmatpush1.msra.mxu0 0.0
    %6510 = vmatprep.subr.mxu0 0.0
    %6511 = vmatpush1.msra.mxu0 0.0
    %6512 = vmatprep.subr.mxu0 0.0
    %6513 = vmatpush1.msra.mxu0 0.0
    %6514 = vmatprep.subr.mxu0 0.0
    %6515 = vmatpush1.msra.mxu0 0.0
    %6516 = vmatprep.subr.mxu0 0.0
    %6517 = vmatpush1.msra.mxu0 0.0
    %6518 = vmatprep.subr.mxu0 0.0
    %6519 = vmatpush1.msra.mxu0 0.0
    %6520 = vmatprep.subr.mxu0 0.0
    %6521 = vmatpush1.msra.mxu0 0.0
    %6522 = vmatprep.subr.mxu0 0.0
    %6523 = vmatpush1.msra.mxu0 0.0
    %6524 = vmatprep.subr.mxu0 0.0
    %6525 = vmatpush1.msra.mxu0 0.0
    %6526 = vmatprep.subr.mxu0 0.0
    %6527 = vmatpush1.msra.mxu0 0.0
    %6528 = vmatprep.subr.mxu0 0.0
    %6529 = vmatpush1.msra.mxu0 0.0
    %6530 = vmatprep.subr.mxu0 0.0
    %6531 = vmatpush1.msra.mxu0 0.0
    %6532 = vmatprep.subr.mxu0 0.0
    %6533 = vmatpush1.msra.mxu0 0.0
    %6534 = vmatprep.subr.mxu0 0.0
    %6535 = vmatpush1.msra.mxu0 0.0
    %6536 = vmatprep.subr.mxu0 0.0
    %6537 = vmatpush1.msra.mxu0 0.0
    %6538 = vmatprep.subr.mxu0 0.0
    %6539 = vmatpush1.msra.mxu0 0.0
    %6540 = vmatprep.subr.mxu0 0.0
    %6541 = vmatpush1.msra.mxu0 0.0
    %6542 = vmatprep.subr.mxu0 0.0
    %6543 = vmatpush1.msra.mxu0 0.0
    %6544 = vmatprep.subr.mxu0 0.0
    %6545 = vmatpush1.msra.mxu0 0.0
    %6546 = vmatprep.subr.mxu0 0.0
    %6547 = vmatpush1.msra.mxu0 0.0
    %6548 = vmatprep.subr.mxu0 0.0
    %6549 = vmatpush1.msra.mxu0 0.0
    %6550 = vmatprep.subr.mxu0 0.0
    %6551 = vmatpush1.msra.mxu0 0.0
    %6552 = vmatprep.mubr.f32.mxu0 0.0
    %6553 = vmatmul.mubr.f32.gmra.mrb[0].mxu0 %v6483
    %v6554 = vpop.f32.mrb[0].mxu0
    %v6555 = vadd.f32 0.0, %v6554
    %v6556 = vpop.f32.mrb[0].mxu0
    %6557 = vmatprep.mubr.f32.mxu0 0.0
    %6558 = vmatmul.mubr.f32.gmra.mrb[0].mxu0 %v6486
    %v6559 = vpop.f32.mrb[0].mxu0
    %v6560 = vadd.f32 0.0, %v6559
    %v6561 = vpop.f32.mrb[0].mxu0
    %6562 = vdwg.mxu0
    %v6564 = vsel %vm531, %v6477, 0
    %v6567 = vsel %vm531, %v6478, 0
    %6569 = vmatprep.subr.mxu0 0.0
    %6570 = vmatpush1.msra.mxu0 %v5788
    %6571 = vmatprep.subr.mxu0 0.0
    %6572 = vmatpush1.msra.mxu0 0.0
    %6573 = vmatprep.subr.mxu0 0.0
    %6574 = vmatpush1.msra.mxu0 0.0
    %6575 = vmatprep.subr.mxu0 0.0
    %6576 = vmatpush1.msra.mxu0 0.0
    %6577 = vmatprep.subr.mxu0 0.0
    %6578 = vmatpush1.msra.mxu0 0.0
    %6579 = vmatprep.subr.mxu0 0.0
    %6580 = vmatpush1.msra.mxu0 0.0
    %6581 = vmatprep.subr.mxu0 0.0
    %6582 = vmatpush1.msra.mxu0 0.0
    %6583 = vmatprep.subr.mxu0 0.0
    %6584 = vmatpush1.msra.mxu0 0.0
    %6585 = vmatprep.subr.mxu0 0.0
    %6586 = vmatpush1.msra.mxu0 0.0
    %6587 = vmatprep.subr.mxu0 0.0
    %6588 = vmatpush1.msra.mxu0 0.0
    %6589 = vmatprep.subr.mxu0 0.0
    %6590 = vmatpush1.msra.mxu0 0.0
    %6591 = vmatprep.subr.mxu0 0.0
    %6592 = vmatpush1.msra.mxu0 0.0
    %6593 = vmatprep.subr.mxu0 0.0
    %6594 = vmatpush1.msra.mxu0 0.0
    %6595 = vmatprep.subr.mxu0 0.0
    %6596 = vmatpush1.msra.mxu0 0.0
    %6597 = vmatprep.subr.mxu0 0.0
    %6598 = vmatpush1.msra.mxu0 0.0
    %6599 = vmatprep.subr.mxu0 0.0
    %6600 = vmatpush1.msra.mxu0 0.0
    %6601 = vmatprep.subr.mxu0 0.0
    %6602 = vmatpush1.msra.mxu0 0.0
    %6603 = vmatprep.subr.mxu0 0.0
    %6604 = vmatpush1.msra.mxu0 0.0
    %6605 = vmatprep.subr.mxu0 0.0
    %6606 = vmatpush1.msra.mxu0 0.0
    %6607 = vmatprep.subr.mxu0 0.0
    %6608 = vmatpush1.msra.mxu0 0.0
    %6609 = vmatprep.subr.mxu0 0.0
    %6610 = vmatpush1.msra.mxu0 0.0
    %6611 = vmatprep.subr.mxu0 0.0
    %6612 = vmatpush1.msra.mxu0 0.0
    %6613 = vmatprep.subr.mxu0 0.0
    %6614 = vmatpush1.msra.mxu0 0.0
    %6615 = vmatprep.subr.mxu0 0.0
    %6616 = vmatpush1.msra.mxu0 0.0
    %6617 = vmatprep.subr.mxu0 0.0
    %6618 = vmatpush1.msra.mxu0 0.0
    %6619 = vmatprep.subr.mxu0 0.0
    %6620 = vmatpush1.msra.mxu0 0.0
    %6621 = vmatprep.subr.mxu0 0.0
    %6622 = vmatpush1.msra.mxu0 0.0
    %6623 = vmatprep.subr.mxu0 0.0
    %6624 = vmatpush1.msra.mxu0 0.0
    %6625 = vmatprep.subr.mxu0 0.0
    %6626 = vmatpush1.msra.mxu0 0.0
    %6627 = vmatprep.subr.mxu0 0.0
    %6628 = vmatpush1.msra.mxu0 0.0
    %6629 = vmatprep.subr.mxu0 0.0
    %6630 = vmatpush1.msra.mxu0 0.0
    %6631 = vmatprep.subr.mxu0 0.0
    %6632 = vmatpush1.msra.mxu0 0.0
    %6633 = vmatprep.mubr.f32.mxu0 0.0
    %6634 = vmatmul.mubr.f32.gmra.mrb[0].mxu0 %v6564
    %v6635 = vpop.f32.mrb[0].mxu0
    %v6636 = vadd.f32 %v6555, %v6635
    %v6637 = vpop.f32.mrb[0].mxu0
    %6638 = vmatprep.mubr.f32.mxu0 0.0
    %6639 = vmatmul.mubr.f32.gmra.mrb[0].mxu0 %v6567
    %v6640 = vpop.f32.mrb[0].mxu0
    %v6641 = vadd.f32 %v6560, %v6640
    %v6642 = vpop.f32.mrb[0].mxu0
    %6643 = vdwg.mxu0
    %6644 = vmatprep.subr.mxu0 0.0
    %6645 = vmatpush1.msra.mxu0 %v3545
    %6646 = vmatprep.subr.mxu0 0.0
    %6647 = vmatpush1.msra.mxu0 %v3546
    %6648 = vmatprep.subr.mxu0 0.0
    %6649 = vmatpush1.msra.mxu0 0.0
    %6650 = vmatprep.subr.mxu0 0.0
    %6651 = vmatpush1.msra.mxu0 0.0
    %6652 = vmatprep.subr.mxu0 0.0
    %6653 = vmatpush1.msra.mxu0 0.0
    %6654 = vmatprep.subr.mxu0 0.0
    %6655 = vmatpush1.msra.mxu0 0.0
    %6656 = vmatprep.subr.mxu0 0.0
    %6657 = vmatpush1.msra.mxu0 0.0
    %6658 = vmatprep.subr.mxu0 0.0
    %6659 = vmatpush1.msra.mxu0 0.0
    %6660 = vmatprep.subr.mxu0 0.0
    %6661 = vmatpush1.msra.mxu0 0.0
    %6662 = vmatprep.subr.mxu0 0.0
    %6663 = vmatpush1.msra.mxu0 0.0
    %6664 = vmatprep.subr.mxu0 0.0
    %6665 = vmatpush1.msra.mxu0 0.0
    %6666 = vmatprep.subr.mxu0 0.0
    %6667 = vmatpush1.msra.mxu0 0.0
    %6668 = vmatprep.subr.mxu0 0.0
    %6669 = vmatpush1.msra.mxu0 0.0
    %6670 = vmatprep.subr.mxu0 0.0
    %6671 = vmatpush1.msra.mxu0 0.0
    %6672 = vmatprep.subr.mxu0 0.0
    %6673 = vmatpush1.msra.mxu0 0.0
    %6674 = vmatprep.subr.mxu0 0.0
    %6675 = vmatpush1.msra.mxu0 0.0
    %6676 = vmatprep.subr.mxu0 0.0
    %6677 = vmatpush1.msra.mxu0 0.0
    %6678 = vmatprep.subr.mxu0 0.0
    %6679 = vmatpush1.msra.mxu0 0.0
    %6680 = vmatprep.subr.mxu0 0.0
    %6681 = vmatpush1.msra.mxu0 0.0
    %6682 = vmatprep.subr.mxu0 0.0
    %6683 = vmatpush1.msra.mxu0 0.0
    %6684 = vmatprep.subr.mxu0 0.0
    %6685 = vmatpush1.msra.mxu0 0.0
    %6686 = vmatprep.subr.mxu0 0.0
    %6687 = vmatpush1.msra.mxu0 0.0
    %6688 = vmatprep.subr.mxu0 0.0
    %6689 = vmatpush1.msra.mxu0 0.0
    %6690 = vmatprep.subr.mxu0 0.0
    %6691 = vmatpush1.msra.mxu0 0.0
    %6692 = vmatprep.subr.mxu0 0.0
    %6693 = vmatpush1.msra.mxu0 0.0
    %6694 = vmatprep.subr.mxu0 0.0
    %6695 = vmatpush1.msra.mxu0 0.0
    %6696 = vmatprep.subr.mxu0 0.0
    %6697 = vmatpush1.msra.mxu0 0.0
    %6698 = vmatprep.subr.mxu0 0.0
    %6699 = vmatpush1.msra.mxu0 0.0
    %6700 = vmatprep.subr.mxu0 0.0
    %6701 = vmatpush1.msra.mxu0 0.0
    %6702 = vmatprep.subr.mxu0 0.0
    %6703 = vmatpush1.msra.mxu0 0.0
    %6704 = vmatprep.subr.mxu0 0.0
    %6705 = vmatpush1.msra.mxu0 0.0
    %6706 = vmatprep.subr.mxu0 0.0
    %6707 = vmatpush1.msra.mxu0 0.0
    %6708 = vmatprep.mubr.f32.mxu0 0.0
    %6709 = vmatmul.mubr.f32.gmra.mrb[0].mxu0 %v3551
    %v6710 = vpop.f32.mrb[0].mxu0
    %v6711 = vadd.f32 0.0, %v6710
    %v6712 = vpop.f32.mrb[0].mxu0
    %6713 = vdwg.mxu0
    %6714 = vmatprep.subr.mxu0 0.0
    %6715 = vmatpush1.msra.mxu0 %v3545
    %6716 = vmatprep.subr.mxu0 0.0
    %6717 = vmatpush1.msra.mxu0 %v3546
    %6718 = vmatprep.subr.mxu0 0.0
    %6719 = vmatpush1.msra.mxu0 0.0
    %6720 = vmatprep.subr.mxu0 0.0
    %6721 = vmatpush1.msra.mxu0 0.0
    %6722 = vmatprep.subr.mxu0 0.0
    %6723 = vmatpush1.msra.mxu0 0.0
    %6724 = vmatprep.subr.mxu0 0.0
    %6725 = vmatpush1.msra.mxu0 0.0
    %6726 = vmatprep.subr.mxu0 0.0
    %6727 = vmatpush1.msra.mxu0 0.0
    %6728 = vmatprep.subr.mxu0 0.0
    %6729 = vmatpush1.msra.mxu0 0.0
    %6730 = vmatprep.subr.mxu0 0.0
    %6731 = vmatpush1.msra.mxu0 0.0
    %6732 = vmatprep.subr.mxu0 0.0
    %6733 = vmatpush1.msra.mxu0 0.0
    %6734 = vmatprep.subr.mxu0 0.0
    %6735 = vmatpush1.msra.mxu0 0.0
    %6736 = vmatprep.subr.mxu0 0.0
    %6737 = vmatpush1.msra.mxu0 0.0
    %6738 = vmatprep.subr.mxu0 0.0
    %6739 = vmatpush1.msra.mxu0 0.0
    %6740 = vmatprep.subr.mxu0 0.0
    %6741 = vmatpush1.msra.mxu0 0.0
    %6742 = vmatprep.subr.mxu0 0.0
    %6743 = vmatpush1.msra.mxu0 0.0
    %6744 = vmatprep.subr.mxu0 0.0
    %6745 = vmatpush1.msra.mxu0 0.0
    %6746 = vmatprep.subr.mxu0 0.0
    %6747 = vmatpush1.msra.mxu0 0.0
    %6748 = vmatprep.subr.mxu0 0.0
    %6749 = vmatpush1.msra.mxu0 0.0
    %6750 = vmatprep.subr.mxu0 0.0
    %6751 = vmatpush1.msra.mxu0 0.0
    %6752 = vmatprep.subr.mxu0 0.0
    %6753 = vmatpush1.msra.mxu0 0.0
    %6754 = vmatprep.subr.mxu0 0.0
    %6755 = vmatpush1.msra.mxu0 0.0
    %6756 = vmatprep.subr.mxu0 0.0
    %6757 = vmatpush1.msra.mxu0 0.0
    %6758 = vmatprep.subr.mxu0 0.0
    %6759 = vmatpush1.msra.mxu0 0.0
    %6760 = vmatprep.subr.mxu0 0.0
    %6761 = vmatpush1.msra.mxu0 0.0
    %6762 = vmatprep.subr.mxu0 0.0
    %6763 = vmatpush1.msra.mxu0 0.0
    %6764 = vmatprep.subr.mxu0 0.0
    %6765 = vmatpush1.msra.mxu0 0.0
    %6766 = vmatprep.subr.mxu0 0.0
    %6767 = vmatpush1.msra.mxu0 0.0
    %6768 = vmatprep.subr.mxu0 0.0
    %6769 = vmatpush1.msra.mxu0 0.0
    %6770 = vmatprep.subr.mxu0 0.0
    %6771 = vmatpush1.msra.mxu0 0.0
    %6772 = vmatprep.subr.mxu0 0.0
    %6773 = vmatpush1.msra.mxu0 0.0
    %6774 = vmatprep.subr.mxu0 0.0
    %6775 = vmatpush1.msra.mxu0 0.0
    %6776 = vmatprep.subr.mxu0 0.0
    %6777 = vmatpush1.msra.mxu0 0.0
    %6778 = vmatprep.mubr.f32.mxu0 0.0
    %6779 = vmatmul.mubr.f32.gmra.mrb[0].mxu0 %v3624
    %v6780 = vpop.f32.mrb[0].mxu0
    %v6781 = vadd.f32 0.0, %v6780
    %v6782 = vpop.f32.mrb[0].mxu0
    %6783 = vdwg.mxu0
    %6784 = vmatprep.subr.mxu0 0.0
    %6785 = vmatpush1.msra.mxu0 %v6711
    %6786 = vmatprep.subr.mxu0 0.0
    %6787 = vmatpush1.msra.mxu0 0.0
    %6788 = vmatprep.subr.mxu0 0.0
    %6789 = vmatpush1.msra.mxu0 0.0
    %6790 = vmatprep.subr.mxu0 0.0
    %6791 = vmatpush1.msra.mxu0 0.0
    %6792 = vmatprep.subr.mxu0 0.0
    %6793 = vmatpush1.msra.mxu0 0.0
    %6794 = vmatprep.subr.mxu0 0.0
    %6795 = vmatpush1.msra.mxu0 0.0
    %6796 = vmatprep.subr.mxu0 0.0
    %6797 = vmatpush1.msra.mxu0 0.0
    %6798 = vmatprep.subr.mxu0 0.0
    %6799 = vmatpush1.msra.mxu0 0.0
    %6800 = vmatprep.subr.mxu0 0.0
    %6801 = vmatpush1.msra.mxu0 0.0
    %6802 = vmatprep.subr.mxu0 0.0
    %6803 = vmatpush1.msra.mxu0 0.0
    %6804 = vmatprep.subr.mxu0 0.0
    %6805 = vmatpush1.msra.mxu0 0.0
    %6806 = vmatprep.subr.mxu0 0.0
    %6807 = vmatpush1.msra.mxu0 0.0
    %6808 = vmatprep.subr.mxu0 0.0
    %6809 = vmatpush1.msra.mxu0 0.0
    %6810 = vmatprep.subr.mxu0 0.0
    %6811 = vmatpush1.msra.mxu0 0.0
    %6812 = vmatprep.subr.mxu0 0.0
    %6813 = vmatpush1.msra.mxu0 0.0
    %6814 = vmatprep.subr.mxu0 0.0
    %6815 = vmatpush1.msra.mxu0 0.0
    %6816 = vmatprep.subr.mxu0 0.0
    %6817 = vmatpush1.msra.mxu0 0.0
    %6818 = vmatprep.subr.mxu0 0.0
    %6819 = vmatpush1.msra.mxu0 0.0
    %6820 = vmatprep.subr.mxu0 0.0
    %6821 = vmatpush1.msra.mxu0 0.0
    %6822 = vmatprep.subr.mxu0 0.0
    %6823 = vmatpush1.msra.mxu0 0.0
    %6824 = vmatprep.subr.mxu0 0.0
    %6825 = vmatpush1.msra.mxu0 0.0
    %6826 = vmatprep.subr.mxu0 0.0
    %6827 = vmatpush1.msra.mxu0 0.0
    %6828 = vmatprep.subr.mxu0 0.0
    %6829 = vmatpush1.msra.mxu0 0.0
    %6830 = vmatprep.subr.mxu0 0.0
    %6831 = vmatpush1.msra.mxu0 0.0
    %6832 = vmatprep.subr.mxu0 0.0
    %6833 = vmatpush1.msra.mxu0 0.0
    %6834 = vmatprep.subr.mxu0 0.0
    %6835 = vmatpush1.msra.mxu0 0.0
    %6836 = vmatprep.subr.mxu0 0.0
    %6837 = vmatpush1.msra.mxu0 0.0
    %6838 = vmatprep.subr.mxu0 0.0
    %6839 = vmatpush1.msra.mxu0 0.0
    %6840 = vmatprep.subr.mxu0 0.0
    %6841 = vmatpush1.msra.mxu0 0.0
    %6842 = vmatprep.subr.mxu0 0.0
    %6843 = vmatpush1.msra.mxu0 0.0
    %6844 = vmatprep.subr.mxu0 0.0
    %6845 = vmatpush1.msra.mxu0 0.0
    %6846 = vmatprep.subr.mxu0 0.0
    %6847 = vmatpush1.msra.mxu0 0.0
    %6848 = vmatprep.mubr.f32.mxu0 0.0
    %6849 = vmatmul.mubr.f32.gmra.mrb[0].mxu0 %v3697
    %v6850 = vpop.f32.mrb[0].mxu0
    %v6851 = vadd.f32 0.0, %v6850
    %v6852 = vpop.f32.mrb[0].mxu0
    %6853 = vmatprep.mubr.f32.mxu0 0.0
    %6854 = vmatmul.mubr.f32.gmra.mrb[0].mxu0 %v3700
    %v6855 = vpop.f32.mrb[0].mxu0
    %v6856 = vadd.f32 0.0, %v6855
    %v6857 = vpop.f32.mrb[0].mxu0
    %6858 = vmatprep.mubr.f32.mxu0 0.0
    %6859 = vmatmul.mubr.f32.gmra.mrb[0].mxu0 %v3703
    %v6860 = vpop.f32.mrb[0].mxu0
    %v6861 = vadd.f32 0.0, %v6860
    %v6862 = vpop.f32.mrb[0].mxu0
    %6863 = vmatprep.mubr.f32.mxu0 0.0
    %6864 = vmatmul.mubr.f32.gmra.mrb[0].mxu0 %v3706
    %v6865 = vpop.f32.mrb[0].mxu0
    %v6866 = vadd.f32 0.0, %v6865
    %v6867 = vpop.f32.mrb[0].mxu0
    %6868 = vmatprep.mubr.f32.mxu0 0.0
    %6869 = vmatmul.mubr.f32.gmra.mrb[0].mxu0 %v3709
    %v6870 = vpop.f32.mrb[0].mxu0
    %v6871 = vadd.f32 0.0, %v6870
    %v6872 = vpop.f32.mrb[0].mxu0
    %6873 = vdwg.mxu0
    %s6874 = scalar_lea.vmem [#allocation2], 192
    %v6875 = vld [vmem:[%s6874] sm:$0xff]
    %s6876 = scalar_lea.vmem [#allocation2], 200
    %v6877 = vld [vmem:[%s6876] sm:$0xff]
    %v6880 = vrot.slane %v6856, 4
    %v6881 = vrot.slane %v6861, 4
    %v6882 = vsel %vm525, %v6880, %v6881
    %v6883 = vsel %vm531, %v6882, 0
    %v6885 = vsel %vm531, %v6881, 0
    %6887 = vmatprep.subr.mxu0 0.0
    %6888 = vmatpush1.msra.mxu0 %v6877
    %6889 = vmatprep.subr.mxu0 0.0
    %6890 = vmatpush1.msra.mxu0 0.0
    %6891 = vmatprep.subr.mxu0 0.0
    %6892 = vmatpush1.msra.mxu0 0.0
    %6893 = vmatprep.subr.mxu0 0.0
    %6894 = vmatpush1.msra.mxu0 0.0
    %6895 = vmatprep.subr.mxu0 0.0
    %6896 = vmatpush1.msra.mxu0 0.0
    %6897 = vmatprep.subr.mxu0 0.0
    %6898 = vmatpush1.msra.mxu0 0.0
    %6899 = vmatprep.subr.mxu0 0.0
    %6900 = vmatpush1.msra.mxu0 0.0
    %6901 = vmatprep.subr.mxu0 0.0
    %6902 = vmatpush1.msra.mxu0 0.0
    %6903 = vmatprep.subr.mxu0 0.0
    %6904 = vmatpush1.msra.mxu0 0.0
    %6905 = vmatprep.subr.mxu0 0.0
    %6906 = vmatpush1.msra.mxu0 0.0
    %6907 = vmatprep.subr.mxu0 0.0
    %6908 = vmatpush1.msra.mxu0 0.0
    %6909 = vmatprep.subr.mxu0 0.0
    %6910 = vmatpush1.msra.mxu0 0.0
    %6911 = vmatprep.subr.mxu0 0.0
    %6912 = vmatpush1.msra.mxu0 0.0
    %6913 = vmatprep.subr.mxu0 0.0
    %6914 = vmatpush1.msra.mxu0 0.0
    %6915 = vmatprep.subr.mxu0 0.0
    %6916 = vmatpush1.msra.mxu0 0.0
    %6917 = vmatprep.subr.mxu0 0.0
    %6918 = vmatpush1.msra.mxu0 0.0
    %6919 = vmatprep.subr.mxu0 0.0
    %6920 = vmatpush1.msra.mxu0 0.0
    %6921 = vmatprep.subr.mxu0 0.0
    %6922 = vmatpush1.msra.mxu0 0.0
    %6923 = vmatprep.subr.mxu0 0.0
    %6924 = vmatpush1.msra.mxu0 0.0
    %6925 = vmatprep.subr.mxu0 0.0
    %6926 = vmatpush1.msra.mxu0 0.0
    %6927 = vmatprep.subr.mxu0 0.0
    %6928 = vmatpush1.msra.mxu0 0.0
    %6929 = vmatprep.subr.mxu0 0.0
    %6930 = vmatpush1.msra.mxu0 0.0
    %6931 = vmatprep.subr.mxu0 0.0
    %6932 = vmatpush1.msra.mxu0 0.0
    %6933 = vmatprep.subr.mxu0 0.0
    %6934 = vmatpush1.msra.mxu0 0.0
    %6935 = vmatprep.subr.mxu0 0.0
    %6936 = vmatpush1.msra.mxu0 0.0
    %6937 = vmatprep.subr.mxu0 0.0
    %6938 = vmatpush1.msra.mxu0 0.0
    %6939 = vmatprep.subr.mxu0 0.0
    %6940 = vmatpush1.msra.mxu0 0.0
    %6941 = vmatprep.subr.mxu0 0.0
    %6942 = vmatpush1.msra.mxu0 0.0
    %6943 = vmatprep.subr.mxu0 0.0
    %6944 = vmatpush1.msra.mxu0 0.0
    %6945 = vmatprep.subr.mxu0 0.0
    %6946 = vmatpush1.msra.mxu0 0.0
    %6947 = vmatprep.subr.mxu0 0.0
    %6948 = vmatpush1.msra.mxu0 0.0
    %6949 = vmatprep.subr.mxu0 0.0
    %6950 = vmatpush1.msra.mxu0 0.0
    %6951 = vmatprep.mubr.f32.mxu0 0.0
    %6952 = vmatmul.mubr.f32.gmra.mrb[0].mxu0 %v6883
    %v6953 = vpop.f32.mrb[0].mxu0
    %v6954 = vadd.f32 0.0, %v6953
    %v6955 = vpop.f32.mrb[0].mxu0
    %6956 = vmatprep.mubr.f32.mxu0 0.0
    %6957 = vmatmul.mubr.f32.gmra.mrb[0].mxu0 %v6885
    %v6958 = vpop.f32.mrb[0].mxu0
    %v6959 = vadd.f32 0.0, %v6958
    %v6960 = vpop.f32.mrb[0].mxu0
    %6961 = vdwg.mxu0
    %v6963 = vsel %vm531, %v6851, 0
    %v6965 = vsel %vm531, %v6856, 0
    %6967 = vmatprep.subr.mxu0 0.0
    %6968 = vmatpush1.msra.mxu0 %v6875
    %6969 = vmatprep.subr.mxu0 0.0
    %6970 = vmatpush1.msra.mxu0 0.0
    %6971 = vmatprep.subr.mxu0 0.0
    %6972 = vmatpush1.msra.mxu0 0.0
    %6973 = vmatprep.subr.mxu0 0.0
    %6974 = vmatpush1.msra.mxu0 0.0
    %6975 = vmatprep.subr.mxu0 0.0
    %6976 = vmatpush1.msra.mxu0 0.0
    %6977 = vmatprep.subr.mxu0 0.0
    %6978 = vmatpush1.msra.mxu0 0.0
    %6979 = vmatprep.subr.mxu0 0.0
    %6980 = vmatpush1.msra.mxu0 0.0
    %6981 = vmatprep.subr.mxu0 0.0
    %6982 = vmatpush1.msra.mxu0 0.0
    %6983 = vmatprep.subr.mxu0 0.0
    %6984 = vmatpush1.msra.mxu0 0.0
    %6985 = vmatprep.subr.mxu0 0.0
    %6986 = vmatpush1.msra.mxu0 0.0
    %6987 = vmatprep.subr.mxu0 0.0
    %6988 = vmatpush1.msra.mxu0 0.0
    %6989 = vmatprep.subr.mxu0 0.0
    %6990 = vmatpush1.msra.mxu0 0.0
    %6991 = vmatprep.subr.mxu0 0.0
    %6992 = vmatpush1.msra.mxu0 0.0
    %6993 = vmatprep.subr.mxu0 0.0
    %6994 = vmatpush1.msra.mxu0 0.0
    %6995 = vmatprep.subr.mxu0 0.0
    %6996 = vmatpush1.msra.mxu0 0.0
    %6997 = vmatprep.subr.mxu0 0.0
    %6998 = vmatpush1.msra.mxu0 0.0
    %6999 = vmatprep.subr.mxu0 0.0
    %7000 = vmatpush1.msra.mxu0 0.0
    %7001 = vmatprep.subr.mxu0 0.0
    %7002 = vmatpush1.msra.mxu0 0.0
    %7003 = vmatprep.subr.mxu0 0.0
    %7004 = vmatpush1.msra.mxu0 0.0
    %7005 = vmatprep.subr.mxu0 0.0
    %7006 = vmatpush1.msra.mxu0 0.0
    %7007 = vmatprep.subr.mxu0 0.0
    %7008 = vmatpush1.msra.mxu0 0.0
    %7009 = vmatprep.subr.mxu0 0.0
    %7010 = vmatpush1.msra.mxu0 0.0
    %7011 = vmatprep.subr.mxu0 0.0
    %7012 = vmatpush1.msra.mxu0 0.0
    %7013 = vmatprep.subr.mxu0 0.0
    %7014 = vmatpush1.msra.mxu0 0.0
    %7015 = vmatprep.subr.mxu0 0.0
    %7016 = vmatpush1.msra.mxu0 0.0
    %7017 = vmatprep.subr.mxu0 0.0
    %7018 = vmatpush1.msra.mxu0 0.0
    %7019 = vmatprep.subr.mxu0 0.0
    %7020 = vmatpush1.msra.mxu0 0.0
    %7021 = vmatprep.subr.mxu0 0.0
    %7022 = vmatpush1.msra.mxu0 0.0
    %7023 = vmatprep.subr.mxu0 0.0
    %7024 = vmatpush1.msra.mxu0 0.0
    %7025 = vmatprep.subr.mxu0 0.0
    %7026 = vmatpush1.msra.mxu0 0.0
    %7027 = vmatprep.subr.mxu0 0.0
    %7028 = vmatpush1.msra.mxu0 0.0
    %7029 = vmatprep.subr.mxu0 0.0
    %7030 = vmatpush1.msra.mxu0 0.0
    %7031 = vmatprep.mubr.f32.mxu0 0.0
    %7032 = vmatmul.mubr.f32.gmra.mrb[0].mxu0 %v6963
    %v7033 = vpop.f32.mrb[0].mxu0
    %v7034 = vadd.f32 %v6954, %v7033
    %v7035 = vpop.f32.mrb[0].mxu0
    %7036 = vmatprep.mubr.f32.mxu0 0.0
    %7037 = vmatmul.mubr.f32.gmra.mrb[0].mxu0 %v6965
    %v7038 = vpop.f32.mrb[0].mxu0
    %v7039 = vadd.f32 %v6959, %v7038
    %v7040 = vpop.f32.mrb[0].mxu0
    %7041 = vdwg.mxu0
    %s7042 = scalar_lea.vmem [#allocation2], 208
    %v7043 = vld [vmem:[%s7042] sm:$0xff]
    %v7045 = vsel %vm531, %v6866, 0
    %v7048 = vsel %vm531, %v6871, 0
    %7050 = vmatprep.subr.mxu0 0.0
    %7051 = vmatpush1.msra.mxu0 %v7043
    %7052 = vmatprep.subr.mxu0 0.0
    %7053 = vmatpush1.msra.mxu0 0.0
    %7054 = vmatprep.subr.mxu0 0.0
    %7055 = vmatpush1.msra.mxu0 0.0
    %7056 = vmatprep.subr.mxu0 0.0
    %7057 = vmatpush1.msra.mxu0 0.0
    %7058 = vmatprep.subr.mxu0 0.0
    %7059 = vmatpush1.msra.mxu0 0.0
    %7060 = vmatprep.subr.mxu0 0.0
    %7061 = vmatpush1.msra.mxu0 0.0
    %7062 = vmatprep.subr.mxu0 0.0
    %7063 = vmatpush1.msra.mxu0 0.0
    %7064 = vmatprep.subr.mxu0 0.0
    %7065 = vmatpush1.msra.mxu0 0.0
    %7066 = vmatprep.subr.mxu0 0.0
    %7067 = vmatpush1.msra.mxu0 0.0
    %7068 = vmatprep.subr.mxu0 0.0
    %7069 = vmatpush1.msra.mxu0 0.0
    %7070 = vmatprep.subr.mxu0 0.0
    %7071 = vmatpush1.msra.mxu0 0.0
    %7072 = vmatprep.subr.mxu0 0.0
    %7073 = vmatpush1.msra.mxu0 0.0
    %7074 = vmatprep.subr.mxu0 0.0
    %7075 = vmatpush1.msra.mxu0 0.0
    %7076 = vmatprep.subr.mxu0 0.0
    %7077 = vmatpush1.msra.mxu0 0.0
    %7078 = vmatprep.subr.mxu0 0.0
    %7079 = vmatpush1.msra.mxu0 0.0
    %7080 = vmatprep.subr.mxu0 0.0
    %7081 = vmatpush1.msra.mxu0 0.0
    %7082 = vmatprep.subr.mxu0 0.0
    %7083 = vmatpush1.msra.mxu0 0.0
    %7084 = vmatprep.subr.mxu0 0.0
    %7085 = vmatpush1.msra.mxu0 0.0
    %7086 = vmatprep.subr.mxu0 0.0
    %7087 = vmatpush1.msra.mxu0 0.0
    %7088 = vmatprep.subr.mxu0 0.0
    %7089 = vmatpush1.msra.mxu0 0.0
    %7090 = vmatprep.subr.mxu0 0.0
    %7091 = vmatpush1.msra.mxu0 0.0
    %7092 = vmatprep.subr.mxu0 0.0
    %7093 = vmatpush1.msra.mxu0 0.0
    %7094 = vmatprep.subr.mxu0 0.0
    %7095 = vmatpush1.msra.mxu0 0.0
    %7096 = vmatprep.subr.mxu0 0.0
    %7097 = vmatpush1.msra.mxu0 0.0
    %7098 = vmatprep.subr.mxu0 0.0
    %7099 = vmatpush1.msra.mxu0 0.0
    %7100 = vmatprep.subr.mxu0 0.0
    %7101 = vmatpush1.msra.mxu0 0.0
    %7102 = vmatprep.subr.mxu0 0.0
    %7103 = vmatpush1.msra.mxu0 0.0
    %7104 = vmatprep.subr.mxu0 0.0
    %7105 = vmatpush1.msra.mxu0 0.0
    %7106 = vmatprep.subr.mxu0 0.0
    %7107 = vmatpush1.msra.mxu0 0.0
    %7108 = vmatprep.subr.mxu0 0.0
    %7109 = vmatpush1.msra.mxu0 0.0
    %7110 = vmatprep.subr.mxu0 0.0
    %7111 = vmatpush1.msra.mxu0 0.0
    %7112 = vmatprep.subr.mxu0 0.0
    %7113 = vmatpush1.msra.mxu0 0.0
    %7114 = vmatprep.mubr.f32.mxu0 0.0
    %7115 = vmatmul.mubr.f32.gmra.mrb[0].mxu0 %v7045
    %v7116 = vpop.f32.mrb[0].mxu0
    %v7117 = vadd.f32 0.0, %v7116
    %v7118 = vpop.f32.mrb[0].mxu0
    %7119 = vmatprep.mubr.f32.mxu0 0.0
    %7120 = vmatmul.mubr.f32.gmra.mrb[0].mxu0 %v7048
    %v7121 = vpop.f32.mrb[0].mxu0
    %v7122 = vadd.f32 0.0, %v7121
    %v7123 = vpop.f32.mrb[0].mxu0
    %7124 = vdwg.mxu0
    %v7125 = vadd.f32 %v7034, %v7117
    %v7126 = vadd.f32 %v7039, %v7122
    %s7127 = scalar_lea.vmem [#allocation5], 8
    %v7128 = vld [vmem:[%s7127] sm:$0x1]
    %v7130 = vlaneseq
    %v7131 = vshrl.u32 %v7130, 7
    %v7132 = vsub.s32 0, %v7131
    %v7133 = vrot.slane %v7128, %v7132
    %v7135 = vadd.f32 %v7125, %v7133
    %v7136 = vadd.f32 %v7126, %v7133
    %vm7137 = vcmp.ge.f32.partialorder %v7135, 0.0
    %vm7138 = vcmp.ge.f32.partialorder %v7136, 0.0
    %v7139 = vmul.f32 %v7135, 0.01
    %v7140 = vmul.f32 %v7136, 0.01
    %v7141 = vsel %vm7137, %v7135, %v7139
    %v7142 = vsel %vm7138, %v7136, %v7140
    %v7144 = vsel %vm525, %v7142, 0
    %7146 = vmatprep.subr.mxu0 0.0
    %7147 = vmatpush1.msra.mxu0 %v7141
    %7148 = vmatprep.subr.mxu0 0.0
    %7149 = vmatpush1.msra.mxu0 %v7144
    %7150 = vmatprep.subr.mxu0 0.0
    %7151 = vmatpush1.msra.mxu0 0.0
    %7152 = vmatprep.subr.mxu0 0.0
    %7153 = vmatpush1.msra.mxu0 0.0
    %7154 = vmatprep.subr.mxu0 0.0
    %7155 = vmatpush1.msra.mxu0 0.0
    %7156 = vmatprep.subr.mxu0 0.0
    %7157 = vmatpush1.msra.mxu0 0.0
    %7158 = vmatprep.subr.mxu0 0.0
    %7159 = vmatpush1.msra.mxu0 0.0
    %7160 = vmatprep.subr.mxu0 0.0
    %7161 = vmatpush1.msra.mxu0 0.0
    %7162 = vmatprep.subr.mxu0 0.0
    %7163 = vmatpush1.msra.mxu0 0.0
    %7164 = vmatprep.subr.mxu0 0.0
    %7165 = vmatpush1.msra.mxu0 0.0
    %7166 = vmatprep.subr.mxu0 0.0
    %7167 = vmatpush1.msra.mxu0 0.0
    %7168 = vmatprep.subr.mxu0 0.0
    %7169 = vmatpush1.msra.mxu0 0.0
    %7170 = vmatprep.subr.mxu0 0.0
    %7171 = vmatpush1.msra.mxu0 0.0
    %7172 = vmatprep.subr.mxu0 0.0
    %7173 = vmatpush1.msra.mxu0 0.0
    %7174 = vmatprep.subr.mxu0 0.0
    %7175 = vmatpush1.msra.mxu0 0.0
    %7176 = vmatprep.subr.mxu0 0.0
    %7177 = vmatpush1.msra.mxu0 0.0
    %7178 = vmatprep.subr.mxu0 0.0
    %7179 = vmatpush1.msra.mxu0 0.0
    %7180 = vmatprep.subr.mxu0 0.0
    %7181 = vmatpush1.msra.mxu0 0.0
    %7182 = vmatprep.subr.mxu0 0.0
    %7183 = vmatpush1.msra.mxu0 0.0
    %7184 = vmatprep.subr.mxu0 0.0
    %7185 = vmatpush1.msra.mxu0 0.0
    %7186 = vmatprep.subr.mxu0 0.0
    %7187 = vmatpush1.msra.mxu0 0.0
    %7188 = vmatprep.subr.mxu0 0.0
    %7189 = vmatpush1.msra.mxu0 0.0
    %7190 = vmatprep.subr.mxu0 0.0
    %7191 = vmatpush1.msra.mxu0 0.0
    %7192 = vmatprep.subr.mxu0 0.0
    %7193 = vmatpush1.msra.mxu0 0.0
    %7194 = vmatprep.subr.mxu0 0.0
    %7195 = vmatpush1.msra.mxu0 0.0
    %7196 = vmatprep.subr.mxu0 0.0
    %7197 = vmatpush1.msra.mxu0 0.0
    %7198 = vmatprep.subr.mxu0 0.0
    %7199 = vmatpush1.msra.mxu0 0.0
    %7200 = vmatprep.subr.mxu0 0.0
    %7201 = vmatpush1.msra.mxu0 0.0
    %7202 = vmatprep.subr.mxu0 0.0
    %7203 = vmatpush1.msra.mxu0 0.0
    %7204 = vmatprep.subr.mxu0 0.0
    %7205 = vmatpush1.msra.mxu0 0.0
    %7206 = vmatprep.subr.mxu0 0.0
    %7207 = vmatpush1.msra.mxu0 0.0
    %7208 = vmatprep.subr.mxu0 0.0
    %7209 = vmatpush1.msra.mxu0 0.0
    %7210 = vmatprep.mubr.f32.mxu0 0.0
    %7211 = vmatmul.mubr.f32.gmra.mrb[0].mxu0 %v4072
    %v7212 = vpop.f32.mrb[0].mxu0
    %v7213 = vadd.f32 0.0, %v7212
    %v7214 = vpop.f32.mrb[0].mxu0
    %7215 = vmatprep.mubr.f32.mxu0 0.0
    %7216 = vmatmul.mubr.f32.gmra.mrb[0].mxu0 %v4075
    %v7217 = vpop.f32.mrb[0].mxu0
    %v7218 = vadd.f32 0.0, %v7217
    %v7219 = vpop.f32.mrb[0].mxu0
    %7220 = vmatprep.mubr.f32.mxu0 0.0
    %7221 = vmatmul.mubr.f32.gmra.mrb[0].mxu0 %v4078
    %v7222 = vpop.f32.mrb[0].mxu0
    %v7223 = vadd.f32 0.0, %v7222
    %v7224 = vpop.f32.mrb[0].mxu0
    %7225 = vdwg.mxu0
    %s7226 = scalar_lea.vmem [#allocation7], 768
    %v7227 = vld [vmem:[%s7226] sm:$0xff]
    %v7228 = vld [vmem:[%s7226 + $0x8] sm:$0xff]
    %v7229 = vld [vmem:[%s7226 + $0x10] sm:$0xff]
    %v7230 = vld [vmem:[%s7226 + $0x18] sm:$0xff]
    %s7231 = scalar_lea.vmem [#allocation7], 800
    %v7232 = vld [vmem:[%s7231] sm:$0xff]
    %v7233 = vld [vmem:[%s7231 + $0x8] sm:$0xff]
    %v7234 = vld [vmem:[%s7231 + $0x10] sm:$0xff]
    %v7235 = vld [vmem:[%s7231 + $0x18] sm:$0xff]
    %v7237 = vsel %vm226, %v7218, 0
    %7239 = vmatprep.subr.mxu0 0.0
    %7240 = vmatpush1.msra.mxu0 %v7232
    %7241 = vmatprep.subr.mxu0 0.0
    %7242 = vmatpush1.msra.mxu0 %v7233
    %7243 = vmatprep.subr.mxu0 0.0
    %7244 = vmatpush1.msra.mxu0 %v7234
    %7245 = vmatprep.subr.mxu0 0.0
    %7246 = vmatpush1.msra.mxu0 %v7235
    %7247 = vmatprep.subr.mxu0 0.0
    %7248 = vmatpush1.msra.mxu0 0.0
    %7249 = vmatprep.subr.mxu0 0.0
    %7250 = vmatpush1.msra.mxu0 0.0
    %7251 = vmatprep.subr.mxu0 0.0
    %7252 = vmatpush1.msra.mxu0 0.0
    %7253 = vmatprep.subr.mxu0 0.0
    %7254 = vmatpush1.msra.mxu0 0.0
    %7255 = vmatprep.subr.mxu0 0.0
    %7256 = vmatpush1.msra.mxu0 0.0
    %7257 = vmatprep.subr.mxu0 0.0
    %7258 = vmatpush1.msra.mxu0 0.0
    %7259 = vmatprep.subr.mxu0 0.0
    %7260 = vmatpush1.msra.mxu0 0.0
    %7261 = vmatprep.subr.mxu0 0.0
    %7262 = vmatpush1.msra.mxu0 0.0
    %7263 = vmatprep.subr.mxu0 0.0
    %7264 = vmatpush1.msra.mxu0 0.0
    %7265 = vmatprep.subr.mxu0 0.0
    %7266 = vmatpush1.msra.mxu0 0.0
    %7267 = vmatprep.subr.mxu0 0.0
    %7268 = vmatpush1.msra.mxu0 0.0
    %7269 = vmatprep.subr.mxu0 0.0
    %7270 = vmatpush1.msra.mxu0 0.0
    %7271 = vmatprep.subr.mxu0 0.0
    %7272 = vmatpush1.msra.mxu0 0.0
    %7273 = vmatprep.subr.mxu0 0.0
    %7274 = vmatpush1.msra.mxu0 0.0
    %7275 = vmatprep.subr.mxu0 0.0
    %7276 = vmatpush1.msra.mxu0 0.0
    %7277 = vmatprep.subr.mxu0 0.0
    %7278 = vmatpush1.msra.mxu0 0.0
    %7279 = vmatprep.subr.mxu0 0.0
    %7280 = vmatpush1.msra.mxu0 0.0
    %7281 = vmatprep.subr.mxu0 0.0
    %7282 = vmatpush1.msra.mxu0 0.0
    %7283 = vmatprep.subr.mxu0 0.0
    %7284 = vmatpush1.msra.mxu0 0.0
    %7285 = vmatprep.subr.mxu0 0.0
    %7286 = vmatpush1.msra.mxu0 0.0
    %7287 = vmatprep.subr.mxu0 0.0
    %7288 = vmatpush1.msra.mxu0 0.0
    %7289 = vmatprep.subr.mxu0 0.0
    %7290 = vmatpush1.msra.mxu0 0.0
    %7291 = vmatprep.subr.mxu0 0.0
    %7292 = vmatpush1.msra.mxu0 0.0
    %7293 = vmatprep.subr.mxu0 0.0
    %7294 = vmatpush1.msra.mxu0 0.0
    %7295 = vmatprep.subr.mxu0 0.0
    %7296 = vmatpush1.msra.mxu0 0.0
    %7297 = vmatprep.subr.mxu0 0.0
    %7298 = vmatpush1.msra.mxu0 0.0
    %7299 = vmatprep.subr.mxu0 0.0
    %7300 = vmatpush1.msra.mxu0 0.0
    %7301 = vmatprep.subr.mxu0 0.0
    %7302 = vmatpush1.msra.mxu0 0.0
    %7303 = vmatprep.mubr.f32.mxu0 0.0
    %7304 = vmatmul.mubr.f32.gmra.mrb[0].mxu0 %v7237
    %v7305 = vpop.f32.mrb[0].mxu0
    %v7306 = vadd.f32 0.0, %v7305
    %v7307 = vpop.f32.mrb[0].mxu0
    %7308 = vdwg.mxu0
    %v7310 = vsel %vm226, %v7213, 0
    %7312 = vmatprep.subr.mxu0 0.0
    %7313 = vmatpush1.msra.mxu0 %v7227
    %7314 = vmatprep.subr.mxu0 0.0
    %7315 = vmatpush1.msra.mxu0 %v7228
    %7316 = vmatprep.subr.mxu0 0.0
    %7317 = vmatpush1.msra.mxu0 %v7229
    %7318 = vmatprep.subr.mxu0 0.0
    %7319 = vmatpush1.msra.mxu0 %v7230
    %7320 = vmatprep.subr.mxu0 0.0
    %7321 = vmatpush1.msra.mxu0 0.0
    %7322 = vmatprep.subr.mxu0 0.0
    %7323 = vmatpush1.msra.mxu0 0.0
    %7324 = vmatprep.subr.mxu0 0.0
    %7325 = vmatpush1.msra.mxu0 0.0
    %7326 = vmatprep.subr.mxu0 0.0
    %7327 = vmatpush1.msra.mxu0 0.0
    %7328 = vmatprep.subr.mxu0 0.0
    %7329 = vmatpush1.msra.mxu0 0.0
    %7330 = vmatprep.subr.mxu0 0.0
    %7331 = vmatpush1.msra.mxu0 0.0
    %7332 = vmatprep.subr.mxu0 0.0
    %7333 = vmatpush1.msra.mxu0 0.0
    %7334 = vmatprep.subr.mxu0 0.0
    %7335 = vmatpush1.msra.mxu0 0.0
    %7336 = vmatprep.subr.mxu0 0.0
    %7337 = vmatpush1.msra.mxu0 0.0
    %7338 = vmatprep.subr.mxu0 0.0
    %7339 = vmatpush1.msra.mxu0 0.0
    %7340 = vmatprep.subr.mxu0 0.0
    %7341 = vmatpush1.msra.mxu0 0.0
    %7342 = vmatprep.subr.mxu0 0.0
    %7343 = vmatpush1.msra.mxu0 0.0
    %7344 = vmatprep.subr.mxu0 0.0
    %7345 = vmatpush1.msra.mxu0 0.0
    %7346 = vmatprep.subr.mxu0 0.0
    %7347 = vmatpush1.msra.mxu0 0.0
    %7348 = vmatprep.subr.mxu0 0.0
    %7349 = vmatpush1.msra.mxu0 0.0
    %7350 = vmatprep.subr.mxu0 0.0
    %7351 = vmatpush1.msra.mxu0 0.0
    %7352 = vmatprep.subr.mxu0 0.0
    %7353 = vmatpush1.msra.mxu0 0.0
    %7354 = vmatprep.subr.mxu0 0.0
    %7355 = vmatpush1.msra.mxu0 0.0
    %7356 = vmatprep.subr.mxu0 0.0
    %7357 = vmatpush1.msra.mxu0 0.0
    %7358 = vmatprep.subr.mxu0 0.0
    %7359 = vmatpush1.msra.mxu0 0.0
    %7360 = vmatprep.subr.mxu0 0.0
    %7361 = vmatpush1.msra.mxu0 0.0
    %7362 = vmatprep.subr.mxu0 0.0
    %7363 = vmatpush1.msra.mxu0 0.0
    %7364 = vmatprep.subr.mxu0 0.0
    %7365 = vmatpush1.msra.mxu0 0.0
    %7366 = vmatprep.subr.mxu0 0.0
    %7367 = vmatpush1.msra.mxu0 0.0
    %7368 = vmatprep.subr.mxu0 0.0
    %7369 = vmatpush1.msra.mxu0 0.0
    %7370 = vmatprep.subr.mxu0 0.0
    %7371 = vmatpush1.msra.mxu0 0.0
    %7372 = vmatprep.subr.mxu0 0.0
    %7373 = vmatpush1.msra.mxu0 0.0
    %7374 = vmatprep.subr.mxu0 0.0
    %7375 = vmatpush1.msra.mxu0 0.0
    %7376 = vmatprep.mubr.f32.mxu0 0.0
    %7377 = vmatmul.mubr.f32.gmra.mrb[0].mxu0 %v7310
    %v7378 = vpop.f32.mrb[0].mxu0
    %v7379 = vadd.f32 %v7306, %v7378
    %v7380 = vpop.f32.mrb[0].mxu0
    %7381 = vdwg.mxu0
    %s7382 = scalar_lea.vmem [#allocation7], 832
    %v7383 = vld [vmem:[%s7382] sm:$0xff]
    %v7384 = vld [vmem:[%s7382 + $0x8] sm:$0xff]
    %v7385 = vld [vmem:[%s7382 + $0x10] sm:$0xff]
    %v7386 = vld [vmem:[%s7382 + $0x18] sm:$0xff]
    %v7388 = vsel %vm226, %v7223, 0
    %7390 = vmatprep.subr.mxu0 0.0
    %7391 = vmatpush1.msra.mxu0 %v7383
    %7392 = vmatprep.subr.mxu0 0.0
    %7393 = vmatpush1.msra.mxu0 %v7384
    %7394 = vmatprep.subr.mxu0 0.0
    %7395 = vmatpush1.msra.mxu0 %v7385
    %7396 = vmatprep.subr.mxu0 0.0
    %7397 = vmatpush1.msra.mxu0 %v7386
    %7398 = vmatprep.subr.mxu0 0.0
    %7399 = vmatpush1.msra.mxu0 0.0
    %7400 = vmatprep.subr.mxu0 0.0
    %7401 = vmatpush1.msra.mxu0 0.0
    %7402 = vmatprep.subr.mxu0 0.0
    %7403 = vmatpush1.msra.mxu0 0.0
    %7404 = vmatprep.subr.mxu0 0.0
    %7405 = vmatpush1.msra.mxu0 0.0
    %7406 = vmatprep.subr.mxu0 0.0
    %7407 = vmatpush1.msra.mxu0 0.0
    %7408 = vmatprep.subr.mxu0 0.0
    %7409 = vmatpush1.msra.mxu0 0.0
    %7410 = vmatprep.subr.mxu0 0.0
    %7411 = vmatpush1.msra.mxu0 0.0
    %7412 = vmatprep.subr.mxu0 0.0
    %7413 = vmatpush1.msra.mxu0 0.0
    %7414 = vmatprep.subr.mxu0 0.0
    %7415 = vmatpush1.msra.mxu0 0.0
    %7416 = vmatprep.subr.mxu0 0.0
    %7417 = vmatpush1.msra.mxu0 0.0
    %7418 = vmatprep.subr.mxu0 0.0
    %7419 = vmatpush1.msra.mxu0 0.0
    %7420 = vmatprep.subr.mxu0 0.0
    %7421 = vmatpush1.msra.mxu0 0.0
    %7422 = vmatprep.subr.mxu0 0.0
    %7423 = vmatpush1.msra.mxu0 0.0
    %7424 = vmatprep.subr.mxu0 0.0
    %7425 = vmatpush1.msra.mxu0 0.0
    %7426 = vmatprep.subr.mxu0 0.0
    %7427 = vmatpush1.msra.mxu0 0.0
    %7428 = vmatprep.subr.mxu0 0.0
    %7429 = vmatpush1.msra.mxu0 0.0
    %7430 = vmatprep.subr.mxu0 0.0
    %7431 = vmatpush1.msra.mxu0 0.0
    %7432 = vmatprep.subr.mxu0 0.0
    %7433 = vmatpush1.msra.mxu0 0.0
    %7434 = vmatprep.subr.mxu0 0.0
    %7435 = vmatpush1.msra.mxu0 0.0
    %7436 = vmatprep.subr.mxu0 0.0
    %7437 = vmatpush1.msra.mxu0 0.0
    %7438 = vmatprep.subr.mxu0 0.0
    %7439 = vmatpush1.msra.mxu0 0.0
    %7440 = vmatprep.subr.mxu0 0.0
    %7441 = vmatpush1.msra.mxu0 0.0
    %7442 = vmatprep.subr.mxu0 0.0
    %7443 = vmatpush1.msra.mxu0 0.0
    %7444 = vmatprep.subr.mxu0 0.0
    %7445 = vmatpush1.msra.mxu0 0.0
    %7446 = vmatprep.subr.mxu0 0.0
    %7447 = vmatpush1.msra.mxu0 0.0
    %7448 = vmatprep.subr.mxu0 0.0
    %7449 = vmatpush1.msra.mxu0 0.0
    %7450 = vmatprep.subr.mxu0 0.0
    %7451 = vmatpush1.msra.mxu0 0.0
    %7452 = vmatprep.subr.mxu0 0.0
    %7453 = vmatpush1.msra.mxu0 0.0
    %7454 = vmatprep.mubr.f32.mxu0 0.0
    %7455 = vmatmul.mubr.f32.gmra.mrb[0].mxu0 %v7388
    %v7456 = vpop.f32.mrb[0].mxu0
    %v7457 = vadd.f32 0.0, %v7456
    %v7458 = vpop.f32.mrb[0].mxu0
    %7459 = vdwg.mxu0
    %v7460 = vadd.f32 %v7379, %v7457
    %s7461 = scalar_lea.vmem [#allocation8], 8
    %v7462 = vld [vmem:[%s7461] sm:$0x1]
    %v7464 = vlaneseq
    %v7465 = vshrl.u32 %v7464, 7
    %v7466 = vsub.s32 0, %v7465
    %v7467 = vrot.slane %v7462, %v7466
    %v7469 = vadd.f32 %v7460, %v7467
    %v7470 = vtanh.pop %v7469
    %v7471 = vmul.f32 %v7470, 1.442695
    %v7472 = vpow.pop %v7471
    %v7473 = vmul.f32 %v6781, %v7472
    %7474 = vmatprep.subr.mxu0 0.0
    %7475 = vmatpush1.msra.mxu0 %v6781
    %7476 = vmatprep.subr.mxu0 0.0
    %7477 = vmatpush1.msra.mxu0 0.0
    %7478 = vmatprep.subr.mxu0 0.0
    %7479 = vmatpush1.msra.mxu0 0.0
    %7480 = vmatprep.subr.mxu0 0.0
    %7481 = vmatpush1.msra.mxu0 0.0
    %7482 = vmatprep.subr.mxu0 0.0
    %7483 = vmatpush1.msra.mxu0 0.0
    %7484 = vmatprep.subr.mxu0 0.0
    %7485 = vmatpush1.msra.mxu0 0.0
    %7486 = vmatprep.subr.mxu0 0.0
    %7487 = vmatpush1.msra.mxu0 0.0
    %7488 = vmatprep.subr.mxu0 0.0
    %7489 = vmatpush1.msra.mxu0 0.0
    %7490 = vmatprep.subr.mxu0 0.0
    %7491 = vmatpush1.msra.mxu0 0.0
    %7492 = vmatprep.subr.mxu0 0.0
    %7493 = vmatpush1.msra.mxu0 0.0
    %7494 = vmatprep.subr.mxu0 0.0
    %7495 = vmatpush1.msra.mxu0 0.0
    %7496 = vmatprep.subr.mxu0 0.0
    %7497 = vmatpush1.msra.mxu0 0.0
    %7498 = vmatprep.subr.mxu0 0.0
    %7499 = vmatpush1.msra.mxu0 0.0
    %7500 = vmatprep.subr.mxu0 0.0
    %7501 = vmatpush1.msra.mxu0 0.0
    %7502 = vmatprep.subr.mxu0 0.0
    %7503 = vmatpush1.msra.mxu0 0.0
    %7504 = vmatprep.subr.mxu0 0.0
    %7505 = vmatpush1.msra.mxu0 0.0
    %7506 = vmatprep.subr.mxu0 0.0
    %7507 = vmatpush1.msra.mxu0 0.0
    %7508 = vmatprep.subr.mxu0 0.0
    %7509 = vmatpush1.msra.mxu0 0.0
    %7510 = vmatprep.subr.mxu0 0.0
    %7511 = vmatpush1.msra.mxu0 0.0
    %7512 = vmatprep.subr.mxu0 0.0
    %7513 = vmatpush1.msra.mxu0 0.0
    %7514 = vmatprep.subr.mxu0 0.0
    %7515 = vmatpush1.msra.mxu0 0.0
    %7516 = vmatprep.subr.mxu0 0.0
    %7517 = vmatpush1.msra.mxu0 0.0
    %7518 = vmatprep.subr.mxu0 0.0
    %7519 = vmatpush1.msra.mxu0 0.0
    %7520 = vmatprep.subr.mxu0 0.0
    %7521 = vmatpush1.msra.mxu0 0.0
    %7522 = vmatprep.subr.mxu0 0.0
    %7523 = vmatpush1.msra.mxu0 0.0
    %7524 = vmatprep.subr.mxu0 0.0
    %7525 = vmatpush1.msra.mxu0 0.0
    %7526 = vmatprep.subr.mxu0 0.0
    %7527 = vmatpush1.msra.mxu0 0.0
    %7528 = vmatprep.subr.mxu0 0.0
    %7529 = vmatpush1.msra.mxu0 0.0
    %7530 = vmatprep.subr.mxu0 0.0
    %7531 = vmatpush1.msra.mxu0 0.0
    %7532 = vmatprep.subr.mxu0 0.0
    %7533 = vmatpush1.msra.mxu0 0.0
    %7534 = vmatprep.subr.mxu0 0.0
    %7535 = vmatpush1.msra.mxu0 0.0
    %7536 = vmatprep.subr.mxu0 0.0
    %7537 = vmatpush1.msra.mxu0 0.0
    %7538 = vmatprep.mubr.f32.mxu0 0.0
    %7539 = vmatmul.mubr.f32.gmra.mrb[0].mxu0 %v3697
    %v7540 = vpop.f32.mrb[0].mxu0
    %v7541 = vadd.f32 0.0, %v7540
    %v7542 = vpop.f32.mrb[0].mxu0
    %7543 = vmatprep.mubr.f32.mxu0 0.0
    %7544 = vmatmul.mubr.f32.gmra.mrb[0].mxu0 %v3700
    %v7545 = vpop.f32.mrb[0].mxu0
    %v7546 = vadd.f32 0.0, %v7545
    %v7547 = vpop.f32.mrb[0].mxu0
    %7548 = vmatprep.mubr.f32.mxu0 0.0
    %7549 = vmatmul.mubr.f32.gmra.mrb[0].mxu0 %v3703
    %v7550 = vpop.f32.mrb[0].mxu0
    %v7551 = vadd.f32 0.0, %v7550
    %v7552 = vpop.f32.mrb[0].mxu0
    %7553 = vmatprep.mubr.f32.mxu0 0.0
    %7554 = vmatmul.mubr.f32.gmra.mrb[0].mxu0 %v3706
    %v7555 = vpop.f32.mrb[0].mxu0
    %v7556 = vadd.f32 0.0, %v7555
    %v7557 = vpop.f32.mrb[0].mxu0
    %7558 = vmatprep.mubr.f32.mxu0 0.0
    %7559 = vmatmul.mubr.f32.gmra.mrb[0].mxu0 %v3709
    %v7560 = vpop.f32.mrb[0].mxu0
    %v7561 = vadd.f32 0.0, %v7560
    %v7562 = vpop.f32.mrb[0].mxu0
    %7563 = vdwg.mxu0
    %s7564 = scalar_lea.vmem [#allocation2], 216
    %v7565 = vld [vmem:[%s7564] sm:$0xff]
    %s7566 = scalar_lea.vmem [#allocation2], 224
    %v7567 = vld [vmem:[%s7566] sm:$0xff]
    %v7570 = vrot.slane %v7546, 4
    %v7571 = vrot.slane %v7551, 4
    %v7572 = vsel %vm525, %v7570, %v7571
    %v7573 = vsel %vm531, %v7572, 0
    %v7575 = vsel %vm531, %v7571, 0
    %7577 = vmatprep.subr.mxu0 0.0
    %7578 = vmatpush1.msra.mxu0 %v7567
    %7579 = vmatprep.subr.mxu0 0.0
    %7580 = vmatpush1.msra.mxu0 0.0
    %7581 = vmatprep.subr.mxu0 0.0
    %7582 = vmatpush1.msra.mxu0 0.0
    %7583 = vmatprep.subr.mxu0 0.0
    %7584 = vmatpush1.msra.mxu0 0.0
    %7585 = vmatprep.subr.mxu0 0.0
    %7586 = vmatpush1.msra.mxu0 0.0
    %7587 = vmatprep.subr.mxu0 0.0
    %7588 = vmatpush1.msra.mxu0 0.0
    %7589 = vmatprep.subr.mxu0 0.0
    %7590 = vmatpush1.msra.mxu0 0.0
    %7591 = vmatprep.subr.mxu0 0.0
    %7592 = vmatpush1.msra.mxu0 0.0
    %7593 = vmatprep.subr.mxu0 0.0
    %7594 = vmatpush1.msra.mxu0 0.0
    %7595 = vmatprep.subr.mxu0 0.0
    %7596 = vmatpush1.msra.mxu0 0.0
    %7597 = vmatprep.subr.mxu0 0.0
    %7598 = vmatpush1.msra.mxu0 0.0
    %7599 = vmatprep.subr.mxu0 0.0
    %7600 = vmatpush1.msra.mxu0 0.0
    %7601 = vmatprep.subr.mxu0 0.0
    %7602 = vmatpush1.msra.mxu0 0.0
    %7603 = vmatprep.subr.mxu0 0.0
    %7604 = vmatpush1.msra.mxu0 0.0
    %7605 = vmatprep.subr.mxu0 0.0
    %7606 = vmatpush1.msra.mxu0 0.0
    %7607 = vmatprep.subr.mxu0 0.0
    %7608 = vmatpush1.msra.mxu0 0.0
    %7609 = vmatprep.subr.mxu0 0.0
    %7610 = vmatpush1.msra.mxu0 0.0
    %7611 = vmatprep.subr.mxu0 0.0
    %7612 = vmatpush1.msra.mxu0 0.0
    %7613 = vmatprep.subr.mxu0 0.0
    %7614 = vmatpush1.msra.mxu0 0.0
    %7615 = vmatprep.subr.mxu0 0.0
    %7616 = vmatpush1.msra.mxu0 0.0
    %7617 = vmatprep.subr.mxu0 0.0
    %7618 = vmatpush1.msra.mxu0 0.0
    %7619 = vmatprep.subr.mxu0 0.0
    %7620 = vmatpush1.msra.mxu0 0.0
    %7621 = vmatprep.subr.mxu0 0.0
    %7622 = vmatpush1.msra.mxu0 0.0
    %7623 = vmatprep.subr.mxu0 0.0
    %7624 = vmatpush1.msra.mxu0 0.0
    %7625 = vmatprep.subr.mxu0 0.0
    %7626 = vmatpush1.msra.mxu0 0.0
    %7627 = vmatprep.subr.mxu0 0.0
    %7628 = vmatpush1.msra.mxu0 0.0
    %7629 = vmatprep.subr.mxu0 0.0
    %7630 = vmatpush1.msra.mxu0 0.0
    %7631 = vmatprep.subr.mxu0 0.0
    %7632 = vmatpush1.msra.mxu0 0.0
    %7633 = vmatprep.subr.mxu0 0.0
    %7634 = vmatpush1.msra.mxu0 0.0
    %7635 = vmatprep.subr.mxu0 0.0
    %7636 = vmatpush1.msra.mxu0 0.0
    %7637 = vmatprep.subr.mxu0 0.0
    %7638 = vmatpush1.msra.mxu0 0.0
    %7639 = vmatprep.subr.mxu0 0.0
    %7640 = vmatpush1.msra.mxu0 0.0
    %7641 = vmatprep.mubr.f32.mxu0 0.0
    %7642 = vmatmul.mubr.f32.gmra.mrb[0].mxu0 %v7573
    %v7643 = vpop.f32.mrb[0].mxu0
    %v7644 = vadd.f32 0.0, %v7643
    %v7645 = vpop.f32.mrb[0].mxu0
    %7646 = vmatprep.mubr.f32.mxu0 0.0
    %7647 = vmatmul.mubr.f32.gmra.mrb[0].mxu0 %v7575
    %v7648 = vpop.f32.mrb[0].mxu0
    %v7649 = vadd.f32 0.0, %v7648
    %v7650 = vpop.f32.mrb[0].mxu0
    %7651 = vdwg.mxu0
    %v7653 = vsel %vm531, %v7541, 0
    %v7655 = vsel %vm531, %v7546, 0
    %7657 = vmatprep.subr.mxu0 0.0
    %7658 = vmatpush1.msra.mxu0 %v7565
    %7659 = vmatprep.subr.mxu0 0.0
    %7660 = vmatpush1.msra.mxu0 0.0
    %7661 = vmatprep.subr.mxu0 0.0
    %7662 = vmatpush1.msra.mxu0 0.0
    %7663 = vmatprep.subr.mxu0 0.0
    %7664 = vmatpush1.msra.mxu0 0.0
    %7665 = vmatprep.subr.mxu0 0.0
    %7666 = vmatpush1.msra.mxu0 0.0
    %7667 = vmatprep.subr.mxu0 0.0
    %7668 = vmatpush1.msra.mxu0 0.0
    %7669 = vmatprep.subr.mxu0 0.0
    %7670 = vmatpush1.msra.mxu0 0.0
    %7671 = vmatprep.subr.mxu0 0.0
    %7672 = vmatpush1.msra.mxu0 0.0
    %7673 = vmatprep.subr.mxu0 0.0
    %7674 = vmatpush1.msra.mxu0 0.0
    %7675 = vmatprep.subr.mxu0 0.0
    %7676 = vmatpush1.msra.mxu0 0.0
    %7677 = vmatprep.subr.mxu0 0.0
    %7678 = vmatpush1.msra.mxu0 0.0
    %7679 = vmatprep.subr.mxu0 0.0
    %7680 = vmatpush1.msra.mxu0 0.0
    %7681 = vmatprep.subr.mxu0 0.0
    %7682 = vmatpush1.msra.mxu0 0.0
    %7683 = vmatprep.subr.mxu0 0.0
    %7684 = vmatpush1.msra.mxu0 0.0
    %7685 = vmatprep.subr.mxu0 0.0
    %7686 = vmatpush1.msra.mxu0 0.0
    %7687 = vmatprep.subr.mxu0 0.0
    %7688 = vmatpush1.msra.mxu0 0.0
    %7689 = vmatprep.subr.mxu0 0.0
    %7690 = vmatpush1.msra.mxu0 0.0
    %7691 = vmatprep.subr.mxu0 0.0
    %7692 = vmatpush1.msra.mxu0 0.0
    %7693 = vmatprep.subr.mxu0 0.0
    %7694 = vmatpush1.msra.mxu0 0.0
    %7695 = vmatprep.subr.mxu0 0.0
    %7696 = vmatpush1.msra.mxu0 0.0
    %7697 = vmatprep.subr.mxu0 0.0
    %7698 = vmatpush1.msra.mxu0 0.0
    %7699 = vmatprep.subr.mxu0 0.0
    %7700 = vmatpush1.msra.mxu0 0.0
    %7701 = vmatprep.subr.mxu0 0.0
    %7702 = vmatpush1.msra.mxu0 0.0
    %7703 = vmatprep.subr.mxu0 0.0
    %7704 = vmatpush1.msra.mxu0 0.0
    %7705 = vmatprep.subr.mxu0 0.0
    %7706 = vmatpush1.msra.mxu0 0.0
    %7707 = vmatprep.subr.mxu0 0.0
    %7708 = vmatpush1.msra.mxu0 0.0
    %7709 = vmatprep.subr.mxu0 0.0
    %7710 = vmatpush1.msra.mxu0 0.0
    %7711 = vmatprep.subr.mxu0 0.0
    %7712 = vmatpush1.msra.mxu0 0.0
    %7713 = vmatprep.subr.mxu0 0.0
    %7714 = vmatpush1.msra.mxu0 0.0
    %7715 = vmatprep.subr.mxu0 0.0
    %7716 = vmatpush1.msra.mxu0 0.0
    %7717 = vmatprep.subr.mxu0 0.0
    %7718 = vmatpush1.msra.mxu0 0.0
    %7719 = vmatprep.subr.mxu0 0.0
    %7720 = vmatpush1.msra.mxu0 0.0
    %7721 = vmatprep.mubr.f32.mxu0 0.0
    %7722 = vmatmul.mubr.f32.gmra.mrb[0].mxu0 %v7653
    %v7723 = vpop.f32.mrb[0].mxu0
    %v7724 = vadd.f32 %v7644, %v7723
    %v7725 = vpop.f32.mrb[0].mxu0
    %7726 = vmatprep.mubr.f32.mxu0 0.0
    %7727 = vmatmul.mubr.f32.gmra.mrb[0].mxu0 %v7655
    %v7728 = vpop.f32.mrb[0].mxu0
    %v7729 = vadd.f32 %v7649, %v7728
    %v7730 = vpop.f32.mrb[0].mxu0
    %7731 = vdwg.mxu0
    %s7732 = scalar_lea.vmem [#allocation2], 232
    %v7733 = vld [vmem:[%s7732] sm:$0xff]
    %v7735 = vsel %vm531, %v7556, 0
    %v7738 = vsel %vm531, %v7561, 0
    %7740 = vmatprep.subr.mxu0 0.0
    %7741 = vmatpush1.msra.mxu0 %v7733
    %7742 = vmatprep.subr.mxu0 0.0
    %7743 = vmatpush1.msra.mxu0 0.0
    %7744 = vmatprep.subr.mxu0 0.0
    %7745 = vmatpush1.msra.mxu0 0.0
    %7746 = vmatprep.subr.mxu0 0.0
    %7747 = vmatpush1.msra.mxu0 0.0
    %7748 = vmatprep.subr.mxu0 0.0
    %7749 = vmatpush1.msra.mxu0 0.0
    %7750 = vmatprep.subr.mxu0 0.0
    %7751 = vmatpush1.msra.mxu0 0.0
    %7752 = vmatprep.subr.mxu0 0.0
    %7753 = vmatpush1.msra.mxu0 0.0
    %7754 = vmatprep.subr.mxu0 0.0
    %7755 = vmatpush1.msra.mxu0 0.0
    %7756 = vmatprep.subr.mxu0 0.0
    %7757 = vmatpush1.msra.mxu0 0.0
    %7758 = vmatprep.subr.mxu0 0.0
    %7759 = vmatpush1.msra.mxu0 0.0
    %7760 = vmatprep.subr.mxu0 0.0
    %7761 = vmatpush1.msra.mxu0 0.0
    %7762 = vmatprep.subr.mxu0 0.0
    %7763 = vmatpush1.msra.mxu0 0.0
    %7764 = vmatprep.subr.mxu0 0.0
    %7765 = vmatpush1.msra.mxu0 0.0
    %7766 = vmatprep.subr.mxu0 0.0
    %7767 = vmatpush1.msra.mxu0 0.0
    %7768 = vmatprep.subr.mxu0 0.0
    %7769 = vmatpush1.msra.mxu0 0.0
    %7770 = vmatprep.subr.mxu0 0.0
    %7771 = vmatpush1.msra.mxu0 0.0
    %7772 = vmatprep.subr.mxu0 0.0
    %7773 = vmatpush1.msra.mxu0 0.0
    %7774 = vmatprep.subr.mxu0 0.0
    %7775 = vmatpush1.msra.mxu0 0.0
    %7776 = vmatprep.subr.mxu0 0.0
    %7777 = vmatpush1.msra.mxu0 0.0
    %7778 = vmatprep.subr.mxu0 0.0
    %7779 = vmatpush1.msra.mxu0 0.0
    %7780 = vmatprep.subr.mxu0 0.0
    %7781 = vmatpush1.msra.mxu0 0.0
    %7782 = vmatprep.subr.mxu0 0.0
    %7783 = vmatpush1.msra.mxu0 0.0
    %7784 = vmatprep.subr.mxu0 0.0
    %7785 = vmatpush1.msra.mxu0 0.0
    %7786 = vmatprep.subr.mxu0 0.0
    %7787 = vmatpush1.msra.mxu0 0.0
    %7788 = vmatprep.subr.mxu0 0.0
    %7789 = vmatpush1.msra.mxu0 0.0
    %7790 = vmatprep.subr.mxu0 0.0
    %7791 = vmatpush1.msra.mxu0 0.0
    %7792 = vmatprep.subr.mxu0 0.0
    %7793 = vmatpush1.msra.mxu0 0.0
    %7794 = vmatprep.subr.mxu0 0.0
    %7795 = vmatpush1.msra.mxu0 0.0
    %7796 = vmatprep.subr.mxu0 0.0
    %7797 = vmatpush1.msra.mxu0 0.0
    %7798 = vmatprep.subr.mxu0 0.0
    %7799 = vmatpush1.msra.mxu0 0.0
    %7800 = vmatprep.subr.mxu0 0.0
    %7801 = vmatpush1.msra.mxu0 0.0
    %7802 = vmatprep.subr.mxu0 0.0
    %7803 = vmatpush1.msra.mxu0 0.0
    %7804 = vmatprep.mubr.f32.mxu0 0.0
    %7805 = vmatmul.mubr.f32.gmra.mrb[0].mxu0 %v7735
    %v7806 = vpop.f32.mrb[0].mxu0
    %v7807 = vadd.f32 0.0, %v7806
    %v7808 = vpop.f32.mrb[0].mxu0
    %7809 = vmatprep.mubr.f32.mxu0 0.0
    %7810 = vmatmul.mubr.f32.gmra.mrb[0].mxu0 %v7738
    %v7811 = vpop.f32.mrb[0].mxu0
    %v7812 = vadd.f32 0.0, %v7811
    %v7813 = vpop.f32.mrb[0].mxu0
    %7814 = vdwg.mxu0
    %v7815 = vadd.f32 %v7724, %v7807
    %v7816 = vadd.f32 %v7729, %v7812
    %s7817 = scalar_lea.vmem [#allocation5], 9
    %v7818 = vld [vmem:[%s7817] sm:$0x1]
    %v7820 = vlaneseq
    %v7821 = vshrl.u32 %v7820, 7
    %v7822 = vsub.s32 0, %v7821
    %v7823 = vrot.slane %v7818, %v7822
    %v7825 = vadd.f32 %v7815, %v7823
    %v7826 = vadd.f32 %v7816, %v7823
    %vm7827 = vcmp.ge.f32.partialorder %v7825, 0.0
    %vm7828 = vcmp.ge.f32.partialorder %v7826, 0.0
    %v7829 = vmul.f32 %v7825, 0.01
    %v7830 = vmul.f32 %v7826, 0.01
    %v7831 = vsel %vm7827, %v7825, %v7829
    %v7832 = vsel %vm7828, %v7826, %v7830
    %v7834 = vsel %vm525, %v7832, 0
    %7836 = vmatprep.subr.mxu0 0.0
    %7837 = vmatpush1.msra.mxu0 %v7831
    %7838 = vmatprep.subr.mxu0 0.0
    %7839 = vmatpush1.msra.mxu0 %v7834
    %7840 = vmatprep.subr.mxu0 0.0
    %7841 = vmatpush1.msra.mxu0 0.0
    %7842 = vmatprep.subr.mxu0 0.0
    %7843 = vmatpush1.msra.mxu0 0.0
    %7844 = vmatprep.subr.mxu0 0.0
    %7845 = vmatpush1.msra.mxu0 0.0
    %7846 = vmatprep.subr.mxu0 0.0
    %7847 = vmatpush1.msra.mxu0 0.0
    %7848 = vmatprep.subr.mxu0 0.0
    %7849 = vmatpush1.msra.mxu0 0.0
    %7850 = vmatprep.subr.mxu0 0.0
    %7851 = vmatpush1.msra.mxu0 0.0
    %7852 = vmatprep.subr.mxu0 0.0
    %7853 = vmatpush1.msra.mxu0 0.0
    %7854 = vmatprep.subr.mxu0 0.0
    %7855 = vmatpush1.msra.mxu0 0.0
    %7856 = vmatprep.subr.mxu0 0.0
    %7857 = vmatpush1.msra.mxu0 0.0
    %7858 = vmatprep.subr.mxu0 0.0
    %7859 = vmatpush1.msra.mxu0 0.0
    %7860 = vmatprep.subr.mxu0 0.0
    %7861 = vmatpush1.msra.mxu0 0.0
    %7862 = vmatprep.subr.mxu0 0.0
    %7863 = vmatpush1.msra.mxu0 0.0
    %7864 = vmatprep.subr.mxu0 0.0
    %7865 = vmatpush1.msra.mxu0 0.0
    %7866 = vmatprep.subr.mxu0 0.0
    %7867 = vmatpush1.msra.mxu0 0.0
    %7868 = vmatprep.subr.mxu0 0.0
    %7869 = vmatpush1.msra.mxu0 0.0
    %7870 = vmatprep.subr.mxu0 0.0
    %7871 = vmatpush1.msra.mxu0 0.0
    %7872 = vmatprep.subr.mxu0 0.0
    %7873 = vmatpush1.msra.mxu0 0.0
    %7874 = vmatprep.subr.mxu0 0.0
    %7875 = vmatpush1.msra.mxu0 0.0
    %7876 = vmatprep.subr.mxu0 0.0
    %7877 = vmatpush1.msra.mxu0 0.0
    %7878 = vmatprep.subr.mxu0 0.0
    %7879 = vmatpush1.msra.mxu0 0.0
    %7880 = vmatprep.subr.mxu0 0.0
    %7881 = vmatpush1.msra.mxu0 0.0
    %7882 = vmatprep.subr.mxu0 0.0
    %7883 = vmatpush1.msra.mxu0 0.0
    %7884 = vmatprep.subr.mxu0 0.0
    %7885 = vmatpush1.msra.mxu0 0.0
    %7886 = vmatprep.subr.mxu0 0.0
    %7887 = vmatpush1.msra.mxu0 0.0
    %7888 = vmatprep.subr.mxu0 0.0
    %7889 = vmatpush1.msra.mxu0 0.0
    %7890 = vmatprep.subr.mxu0 0.0
    %7891 = vmatpush1.msra.mxu0 0.0
    %7892 = vmatprep.subr.mxu0 0.0
    %7893 = vmatpush1.msra.mxu0 0.0
    %7894 = vmatprep.subr.mxu0 0.0
    %7895 = vmatpush1.msra.mxu0 0.0
    %7896 = vmatprep.subr.mxu0 0.0
    %7897 = vmatpush1.msra.mxu0 0.0
    %7898 = vmatprep.subr.mxu0 0.0
    %7899 = vmatpush1.msra.mxu0 0.0
    %7900 = vmatprep.mubr.f32.mxu0 0.0
    %7901 = vmatmul.mubr.f32.gmra.mrb[0].mxu0 %v4072
    %v7902 = vpop.f32.mrb[0].mxu0
    %v7903 = vadd.f32 0.0, %v7902
    %v7904 = vpop.f32.mrb[0].mxu0
    %7905 = vmatprep.mubr.f32.mxu0 0.0
    %7906 = vmatmul.mubr.f32.gmra.mrb[0].mxu0 %v4075
    %v7907 = vpop.f32.mrb[0].mxu0
    %v7908 = vadd.f32 0.0, %v7907
    %v7909 = vpop.f32.mrb[0].mxu0
    %7910 = vmatprep.mubr.f32.mxu0 0.0
    %7911 = vmatmul.mubr.f32.gmra.mrb[0].mxu0 %v4078
    %v7912 = vpop.f32.mrb[0].mxu0
    %v7913 = vadd.f32 0.0, %v7912
    %v7914 = vpop.f32.mrb[0].mxu0
    %7915 = vdwg.mxu0
    %s7916 = scalar_lea.vmem [#allocation7], 864
    %v7917 = vld [vmem:[%s7916] sm:$0xff]
    %v7918 = vld [vmem:[%s7916 + $0x8] sm:$0xff]
    %v7919 = vld [vmem:[%s7916 + $0x10] sm:$0xff]
    %v7920 = vld [vmem:[%s7916 + $0x18] sm:$0xff]
    %s7921 = scalar_lea.vmem [#allocation7], 896
    %v7922 = vld [vmem:[%s7921] sm:$0xff]
    %v7923 = vld [vmem:[%s7921 + $0x8] sm:$0xff]
    %v7924 = vld [vmem:[%s7921 + $0x10] sm:$0xff]
    %v7925 = vld [vmem:[%s7921 + $0x18] sm:$0xff]
    %v7927 = vsel %vm226, %v7908, 0
    %7929 = vmatprep.subr.mxu0 0.0
    %7930 = vmatpush1.msra.mxu0 %v7922
    %7931 = vmatprep.subr.mxu0 0.0
    %7932 = vmatpush1.msra.mxu0 %v7923
    %7933 = vmatprep.subr.mxu0 0.0
    %7934 = vmatpush1.msra.mxu0 %v7924
    %7935 = vmatprep.subr.mxu0 0.0
    %7936 = vmatpush1.msra.mxu0 %v7925
    %7937 = vmatprep.subr.mxu0 0.0
    %7938 = vmatpush1.msra.mxu0 0.0
    %7939 = vmatprep.subr.mxu0 0.0
    %7940 = vmatpush1.msra.mxu0 0.0
    %7941 = vmatprep.subr.mxu0 0.0
    %7942 = vmatpush1.msra.mxu0 0.0
    %7943 = vmatprep.subr.mxu0 0.0
    %7944 = vmatpush1.msra.mxu0 0.0
    %7945 = vmatprep.subr.mxu0 0.0
    %7946 = vmatpush1.msra.mxu0 0.0
    %7947 = vmatprep.subr.mxu0 0.0
    %7948 = vmatpush1.msra.mxu0 0.0
    %7949 = vmatprep.subr.mxu0 0.0
    %7950 = vmatpush1.msra.mxu0 0.0
    %7951 = vmatprep.subr.mxu0 0.0
    %7952 = vmatpush1.msra.mxu0 0.0
    %7953 = vmatprep.subr.mxu0 0.0
    %7954 = vmatpush1.msra.mxu0 0.0
    %7955 = vmatprep.subr.mxu0 0.0
    %7956 = vmatpush1.msra.mxu0 0.0
    %7957 = vmatprep.subr.mxu0 0.0
    %7958 = vmatpush1.msra.mxu0 0.0
    %7959 = vmatprep.subr.mxu0 0.0
    %7960 = vmatpush1.msra.mxu0 0.0
    %7961 = vmatprep.subr.mxu0 0.0
    %7962 = vmatpush1.msra.mxu0 0.0
    %7963 = vmatprep.subr.mxu0 0.0
    %7964 = vmatpush1.msra.mxu0 0.0
    %7965 = vmatprep.subr.mxu0 0.0
    %7966 = vmatpush1.msra.mxu0 0.0
    %7967 = vmatprep.subr.mxu0 0.0
    %7968 = vmatpush1.msra.mxu0 0.0
    %7969 = vmatprep.subr.mxu0 0.0
    %7970 = vmatpush1.msra.mxu0 0.0
    %7971 = vmatprep.subr.mxu0 0.0
    %7972 = vmatpush1.msra.mxu0 0.0
    %7973 = vmatprep.subr.mxu0 0.0
    %7974 = vmatpush1.msra.mxu0 0.0
    %7975 = vmatprep.subr.mxu0 0.0
    %7976 = vmatpush1.msra.mxu0 0.0
    %7977 = vmatprep.subr.mxu0 0.0
    %7978 = vmatpush1.msra.mxu0 0.0
    %7979 = vmatprep.subr.mxu0 0.0
    %7980 = vmatpush1.msra.mxu0 0.0
    %7981 = vmatprep.subr.mxu0 0.0
    %7982 = vmatpush1.msra.mxu0 0.0
    %7983 = vmatprep.subr.mxu0 0.0
    %7984 = vmatpush1.msra.mxu0 0.0
    %7985 = vmatprep.subr.mxu0 0.0
    %7986 = vmatpush1.msra.mxu0 0.0
    %7987 = vmatprep.subr.mxu0 0.0
    %7988 = vmatpush1.msra.mxu0 0.0
    %7989 = vmatprep.subr.mxu0 0.0
    %7990 = vmatpush1.msra.mxu0 0.0
    %7991 = vmatprep.subr.mxu0 0.0
    %7992 = vmatpush1.msra.mxu0 0.0
    %7993 = vmatprep.mubr.f32.mxu0 0.0
    %7994 = vmatmul.mubr.f32.gmra.mrb[0].mxu0 %v7927
    %v7995 = vpop.f32.mrb[0].mxu0
    %v7996 = vadd.f32 0.0, %v7995
    %v7997 = vpop.f32.mrb[0].mxu0
    %7998 = vdwg.mxu0
    %v8000 = vsel %vm226, %v7903, 0
    %8002 = vmatprep.subr.mxu0 0.0
    %8003 = vmatpush1.msra.mxu0 %v7917
    %8004 = vmatprep.subr.mxu0 0.0
    %8005 = vmatpush1.msra.mxu0 %v7918
    %8006 = vmatprep.subr.mxu0 0.0
    %8007 = vmatpush1.msra.mxu0 %v7919
    %8008 = vmatprep.subr.mxu0 0.0
    %8009 = vmatpush1.msra.mxu0 %v7920
    %8010 = vmatprep.subr.mxu0 0.0
    %8011 = vmatpush1.msra.mxu0 0.0
    %8012 = vmatprep.subr.mxu0 0.0
    %8013 = vmatpush1.msra.mxu0 0.0
    %8014 = vmatprep.subr.mxu0 0.0
    %8015 = vmatpush1.msra.mxu0 0.0
    %8016 = vmatprep.subr.mxu0 0.0
    %8017 = vmatpush1.msra.mxu0 0.0
    %8018 = vmatprep.subr.mxu0 0.0
    %8019 = vmatpush1.msra.mxu0 0.0
    %8020 = vmatprep.subr.mxu0 0.0
    %8021 = vmatpush1.msra.mxu0 0.0
    %8022 = vmatprep.subr.mxu0 0.0
    %8023 = vmatpush1.msra.mxu0 0.0
    %8024 = vmatprep.subr.mxu0 0.0
    %8025 = vmatpush1.msra.mxu0 0.0
    %8026 = vmatprep.subr.mxu0 0.0
    %8027 = vmatpush1.msra.mxu0 0.0
    %8028 = vmatprep.subr.mxu0 0.0
    %8029 = vmatpush1.msra.mxu0 0.0
    %8030 = vmatprep.subr.mxu0 0.0
    %8031 = vmatpush1.msra.mxu0 0.0
    %8032 = vmatprep.subr.mxu0 0.0
    %8033 = vmatpush1.msra.mxu0 0.0
    %8034 = vmatprep.subr.mxu0 0.0
    %8035 = vmatpush1.msra.mxu0 0.0
    %8036 = vmatprep.subr.mxu0 0.0
    %8037 = vmatpush1.msra.mxu0 0.0
    %8038 = vmatprep.subr.mxu0 0.0
    %8039 = vmatpush1.msra.mxu0 0.0
    %8040 = vmatprep.subr.mxu0 0.0
    %8041 = vmatpush1.msra.mxu0 0.0
    %8042 = vmatprep.subr.mxu0 0.0
    %8043 = vmatpush1.msra.mxu0 0.0
    %8044 = vmatprep.subr.mxu0 0.0
    %8045 = vmatpush1.msra.mxu0 0.0
    %8046 = vmatprep.subr.mxu0 0.0
    %8047 = vmatpush1.msra.mxu0 0.0
    %8048 = vmatprep.subr.mxu0 0.0
    %8049 = vmatpush1.msra.mxu0 0.0
    %8050 = vmatprep.subr.mxu0 0.0
    %8051 = vmatpush1.msra.mxu0 0.0
    %8052 = vmatprep.subr.mxu0 0.0
    %8053 = vmatpush1.msra.mxu0 0.0
    %8054 = vmatprep.subr.mxu0 0.0
    %8055 = vmatpush1.msra.mxu0 0.0
    %8056 = vmatprep.subr.mxu0 0.0
    %8057 = vmatpush1.msra.mxu0 0.0
    %8058 = vmatprep.subr.mxu0 0.0
    %8059 = vmatpush1.msra.mxu0 0.0
    %8060 = vmatprep.subr.mxu0 0.0
    %8061 = vmatpush1.msra.mxu0 0.0
    %8062 = vmatprep.subr.mxu0 0.0
    %8063 = vmatpush1.msra.mxu0 0.0
    %8064 = vmatprep.subr.mxu0 0.0
    %8065 = vmatpush1.msra.mxu0 0.0
    %8066 = vmatprep.mubr.f32.mxu0 0.0
    %8067 = vmatmul.mubr.f32.gmra.mrb[0].mxu0 %v8000
    %v8068 = vpop.f32.mrb[0].mxu0
    %v8069 = vadd.f32 %v7996, %v8068
    %v8070 = vpop.f32.mrb[0].mxu0
    %8071 = vdwg.mxu0
    %s8072 = scalar_lea.vmem [#allocation7], 928
    %v8073 = vld [vmem:[%s8072] sm:$0xff]
    %v8074 = vld [vmem:[%s8072 + $0x8] sm:$0xff]
    %v8075 = vld [vmem:[%s8072 + $0x10] sm:$0xff]
    %v8076 = vld [vmem:[%s8072 + $0x18] sm:$0xff]
    %v8078 = vsel %vm226, %v7913, 0
    %8080 = vmatprep.subr.mxu0 0.0
    %8081 = vmatpush1.msra.mxu0 %v8073
    %8082 = vmatprep.subr.mxu0 0.0
    %8083 = vmatpush1.msra.mxu0 %v8074
    %8084 = vmatprep.subr.mxu0 0.0
    %8085 = vmatpush1.msra.mxu0 %v8075
    %8086 = vmatprep.subr.mxu0 0.0
    %8087 = vmatpush1.msra.mxu0 %v8076
    %8088 = vmatprep.subr.mxu0 0.0
    %8089 = vmatpush1.msra.mxu0 0.0
    %8090 = vmatprep.subr.mxu0 0.0
    %8091 = vmatpush1.msra.mxu0 0.0
    %8092 = vmatprep.subr.mxu0 0.0
    %8093 = vmatpush1.msra.mxu0 0.0
    %8094 = vmatprep.subr.mxu0 0.0
    %8095 = vmatpush1.msra.mxu0 0.0
    %8096 = vmatprep.subr.mxu0 0.0
    %8097 = vmatpush1.msra.mxu0 0.0
    %8098 = vmatprep.subr.mxu0 0.0
    %8099 = vmatpush1.msra.mxu0 0.0
    %8100 = vmatprep.subr.mxu0 0.0
    %8101 = vmatpush1.msra.mxu0 0.0
    %8102 = vmatprep.subr.mxu0 0.0
    %8103 = vmatpush1.msra.mxu0 0.0
    %8104 = vmatprep.subr.mxu0 0.0
    %8105 = vmatpush1.msra.mxu0 0.0
    %8106 = vmatprep.subr.mxu0 0.0
    %8107 = vmatpush1.msra.mxu0 0.0
    %8108 = vmatprep.subr.mxu0 0.0
    %8109 = vmatpush1.msra.mxu0 0.0
    %8110 = vmatprep.subr.mxu0 0.0
    %8111 = vmatpush1.msra.mxu0 0.0
    %8112 = vmatprep.subr.mxu0 0.0
    %8113 = vmatpush1.msra.mxu0 0.0
    %8114 = vmatprep.subr.mxu0 0.0
    %8115 = vmatpush1.msra.mxu0 0.0
    %8116 = vmatprep.subr.mxu0 0.0
    %8117 = vmatpush1.msra.mxu0 0.0
    %8118 = vmatprep.subr.mxu0 0.0
    %8119 = vmatpush1.msra.mxu0 0.0
    %8120 = vmatprep.subr.mxu0 0.0
    %8121 = vmatpush1.msra.mxu0 0.0
    %8122 = vmatprep.subr.mxu0 0.0
    %8123 = vmatpush1.msra.mxu0 0.0
    %8124 = vmatprep.subr.mxu0 0.0
    %8125 = vmatpush1.msra.mxu0 0.0
    %8126 = vmatprep.subr.mxu0 0.0
    %8127 = vmatpush1.msra.mxu0 0.0
    %8128 = vmatprep.subr.mxu0 0.0
    %8129 = vmatpush1.msra.mxu0 0.0
    %8130 = vmatprep.subr.mxu0 0.0
    %8131 = vmatpush1.msra.mxu0 0.0
    %8132 = vmatprep.subr.mxu0 0.0
    %8133 = vmatpush1.msra.mxu0 0.0
    %8134 = vmatprep.subr.mxu0 0.0
    %8135 = vmatpush1.msra.mxu0 0.0
    %8136 = vmatprep.subr.mxu0 0.0
    %8137 = vmatpush1.msra.mxu0 0.0
    %8138 = vmatprep.subr.mxu0 0.0
    %8139 = vmatpush1.msra.mxu0 0.0
    %8140 = vmatprep.subr.mxu0 0.0
    %8141 = vmatpush1.msra.mxu0 0.0
    %8142 = vmatprep.subr.mxu0 0.0
    %8143 = vmatpush1.msra.mxu0 0.0
    %8144 = vmatprep.mubr.f32.mxu0 0.0
    %8145 = vmatmul.mubr.f32.gmra.mrb[0].mxu0 %v8078
    %v8146 = vpop.f32.mrb[0].mxu0
    %v8147 = vadd.f32 0.0, %v8146
    %v8148 = vpop.f32.mrb[0].mxu0
    %8149 = vdwg.mxu0
    %v8150 = vadd.f32 %v8069, %v8147
    %s8151 = scalar_lea.vmem [#allocation8], 9
    %v8152 = vld [vmem:[%s8151] sm:$0x1]
    %v8154 = vlaneseq
    %v8155 = vshrl.u32 %v8154, 7
    %v8156 = vsub.s32 0, %v8155
    %v8157 = vrot.slane %v8152, %v8156
    %v8159 = vadd.f32 %v8150, %v8157
    %v8160 = vtanh.pop %v8159
    %v8161 = vmul.f32 %v8160, 1.442695
    %v8162 = vpow.pop %v8161
    %v8163 = vmul.f32 %v6711, %v8162
    %8164 = vmatprep.subr.mxu0 0.0
    %8165 = vmatpush1.msra.mxu0 %v7473
    %8166 = vmatprep.subr.mxu0 0.0
    %8167 = vmatpush1.msra.mxu0 0.0
    %8168 = vmatprep.subr.mxu0 0.0
    %8169 = vmatpush1.msra.mxu0 0.0
    %8170 = vmatprep.subr.mxu0 0.0
    %8171 = vmatpush1.msra.mxu0 0.0
    %8172 = vmatprep.subr.mxu0 0.0
    %8173 = vmatpush1.msra.mxu0 0.0
    %8174 = vmatprep.subr.mxu0 0.0
    %8175 = vmatpush1.msra.mxu0 0.0
    %8176 = vmatprep.subr.mxu0 0.0
    %8177 = vmatpush1.msra.mxu0 0.0
    %8178 = vmatprep.subr.mxu0 0.0
    %8179 = vmatpush1.msra.mxu0 0.0
    %8180 = vmatprep.subr.mxu0 0.0
    %8181 = vmatpush1.msra.mxu0 0.0
    %8182 = vmatprep.subr.mxu0 0.0
    %8183 = vmatpush1.msra.mxu0 0.0
    %8184 = vmatprep.subr.mxu0 0.0
    %8185 = vmatpush1.msra.mxu0 0.0
    %8186 = vmatprep.subr.mxu0 0.0
    %8187 = vmatpush1.msra.mxu0 0.0
    %8188 = vmatprep.subr.mxu0 0.0
    %8189 = vmatpush1.msra.mxu0 0.0
    %8190 = vmatprep.subr.mxu0 0.0
    %8191 = vmatpush1.msra.mxu0 0.0
    %8192 = vmatprep.subr.mxu0 0.0
    %8193 = vmatpush1.msra.mxu0 0.0
    %8194 = vmatprep.subr.mxu0 0.0
    %8195 = vmatpush1.msra.mxu0 0.0
    %8196 = vmatprep.subr.mxu0 0.0
    %8197 = vmatpush1.msra.mxu0 0.0
    %8198 = vmatprep.subr.mxu0 0.0
    %8199 = vmatpush1.msra.mxu0 0.0
    %8200 = vmatprep.subr.mxu0 0.0
    %8201 = vmatpush1.msra.mxu0 0.0
    %8202 = vmatprep.subr.mxu0 0.0
    %8203 = vmatpush1.msra.mxu0 0.0
    %8204 = vmatprep.subr.mxu0 0.0
    %8205 = vmatpush1.msra.mxu0 0.0
    %8206 = vmatprep.subr.mxu0 0.0
    %8207 = vmatpush1.msra.mxu0 0.0
    %8208 = vmatprep.subr.mxu0 0.0
    %8209 = vmatpush1.msra.mxu0 0.0
    %8210 = vmatprep.subr.mxu0 0.0
    %8211 = vmatpush1.msra.mxu0 0.0
    %8212 = vmatprep.subr.mxu0 0.0
    %8213 = vmatpush1.msra.mxu0 0.0
    %8214 = vmatprep.subr.mxu0 0.0
    %8215 = vmatpush1.msra.mxu0 0.0
    %8216 = vmatprep.subr.mxu0 0.0
    %8217 = vmatpush1.msra.mxu0 0.0
    %8218 = vmatprep.subr.mxu0 0.0
    %8219 = vmatpush1.msra.mxu0 0.0
    %8220 = vmatprep.subr.mxu0 0.0
    %8221 = vmatpush1.msra.mxu0 0.0
    %8222 = vmatprep.subr.mxu0 0.0
    %8223 = vmatpush1.msra.mxu0 0.0
    %8224 = vmatprep.subr.mxu0 0.0
    %8225 = vmatpush1.msra.mxu0 0.0
    %8226 = vmatprep.subr.mxu0 0.0
    %8227 = vmatpush1.msra.mxu0 0.0
    %8228 = vmatprep.mubr.f32.mxu0 0.0
    %8229 = vmatmul.mubr.f32.gmra.mrb[0].mxu0 %v3697
    %v8230 = vpop.f32.mrb[0].mxu0
    %v8231 = vadd.f32 0.0, %v8230
    %v8232 = vpop.f32.mrb[0].mxu0
    %8233 = vmatprep.mubr.f32.mxu0 0.0
    %8234 = vmatmul.mubr.f32.gmra.mrb[0].mxu0 %v3700
    %v8235 = vpop.f32.mrb[0].mxu0
    %v8236 = vadd.f32 0.0, %v8235
    %v8237 = vpop.f32.mrb[0].mxu0
    %8238 = vmatprep.mubr.f32.mxu0 0.0
    %8239 = vmatmul.mubr.f32.gmra.mrb[0].mxu0 %v3703
    %v8240 = vpop.f32.mrb[0].mxu0
    %v8241 = vadd.f32 0.0, %v8240
    %v8242 = vpop.f32.mrb[0].mxu0
    %8243 = vmatprep.mubr.f32.mxu0 0.0
    %8244 = vmatmul.mubr.f32.gmra.mrb[0].mxu0 %v3706
    %v8245 = vpop.f32.mrb[0].mxu0
    %v8246 = vadd.f32 0.0, %v8245
    %v8247 = vpop.f32.mrb[0].mxu0
    %8248 = vmatprep.mubr.f32.mxu0 0.0
    %8249 = vmatmul.mubr.f32.gmra.mrb[0].mxu0 %v3709
    %v8250 = vpop.f32.mrb[0].mxu0
    %v8251 = vadd.f32 0.0, %v8250
    %v8252 = vpop.f32.mrb[0].mxu0
    %8253 = vdwg.mxu0
    %s8254 = scalar_lea.vmem [#allocation2], 264
    %v8255 = vld [vmem:[%s8254] sm:$0xff]
    %s8256 = scalar_lea.vmem [#allocation2], 272
    %v8257 = vld [vmem:[%s8256] sm:$0xff]
    %v8260 = vrot.slane %v8236, 4
    %v8261 = vrot.slane %v8241, 4
    %v8262 = vsel %vm525, %v8260, %v8261
    %v8263 = vsel %vm531, %v8262, 0
    %v8265 = vsel %vm531, %v8261, 0
    %8267 = vmatprep.subr.mxu0 0.0
    %8268 = vmatpush1.msra.mxu0 %v8257
    %8269 = vmatprep.subr.mxu0 0.0
    %8270 = vmatpush1.msra.mxu0 0.0
    %8271 = vmatprep.subr.mxu0 0.0
    %8272 = vmatpush1.msra.mxu0 0.0
    %8273 = vmatprep.subr.mxu0 0.0
    %8274 = vmatpush1.msra.mxu0 0.0
    %8275 = vmatprep.subr.mxu0 0.0
    %8276 = vmatpush1.msra.mxu0 0.0
    %8277 = vmatprep.subr.mxu0 0.0
    %8278 = vmatpush1.msra.mxu0 0.0
    %8279 = vmatprep.subr.mxu0 0.0
    %8280 = vmatpush1.msra.mxu0 0.0
    %8281 = vmatprep.subr.mxu0 0.0
    %8282 = vmatpush1.msra.mxu0 0.0
    %8283 = vmatprep.subr.mxu0 0.0
    %8284 = vmatpush1.msra.mxu0 0.0
    %8285 = vmatprep.subr.mxu0 0.0
    %8286 = vmatpush1.msra.mxu0 0.0
    %8287 = vmatprep.subr.mxu0 0.0
    %8288 = vmatpush1.msra.mxu0 0.0
    %8289 = vmatprep.subr.mxu0 0.0
    %8290 = vmatpush1.msra.mxu0 0.0
    %8291 = vmatprep.subr.mxu0 0.0
    %8292 = vmatpush1.msra.mxu0 0.0
    %8293 = vmatprep.subr.mxu0 0.0
    %8294 = vmatpush1.msra.mxu0 0.0
    %8295 = vmatprep.subr.mxu0 0.0
    %8296 = vmatpush1.msra.mxu0 0.0
    %8297 = vmatprep.subr.mxu0 0.0
    %8298 = vmatpush1.msra.mxu0 0.0
    %8299 = vmatprep.subr.mxu0 0.0
    %8300 = vmatpush1.msra.mxu0 0.0
    %8301 = vmatprep.subr.mxu0 0.0
    %8302 = vmatpush1.msra.mxu0 0.0
    %8303 = vmatprep.subr.mxu0 0.0
    %8304 = vmatpush1.msra.mxu0 0.0
    %8305 = vmatprep.subr.mxu0 0.0
    %8306 = vmatpush1.msra.mxu0 0.0
    %8307 = vmatprep.subr.mxu0 0.0
    %8308 = vmatpush1.msra.mxu0 0.0
    %8309 = vmatprep.subr.mxu0 0.0
    %8310 = vmatpush1.msra.mxu0 0.0
    %8311 = vmatprep.subr.mxu0 0.0
    %8312 = vmatpush1.msra.mxu0 0.0
    %8313 = vmatprep.subr.mxu0 0.0
    %8314 = vmatpush1.msra.mxu0 0.0
    %8315 = vmatprep.subr.mxu0 0.0
    %8316 = vmatpush1.msra.mxu0 0.0
    %8317 = vmatprep.subr.mxu0 0.0
    %8318 = vmatpush1.msra.mxu0 0.0
    %8319 = vmatprep.subr.mxu0 0.0
    %8320 = vmatpush1.msra.mxu0 0.0
    %8321 = vmatprep.subr.mxu0 0.0
    %8322 = vmatpush1.msra.mxu0 0.0
    %8323 = vmatprep.subr.mxu0 0.0
    %8324 = vmatpush1.msra.mxu0 0.0
    %8325 = vmatprep.subr.mxu0 0.0
    %8326 = vmatpush1.msra.mxu0 0.0
    %8327 = vmatprep.subr.mxu0 0.0
    %8328 = vmatpush1.msra.mxu0 0.0
    %8329 = vmatprep.subr.mxu0 0.0
    %8330 = vmatpush1.msra.mxu0 0.0
    %8331 = vmatprep.mubr.f32.mxu0 0.0
    %8332 = vmatmul.mubr.f32.gmra.mrb[0].mxu0 %v8263
    %v8333 = vpop.f32.mrb[0].mxu0
    %v8334 = vadd.f32 0.0, %v8333
    %v8335 = vpop.f32.mrb[0].mxu0
    %8336 = vmatprep.mubr.f32.mxu0 0.0
    %8337 = vmatmul.mubr.f32.gmra.mrb[0].mxu0 %v8265
    %v8338 = vpop.f32.mrb[0].mxu0
    %v8339 = vadd.f32 0.0, %v8338
    %v8340 = vpop.f32.mrb[0].mxu0
    %8341 = vdwg.mxu0
    %v8343 = vsel %vm531, %v8231, 0
    %v8345 = vsel %vm531, %v8236, 0
    %8347 = vmatprep.subr.mxu0 0.0
    %8348 = vmatpush1.msra.mxu0 %v8255
    %8349 = vmatprep.subr.mxu0 0.0
    %8350 = vmatpush1.msra.mxu0 0.0
    %8351 = vmatprep.subr.mxu0 0.0
    %8352 = vmatpush1.msra.mxu0 0.0
    %8353 = vmatprep.subr.mxu0 0.0
    %8354 = vmatpush1.msra.mxu0 0.0
    %8355 = vmatprep.subr.mxu0 0.0
    %8356 = vmatpush1.msra.mxu0 0.0
    %8357 = vmatprep.subr.mxu0 0.0
    %8358 = vmatpush1.msra.mxu0 0.0
    %8359 = vmatprep.subr.mxu0 0.0
    %8360 = vmatpush1.msra.mxu0 0.0
    %8361 = vmatprep.subr.mxu0 0.0
    %8362 = vmatpush1.msra.mxu0 0.0
    %8363 = vmatprep.subr.mxu0 0.0
    %8364 = vmatpush1.msra.mxu0 0.0
    %8365 = vmatprep.subr.mxu0 0.0
    %8366 = vmatpush1.msra.mxu0 0.0
    %8367 = vmatprep.subr.mxu0 0.0
    %8368 = vmatpush1.msra.mxu0 0.0
    %8369 = vmatprep.subr.mxu0 0.0
    %8370 = vmatpush1.msra.mxu0 0.0
    %8371 = vmatprep.subr.mxu0 0.0
    %8372 = vmatpush1.msra.mxu0 0.0
    %8373 = vmatprep.subr.mxu0 0.0
    %8374 = vmatpush1.msra.mxu0 0.0
    %8375 = vmatprep.subr.mxu0 0.0
    %8376 = vmatpush1.msra.mxu0 0.0
    %8377 = vmatprep.subr.mxu0 0.0
    %8378 = vmatpush1.msra.mxu0 0.0
    %8379 = vmatprep.subr.mxu0 0.0
    %8380 = vmatpush1.msra.mxu0 0.0
    %8381 = vmatprep.subr.mxu0 0.0
    %8382 = vmatpush1.msra.mxu0 0.0
    %8383 = vmatprep.subr.mxu0 0.0
    %8384 = vmatpush1.msra.mxu0 0.0
    %8385 = vmatprep.subr.mxu0 0.0
    %8386 = vmatpush1.msra.mxu0 0.0
    %8387 = vmatprep.subr.mxu0 0.0
    %8388 = vmatpush1.msra.mxu0 0.0
    %8389 = vmatprep.subr.mxu0 0.0
    %8390 = vmatpush1.msra.mxu0 0.0
    %8391 = vmatprep.subr.mxu0 0.0
    %8392 = vmatpush1.msra.mxu0 0.0
    %8393 = vmatprep.subr.mxu0 0.0
    %8394 = vmatpush1.msra.mxu0 0.0
    %8395 = vmatprep.subr.mxu0 0.0
    %8396 = vmatpush1.msra.mxu0 0.0
    %8397 = vmatprep.subr.mxu0 0.0
    %8398 = vmatpush1.msra.mxu0 0.0
    %8399 = vmatprep.subr.mxu0 0.0
    %8400 = vmatpush1.msra.mxu0 0.0
    %8401 = vmatprep.subr.mxu0 0.0
    %8402 = vmatpush1.msra.mxu0 0.0
    %8403 = vmatprep.subr.mxu0 0.0
    %8404 = vmatpush1.msra.mxu0 0.0
    %8405 = vmatprep.subr.mxu0 0.0
    %8406 = vmatpush1.msra.mxu0 0.0
    %8407 = vmatprep.subr.mxu0 0.0
    %8408 = vmatpush1.msra.mxu0 0.0
    %8409 = vmatprep.subr.mxu0 0.0
    %8410 = vmatpush1.msra.mxu0 0.0
    %8411 = vmatprep.mubr.f32.mxu0 0.0
    %8412 = vmatmul.mubr.f32.gmra.mrb[0].mxu0 %v8343
    %v8413 = vpop.f32.mrb[0].mxu0
    %v8414 = vadd.f32 %v8334, %v8413
    %v8415 = vpop.f32.mrb[0].mxu0
    %8416 = vmatprep.mubr.f32.mxu0 0.0
    %8417 = vmatmul.mubr.f32.gmra.mrb[0].mxu0 %v8345
    %v8418 = vpop.f32.mrb[0].mxu0
    %v8419 = vadd.f32 %v8339, %v8418
    %v8420 = vpop.f32.mrb[0].mxu0
    %8421 = vdwg.mxu0
    %s8422 = scalar_lea.vmem [#allocation2], 280
    %v8423 = vld [vmem:[%s8422] sm:$0xff]
    %v8425 = vsel %vm531, %v8246, 0
    %v8428 = vsel %vm531, %v8251, 0
    %8430 = vmatprep.subr.mxu0 0.0
    %8431 = vmatpush1.msra.mxu0 %v8423
    %8432 = vmatprep.subr.mxu0 0.0
    %8433 = vmatpush1.msra.mxu0 0.0
    %8434 = vmatprep.subr.mxu0 0.0
    %8435 = vmatpush1.msra.mxu0 0.0
    %8436 = vmatprep.subr.mxu0 0.0
    %8437 = vmatpush1.msra.mxu0 0.0
    %8438 = vmatprep.subr.mxu0 0.0
    %8439 = vmatpush1.msra.mxu0 0.0
    %8440 = vmatprep.subr.mxu0 0.0
    %8441 = vmatpush1.msra.mxu0 0.0
    %8442 = vmatprep.subr.mxu0 0.0
    %8443 = vmatpush1.msra.mxu0 0.0
    %8444 = vmatprep.subr.mxu0 0.0
    %8445 = vmatpush1.msra.mxu0 0.0
    %8446 = vmatprep.subr.mxu0 0.0
    %8447 = vmatpush1.msra.mxu0 0.0
    %8448 = vmatprep.subr.mxu0 0.0
    %8449 = vmatpush1.msra.mxu0 0.0
    %8450 = vmatprep.subr.mxu0 0.0
    %8451 = vmatpush1.msra.mxu0 0.0
    %8452 = vmatprep.subr.mxu0 0.0
    %8453 = vmatpush1.msra.mxu0 0.0
    %8454 = vmatprep.subr.mxu0 0.0
    %8455 = vmatpush1.msra.mxu0 0.0
    %8456 = vmatprep.subr.mxu0 0.0
    %8457 = vmatpush1.msra.mxu0 0.0
    %8458 = vmatprep.subr.mxu0 0.0
    %8459 = vmatpush1.msra.mxu0 0.0
    %8460 = vmatprep.subr.mxu0 0.0
    %8461 = vmatpush1.msra.mxu0 0.0
    %8462 = vmatprep.subr.mxu0 0.0
    %8463 = vmatpush1.msra.mxu0 0.0
    %8464 = vmatprep.subr.mxu0 0.0
    %8465 = vmatpush1.msra.mxu0 0.0
    %8466 = vmatprep.subr.mxu0 0.0
    %8467 = vmatpush1.msra.mxu0 0.0
    %8468 = vmatprep.subr.mxu0 0.0
    %8469 = vmatpush1.msra.mxu0 0.0
    %8470 = vmatprep.subr.mxu0 0.0
    %8471 = vmatpush1.msra.mxu0 0.0
    %8472 = vmatprep.subr.mxu0 0.0
    %8473 = vmatpush1.msra.mxu0 0.0
    %8474 = vmatprep.subr.mxu0 0.0
    %8475 = vmatpush1.msra.mxu0 0.0
    %8476 = vmatprep.subr.mxu0 0.0
    %8477 = vmatpush1.msra.mxu0 0.0
    %8478 = vmatprep.subr.mxu0 0.0
    %8479 = vmatpush1.msra.mxu0 0.0
    %8480 = vmatprep.subr.mxu0 0.0
    %8481 = vmatpush1.msra.mxu0 0.0
    %8482 = vmatprep.subr.mxu0 0.0
    %8483 = vmatpush1.msra.mxu0 0.0
    %8484 = vmatprep.subr.mxu0 0.0
    %8485 = vmatpush1.msra.mxu0 0.0
    %8486 = vmatprep.subr.mxu0 0.0
    %8487 = vmatpush1.msra.mxu0 0.0
    %8488 = vmatprep.subr.mxu0 0.0
    %8489 = vmatpush1.msra.mxu0 0.0
    %8490 = vmatprep.subr.mxu0 0.0
    %8491 = vmatpush1.msra.mxu0 0.0
    %8492 = vmatprep.subr.mxu0 0.0
    %8493 = vmatpush1.msra.mxu0 0.0
    %8494 = vmatprep.mubr.f32.mxu0 0.0
    %8495 = vmatmul.mubr.f32.gmra.mrb[0].mxu0 %v8425
    %v8496 = vpop.f32.mrb[0].mxu0
    %v8497 = vadd.f32 0.0, %v8496
    %v8498 = vpop.f32.mrb[0].mxu0
    %8499 = vmatprep.mubr.f32.mxu0 0.0
    %8500 = vmatmul.mubr.f32.gmra.mrb[0].mxu0 %v8428
    %v8501 = vpop.f32.mrb[0].mxu0
    %v8502 = vadd.f32 0.0, %v8501
    %v8503 = vpop.f32.mrb[0].mxu0
    %8504 = vdwg.mxu0
    %v8505 = vadd.f32 %v8414, %v8497
    %v8506 = vadd.f32 %v8419, %v8502
    %s8507 = scalar_lea.vmem [#allocation5], 11
    %v8508 = vld [vmem:[%s8507] sm:$0x1]
    %v8510 = vlaneseq
    %v8511 = vshrl.u32 %v8510, 7
    %v8512 = vsub.s32 0, %v8511
    %v8513 = vrot.slane %v8508, %v8512
    %v8515 = vadd.f32 %v8505, %v8513
    %v8516 = vadd.f32 %v8506, %v8513
    %vm8517 = vcmp.ge.f32.partialorder %v8515, 0.0
    %vm8518 = vcmp.ge.f32.partialorder %v8516, 0.0
    %v8519 = vmul.f32 %v8515, 0.01
    %v8520 = vmul.f32 %v8516, 0.01
    %v8521 = vsel %vm8517, %v8515, %v8519
    %v8522 = vsel %vm8518, %v8516, %v8520
    %v8524 = vsel %vm525, %v8522, 0
    %8526 = vmatprep.subr.mxu0 0.0
    %8527 = vmatpush1.msra.mxu0 %v8521
    %8528 = vmatprep.subr.mxu0 0.0
    %8529 = vmatpush1.msra.mxu0 %v8524
    %8530 = vmatprep.subr.mxu0 0.0
    %8531 = vmatpush1.msra.mxu0 0.0
    %8532 = vmatprep.subr.mxu0 0.0
    %8533 = vmatpush1.msra.mxu0 0.0
    %8534 = vmatprep.subr.mxu0 0.0
    %8535 = vmatpush1.msra.mxu0 0.0
    %8536 = vmatprep.subr.mxu0 0.0
    %8537 = vmatpush1.msra.mxu0 0.0
    %8538 = vmatprep.subr.mxu0 0.0
    %8539 = vmatpush1.msra.mxu0 0.0
    %8540 = vmatprep.subr.mxu0 0.0
    %8541 = vmatpush1.msra.mxu0 0.0
    %8542 = vmatprep.subr.mxu0 0.0
    %8543 = vmatpush1.msra.mxu0 0.0
    %8544 = vmatprep.subr.mxu0 0.0
    %8545 = vmatpush1.msra.mxu0 0.0
    %8546 = vmatprep.subr.mxu0 0.0
    %8547 = vmatpush1.msra.mxu0 0.0
    %8548 = vmatprep.subr.mxu0 0.0
    %8549 = vmatpush1.msra.mxu0 0.0
    %8550 = vmatprep.subr.mxu0 0.0
    %8551 = vmatpush1.msra.mxu0 0.0
    %8552 = vmatprep.subr.mxu0 0.0
    %8553 = vmatpush1.msra.mxu0 0.0
    %8554 = vmatprep.subr.mxu0 0.0
    %8555 = vmatpush1.msra.mxu0 0.0
    %8556 = vmatprep.subr.mxu0 0.0
    %8557 = vmatpush1.msra.mxu0 0.0
    %8558 = vmatprep.subr.mxu0 0.0
    %8559 = vmatpush1.msra.mxu0 0.0
    %8560 = vmatprep.subr.mxu0 0.0
    %8561 = vmatpush1.msra.mxu0 0.0
    %8562 = vmatprep.subr.mxu0 0.0
    %8563 = vmatpush1.msra.mxu0 0.0
    %8564 = vmatprep.subr.mxu0 0.0
    %8565 = vmatpush1.msra.mxu0 0.0
    %8566 = vmatprep.subr.mxu0 0.0
    %8567 = vmatpush1.msra.mxu0 0.0
    %8568 = vmatprep.subr.mxu0 0.0
    %8569 = vmatpush1.msra.mxu0 0.0
    %8570 = vmatprep.subr.mxu0 0.0
    %8571 = vmatpush1.msra.mxu0 0.0
    %8572 = vmatprep.subr.mxu0 0.0
    %8573 = vmatpush1.msra.mxu0 0.0
    %8574 = vmatprep.subr.mxu0 0.0
    %8575 = vmatpush1.msra.mxu0 0.0
    %8576 = vmatprep.subr.mxu0 0.0
    %8577 = vmatpush1.msra.mxu0 0.0
    %8578 = vmatprep.subr.mxu0 0.0
    %8579 = vmatpush1.msra.mxu0 0.0
    %8580 = vmatprep.subr.mxu0 0.0
    %8581 = vmatpush1.msra.mxu0 0.0
    %8582 = vmatprep.subr.mxu0 0.0
    %8583 = vmatpush1.msra.mxu0 0.0
    %8584 = vmatprep.subr.mxu0 0.0
    %8585 = vmatpush1.msra.mxu0 0.0
    %8586 = vmatprep.subr.mxu0 0.0
    %8587 = vmatpush1.msra.mxu0 0.0
    %8588 = vmatprep.subr.mxu0 0.0
    %8589 = vmatpush1.msra.mxu0 0.0
    %8590 = vmatprep.mubr.f32.mxu0 0.0
    %8591 = vmatmul.mubr.f32.gmra.mrb[0].mxu0 %v4072
    %v8592 = vpop.f32.mrb[0].mxu0
    %v8593 = vadd.f32 0.0, %v8592
    %v8594 = vpop.f32.mrb[0].mxu0
    %8595 = vmatprep.mubr.f32.mxu0 0.0
    %8596 = vmatmul.mubr.f32.gmra.mrb[0].mxu0 %v4075
    %v8597 = vpop.f32.mrb[0].mxu0
    %v8598 = vadd.f32 0.0, %v8597
    %v8599 = vpop.f32.mrb[0].mxu0
    %8600 = vmatprep.mubr.f32.mxu0 0.0
    %8601 = vmatmul.mubr.f32.gmra.mrb[0].mxu0 %v4078
    %v8602 = vpop.f32.mrb[0].mxu0
    %v8603 = vadd.f32 0.0, %v8602
    %v8604 = vpop.f32.mrb[0].mxu0
    %8605 = vdwg.mxu0
    %s8606 = scalar_lea.vmem [#allocation7], 1056
    %v8607 = vld [vmem:[%s8606] sm:$0xff]
    %v8608 = vld [vmem:[%s8606 + $0x8] sm:$0xff]
    %v8609 = vld [vmem:[%s8606 + $0x10] sm:$0xff]
    %v8610 = vld [vmem:[%s8606 + $0x18] sm:$0xff]
    %s8611 = scalar_lea.vmem [#allocation7], 1088
    %v8612 = vld [vmem:[%s8611] sm:$0xff]
    %v8613 = vld [vmem:[%s8611 + $0x8] sm:$0xff]
    %v8614 = vld [vmem:[%s8611 + $0x10] sm:$0xff]
    %v8615 = vld [vmem:[%s8611 + $0x18] sm:$0xff]
    %v8617 = vsel %vm226, %v8598, 0
    %8619 = vmatprep.subr.mxu0 0.0
    %8620 = vmatpush1.msra.mxu0 %v8612
    %8621 = vmatprep.subr.mxu0 0.0
    %8622 = vmatpush1.msra.mxu0 %v8613
    %8623 = vmatprep.subr.mxu0 0.0
    %8624 = vmatpush1.msra.mxu0 %v8614
    %8625 = vmatprep.subr.mxu0 0.0
    %8626 = vmatpush1.msra.mxu0 %v8615
    %8627 = vmatprep.subr.mxu0 0.0
    %8628 = vmatpush1.msra.mxu0 0.0
    %8629 = vmatprep.subr.mxu0 0.0
    %8630 = vmatpush1.msra.mxu0 0.0
    %8631 = vmatprep.subr.mxu0 0.0
    %8632 = vmatpush1.msra.mxu0 0.0
    %8633 = vmatprep.subr.mxu0 0.0
    %8634 = vmatpush1.msra.mxu0 0.0
    %8635 = vmatprep.subr.mxu0 0.0
    %8636 = vmatpush1.msra.mxu0 0.0
    %8637 = vmatprep.subr.mxu0 0.0
    %8638 = vmatpush1.msra.mxu0 0.0
    %8639 = vmatprep.subr.mxu0 0.0
    %8640 = vmatpush1.msra.mxu0 0.0
    %8641 = vmatprep.subr.mxu0 0.0
    %8642 = vmatpush1.msra.mxu0 0.0
    %8643 = vmatprep.subr.mxu0 0.0
    %8644 = vmatpush1.msra.mxu0 0.0
    %8645 = vmatprep.subr.mxu0 0.0
    %8646 = vmatpush1.msra.mxu0 0.0
    %8647 = vmatprep.subr.mxu0 0.0
    %8648 = vmatpush1.msra.mxu0 0.0
    %8649 = vmatprep.subr.mxu0 0.0
    %8650 = vmatpush1.msra.mxu0 0.0
    %8651 = vmatprep.subr.mxu0 0.0
    %8652 = vmatpush1.msra.mxu0 0.0
    %8653 = vmatprep.subr.mxu0 0.0
    %8654 = vmatpush1.msra.mxu0 0.0
    %8655 = vmatprep.subr.mxu0 0.0
    %8656 = vmatpush1.msra.mxu0 0.0
    %8657 = vmatprep.subr.mxu0 0.0
    %8658 = vmatpush1.msra.mxu0 0.0
    %8659 = vmatprep.subr.mxu0 0.0
    %8660 = vmatpush1.msra.mxu0 0.0
    %8661 = vmatprep.subr.mxu0 0.0
    %8662 = vmatpush1.msra.mxu0 0.0
    %8663 = vmatprep.subr.mxu0 0.0
    %8664 = vmatpush1.msra.mxu0 0.0
    %8665 = vmatprep.subr.mxu0 0.0
    %8666 = vmatpush1.msra.mxu0 0.0
    %8667 = vmatprep.subr.mxu0 0.0
    %8668 = vmatpush1.msra.mxu0 0.0
    %8669 = vmatprep.subr.mxu0 0.0
    %8670 = vmatpush1.msra.mxu0 0.0
    %8671 = vmatprep.subr.mxu0 0.0
    %8672 = vmatpush1.msra.mxu0 0.0
    %8673 = vmatprep.subr.mxu0 0.0
    %8674 = vmatpush1.msra.mxu0 0.0
    %8675 = vmatprep.subr.mxu0 0.0
    %8676 = vmatpush1.msra.mxu0 0.0
    %8677 = vmatprep.subr.mxu0 0.0
    %8678 = vmatpush1.msra.mxu0 0.0
    %8679 = vmatprep.subr.mxu0 0.0
    %8680 = vmatpush1.msra.mxu0 0.0
    %8681 = vmatprep.subr.mxu0 0.0
    %8682 = vmatpush1.msra.mxu0 0.0
    %8683 = vmatprep.mubr.f32.mxu0 0.0
    %8684 = vmatmul.mubr.f32.gmra.mrb[0].mxu0 %v8617
    %v8685 = vpop.f32.mrb[0].mxu0
    %v8686 = vadd.f32 0.0, %v8685
    %v8687 = vpop.f32.mrb[0].mxu0
    %8688 = vdwg.mxu0
    %v8690 = vsel %vm226, %v8593, 0
    %8692 = vmatprep.subr.mxu0 0.0
    %8693 = vmatpush1.msra.mxu0 %v8607
    %8694 = vmatprep.subr.mxu0 0.0
    %8695 = vmatpush1.msra.mxu0 %v8608
    %8696 = vmatprep.subr.mxu0 0.0
    %8697 = vmatpush1.msra.mxu0 %v8609
    %8698 = vmatprep.subr.mxu0 0.0
    %8699 = vmatpush1.msra.mxu0 %v8610
    %8700 = vmatprep.subr.mxu0 0.0
    %8701 = vmatpush1.msra.mxu0 0.0
    %8702 = vmatprep.subr.mxu0 0.0
    %8703 = vmatpush1.msra.mxu0 0.0
    %8704 = vmatprep.subr.mxu0 0.0
    %8705 = vmatpush1.msra.mxu0 0.0
    %8706 = vmatprep.subr.mxu0 0.0
    %8707 = vmatpush1.msra.mxu0 0.0
    %8708 = vmatprep.subr.mxu0 0.0
    %8709 = vmatpush1.msra.mxu0 0.0
    %8710 = vmatprep.subr.mxu0 0.0
    %8711 = vmatpush1.msra.mxu0 0.0
    %8712 = vmatprep.subr.mxu0 0.0
    %8713 = vmatpush1.msra.mxu0 0.0
    %8714 = vmatprep.subr.mxu0 0.0
    %8715 = vmatpush1.msra.mxu0 0.0
    %8716 = vmatprep.subr.mxu0 0.0
    %8717 = vmatpush1.msra.mxu0 0.0
    %8718 = vmatprep.subr.mxu0 0.0
    %8719 = vmatpush1.msra.mxu0 0.0
    %8720 = vmatprep.subr.mxu0 0.0
    %8721 = vmatpush1.msra.mxu0 0.0
    %8722 = vmatprep.subr.mxu0 0.0
    %8723 = vmatpush1.msra.mxu0 0.0
    %8724 = vmatprep.subr.mxu0 0.0
    %8725 = vmatpush1.msra.mxu0 0.0
    %8726 = vmatprep.subr.mxu0 0.0
    %8727 = vmatpush1.msra.mxu0 0.0
    %8728 = vmatprep.subr.mxu0 0.0
    %8729 = vmatpush1.msra.mxu0 0.0
    %8730 = vmatprep.subr.mxu0 0.0
    %8731 = vmatpush1.msra.mxu0 0.0
    %8732 = vmatprep.subr.mxu0 0.0
    %8733 = vmatpush1.msra.mxu0 0.0
    %8734 = vmatprep.subr.mxu0 0.0
    %8735 = vmatpush1.msra.mxu0 0.0
    %8736 = vmatprep.subr.mxu0 0.0
    %8737 = vmatpush1.msra.mxu0 0.0
    %8738 = vmatprep.subr.mxu0 0.0
    %8739 = vmatpush1.msra.mxu0 0.0
    %8740 = vmatprep.subr.mxu0 0.0
    %8741 = vmatpush1.msra.mxu0 0.0
    %8742 = vmatprep.subr.mxu0 0.0
    %8743 = vmatpush1.msra.mxu0 0.0
    %8744 = vmatprep.subr.mxu0 0.0
    %8745 = vmatpush1.msra.mxu0 0.0
    %8746 = vmatprep.subr.mxu0 0.0
    %8747 = vmatpush1.msra.mxu0 0.0
    %8748 = vmatprep.subr.mxu0 0.0
    %8749 = vmatpush1.msra.mxu0 0.0
    %8750 = vmatprep.subr.mxu0 0.0
    %8751 = vmatpush1.msra.mxu0 0.0
    %8752 = vmatprep.subr.mxu0 0.0
    %8753 = vmatpush1.msra.mxu0 0.0
    %8754 = vmatprep.subr.mxu0 0.0
    %8755 = vmatpush1.msra.mxu0 0.0
    %8756 = vmatprep.mubr.f32.mxu0 0.0
    %8757 = vmatmul.mubr.f32.gmra.mrb[0].mxu0 %v8690
    %v8758 = vpop.f32.mrb[0].mxu0
    %v8759 = vadd.f32 %v8686, %v8758
    %v8760 = vpop.f32.mrb[0].mxu0
    %8761 = vdwg.mxu0
    %s8762 = scalar_lea.vmem [#allocation7], 1120
    %v8763 = vld [vmem:[%s8762] sm:$0xff]
    %v8764 = vld [vmem:[%s8762 + $0x8] sm:$0xff]
    %v8765 = vld [vmem:[%s8762 + $0x10] sm:$0xff]
    %v8766 = vld [vmem:[%s8762 + $0x18] sm:$0xff]
    %v8768 = vsel %vm226, %v8603, 0
    %8770 = vmatprep.subr.mxu0 0.0
    %8771 = vmatpush1.msra.mxu0 %v8763
    %8772 = vmatprep.subr.mxu0 0.0
    %8773 = vmatpush1.msra.mxu0 %v8764
    %8774 = vmatprep.subr.mxu0 0.0
    %8775 = vmatpush1.msra.mxu0 %v8765
    %8776 = vmatprep.subr.mxu0 0.0
    %8777 = vmatpush1.msra.mxu0 %v8766
    %8778 = vmatprep.subr.mxu0 0.0
    %8779 = vmatpush1.msra.mxu0 0.0
    %8780 = vmatprep.subr.mxu0 0.0
    %8781 = vmatpush1.msra.mxu0 0.0
    %8782 = vmatprep.subr.mxu0 0.0
    %8783 = vmatpush1.msra.mxu0 0.0
    %8784 = vmatprep.subr.mxu0 0.0
    %8785 = vmatpush1.msra.mxu0 0.0
    %8786 = vmatprep.subr.mxu0 0.0
    %8787 = vmatpush1.msra.mxu0 0.0
    %8788 = vmatprep.subr.mxu0 0.0
    %8789 = vmatpush1.msra.mxu0 0.0
    %8790 = vmatprep.subr.mxu0 0.0
    %8791 = vmatpush1.msra.mxu0 0.0
    %8792 = vmatprep.subr.mxu0 0.0
    %8793 = vmatpush1.msra.mxu0 0.0
    %8794 = vmatprep.subr.mxu0 0.0
    %8795 = vmatpush1.msra.mxu0 0.0
    %8796 = vmatprep.subr.mxu0 0.0
    %8797 = vmatpush1.msra.mxu0 0.0
    %8798 = vmatprep.subr.mxu0 0.0
    %8799 = vmatpush1.msra.mxu0 0.0
    %8800 = vmatprep.subr.mxu0 0.0
    %8801 = vmatpush1.msra.mxu0 0.0
    %8802 = vmatprep.subr.mxu0 0.0
    %8803 = vmatpush1.msra.mxu0 0.0
    %8804 = vmatprep.subr.mxu0 0.0
    %8805 = vmatpush1.msra.mxu0 0.0
    %8806 = vmatprep.subr.mxu0 0.0
    %8807 = vmatpush1.msra.mxu0 0.0
    %8808 = vmatprep.subr.mxu0 0.0
    %8809 = vmatpush1.msra.mxu0 0.0
    %8810 = vmatprep.subr.mxu0 0.0
    %8811 = vmatpush1.msra.mxu0 0.0
    %8812 = vmatprep.subr.mxu0 0.0
    %8813 = vmatpush1.msra.mxu0 0.0
    %8814 = vmatprep.subr.mxu0 0.0
    %8815 = vmatpush1.msra.mxu0 0.0
    %8816 = vmatprep.subr.mxu0 0.0
    %8817 = vmatpush1.msra.mxu0 0.0
    %8818 = vmatprep.subr.mxu0 0.0
    %8819 = vmatpush1.msra.mxu0 0.0
    %8820 = vmatprep.subr.mxu0 0.0
    %8821 = vmatpush1.msra.mxu0 0.0
    %8822 = vmatprep.subr.mxu0 0.0
    %8823 = vmatpush1.msra.mxu0 0.0
    %8824 = vmatprep.subr.mxu0 0.0
    %8825 = vmatpush1.msra.mxu0 0.0
    %8826 = vmatprep.subr.mxu0 0.0
    %8827 = vmatpush1.msra.mxu0 0.0
    %8828 = vmatprep.subr.mxu0 0.0
    %8829 = vmatpush1.msra.mxu0 0.0
    %8830 = vmatprep.subr.mxu0 0.0
    %8831 = vmatpush1.msra.mxu0 0.0
    %8832 = vmatprep.subr.mxu0 0.0
    %8833 = vmatpush1.msra.mxu0 0.0
    %8834 = vmatprep.mubr.f32.mxu0 0.0
    %8835 = vmatmul.mubr.f32.gmra.mrb[0].mxu0 %v8768
    %v8836 = vpop.f32.mrb[0].mxu0
    %v8837 = vadd.f32 0.0, %v8836
    %v8838 = vpop.f32.mrb[0].mxu0
    %8839 = vdwg.mxu0
    %v8840 = vadd.f32 %v8759, %v8837
    %s8841 = scalar_lea.vmem [#allocation8], 11
    %v8842 = vld [vmem:[%s8841] sm:$0x1]
    %v8844 = vlaneseq
    %v8845 = vshrl.u32 %v8844, 7
    %v8846 = vsub.s32 0, %v8845
    %v8847 = vrot.slane %v8842, %v8846
    %v8849 = vadd.f32 %v8840, %v8847
    %v8850 = vtanh.pop %v8849
    %v8851 = vadd.f32 %v8163, %v8850
    %8852 = vmatprep.subr.mxu0 0.0
    %8853 = vmatpush1.msra.mxu0 %v8163
    %8854 = vmatprep.subr.mxu0 0.0
    %8855 = vmatpush1.msra.mxu0 0.0
    %8856 = vmatprep.subr.mxu0 0.0
    %8857 = vmatpush1.msra.mxu0 0.0
    %8858 = vmatprep.subr.mxu0 0.0
    %8859 = vmatpush1.msra.mxu0 0.0
    %8860 = vmatprep.subr.mxu0 0.0
    %8861 = vmatpush1.msra.mxu0 0.0
    %8862 = vmatprep.subr.mxu0 0.0
    %8863 = vmatpush1.msra.mxu0 0.0
    %8864 = vmatprep.subr.mxu0 0.0
    %8865 = vmatpush1.msra.mxu0 0.0
    %8866 = vmatprep.subr.mxu0 0.0
    %8867 = vmatpush1.msra.mxu0 0.0
    %8868 = vmatprep.subr.mxu0 0.0
    %8869 = vmatpush1.msra.mxu0 0.0
    %8870 = vmatprep.subr.mxu0 0.0
    %8871 = vmatpush1.msra.mxu0 0.0
    %8872 = vmatprep.subr.mxu0 0.0
    %8873 = vmatpush1.msra.mxu0 0.0
    %8874 = vmatprep.subr.mxu0 0.0
    %8875 = vmatpush1.msra.mxu0 0.0
    %8876 = vmatprep.subr.mxu0 0.0
    %8877 = vmatpush1.msra.mxu0 0.0
    %8878 = vmatprep.subr.mxu0 0.0
    %8879 = vmatpush1.msra.mxu0 0.0
    %8880 = vmatprep.subr.mxu0 0.0
    %8881 = vmatpush1.msra.mxu0 0.0
    %8882 = vmatprep.subr.mxu0 0.0
    %8883 = vmatpush1.msra.mxu0 0.0
    %8884 = vmatprep.subr.mxu0 0.0
    %8885 = vmatpush1.msra.mxu0 0.0
    %8886 = vmatprep.subr.mxu0 0.0
    %8887 = vmatpush1.msra.mxu0 0.0
    %8888 = vmatprep.subr.mxu0 0.0
    %8889 = vmatpush1.msra.mxu0 0.0
    %8890 = vmatprep.subr.mxu0 0.0
    %8891 = vmatpush1.msra.mxu0 0.0
    %8892 = vmatprep.subr.mxu0 0.0
    %8893 = vmatpush1.msra.mxu0 0.0
    %8894 = vmatprep.subr.mxu0 0.0
    %8895 = vmatpush1.msra.mxu0 0.0
    %8896 = vmatprep.subr.mxu0 0.0
    %8897 = vmatpush1.msra.mxu0 0.0
    %8898 = vmatprep.subr.mxu0 0.0
    %8899 = vmatpush1.msra.mxu0 0.0
    %8900 = vmatprep.subr.mxu0 0.0
    %8901 = vmatpush1.msra.mxu0 0.0
    %8902 = vmatprep.subr.mxu0 0.0
    %8903 = vmatpush1.msra.mxu0 0.0
    %8904 = vmatprep.subr.mxu0 0.0
    %8905 = vmatpush1.msra.mxu0 0.0
    %8906 = vmatprep.subr.mxu0 0.0
    %8907 = vmatpush1.msra.mxu0 0.0
    %8908 = vmatprep.subr.mxu0 0.0
    %8909 = vmatpush1.msra.mxu0 0.0
    %8910 = vmatprep.subr.mxu0 0.0
    %8911 = vmatpush1.msra.mxu0 0.0
    %8912 = vmatprep.subr.mxu0 0.0
    %8913 = vmatpush1.msra.mxu0 0.0
    %8914 = vmatprep.subr.mxu0 0.0
    %8915 = vmatpush1.msra.mxu0 0.0
    %8916 = vmatprep.mubr.f32.mxu0 0.0
    %8917 = vmatmul.mubr.f32.gmra.mrb[0].mxu0 %v3697
    %v8918 = vpop.f32.mrb[0].mxu0
    %v8919 = vadd.f32 0.0, %v8918
    %v8920 = vpop.f32.mrb[0].mxu0
    %8921 = vmatprep.mubr.f32.mxu0 0.0
    %8922 = vmatmul.mubr.f32.gmra.mrb[0].mxu0 %v3700
    %v8923 = vpop.f32.mrb[0].mxu0
    %v8924 = vadd.f32 0.0, %v8923
    %v8925 = vpop.f32.mrb[0].mxu0
    %8926 = vmatprep.mubr.f32.mxu0 0.0
    %8927 = vmatmul.mubr.f32.gmra.mrb[0].mxu0 %v3703
    %v8928 = vpop.f32.mrb[0].mxu0
    %v8929 = vadd.f32 0.0, %v8928
    %v8930 = vpop.f32.mrb[0].mxu0
    %8931 = vmatprep.mubr.f32.mxu0 0.0
    %8932 = vmatmul.mubr.f32.gmra.mrb[0].mxu0 %v3706
    %v8933 = vpop.f32.mrb[0].mxu0
    %v8934 = vadd.f32 0.0, %v8933
    %v8935 = vpop.f32.mrb[0].mxu0
    %8936 = vmatprep.mubr.f32.mxu0 0.0
    %8937 = vmatmul.mubr.f32.gmra.mrb[0].mxu0 %v3709
    %v8938 = vpop.f32.mrb[0].mxu0
    %v8939 = vadd.f32 0.0, %v8938
    %v8940 = vpop.f32.mrb[0].mxu0
    %8941 = vdwg.mxu0
    %s8942 = scalar_lea.vmem [#allocation2], 240
    %v8943 = vld [vmem:[%s8942] sm:$0xff]
    %s8944 = scalar_lea.vmem [#allocation2], 248
    %v8945 = vld [vmem:[%s8944] sm:$0xff]
    %v8948 = vrot.slane %v8924, 4
    %v8949 = vrot.slane %v8929, 4
    %v8950 = vsel %vm525, %v8948, %v8949
    %v8951 = vsel %vm531, %v8950, 0
    %v8953 = vsel %vm531, %v8949, 0
    %8955 = vmatprep.subr.mxu0 0.0
    %8956 = vmatpush1.msra.mxu0 %v8945
    %8957 = vmatprep.subr.mxu0 0.0
    %8958 = vmatpush1.msra.mxu0 0.0
    %8959 = vmatprep.subr.mxu0 0.0
    %8960 = vmatpush1.msra.mxu0 0.0
    %8961 = vmatprep.subr.mxu0 0.0
    %8962 = vmatpush1.msra.mxu0 0.0
    %8963 = vmatprep.subr.mxu0 0.0
    %8964 = vmatpush1.msra.mxu0 0.0
    %8965 = vmatprep.subr.mxu0 0.0
    %8966 = vmatpush1.msra.mxu0 0.0
    %8967 = vmatprep.subr.mxu0 0.0
    %8968 = vmatpush1.msra.mxu0 0.0
    %8969 = vmatprep.subr.mxu0 0.0
    %8970 = vmatpush1.msra.mxu0 0.0
    %8971 = vmatprep.subr.mxu0 0.0
    %8972 = vmatpush1.msra.mxu0 0.0
    %8973 = vmatprep.subr.mxu0 0.0
    %8974 = vmatpush1.msra.mxu0 0.0
    %8975 = vmatprep.subr.mxu0 0.0
    %8976 = vmatpush1.msra.mxu0 0.0
    %8977 = vmatprep.subr.mxu0 0.0
    %8978 = vmatpush1.msra.mxu0 0.0
    %8979 = vmatprep.subr.mxu0 0.0
    %8980 = vmatpush1.msra.mxu0 0.0
    %8981 = vmatprep.subr.mxu0 0.0
    %8982 = vmatpush1.msra.mxu0 0.0
    %8983 = vmatprep.subr.mxu0 0.0
    %8984 = vmatpush1.msra.mxu0 0.0
    %8985 = vmatprep.subr.mxu0 0.0
    %8986 = vmatpush1.msra.mxu0 0.0
    %8987 = vmatprep.subr.mxu0 0.0
    %8988 = vmatpush1.msra.mxu0 0.0
    %8989 = vmatprep.subr.mxu0 0.0
    %8990 = vmatpush1.msra.mxu0 0.0
    %8991 = vmatprep.subr.mxu0 0.0
    %8992 = vmatpush1.msra.mxu0 0.0
    %8993 = vmatprep.subr.mxu0 0.0
    %8994 = vmatpush1.msra.mxu0 0.0
    %8995 = vmatprep.subr.mxu0 0.0
    %8996 = vmatpush1.msra.mxu0 0.0
    %8997 = vmatprep.subr.mxu0 0.0
    %8998 = vmatpush1.msra.mxu0 0.0
    %8999 = vmatprep.subr.mxu0 0.0
    %9000 = vmatpush1.msra.mxu0 0.0
    %9001 = vmatprep.subr.mxu0 0.0
    %9002 = vmatpush1.msra.mxu0 0.0
    %9003 = vmatprep.subr.mxu0 0.0
    %9004 = vmatpush1.msra.mxu0 0.0
    %9005 = vmatprep.subr.mxu0 0.0
    %9006 = vmatpush1.msra.mxu0 0.0
    %9007 = vmatprep.subr.mxu0 0.0
    %9008 = vmatpush1.msra.mxu0 0.0
    %9009 = vmatprep.subr.mxu0 0.0
    %9010 = vmatpush1.msra.mxu0 0.0
    %9011 = vmatprep.subr.mxu0 0.0
    %9012 = vmatpush1.msra.mxu0 0.0
    %9013 = vmatprep.subr.mxu0 0.0
    %9014 = vmatpush1.msra.mxu0 0.0
    %9015 = vmatprep.subr.mxu0 0.0
    %9016 = vmatpush1.msra.mxu0 0.0
    %9017 = vmatprep.subr.mxu0 0.0
    %9018 = vmatpush1.msra.mxu0 0.0
    %9019 = vmatprep.mubr.f32.mxu0 0.0
    %9020 = vmatmul.mubr.f32.gmra.mrb[0].mxu0 %v8951
    %v9021 = vpop.f32.mrb[0].mxu0
    %v9022 = vadd.f32 0.0, %v9021
    %v9023 = vpop.f32.mrb[0].mxu0
    %9024 = vmatprep.mubr.f32.mxu0 0.0
    %9025 = vmatmul.mubr.f32.gmra.mrb[0].mxu0 %v8953
    %v9026 = vpop.f32.mrb[0].mxu0
    %v9027 = vadd.f32 0.0, %v9026
    %v9028 = vpop.f32.mrb[0].mxu0
    %9029 = vdwg.mxu0
    %v9031 = vsel %vm531, %v8919, 0
    %v9033 = vsel %vm531, %v8924, 0
    %9035 = vmatprep.subr.mxu0 0.0
    %9036 = vmatpush1.msra.mxu0 %v8943
    %9037 = vmatprep.subr.mxu0 0.0
    %9038 = vmatpush1.msra.mxu0 0.0
    %9039 = vmatprep.subr.mxu0 0.0
    %9040 = vmatpush1.msra.mxu0 0.0
    %9041 = vmatprep.subr.mxu0 0.0
    %9042 = vmatpush1.msra.mxu0 0.0
    %9043 = vmatprep.subr.mxu0 0.0
    %9044 = vmatpush1.msra.mxu0 0.0
    %9045 = vmatprep.subr.mxu0 0.0
    %9046 = vmatpush1.msra.mxu0 0.0
    %9047 = vmatprep.subr.mxu0 0.0
    %9048 = vmatpush1.msra.mxu0 0.0
    %9049 = vmatprep.subr.mxu0 0.0
    %9050 = vmatpush1.msra.mxu0 0.0
    %9051 = vmatprep.subr.mxu0 0.0
    %9052 = vmatpush1.msra.mxu0 0.0
    %9053 = vmatprep.subr.mxu0 0.0
    %9054 = vmatpush1.msra.mxu0 0.0
    %9055 = vmatprep.subr.mxu0 0.0
    %9056 = vmatpush1.msra.mxu0 0.0
    %9057 = vmatprep.subr.mxu0 0.0
    %9058 = vmatpush1.msra.mxu0 0.0
    %9059 = vmatprep.subr.mxu0 0.0
    %9060 = vmatpush1.msra.mxu0 0.0
    %9061 = vmatprep.subr.mxu0 0.0
    %9062 = vmatpush1.msra.mxu0 0.0
    %9063 = vmatprep.subr.mxu0 0.0
    %9064 = vmatpush1.msra.mxu0 0.0
    %9065 = vmatprep.subr.mxu0 0.0
    %9066 = vmatpush1.msra.mxu0 0.0
    %9067 = vmatprep.subr.mxu0 0.0
    %9068 = vmatpush1.msra.mxu0 0.0
    %9069 = vmatprep.subr.mxu0 0.0
    %9070 = vmatpush1.msra.mxu0 0.0
    %9071 = vmatprep.subr.mxu0 0.0
    %9072 = vmatpush1.msra.mxu0 0.0
    %9073 = vmatprep.subr.mxu0 0.0
    %9074 = vmatpush1.msra.mxu0 0.0
    %9075 = vmatprep.subr.mxu0 0.0
    %9076 = vmatpush1.msra.mxu0 0.0
    %9077 = vmatprep.subr.mxu0 0.0
    %9078 = vmatpush1.msra.mxu0 0.0
    %9079 = vmatprep.subr.mxu0 0.0
    %9080 = vmatpush1.msra.mxu0 0.0
    %9081 = vmatprep.subr.mxu0 0.0
    %9082 = vmatpush1.msra.mxu0 0.0
    %9083 = vmatprep.subr.mxu0 0.0
    %9084 = vmatpush1.msra.mxu0 0.0
    %9085 = vmatprep.subr.mxu0 0.0
    %9086 = vmatpush1.msra.mxu0 0.0
    %9087 = vmatprep.subr.mxu0 0.0
    %9088 = vmatpush1.msra.mxu0 0.0
    %9089 = vmatprep.subr.mxu0 0.0
    %9090 = vmatpush1.msra.mxu0 0.0
    %9091 = vmatprep.subr.mxu0 0.0
    %9092 = vmatpush1.msra.mxu0 0.0
    %9093 = vmatprep.subr.mxu0 0.0
    %9094 = vmatpush1.msra.mxu0 0.0
    %9095 = vmatprep.subr.mxu0 0.0
    %9096 = vmatpush1.msra.mxu0 0.0
    %9097 = vmatprep.subr.mxu0 0.0
    %9098 = vmatpush1.msra.mxu0 0.0
    %9099 = vmatprep.mubr.f32.mxu0 0.0
    %9100 = vmatmul.mubr.f32.gmra.mrb[0].mxu0 %v9031
    %v9101 = vpop.f32.mrb[0].mxu0
    %v9102 = vadd.f32 %v9022, %v9101
    %v9103 = vpop.f32.mrb[0].mxu0
    %9104 = vmatprep.mubr.f32.mxu0 0.0
    %9105 = vmatmul.mubr.f32.gmra.mrb[0].mxu0 %v9033
    %v9106 = vpop.f32.mrb[0].mxu0
    %v9107 = vadd.f32 %v9027, %v9106
    %v9108 = vpop.f32.mrb[0].mxu0
    %9109 = vdwg.mxu0
    %s9110 = scalar_lea.vmem [#allocation2], 256
    %v9111 = vld [vmem:[%s9110] sm:$0xff]
    %v9113 = vsel %vm531, %v8934, 0
    %v9116 = vsel %vm531, %v8939, 0
    %9118 = vmatprep.subr.mxu0 0.0
    %9119 = vmatpush1.msra.mxu0 %v9111
    %9120 = vmatprep.subr.mxu0 0.0
    %9121 = vmatpush1.msra.mxu0 0.0
    %9122 = vmatprep.subr.mxu0 0.0
    %9123 = vmatpush1.msra.mxu0 0.0
    %9124 = vmatprep.subr.mxu0 0.0
    %9125 = vmatpush1.msra.mxu0 0.0
    %9126 = vmatprep.subr.mxu0 0.0
    %9127 = vmatpush1.msra.mxu0 0.0
    %9128 = vmatprep.subr.mxu0 0.0
    %9129 = vmatpush1.msra.mxu0 0.0
    %9130 = vmatprep.subr.mxu0 0.0
    %9131 = vmatpush1.msra.mxu0 0.0
    %9132 = vmatprep.subr.mxu0 0.0
    %9133 = vmatpush1.msra.mxu0 0.0
    %9134 = vmatprep.subr.mxu0 0.0
    %9135 = vmatpush1.msra.mxu0 0.0
    %9136 = vmatprep.subr.mxu0 0.0
    %9137 = vmatpush1.msra.mxu0 0.0
    %9138 = vmatprep.subr.mxu0 0.0
    %9139 = vmatpush1.msra.mxu0 0.0
    %9140 = vmatprep.subr.mxu0 0.0
    %9141 = vmatpush1.msra.mxu0 0.0
    %9142 = vmatprep.subr.mxu0 0.0
    %9143 = vmatpush1.msra.mxu0 0.0
    %9144 = vmatprep.subr.mxu0 0.0
    %9145 = vmatpush1.msra.mxu0 0.0
    %9146 = vmatprep.subr.mxu0 0.0
    %9147 = vmatpush1.msra.mxu0 0.0
    %9148 = vmatprep.subr.mxu0 0.0
    %9149 = vmatpush1.msra.mxu0 0.0
    %9150 = vmatprep.subr.mxu0 0.0
    %9151 = vmatpush1.msra.mxu0 0.0
    %9152 = vmatprep.subr.mxu0 0.0
    %9153 = vmatpush1.msra.mxu0 0.0
    %9154 = vmatprep.subr.mxu0 0.0
    %9155 = vmatpush1.msra.mxu0 0.0
    %9156 = vmatprep.subr.mxu0 0.0
    %9157 = vmatpush1.msra.mxu0 0.0
    %9158 = vmatprep.subr.mxu0 0.0
    %9159 = vmatpush1.msra.mxu0 0.0
    %9160 = vmatprep.subr.mxu0 0.0
    %9161 = vmatpush1.msra.mxu0 0.0
    %9162 = vmatprep.subr.mxu0 0.0
    %9163 = vmatpush1.msra.mxu0 0.0
    %9164 = vmatprep.subr.mxu0 0.0
    %9165 = vmatpush1.msra.mxu0 0.0
    %9166 = vmatprep.subr.mxu0 0.0
    %9167 = vmatpush1.msra.mxu0 0.0
    %9168 = vmatprep.subr.mxu0 0.0
    %9169 = vmatpush1.msra.mxu0 0.0
    %9170 = vmatprep.subr.mxu0 0.0
    %9171 = vmatpush1.msra.mxu0 0.0
    %9172 = vmatprep.subr.mxu0 0.0
    %9173 = vmatpush1.msra.mxu0 0.0
    %9174 = vmatprep.subr.mxu0 0.0
    %9175 = vmatpush1.msra.mxu0 0.0
    %9176 = vmatprep.subr.mxu0 0.0
    %9177 = vmatpush1.msra.mxu0 0.0
    %9178 = vmatprep.subr.mxu0 0.0
    %9179 = vmatpush1.msra.mxu0 0.0
    %9180 = vmatprep.subr.mxu0 0.0
    %9181 = vmatpush1.msra.mxu0 0.0
    %9182 = vmatprep.mubr.f32.mxu0 0.0
    %9183 = vmatmul.mubr.f32.gmra.mrb[0].mxu0 %v9113
    %v9184 = vpop.f32.mrb[0].mxu0
    %v9185 = vadd.f32 0.0, %v9184
    %v9186 = vpop.f32.mrb[0].mxu0
    %9187 = vmatprep.mubr.f32.mxu0 0.0
    %9188 = vmatmul.mubr.f32.gmra.mrb[0].mxu0 %v9116
    %v9189 = vpop.f32.mrb[0].mxu0
    %v9190 = vadd.f32 0.0, %v9189
    %v9191 = vpop.f32.mrb[0].mxu0
    %9192 = vdwg.mxu0
    %v9193 = vadd.f32 %v9102, %v9185
    %v9194 = vadd.f32 %v9107, %v9190
    %s9195 = scalar_lea.vmem [#allocation5], 10
    %v9196 = vld [vmem:[%s9195] sm:$0x1]
    %v9198 = vlaneseq
    %v9199 = vshrl.u32 %v9198, 7
    %v9200 = vsub.s32 0, %v9199
    %v9201 = vrot.slane %v9196, %v9200
    %v9203 = vadd.f32 %v9193, %v9201
    %v9204 = vadd.f32 %v9194, %v9201
    %vm9205 = vcmp.ge.f32.partialorder %v9203, 0.0
    %vm9206 = vcmp.ge.f32.partialorder %v9204, 0.0
    %v9207 = vmul.f32 %v9203, 0.01
    %v9208 = vmul.f32 %v9204, 0.01
    %v9209 = vsel %vm9205, %v9203, %v9207
    %v9210 = vsel %vm9206, %v9204, %v9208
    %v9212 = vsel %vm525, %v9210, 0
    %9214 = vmatprep.subr.mxu0 0.0
    %9215 = vmatpush1.msra.mxu0 %v9209
    %9216 = vmatprep.subr.mxu0 0.0
    %9217 = vmatpush1.msra.mxu0 %v9212
    %9218 = vmatprep.subr.mxu0 0.0
    %9219 = vmatpush1.msra.mxu0 0.0
    %9220 = vmatprep.subr.mxu0 0.0
    %9221 = vmatpush1.msra.mxu0 0.0
    %9222 = vmatprep.subr.mxu0 0.0
    %9223 = vmatpush1.msra.mxu0 0.0
    %9224 = vmatprep.subr.mxu0 0.0
    %9225 = vmatpush1.msra.mxu0 0.0
    %9226 = vmatprep.subr.mxu0 0.0
    %9227 = vmatpush1.msra.mxu0 0.0
    %9228 = vmatprep.subr.mxu0 0.0
    %9229 = vmatpush1.msra.mxu0 0.0
    %9230 = vmatprep.subr.mxu0 0.0
    %9231 = vmatpush1.msra.mxu0 0.0
    %9232 = vmatprep.subr.mxu0 0.0
    %9233 = vmatpush1.msra.mxu0 0.0
    %9234 = vmatprep.subr.mxu0 0.0
    %9235 = vmatpush1.msra.mxu0 0.0
    %9236 = vmatprep.subr.mxu0 0.0
    %9237 = vmatpush1.msra.mxu0 0.0
    %9238 = vmatprep.subr.mxu0 0.0
    %9239 = vmatpush1.msra.mxu0 0.0
    %9240 = vmatprep.subr.mxu0 0.0
    %9241 = vmatpush1.msra.mxu0 0.0
    %9242 = vmatprep.subr.mxu0 0.0
    %9243 = vmatpush1.msra.mxu0 0.0
    %9244 = vmatprep.subr.mxu0 0.0
    %9245 = vmatpush1.msra.mxu0 0.0
    %9246 = vmatprep.subr.mxu0 0.0
    %9247 = vmatpush1.msra.mxu0 0.0
    %9248 = vmatprep.subr.mxu0 0.0
    %9249 = vmatpush1.msra.mxu0 0.0
    %9250 = vmatprep.subr.mxu0 0.0
    %9251 = vmatpush1.msra.mxu0 0.0
    %9252 = vmatprep.subr.mxu0 0.0
    %9253 = vmatpush1.msra.mxu0 0.0
    %9254 = vmatprep.subr.mxu0 0.0
    %9255 = vmatpush1.msra.mxu0 0.0
    %9256 = vmatprep.subr.mxu0 0.0
    %9257 = vmatpush1.msra.mxu0 0.0
    %9258 = vmatprep.subr.mxu0 0.0
    %9259 = vmatpush1.msra.mxu0 0.0
    %9260 = vmatprep.subr.mxu0 0.0
    %9261 = vmatpush1.msra.mxu0 0.0
    %9262 = vmatprep.subr.mxu0 0.0
    %9263 = vmatpush1.msra.mxu0 0.0
    %9264 = vmatprep.subr.mxu0 0.0
    %9265 = vmatpush1.msra.mxu0 0.0
    %9266 = vmatprep.subr.mxu0 0.0
    %9267 = vmatpush1.msra.mxu0 0.0
    %9268 = vmatprep.subr.mxu0 0.0
    %9269 = vmatpush1.msra.mxu0 0.0
    %9270 = vmatprep.subr.mxu0 0.0
    %9271 = vmatpush1.msra.mxu0 0.0
    %9272 = vmatprep.subr.mxu0 0.0
    %9273 = vmatpush1.msra.mxu0 0.0
    %9274 = vmatprep.subr.mxu0 0.0
    %9275 = vmatpush1.msra.mxu0 0.0
    %9276 = vmatprep.subr.mxu0 0.0
    %9277 = vmatpush1.msra.mxu0 0.0
    %9278 = vmatprep.mubr.f32.mxu0 0.0
    %9279 = vmatmul.mubr.f32.gmra.mrb[0].mxu0 %v4072
    %v9280 = vpop.f32.mrb[0].mxu0
    %v9281 = vadd.f32 0.0, %v9280
    %v9282 = vpop.f32.mrb[0].mxu0
    %9283 = vmatprep.mubr.f32.mxu0 0.0
    %9284 = vmatmul.mubr.f32.gmra.mrb[0].mxu0 %v4075
    %v9285 = vpop.f32.mrb[0].mxu0
    %v9286 = vadd.f32 0.0, %v9285
    %v9287 = vpop.f32.mrb[0].mxu0
    %9288 = vmatprep.mubr.f32.mxu0 0.0
    %9289 = vmatmul.mubr.f32.gmra.mrb[0].mxu0 %v4078
    %v9290 = vpop.f32.mrb[0].mxu0
    %v9291 = vadd.f32 0.0, %v9290
    %v9292 = vpop.f32.mrb[0].mxu0
    %9293 = vdwg.mxu0
    %s9294 = scalar_lea.vmem [#allocation7], 960
    %v9295 = vld [vmem:[%s9294] sm:$0xff]
    %v9296 = vld [vmem:[%s9294 + $0x8] sm:$0xff]
    %v9297 = vld [vmem:[%s9294 + $0x10] sm:$0xff]
    %v9298 = vld [vmem:[%s9294 + $0x18] sm:$0xff]
    %s9299 = scalar_lea.vmem [#allocation7], 992
    %v9300 = vld [vmem:[%s9299] sm:$0xff]
    %v9301 = vld [vmem:[%s9299 + $0x8] sm:$0xff]
    %v9302 = vld [vmem:[%s9299 + $0x10] sm:$0xff]
    %v9303 = vld [vmem:[%s9299 + $0x18] sm:$0xff]
    %v9305 = vsel %vm226, %v9286, 0
    %9307 = vmatprep.subr.mxu0 0.0
    %9308 = vmatpush1.msra.mxu0 %v9300
    %9309 = vmatprep.subr.mxu0 0.0
    %9310 = vmatpush1.msra.mxu0 %v9301
    %9311 = vmatprep.subr.mxu0 0.0
    %9312 = vmatpush1.msra.mxu0 %v9302
    %9313 = vmatprep.subr.mxu0 0.0
    %9314 = vmatpush1.msra.mxu0 %v9303
    %9315 = vmatprep.subr.mxu0 0.0
    %9316 = vmatpush1.msra.mxu0 0.0
    %9317 = vmatprep.subr.mxu0 0.0
    %9318 = vmatpush1.msra.mxu0 0.0
    %9319 = vmatprep.subr.mxu0 0.0
    %9320 = vmatpush1.msra.mxu0 0.0
    %9321 = vmatprep.subr.mxu0 0.0
    %9322 = vmatpush1.msra.mxu0 0.0
    %9323 = vmatprep.subr.mxu0 0.0
    %9324 = vmatpush1.msra.mxu0 0.0
    %9325 = vmatprep.subr.mxu0 0.0
    %9326 = vmatpush1.msra.mxu0 0.0
    %9327 = vmatprep.subr.mxu0 0.0
    %9328 = vmatpush1.msra.mxu0 0.0
    %9329 = vmatprep.subr.mxu0 0.0
    %9330 = vmatpush1.msra.mxu0 0.0
    %9331 = vmatprep.subr.mxu0 0.0
    %9332 = vmatpush1.msra.mxu0 0.0
    %9333 = vmatprep.subr.mxu0 0.0
    %9334 = vmatpush1.msra.mxu0 0.0
    %9335 = vmatprep.subr.mxu0 0.0
    %9336 = vmatpush1.msra.mxu0 0.0
    %9337 = vmatprep.subr.mxu0 0.0
    %9338 = vmatpush1.msra.mxu0 0.0
    %9339 = vmatprep.subr.mxu0 0.0
    %9340 = vmatpush1.msra.mxu0 0.0
    %9341 = vmatprep.subr.mxu0 0.0
    %9342 = vmatpush1.msra.mxu0 0.0
    %9343 = vmatprep.subr.mxu0 0.0
    %9344 = vmatpush1.msra.mxu0 0.0
    %9345 = vmatprep.subr.mxu0 0.0
    %9346 = vmatpush1.msra.mxu0 0.0
    %9347 = vmatprep.subr.mxu0 0.0
    %9348 = vmatpush1.msra.mxu0 0.0
    %9349 = vmatprep.subr.mxu0 0.0
    %9350 = vmatpush1.msra.mxu0 0.0
    %9351 = vmatprep.subr.mxu0 0.0
    %9352 = vmatpush1.msra.mxu0 0.0
    %9353 = vmatprep.subr.mxu0 0.0
    %9354 = vmatpush1.msra.mxu0 0.0
    %9355 = vmatprep.subr.mxu0 0.0
    %9356 = vmatpush1.msra.mxu0 0.0
    %9357 = vmatprep.subr.mxu0 0.0
    %9358 = vmatpush1.msra.mxu0 0.0
    %9359 = vmatprep.subr.mxu0 0.0
    %9360 = vmatpush1.msra.mxu0 0.0
    %9361 = vmatprep.subr.mxu0 0.0
    %9362 = vmatpush1.msra.mxu0 0.0
    %9363 = vmatprep.subr.mxu0 0.0
    %9364 = vmatpush1.msra.mxu0 0.0
    %9365 = vmatprep.subr.mxu0 0.0
    %9366 = vmatpush1.msra.mxu0 0.0
    %9367 = vmatprep.subr.mxu0 0.0
    %9368 = vmatpush1.msra.mxu0 0.0
    %9369 = vmatprep.subr.mxu0 0.0
    %9370 = vmatpush1.msra.mxu0 0.0
    %9371 = vmatprep.mubr.f32.mxu0 0.0
    %9372 = vmatmul.mubr.f32.gmra.mrb[0].mxu0 %v9305
    %v9373 = vpop.f32.mrb[0].mxu0
    %v9374 = vadd.f32 0.0, %v9373
    %v9375 = vpop.f32.mrb[0].mxu0
    %9376 = vdwg.mxu0
    %v9378 = vsel %vm226, %v9281, 0
    %9380 = vmatprep.subr.mxu0 0.0
    %9381 = vmatpush1.msra.mxu0 %v9295
    %9382 = vmatprep.subr.mxu0 0.0
    %9383 = vmatpush1.msra.mxu0 %v9296
    %9384 = vmatprep.subr.mxu0 0.0
    %9385 = vmatpush1.msra.mxu0 %v9297
    %9386 = vmatprep.subr.mxu0 0.0
    %9387 = vmatpush1.msra.mxu0 %v9298
    %9388 = vmatprep.subr.mxu0 0.0
    %9389 = vmatpush1.msra.mxu0 0.0
    %9390 = vmatprep.subr.mxu0 0.0
    %9391 = vmatpush1.msra.mxu0 0.0
    %9392 = vmatprep.subr.mxu0 0.0
    %9393 = vmatpush1.msra.mxu0 0.0
    %9394 = vmatprep.subr.mxu0 0.0
    %9395 = vmatpush1.msra.mxu0 0.0
    %9396 = vmatprep.subr.mxu0 0.0
    %9397 = vmatpush1.msra.mxu0 0.0
    %9398 = vmatprep.subr.mxu0 0.0
    %9399 = vmatpush1.msra.mxu0 0.0
    %9400 = vmatprep.subr.mxu0 0.0
    %9401 = vmatpush1.msra.mxu0 0.0
    %9402 = vmatprep.subr.mxu0 0.0
    %9403 = vmatpush1.msra.mxu0 0.0
    %9404 = vmatprep.subr.mxu0 0.0
    %9405 = vmatpush1.msra.mxu0 0.0
    %9406 = vmatprep.subr.mxu0 0.0
    %9407 = vmatpush1.msra.mxu0 0.0
    %9408 = vmatprep.subr.mxu0 0.0
    %9409 = vmatpush1.msra.mxu0 0.0
    %9410 = vmatprep.subr.mxu0 0.0
    %9411 = vmatpush1.msra.mxu0 0.0
    %9412 = vmatprep.subr.mxu0 0.0
    %9413 = vmatpush1.msra.mxu0 0.0
    %9414 = vmatprep.subr.mxu0 0.0
    %9415 = vmatpush1.msra.mxu0 0.0
    %9416 = vmatprep.subr.mxu0 0.0
    %9417 = vmatpush1.msra.mxu0 0.0
    %9418 = vmatprep.subr.mxu0 0.0
    %9419 = vmatpush1.msra.mxu0 0.0
    %9420 = vmatprep.subr.mxu0 0.0
    %9421 = vmatpush1.msra.mxu0 0.0
    %9422 = vmatprep.subr.mxu0 0.0
    %9423 = vmatpush1.msra.mxu0 0.0
    %9424 = vmatprep.subr.mxu0 0.0
    %9425 = vmatpush1.msra.mxu0 0.0
    %9426 = vmatprep.subr.mxu0 0.0
    %9427 = vmatpush1.msra.mxu0 0.0
    %9428 = vmatprep.subr.mxu0 0.0
    %9429 = vmatpush1.msra.mxu0 0.0
    %9430 = vmatprep.subr.mxu0 0.0
    %9431 = vmatpush1.msra.mxu0 0.0
    %9432 = vmatprep.subr.mxu0 0.0
    %9433 = vmatpush1.msra.mxu0 0.0
    %9434 = vmatprep.subr.mxu0 0.0
    %9435 = vmatpush1.msra.mxu0 0.0
    %9436 = vmatprep.subr.mxu0 0.0
    %9437 = vmatpush1.msra.mxu0 0.0
    %9438 = vmatprep.subr.mxu0 0.0
    %9439 = vmatpush1.msra.mxu0 0.0
    %9440 = vmatprep.subr.mxu0 0.0
    %9441 = vmatpush1.msra.mxu0 0.0
    %9442 = vmatprep.subr.mxu0 0.0
    %9443 = vmatpush1.msra.mxu0 0.0
    %9444 = vmatprep.mubr.f32.mxu0 0.0
    %9445 = vmatmul.mubr.f32.gmra.mrb[0].mxu0 %v9378
    %v9446 = vpop.f32.mrb[0].mxu0
    %v9447 = vadd.f32 %v9374, %v9446
    %v9448 = vpop.f32.mrb[0].mxu0
    %9449 = vdwg.mxu0
    %s9450 = scalar_lea.vmem [#allocation7], 1024
    %v9451 = vld [vmem:[%s9450] sm:$0xff]
    %v9452 = vld [vmem:[%s9450 + $0x8] sm:$0xff]
    %v9453 = vld [vmem:[%s9450 + $0x10] sm:$0xff]
    %v9454 = vld [vmem:[%s9450 + $0x18] sm:$0xff]
    %v9456 = vsel %vm226, %v9291, 0
    %9458 = vmatprep.subr.mxu0 0.0
    %9459 = vmatpush1.msra.mxu0 %v9451
    %9460 = vmatprep.subr.mxu0 0.0
    %9461 = vmatpush1.msra.mxu0 %v9452
    %9462 = vmatprep.subr.mxu0 0.0
    %9463 = vmatpush1.msra.mxu0 %v9453
    %9464 = vmatprep.subr.mxu0 0.0
    %9465 = vmatpush1.msra.mxu0 %v9454
    %9466 = vmatprep.subr.mxu0 0.0
    %9467 = vmatpush1.msra.mxu0 0.0
    %9468 = vmatprep.subr.mxu0 0.0
    %9469 = vmatpush1.msra.mxu0 0.0
    %9470 = vmatprep.subr.mxu0 0.0
    %9471 = vmatpush1.msra.mxu0 0.0
    %9472 = vmatprep.subr.mxu0 0.0
    %9473 = vmatpush1.msra.mxu0 0.0
    %9474 = vmatprep.subr.mxu0 0.0
    %9475 = vmatpush1.msra.mxu0 0.0
    %9476 = vmatprep.subr.mxu0 0.0
    %9477 = vmatpush1.msra.mxu0 0.0
    %9478 = vmatprep.subr.mxu0 0.0
    %9479 = vmatpush1.msra.mxu0 0.0
    %9480 = vmatprep.subr.mxu0 0.0
    %9481 = vmatpush1.msra.mxu0 0.0
    %9482 = vmatprep.subr.mxu0 0.0
    %9483 = vmatpush1.msra.mxu0 0.0
    %9484 = vmatprep.subr.mxu0 0.0
    %9485 = vmatpush1.msra.mxu0 0.0
    %9486 = vmatprep.subr.mxu0 0.0
    %9487 = vmatpush1.msra.mxu0 0.0
    %9488 = vmatprep.subr.mxu0 0.0
    %9489 = vmatpush1.msra.mxu0 0.0
    %9490 = vmatprep.subr.mxu0 0.0
    %9491 = vmatpush1.msra.mxu0 0.0
    %9492 = vmatprep.subr.mxu0 0.0
    %9493 = vmatpush1.msra.mxu0 0.0
    %9494 = vmatprep.subr.mxu0 0.0
    %9495 = vmatpush1.msra.mxu0 0.0
    %9496 = vmatprep.subr.mxu0 0.0
    %9497 = vmatpush1.msra.mxu0 0.0
    %9498 = vmatprep.subr.mxu0 0.0
    %9499 = vmatpush1.msra.mxu0 0.0
    %9500 = vmatprep.subr.mxu0 0.0
    %9501 = vmatpush1.msra.mxu0 0.0
    %9502 = vmatprep.subr.mxu0 0.0
    %9503 = vmatpush1.msra.mxu0 0.0
    %9504 = vmatprep.subr.mxu0 0.0
    %9505 = vmatpush1.msra.mxu0 0.0
    %9506 = vmatprep.subr.mxu0 0.0
    %9507 = vmatpush1.msra.mxu0 0.0
    %9508 = vmatprep.subr.mxu0 0.0
    %9509 = vmatpush1.msra.mxu0 0.0
    %9510 = vmatprep.subr.mxu0 0.0
    %9511 = vmatpush1.msra.mxu0 0.0
    %9512 = vmatprep.subr.mxu0 0.0
    %9513 = vmatpush1.msra.mxu0 0.0
    %9514 = vmatprep.subr.mxu0 0.0
    %9515 = vmatpush1.msra.mxu0 0.0
    %9516 = vmatprep.subr.mxu0 0.0
    %9517 = vmatpush1.msra.mxu0 0.0
    %9518 = vmatprep.subr.mxu0 0.0
    %9519 = vmatpush1.msra.mxu0 0.0
    %9520 = vmatprep.subr.mxu0 0.0
    %9521 = vmatpush1.msra.mxu0 0.0
    %9522 = vmatprep.mubr.f32.mxu0 0.0
    %9523 = vmatmul.mubr.f32.gmra.mrb[0].mxu0 %v9456
    %v9524 = vpop.f32.mrb[0].mxu0
    %v9525 = vadd.f32 0.0, %v9524
    %v9526 = vpop.f32.mrb[0].mxu0
    %9527 = vdwg.mxu0
    %v9528 = vadd.f32 %v9447, %v9525
    %s9529 = scalar_lea.vmem [#allocation8], 10
    %v9530 = vld [vmem:[%s9529] sm:$0x1]
    %v9532 = vlaneseq
    %v9533 = vshrl.u32 %v9532, 7
    %v9534 = vsub.s32 0, %v9533
    %v9535 = vrot.slane %v9530, %v9534
    %v9537 = vadd.f32 %v9528, %v9535
    %v9538 = vtanh.pop %v9537
    %v9539 = vsub.f32 %v7473, %v9538
    %9540 = vmatprep.subr.mxu0 0.0
    %9541 = vmatpush1.msra.mxu0 %v9539
    %9542 = vmatprep.subr.mxu0 0.0
    %9543 = vmatpush1.msra.mxu0 0.0
    %9544 = vmatprep.subr.mxu0 0.0
    %9545 = vmatpush1.msra.mxu0 0.0
    %9546 = vmatprep.subr.mxu0 0.0
    %9547 = vmatpush1.msra.mxu0 0.0
    %9548 = vmatprep.subr.mxu0 0.0
    %9549 = vmatpush1.msra.mxu0 0.0
    %9550 = vmatprep.subr.mxu0 0.0
    %9551 = vmatpush1.msra.mxu0 0.0
    %9552 = vmatprep.subr.mxu0 0.0
    %9553 = vmatpush1.msra.mxu0 0.0
    %9554 = vmatprep.subr.mxu0 0.0
    %9555 = vmatpush1.msra.mxu0 0.0
    %9556 = vmatprep.subr.mxu0 0.0
    %9557 = vmatpush1.msra.mxu0 0.0
    %9558 = vmatprep.subr.mxu0 0.0
    %9559 = vmatpush1.msra.mxu0 0.0
    %9560 = vmatprep.subr.mxu0 0.0
    %9561 = vmatpush1.msra.mxu0 0.0
    %9562 = vmatprep.subr.mxu0 0.0
    %9563 = vmatpush1.msra.mxu0 0.0
    %9564 = vmatprep.subr.mxu0 0.0
    %9565 = vmatpush1.msra.mxu0 0.0
    %9566 = vmatprep.subr.mxu0 0.0
    %9567 = vmatpush1.msra.mxu0 0.0
    %9568 = vmatprep.subr.mxu0 0.0
    %9569 = vmatpush1.msra.mxu0 0.0
    %9570 = vmatprep.subr.mxu0 0.0
    %9571 = vmatpush1.msra.mxu0 0.0
    %9572 = vmatprep.subr.mxu0 0.0
    %9573 = vmatpush1.msra.mxu0 0.0
    %9574 = vmatprep.subr.mxu0 0.0
    %9575 = vmatpush1.msra.mxu0 0.0
    %9576 = vmatprep.subr.mxu0 0.0
    %9577 = vmatpush1.msra.mxu0 0.0
    %9578 = vmatprep.subr.mxu0 0.0
    %9579 = vmatpush1.msra.mxu0 0.0
    %9580 = vmatprep.subr.mxu0 0.0
    %9581 = vmatpush1.msra.mxu0 0.0
    %9582 = vmatprep.subr.mxu0 0.0
    %9583 = vmatpush1.msra.mxu0 0.0
    %9584 = vmatprep.subr.mxu0 0.0
    %9585 = vmatpush1.msra.mxu0 0.0
    %9586 = vmatprep.subr.mxu0 0.0
    %9587 = vmatpush1.msra.mxu0 0.0
    %9588 = vmatprep.subr.mxu0 0.0
    %9589 = vmatpush1.msra.mxu0 0.0
    %9590 = vmatprep.subr.mxu0 0.0
    %9591 = vmatpush1.msra.mxu0 0.0
    %9592 = vmatprep.subr.mxu0 0.0
    %9593 = vmatpush1.msra.mxu0 0.0
    %9594 = vmatprep.subr.mxu0 0.0
    %9595 = vmatpush1.msra.mxu0 0.0
    %9596 = vmatprep.subr.mxu0 0.0
    %9597 = vmatpush1.msra.mxu0 0.0
    %9598 = vmatprep.subr.mxu0 0.0
    %9599 = vmatpush1.msra.mxu0 0.0
    %9600 = vmatprep.subr.mxu0 0.0
    %9601 = vmatpush1.msra.mxu0 0.0
    %9602 = vmatprep.subr.mxu0 0.0
    %9603 = vmatpush1.msra.mxu0 0.0
    %9604 = vmatprep.mubr.f32.mxu0 0.0
    %9605 = vmatmul.mubr.f32.gmra.mrb[0].mxu0 %v6483
    %v9606 = vpop.f32.mrb[0].mxu0
    %v9607 = vadd.f32 0.0, %v9606
    %v9608 = vpop.f32.mrb[0].mxu0
    %9609 = vmatprep.mubr.f32.mxu0 0.0
    %9610 = vmatmul.mubr.f32.gmra.mrb[0].mxu0 %v6486
    %v9611 = vpop.f32.mrb[0].mxu0
    %v9612 = vadd.f32 0.0, %v9611
    %v9613 = vpop.f32.mrb[0].mxu0
    %9614 = vdwg.mxu0
    %9615 = vmatprep.subr.mxu0 0.0
    %9616 = vmatpush1.msra.mxu0 %v8851
    %9617 = vmatprep.subr.mxu0 0.0
    %9618 = vmatpush1.msra.mxu0 0.0
    %9619 = vmatprep.subr.mxu0 0.0
    %9620 = vmatpush1.msra.mxu0 0.0
    %9621 = vmatprep.subr.mxu0 0.0
    %9622 = vmatpush1.msra.mxu0 0.0
    %9623 = vmatprep.subr.mxu0 0.0
    %9624 = vmatpush1.msra.mxu0 0.0
    %9625 = vmatprep.subr.mxu0 0.0
    %9626 = vmatpush1.msra.mxu0 0.0
    %9627 = vmatprep.subr.mxu0 0.0
    %9628 = vmatpush1.msra.mxu0 0.0
    %9629 = vmatprep.subr.mxu0 0.0
    %9630 = vmatpush1.msra.mxu0 0.0
    %9631 = vmatprep.subr.mxu0 0.0
    %9632 = vmatpush1.msra.mxu0 0.0
    %9633 = vmatprep.subr.mxu0 0.0
    %9634 = vmatpush1.msra.mxu0 0.0
    %9635 = vmatprep.subr.mxu0 0.0
    %9636 = vmatpush1.msra.mxu0 0.0
    %9637 = vmatprep.subr.mxu0 0.0
    %9638 = vmatpush1.msra.mxu0 0.0
    %9639 = vmatprep.subr.mxu0 0.0
    %9640 = vmatpush1.msra.mxu0 0.0
    %9641 = vmatprep.subr.mxu0 0.0
    %9642 = vmatpush1.msra.mxu0 0.0
    %9643 = vmatprep.subr.mxu0 0.0
    %9644 = vmatpush1.msra.mxu0 0.0
    %9645 = vmatprep.subr.mxu0 0.0
    %9646 = vmatpush1.msra.mxu0 0.0
    %9647 = vmatprep.subr.mxu0 0.0
    %9648 = vmatpush1.msra.mxu0 0.0
    %9649 = vmatprep.subr.mxu0 0.0
    %9650 = vmatpush1.msra.mxu0 0.0
    %9651 = vmatprep.subr.mxu0 0.0
    %9652 = vmatpush1.msra.mxu0 0.0
    %9653 = vmatprep.subr.mxu0 0.0
    %9654 = vmatpush1.msra.mxu0 0.0
    %9655 = vmatprep.subr.mxu0 0.0
    %9656 = vmatpush1.msra.mxu0 0.0
    %9657 = vmatprep.subr.mxu0 0.0
    %9658 = vmatpush1.msra.mxu0 0.0
    %9659 = vmatprep.subr.mxu0 0.0
    %9660 = vmatpush1.msra.mxu0 0.0
    %9661 = vmatprep.subr.mxu0 0.0
    %9662 = vmatpush1.msra.mxu0 0.0
    %9663 = vmatprep.subr.mxu0 0.0
    %9664 = vmatpush1.msra.mxu0 0.0
    %9665 = vmatprep.subr.mxu0 0.0
    %9666 = vmatpush1.msra.mxu0 0.0
    %9667 = vmatprep.subr.mxu0 0.0
    %9668 = vmatpush1.msra.mxu0 0.0
    %9669 = vmatprep.subr.mxu0 0.0
    %9670 = vmatpush1.msra.mxu0 0.0
    %9671 = vmatprep.subr.mxu0 0.0
    %9672 = vmatpush1.msra.mxu0 0.0
    %9673 = vmatprep.subr.mxu0 0.0
    %9674 = vmatpush1.msra.mxu0 0.0
    %9675 = vmatprep.subr.mxu0 0.0
    %9676 = vmatpush1.msra.mxu0 0.0
    %9677 = vmatprep.subr.mxu0 0.0
    %9678 = vmatpush1.msra.mxu0 0.0
    %9679 = vmatprep.mubr.f32.mxu0 0.0
    %9680 = vmatmul.mubr.f32.gmra.mrb[0].mxu0 %v6564
    %v9681 = vpop.f32.mrb[0].mxu0
    %v9682 = vadd.f32 %v9607, %v9681
    %v9683 = vpop.f32.mrb[0].mxu0
    %9684 = vmatprep.mubr.f32.mxu0 0.0
    %9685 = vmatmul.mubr.f32.gmra.mrb[0].mxu0 %v6567
    %v9686 = vpop.f32.mrb[0].mxu0
    %v9687 = vadd.f32 %v9612, %v9686
    %v9688 = vpop.f32.mrb[0].mxu0
    %9689 = vdwg.mxu0
    %v9690 = vld [vmem:[#allocation13] sm:$0xff]
    %v9691 = vld [vmem:[#allocation13 + $0x8] sm:$0xff]
    %v9692 = vld [vmem:[#allocation13 + $0x10] sm:$0xff]
    %v9693 = vld [vmem:[#allocation13 + $0x18] sm:$0xff]
    %s9694 = scalar_lea.vmem [#allocation13], 32
    %v9695 = vld [vmem:[%s9694] sm:$0xff]
    %v9696 = vld [vmem:[%s9694 + $0x8] sm:$0xff]
    %v9697 = vld [vmem:[%s9694 + $0x10] sm:$0xff]
    %v9698 = vld [vmem:[%s9694 + $0x18] sm:$0xff]
    %v9700 = vsel %vm389, %v9695, 0
    %v9703 = vsel %vm389, %v9696, 0
    %v9706 = vsel %vm389, %v9697, 0
    %v9709 = vsel %vm389, %v9698, 0
    %9711 = vmatprep.subr.mxu0 0.0
    %9712 = vmatpush1.msra.mxu0 %v9682
    %9713 = vmatprep.subr.mxu0 0.0
    %9714 = vmatpush1.msra.mxu0 %v9687
    %9715 = vmatprep.subr.mxu0 0.0
    %9716 = vmatpush1.msra.mxu0 0.0
    %9717 = vmatprep.subr.mxu0 0.0
    %9718 = vmatpush1.msra.mxu0 0.0
    %9719 = vmatprep.subr.mxu0 0.0
    %9720 = vmatpush1.msra.mxu0 0.0
    %9721 = vmatprep.subr.mxu0 0.0
    %9722 = vmatpush1.msra.mxu0 0.0
    %9723 = vmatprep.subr.mxu0 0.0
    %9724 = vmatpush1.msra.mxu0 0.0
    %9725 = vmatprep.subr.mxu0 0.0
    %9726 = vmatpush1.msra.mxu0 0.0
    %9727 = vmatprep.subr.mxu0 0.0
    %9728 = vmatpush1.msra.mxu0 0.0
    %9729 = vmatprep.subr.mxu0 0.0
    %9730 = vmatpush1.msra.mxu0 0.0
    %9731 = vmatprep.subr.mxu0 0.0
    %9732 = vmatpush1.msra.mxu0 0.0
    %9733 = vmatprep.subr.mxu0 0.0
    %9734 = vmatpush1.msra.mxu0 0.0
    %9735 = vmatprep.subr.mxu0 0.0
    %9736 = vmatpush1.msra.mxu0 0.0
    %9737 = vmatprep.subr.mxu0 0.0
    %9738 = vmatpush1.msra.mxu0 0.0
    %9739 = vmatprep.subr.mxu0 0.0
    %9740 = vmatpush1.msra.mxu0 0.0
    %9741 = vmatprep.subr.mxu0 0.0
    %9742 = vmatpush1.msra.mxu0 0.0
    %9743 = vmatprep.subr.mxu0 0.0
    %9744 = vmatpush1.msra.mxu0 0.0
    %9745 = vmatprep.subr.mxu0 0.0
    %9746 = vmatpush1.msra.mxu0 0.0
    %9747 = vmatprep.subr.mxu0 0.0
    %9748 = vmatpush1.msra.mxu0 0.0
    %9749 = vmatprep.subr.mxu0 0.0
    %9750 = vmatpush1.msra.mxu0 0.0
    %9751 = vmatprep.subr.mxu0 0.0
    %9752 = vmatpush1.msra.mxu0 0.0
    %9753 = vmatprep.subr.mxu0 0.0
    %9754 = vmatpush1.msra.mxu0 0.0
    %9755 = vmatprep.subr.mxu0 0.0
    %9756 = vmatpush1.msra.mxu0 0.0
    %9757 = vmatprep.subr.mxu0 0.0
    %9758 = vmatpush1.msra.mxu0 0.0
    %9759 = vmatprep.subr.mxu0 0.0
    %9760 = vmatpush1.msra.mxu0 0.0
    %9761 = vmatprep.subr.mxu0 0.0
    %9762 = vmatpush1.msra.mxu0 0.0
    %9763 = vmatprep.subr.mxu0 0.0
    %9764 = vmatpush1.msra.mxu0 0.0
    %9765 = vmatprep.subr.mxu0 0.0
    %9766 = vmatpush1.msra.mxu0 0.0
    %9767 = vmatprep.subr.mxu0 0.0
    %9768 = vmatpush1.msra.mxu0 0.0
    %9769 = vmatprep.subr.mxu0 0.0
    %9770 = vmatpush1.msra.mxu0 0.0
    %9771 = vmatprep.subr.mxu0 0.0
    %9772 = vmatpush1.msra.mxu0 0.0
    %9773 = vmatprep.subr.mxu0 0.0
    %9774 = vmatpush1.msra.mxu0 0.0
    %9775 = vmatprep.mubr.f32.mxu0 0.0
    %9776 = vmatmul.mubr.f32.gmra.mrb[0].mxu0 %v9700
    %v9777 = vpop.f32.mrb[0].mxu0
    %v9778 = vadd.f32 0.0, %v9777
    %v9779 = vpop.f32.mrb[0].mxu0
    %9780 = vmatprep.mubr.f32.mxu0 0.0
    %9781 = vmatmul.mubr.f32.gmra.mrb[0].mxu0 %v9703
    %v9782 = vpop.f32.mrb[0].mxu0
    %v9783 = vadd.f32 0.0, %v9782
    %v9784 = vpop.f32.mrb[0].mxu0
    %9785 = vmatprep.mubr.f32.mxu0 0.0
    %9786 = vmatmul.mubr.f32.gmra.mrb[0].mxu0 %v9706
    %v9787 = vpop.f32.mrb[0].mxu0
    %v9788 = vadd.f32 0.0, %v9787
    %v9789 = vpop.f32.mrb[0].mxu0
    %9790 = vmatprep.mubr.f32.mxu0 0.0
    %9791 = vmatmul.mubr.f32.gmra.mrb[0].mxu0 %v9709
    %v9792 = vpop.f32.mrb[0].mxu0
    %v9793 = vadd.f32 0.0, %v9792
    %v9794 = vpop.f32.mrb[0].mxu0
    %9795 = vdwg.mxu0
    %v9797 = vsel %vm389, %v9690, 0
    %v9800 = vsel %vm389, %v9691, 0
    %v9803 = vsel %vm389, %v9692, 0
    %v9806 = vsel %vm389, %v9693, 0
    %9808 = vmatprep.subr.mxu0 0.0
    %9809 = vmatpush1.msra.mxu0 %v6636
    %9810 = vmatprep.subr.mxu0 0.0
    %9811 = vmatpush1.msra.mxu0 %v6641
    %9812 = vmatprep.subr.mxu0 0.0
    %9813 = vmatpush1.msra.mxu0 0.0
    %9814 = vmatprep.subr.mxu0 0.0
    %9815 = vmatpush1.msra.mxu0 0.0
    %9816 = vmatprep.subr.mxu0 0.0
    %9817 = vmatpush1.msra.mxu0 0.0
    %9818 = vmatprep.subr.mxu0 0.0
    %9819 = vmatpush1.msra.mxu0 0.0
    %9820 = vmatprep.subr.mxu0 0.0
    %9821 = vmatpush1.msra.mxu0 0.0
    %9822 = vmatprep.subr.mxu0 0.0
    %9823 = vmatpush1.msra.mxu0 0.0
    %9824 = vmatprep.subr.mxu0 0.0
    %9825 = vmatpush1.msra.mxu0 0.0
    %9826 = vmatprep.subr.mxu0 0.0
    %9827 = vmatpush1.msra.mxu0 0.0
    %9828 = vmatprep.subr.mxu0 0.0
    %9829 = vmatpush1.msra.mxu0 0.0
    %9830 = vmatprep.subr.mxu0 0.0
    %9831 = vmatpush1.msra.mxu0 0.0
    %9832 = vmatprep.subr.mxu0 0.0
    %9833 = vmatpush1.msra.mxu0 0.0
    %9834 = vmatprep.subr.mxu0 0.0
    %9835 = vmatpush1.msra.mxu0 0.0
    %9836 = vmatprep.subr.mxu0 0.0
    %9837 = vmatpush1.msra.mxu0 0.0
    %9838 = vmatprep.subr.mxu0 0.0
    %9839 = vmatpush1.msra.mxu0 0.0
    %9840 = vmatprep.subr.mxu0 0.0
    %9841 = vmatpush1.msra.mxu0 0.0
    %9842 = vmatprep.subr.mxu0 0.0
    %9843 = vmatpush1.msra.mxu0 0.0
    %9844 = vmatprep.subr.mxu0 0.0
    %9845 = vmatpush1.msra.mxu0 0.0
    %9846 = vmatprep.subr.mxu0 0.0
    %9847 = vmatpush1.msra.mxu0 0.0
    %9848 = vmatprep.subr.mxu0 0.0
    %9849 = vmatpush1.msra.mxu0 0.0
    %9850 = vmatprep.subr.mxu0 0.0
    %9851 = vmatpush1.msra.mxu0 0.0
    %9852 = vmatprep.subr.mxu0 0.0
    %9853 = vmatpush1.msra.mxu0 0.0
    %9854 = vmatprep.subr.mxu0 0.0
    %9855 = vmatpush1.msra.mxu0 0.0
    %9856 = vmatprep.subr.mxu0 0.0
    %9857 = vmatpush1.msra.mxu0 0.0
    %9858 = vmatprep.subr.mxu0 0.0
    %9859 = vmatpush1.msra.mxu0 0.0
    %9860 = vmatprep.subr.mxu0 0.0
    %9861 = vmatpush1.msra.mxu0 0.0
    %9862 = vmatprep.subr.mxu0 0.0
    %9863 = vmatpush1.msra.mxu0 0.0
    %9864 = vmatprep.subr.mxu0 0.0
    %9865 = vmatpush1.msra.mxu0 0.0
    %9866 = vmatprep.subr.mxu0 0.0
    %9867 = vmatpush1.msra.mxu0 0.0
    %9868 = vmatprep.subr.mxu0 0.0
    %9869 = vmatpush1.msra.mxu0 0.0
    %9870 = vmatprep.subr.mxu0 0.0
    %9871 = vmatpush1.msra.mxu0 0.0
    %9872 = vmatprep.mubr.f32.mxu0 0.0
    %9873 = vmatmul.mubr.f32.gmra.mrb[0].mxu0 %v9797
    %v9874 = vpop.f32.mrb[0].mxu0
    %v9875 = vadd.f32 %v9778, %v9874
    %v9876 = vpop.f32.mrb[0].mxu0
    %9877 = vmatprep.mubr.f32.mxu0 0.0
    %9878 = vmatmul.mubr.f32.gmra.mrb[0].mxu0 %v9800
    %v9879 = vpop.f32.mrb[0].mxu0
    %v9880 = vadd.f32 %v9783, %v9879
    %v9881 = vpop.f32.mrb[0].mxu0
    %9882 = vmatprep.mubr.f32.mxu0 0.0
    %9883 = vmatmul.mubr.f32.gmra.mrb[0].mxu0 %v9803
    %v9884 = vpop.f32.mrb[0].mxu0
    %v9885 = vadd.f32 %v9788, %v9884
    %v9886 = vpop.f32.mrb[0].mxu0
    %9887 = vmatprep.mubr.f32.mxu0 0.0
    %9888 = vmatmul.mubr.f32.gmra.mrb[0].mxu0 %v9806
    %v9889 = vpop.f32.mrb[0].mxu0
    %v9890 = vadd.f32 %v9793, %v9889
    %v9891 = vpop.f32.mrb[0].mxu0
    %9892 = vdwg.mxu0
    %v9893 = vadd.f32 %v9875, %v195
    %v9894 = vadd.f32 %v9880, %v196
    %v9895 = vadd.f32 %v9885, %v197
    %v9896 = vadd.f32 %v9890, %v198
    %v9897 = vld [vmem:[#allocation10] sm:$0xff]
    %v9899 = vsel %vm389, %v9897, 0
    %9901 = vmatprep.subr.mxu0 0.0
    %9902 = vmatpush1.msra.mxu0 %v9893
    %9903 = vmatprep.subr.mxu0 0.0
    %9904 = vmatpush1.msra.mxu0 %v9894
    %9905 = vmatprep.subr.mxu0 0.0
    %9906 = vmatpush1.msra.mxu0 0.0
    %9907 = vmatprep.subr.mxu0 0.0
    %9908 = vmatpush1.msra.mxu0 0.0
    %9909 = vmatprep.subr.mxu0 0.0
    %9910 = vmatpush1.msra.mxu0 0.0
    %9911 = vmatprep.subr.mxu0 0.0
    %9912 = vmatpush1.msra.mxu0 0.0
    %9913 = vmatprep.subr.mxu0 0.0
    %9914 = vmatpush1.msra.mxu0 0.0
    %9915 = vmatprep.subr.mxu0 0.0
    %9916 = vmatpush1.msra.mxu0 0.0
    %9917 = vmatprep.subr.mxu0 0.0
    %9918 = vmatpush1.msra.mxu0 0.0
    %9919 = vmatprep.subr.mxu0 0.0
    %9920 = vmatpush1.msra.mxu0 0.0
    %9921 = vmatprep.subr.mxu0 0.0
    %9922 = vmatpush1.msra.mxu0 0.0
    %9923 = vmatprep.subr.mxu0 0.0
    %9924 = vmatpush1.msra.mxu0 0.0
    %9925 = vmatprep.subr.mxu0 0.0
    %9926 = vmatpush1.msra.mxu0 0.0
    %9927 = vmatprep.subr.mxu0 0.0
    %9928 = vmatpush1.msra.mxu0 0.0
    %9929 = vmatprep.subr.mxu0 0.0
    %9930 = vmatpush1.msra.mxu0 0.0
    %9931 = vmatprep.subr.mxu0 0.0
    %9932 = vmatpush1.msra.mxu0 0.0
    %9933 = vmatprep.subr.mxu0 0.0
    %9934 = vmatpush1.msra.mxu0 0.0
    %9935 = vmatprep.subr.mxu0 0.0
    %9936 = vmatpush1.msra.mxu0 0.0
    %9937 = vmatprep.subr.mxu0 0.0
    %9938 = vmatpush1.msra.mxu0 0.0
    %9939 = vmatprep.subr.mxu0 0.0
    %9940 = vmatpush1.msra.mxu0 0.0
    %9941 = vmatprep.subr.mxu0 0.0
    %9942 = vmatpush1.msra.mxu0 0.0
    %9943 = vmatprep.subr.mxu0 0.0
    %9944 = vmatpush1.msra.mxu0 0.0
    %9945 = vmatprep.subr.mxu0 0.0
    %9946 = vmatpush1.msra.mxu0 0.0
    %9947 = vmatprep.subr.mxu0 0.0
    %9948 = vmatpush1.msra.mxu0 0.0
    %9949 = vmatprep.subr.mxu0 0.0
    %9950 = vmatpush1.msra.mxu0 0.0
    %9951 = vmatprep.subr.mxu0 0.0
    %9952 = vmatpush1.msra.mxu0 0.0
    %9953 = vmatprep.subr.mxu0 0.0
    %9954 = vmatpush1.msra.mxu0 0.0
    %9955 = vmatprep.subr.mxu0 0.0
    %9956 = vmatpush1.msra.mxu0 0.0
    %9957 = vmatprep.subr.mxu0 0.0
    %9958 = vmatpush1.msra.mxu0 0.0
    %9959 = vmatprep.subr.mxu0 0.0
    %9960 = vmatpush1.msra.mxu0 0.0
    %9961 = vmatprep.subr.mxu0 0.0
    %9962 = vmatpush1.msra.mxu0 0.0
    %9963 = vmatprep.subr.mxu0 0.0
    %9964 = vmatpush1.msra.mxu0 0.0
    %9965 = vmatprep.mubr.f32.mxu0 0.0
    %9966 = vmatmul.mubr.f32.gmra.mrb[0].mxu0 %v9899
    %v9967 = vpop.f32.mrb[0].mxu0
    %v9968 = vadd.f32 0.0, %v9967
    %v9969 = vpop.f32.mrb[0].mxu0
    %9970 = vdwg.mxu0
    %9971 = vst.msk [vmem:[#allocation20] sm:$0xff] %vm531, %v9968
    %9972 = vmatprep.subr.mxu0 0.0
    %9973 = vmatpush1.msra.mxu0 %v9895
    %9974 = vmatprep.subr.mxu0 0.0
    %9975 = vmatpush1.msra.mxu0 %v9896
    %9976 = vmatprep.subr.mxu0 0.0
    %9977 = vmatpush1.msra.mxu0 0.0
    %9978 = vmatprep.subr.mxu0 0.0
    %9979 = vmatpush1.msra.mxu0 0.0
    %9980 = vmatprep.subr.mxu0 0.0
    %9981 = vmatpush1.msra.mxu0 0.0
    %9982 = vmatprep.subr.mxu0 0.0
    %9983 = vmatpush1.msra.mxu0 0.0
    %9984 = vmatprep.subr.mxu0 0.0
    %9985 = vmatpush1.msra.mxu0 0.0
    %9986 = vmatprep.subr.mxu0 0.0
    %9987 = vmatpush1.msra.mxu0 0.0
    %9988 = vmatprep.subr.mxu0 0.0
    %9989 = vmatpush1.msra.mxu0 0.0
    %9990 = vmatprep.subr.mxu0 0.0
    %9991 = vmatpush1.msra.mxu0 0.0
    %9992 = vmatprep.subr.mxu0 0.0
    %9993 = vmatpush1.msra.mxu0 0.0
    %9994 = vmatprep.subr.mxu0 0.0
    %9995 = vmatpush1.msra.mxu0 0.0
    %9996 = vmatprep.subr.mxu0 0.0
    %9997 = vmatpush1.msra.mxu0 0.0
    %9998 = vmatprep.subr.mxu0 0.0
    %9999 = vmatpush1.msra.mxu0 0.0
    %10000 = vmatprep.subr.mxu0 0.0
    %10001 = vmatpush1.msra.mxu0 0.0
    %10002 = vmatprep.subr.mxu0 0.0
    %10003 = vmatpush1.msra.mxu0 0.0
    %10004 = vmatprep.subr.mxu0 0.0
    %10005 = vmatpush1.msra.mxu0 0.0
    %10006 = vmatprep.subr.mxu0 0.0
    %10007 = vmatpush1.msra.mxu0 0.0
    %10008 = vmatprep.subr.mxu0 0.0
    %10009 = vmatpush1.msra.mxu0 0.0
    %10010 = vmatprep.subr.mxu0 0.0
    %10011 = vmatpush1.msra.mxu0 0.0
    %10012 = vmatprep.subr.mxu0 0.0
    %10013 = vmatpush1.msra.mxu0 0.0
    %10014 = vmatprep.subr.mxu0 0.0
    %10015 = vmatpush1.msra.mxu0 0.0
    %10016 = vmatprep.subr.mxu0 0.0
    %10017 = vmatpush1.msra.mxu0 0.0
    %10018 = vmatprep.subr.mxu0 0.0
    %10019 = vmatpush1.msra.mxu0 0.0
    %10020 = vmatprep.subr.mxu0 0.0
    %10021 = vmatpush1.msra.mxu0 0.0
    %10022 = vmatprep.subr.mxu0 0.0
    %10023 = vmatpush1.msra.mxu0 0.0
    %10024 = vmatprep.subr.mxu0 0.0
    %10025 = vmatpush1.msra.mxu0 0.0
    %10026 = vmatprep.subr.mxu0 0.0
    %10027 = vmatpush1.msra.mxu0 0.0
    %10028 = vmatprep.subr.mxu0 0.0
    %10029 = vmatpush1.msra.mxu0 0.0
    %10030 = vmatprep.subr.mxu0 0.0
    %10031 = vmatpush1.msra.mxu0 0.0
    %10032 = vmatprep.subr.mxu0 0.0
    %10033 = vmatpush1.msra.mxu0 0.0
    %10034 = vmatprep.subr.mxu0 0.0
    %10035 = vmatpush1.msra.mxu0 0.0
    %10036 = vmatprep.mubr.f32.mxu0 0.0
    %10037 = vmatmul.mubr.f32.gmra.mrb[0].mxu0 %v9899
    %v10038 = vpop.f32.mrb[0].mxu0
    %v10039 = vadd.f32 0.0, %v10038
    %v10040 = vpop.f32.mrb[0].mxu0
    %10041 = vdwg.mxu0
    %s10042 = scalar_lea.vmem [#allocation20], 8
    %10043 = vst.msk [vmem:[%s10042] sm:$0xff] %vm531, %v10039
    // Predicated region
    $region102: #{model_forward.1} parent=1 // pred_check
      _
    $region103: #{model_forward.1} parent=1 // pred_check_branch
      %10045 = sbr.rel (0) target = $region105
    $region104: #{model_forward.1} parent=1 // pred_region
      %s10047 = ssub.s32 256, 256
      %10048 = vsyncadd [#allocation4], %s10047
      %s10049 = sshll.u32 [#allocation20], 4
      %s10050 = int_to_ptr.vmem [resolvable:$true] %s10049
      %10055 = dma.vmem_to_hbm [thread:$0]  %s10050, 256, %s14, [#allocation4], 128, 128, 8
    $region105: #{model_forward.1} parent=1 // pred_fallthru
      _
    // Predicated region
    $region106: #{model_forward.1} parent=1 // pred_check
      _
    $region107: #{model_forward.1} parent=1 // pred_check_branch
      %10057 = sbr.rel (0) target = $region109
    $region108: #{model_forward.1} parent=1 // pred_region
      %10058 = dma.done [#allocation4], 256
    $region109: #{model_forward.1} parent=1 // pred_fallthru
      _
    %10059 = vsyncpa [#allocation3], 1
    %10060 = vsyncpa [#allocation6], 1
    %10061 = vsyncpa [#allocation9], 1
    %10062 = vsyncpa [#allocation12], 1
    %10063 = vsyncpa [#allocation15], 1
    %10064 = vsyncpa [#allocation18], 1
    %10065 = vsyncpa [#allocation4], 1

</llo_original>
